<compile_context>
chip_gen: v5e
topology: v5e:2x2
jax: 0.10.0
libtpu: 0.0.40
codegen_flags: <defaults>
</compile_context>

<pallas_src>
import functools

import jax
import jax.numpy as jnp
from jax import lax
from jax.experimental import pallas as pl
from jax.experimental.pallas import tpu as pltpu


# ----------------------------------------------------------------------------
# Pallas kernel: one grid step == one batch element.
# ----------------------------------------------------------------------------
def _convgru_kernel(hpad_ref, xpad_ref, h_ref, czr_ref, cq_ref,
                    wh_ref, wx_ref, wrh_ref, out_ref, rhpad_ref,
                    *, H, W, Ch):
    Hp, Wp = H + 2, W + 2
    HW = H * W

    def conv3x3_t(inp_pad, w_ref):
        """3x3 SAME conv as 9 shifted bf16 MXU matmuls. Returns (Cout, H*W)."""
        cin = inp_pad.shape[-1]
        cout = w_ref.shape[-1]
        acc = jnp.zeros((HW, cout), jnp.float32)
        for dy in range(3):
            rows = inp_pad[dy:dy + H]                         # (H, Wp, cin)
            for dx in range(3):
                patch = rows[:, dx:dx + W, :].reshape(HW, cin)
                acc = acc + jnp.dot(patch.astype(jnp.bfloat16), w_ref[dy, dx],
                                    preferred_element_type=jnp.float32)
        # Transposed so downstream gating math / stores put H*W on the
        # 128-lane axis (dense) instead of the narrow channel dim.
        return acc.T                                          # (cout, HW)

    h = h_ref[0]                                              # (Ch, HW) f32

    ax = conv3x3_t(xpad_ref[0], wx_ref)                       # x   -> [z|r|q]
    ah = conv3x3_t(hpad_ref[0], wh_ref)                       # h   -> [z|r]

    zr = jax.nn.sigmoid(ax[:2 * Ch] + ah + czr_ref[0])        # (2Ch, HW)
    z = zr[:Ch]
    r = zr[Ch:]

    # Zero-padded (r*h) in VMEM scratch for the q conv.  Only the 1-px border
    # needs zeroing; the interior is fully overwritten every grid step.
    rhpad_ref[0:1] = jnp.zeros((1, Wp, Ch), jnp.float32)
    rhpad_ref[Hp - 1:Hp] = jnp.zeros((1, Wp, Ch), jnp.float32)
    rhpad_ref[:, 0:1, :] = jnp.zeros((Hp, 1, Ch), jnp.float32)
    rhpad_ref[:, Wp - 1:Wp, :] = jnp.zeros((Hp, 1, Ch), jnp.float32)
    rh = r * h                                                # (Ch, HW) f32
    rhpad_ref[1:1 + H, 1:1 + W, :] = rh.T.reshape(H, W, Ch)

    arh = conv3x3_t(rhpad_ref[...], wrh_ref)                  # r*h -> [q]
    q = jnp.tanh(ax[2 * Ch:] + arh + cq_ref[0])               # (Ch, HW)

    out_ref[0] = ((1.0 - z) * h + z * q).astype(out_ref.dtype)


# ----------------------------------------------------------------------------
# Wrapper: NCHW (PyTorch) in/out, OIHW weights; packs fused bf16 weights,
# pads activations, folds biases into cz/cr/cq, calls pallas_call.
# ----------------------------------------------------------------------------
def convgru_forward(h, cz, cr, cq, x_list, params):
    """All array args are NCHW float32; weights are PyTorch OIHW layout."""
    x = jnp.concatenate(x_list, axis=1)                       # (N, Cx, H, W)
    N, Ch, H, W = h.shape
    Cx = x.shape[1]
    Hp, Wp = H + 2, W + 2
    HW = H * W
    bf16 = jnp.bfloat16

    # --- weights: OIHW -> HWIO, split by input and fused by gate ------------
    def to_hwio(w):                                           # (O,I,3,3)->(3,3,I,O)
        return jnp.transpose(w, (2, 3, 1, 0))

    wz, wr, wq = params["wz"], params["wr"], params["wq"]
    bz, br, bq = params["bz"], params["br"], params["bq"]
    wh_zr = jnp.concatenate([to_hwio(wz[:, :Ch]),
                             to_hwio(wr[:, :Ch])], axis=-1).astype(bf16)
    wx_zrq = jnp.concatenate([to_hwio(wz[:, Ch:]),
                              to_hwio(wr[:, Ch:]),
                              to_hwio(wq[:, Ch:])], axis=-1).astype(bf16)
    wrh_q = to_hwio(wq[:, :Ch]).astype(bf16)

    # --- activations ---------------------------------------------------------
    pad = ((0, 0), (1, 1), (1, 1), (0, 0))
    h_pad = jnp.pad(jnp.transpose(h, (0, 2, 3, 1)), pad).astype(bf16)  # NHWC
    x_pad = jnp.pad(jnp.transpose(x, (0, 2, 3, 1)), pad).astype(bf16)  # NHWC

    # Channel-major (C, H*W) f32 tensors for lane-dense gating math; conv
    # biases folded in here (pure reshapes of NCHW -> no transposes needed).
    h_cm = h.reshape(N, Ch, HW)
    czr = jnp.concatenate([cz + bz[None, :, None, None],
                           cr + br[None, :, None, None]],
                          axis=1).reshape(N, 2 * Ch, HW)
    cqb = (cq + bq[None, :, None, None]).reshape(N, Ch, HW)

    kernel = functools.partial(_convgru_kernel, H=H, W=W, Ch=Ch)

    out = pl.pallas_call(
        kernel,
        out_shape=jax.ShapeDtypeStruct((N, Ch, HW), jnp.float32),
        grid_spec=pltpu.PrefetchScalarGridSpec(
            num_scalar_prefetch=0,
            grid=(N,),
            in_specs=[
                pl.BlockSpec((1, Hp, Wp, Ch), lambda n: (n, 0, 0, 0)),     # h pad
                pl.BlockSpec((1, Hp, Wp, Cx), lambda n: (n, 0, 0, 0)),     # x pad
                pl.BlockSpec((1, Ch, HW), lambda n: (n, 0, 0)),            # h (C-major)
                pl.BlockSpec((1, 2 * Ch, HW), lambda n: (n, 0, 0)),        # cz|cr + bias
                pl.BlockSpec((1, Ch, HW), lambda n: (n, 0, 0)),            # cq + bias
                pl.BlockSpec((3, 3, Ch, 2 * Ch), lambda n: (0, 0, 0, 0)),  # h   -> z|r
                pl.BlockSpec((3, 3, Cx, 3 * Ch), lambda n: (0, 0, 0, 0)),  # x   -> z|r|q
                pl.BlockSpec((3, 3, Ch, Ch), lambda n: (0, 0, 0, 0)),      # r*h -> q
            ],
            out_specs=pl.BlockSpec((1, Ch, HW), lambda n: (n, 0, 0)),
            scratch_shapes=[pltpu.VMEM((Hp, Wp, Ch), jnp.float32)],
        ),
        # Batch axis is embarrassingly parallel -> v7x shards it across its
        # two TensorCores (no-op on single-core v5e/v6e).
        # NOTE: at production stereo shapes (large H*W), tile H into row
        # strips with a 1-px halo and raise vmem_limit_bytes for v7x (64 MiB).
        compiler_params=pltpu.CompilerParams(
            dimension_semantics=("parallel",)),
    )(h_pad, x_pad, h_cm, czr, cqb, wh_zr, wx_zrq, wrh_q)

    return out.reshape(N, Ch, H, W)                           # already NCHW


# ----------------------------------------------------------------------------
# Pure-JAX references (NCHW, lax.conv) for correctness checks.
# ----------------------------------------------------------------------------
def _conv_ref(x_nchw, w_oihw, b, bf16_operands):
    if bf16_operands:
        x_nchw = x_nchw.astype(jnp.bfloat16)
        w_oihw = w_oihw.astype(jnp.bfloat16)
    y = lax.conv_general_dilated(
        x_nchw, w_oihw, window_strides=(1, 1), padding="SAME",
        dimension_numbers=("NCHW", "OIHW", "NCHW"),
        preferred_element_type=jnp.float32)
    return y + b[None, :, None, None]


def convgru_reference(h, cz, cr, cq, x_list, params, bf16_operands=False):
    x = jnp.concatenate(x_list, axis=1)
    hx = jnp.concatenate([h, x], axis=1)
    conv = functools.partial(_conv_ref, bf16_operands=bf16_operands)
    z = jax.nn.sigmoid(conv(hx, params["wz"], params["bz"]) + cz)
    r = jax.nn.sigmoid(conv(hx, params["wr"], params["br"]) + cr)
    rhx = jnp.concatenate([r * h, x], axis=1)
    q = jnp.tanh(conv(rhx, params["wq"], params["bq"]) + cq)
    return (1.0 - z) * h + z * q


# ----------------------------------------------------------------------------
if __name__ == "__main__":
    N, hidden_dim, input_dim, H, W = 2, 32, 32, 16, 16
    Cin = hidden_dim + input_dim

    key = jax.random.PRNGKey(0)
    keys = jax.random.split(key, 12)

    def mk_w(k):   # PyTorch nn.Conv2d weight layout: (Cout, Cin, kh, kw)
        return jax.random.normal(k, (hidden_dim, Cin, 3, 3), jnp.float32) * 0.05

    def mk_b(k):
        return jax.random.normal(k, (hidden_dim,), jnp.float32) * 0.05

    params = {
        "wz": mk_w(keys[0]), "bz": mk_b(keys[1]),
        "wr": mk_w(keys[2]), "br": mk_b(keys[3]),
        "wq": mk_w(keys[4]), "bq": mk_b(keys[5]),
    }

    # Inputs (NCHW, as in the PyTorch module). x_list exercises the cat().
    h = jax.random.normal(keys[6], (N, hidden_dim, H, W), jnp.float32)
    cz = jax.random.normal(keys[7], (N, hidden_dim, H, W), jnp.float32) * 0.1
    cr = jax.random.normal(keys[8], (N, hidden_dim, H, W), jnp.float32) * 0.1
    cq = jax.random.normal(keys[9], (N, hidden_dim, H, W), jnp.float32) * 0.1
    x1 = jax.random.normal(keys[10], (N, input_dim // 2, H, W), jnp.float32)
    x2 = jax.random.normal(keys[11], (N, input_dim // 2, H, W), jnp.float32)
    x_list = (x1, x2)

    out = jax.block_until_ready(convgru_forward(h, cz, cr, cq, x_list, params))

    # Check 1: reference that also uses bf16 conv operands with f32 accumulation
    # (apples-to-apples with the kernel's MXU precision) -> tight tolerance.
    ref_bf16 = jax.block_until_ready(
        convgru_reference(h, cz, cr, cq, x_list, params, bf16_operands=True))
    # Check 2: looser sanity check against the pure-f32 reference.
    ref_f32 = jax.block_until_ready(
        convgru_reference(h, cz, cr, cq, x_list, params, bf16_operands=False))

    assert out.shape == ref_f32.shape == (N, hidden_dim, H, W)
    err_bf16 = float(jnp.max(jnp.abs(out - ref_bf16)))
    err_f32 = float(jnp.max(jnp.abs(out - ref_f32)))
    assert jnp.allclose(out, ref_bf16, atol=5e-3, rtol=5e-3), err_bf16
    assert jnp.allclose(out, ref_f32, atol=5e-2, rtol=5e-2), err_f32

    print("KERNEL_OK")
</pallas_src>

<mosaic_0001>
module attributes {stable_mosaic.version = 11 : i64} {
  func.func @_convgru_kernel(%arg0: i32, %arg1: memref<1x18x18x32xbf16, #tpu.memory_space<vmem>>, %arg2: memref<1x18x18x32xbf16, #tpu.memory_space<vmem>>, %arg3: memref<1x32x256xf32, #tpu.memory_space<vmem>>, %arg4: memref<1x64x256xf32, #tpu.memory_space<vmem>>, %arg5: memref<1x32x256xf32, #tpu.memory_space<vmem>>, %arg6: memref<3x3x32x64xbf16, #tpu.memory_space<vmem>>, %arg7: memref<3x3x32x96xbf16, #tpu.memory_space<vmem>>, %arg8: memref<3x3x32x32xbf16, #tpu.memory_space<vmem>>, %arg9: memref<1x32x256xf32, #tpu.memory_space<vmem>>, %arg10: memref<18x18x32xf32, #tpu.memory_space<vmem>>) attributes {dimension_semantics = [#tpu.dimension_semantics<parallel>], iteration_bounds = array<i64: 2>, scalar_prefetch = 0 : i64, scratch_operands = 1 : i64, tpu.core_type = #tpu.core_type<tc>, window_params = [{transform_indices = @transform_0, window_bounds = array<i64: 1, 18, 18, 32>}, {transform_indices = @transform_1, window_bounds = array<i64: 1, 18, 18, 32>}, {transform_indices = @transform_2, window_bounds = array<i64: 1, 32, 256>}, {transform_indices = @transform_3, window_bounds = array<i64: 1, 64, 256>}, {transform_indices = @transform_4, window_bounds = array<i64: 1, 32, 256>}, {pipeline_mode = #tpu.pipeline_mode<synchronous>, transform_indices = @transform_5, window_bounds = array<i64: 3, 3, 32, 64>}, {pipeline_mode = #tpu.pipeline_mode<synchronous>, transform_indices = @transform_6, window_bounds = array<i64: 3, 3, 32, 96>}, {pipeline_mode = #tpu.pipeline_mode<synchronous>, transform_indices = @transform_7, window_bounds = array<i64: 3, 3, 32, 32>}, {transform_indices = @transform_8, window_bounds = array<i64: 1, 32, 256>}]} {
    %c0 = arith.constant 0 : index
    %c0_0 = arith.constant 0 : index
    %c0_1 = arith.constant 0 : index
    %0 = vector.load %arg3[%c0, %c0_0, %c0_1] : memref<1x32x256xf32, #tpu.memory_space<vmem>>, vector<1x32x256xf32>
    %1 = vector.shape_cast %0 : vector<1x32x256xf32> to vector<32x256xf32>
    %c0_2 = arith.constant 0 : index
    %c0_3 = arith.constant 0 : index
    %c0_4 = arith.constant 0 : index
    %c0_5 = arith.constant 0 : index
    %2 = vector.load %arg2[%c0_2, %c0_3, %c0_4, %c0_5] : memref<1x18x18x32xbf16, #tpu.memory_space<vmem>>, vector<1x18x18x32xbf16>
    %3 = vector.shape_cast %2 : vector<1x18x18x32xbf16> to vector<18x18x32xbf16>
    %cst = arith.constant 0.000000e+00 : f32
    %4 = vector.broadcast %cst : f32 to vector<256x96xf32>
    %5 = vector.extract_strided_slice %3 {offsets = [0, 0, 0], sizes = [16, 18, 32], strides = [1, 1, 1]} : vector<18x18x32xbf16> to vector<16x18x32xbf16>
    %6 = vector.extract_strided_slice %5 {offsets = [0, 0, 0], sizes = [16, 16, 32], strides = [1, 1, 1]} : vector<16x18x32xbf16> to vector<16x16x32xbf16>
    %7 = vector.shape_cast %6 : vector<16x16x32xbf16> to vector<256x32xbf16>
    %c0_6 = arith.constant 0 : index
    %c0_7 = arith.constant 0 : index
    %c0_8 = arith.constant 0 : index
    %c0_9 = arith.constant 0 : index
    %8 = vector.load %arg7[%c0_6, %c0_7, %c0_8, %c0_9] : memref<3x3x32x96xbf16, #tpu.memory_space<vmem>>, vector<1x1x32x96xbf16>
    %9 = vector.shape_cast %8 : vector<1x1x32x96xbf16> to vector<32x96xbf16>
    %cst_10 = arith.constant dense<0.000000e+00> : vector<256x96xf32>
    %10 = tpu.matmul %7, %9, %cst_10 {dimension_numbers = #tpu.dot_dimension_numbers<[1], [0], [0], [1], [0, 0, 1, 1], [], []>} : vector<256x32xbf16>, vector<32x96xbf16>, vector<256x96xf32> -> vector<256x96xf32>
    %11 = arith.addf %4, %10 : vector<256x96xf32>
    %12 = vector.extract_strided_slice %5 {offsets = [0, 1, 0], sizes = [16, 16, 32], strides = [1, 1, 1]} : vector<16x18x32xbf16> to vector<16x16x32xbf16>
    %13 = vector.shape_cast %12 : vector<16x16x32xbf16> to vector<256x32xbf16>
    %c0_11 = arith.constant 0 : index
    %c1 = arith.constant 1 : index
    %c0_12 = arith.constant 0 : index
    %c0_13 = arith.constant 0 : index
    %14 = vector.load %arg7[%c0_11, %c1, %c0_12, %c0_13] : memref<3x3x32x96xbf16, #tpu.memory_space<vmem>>, vector<1x1x32x96xbf16>
    %15 = vector.shape_cast %14 : vector<1x1x32x96xbf16> to vector<32x96xbf16>
    %cst_14 = arith.constant dense<0.000000e+00> : vector<256x96xf32>
    %16 = tpu.matmul %13, %15, %cst_14 {dimension_numbers = #tpu.dot_dimension_numbers<[1], [0], [0], [1], [0, 0, 1, 1], [], []>} : vector<256x32xbf16>, vector<32x96xbf16>, vector<256x96xf32> -> vector<256x96xf32>
    %17 = arith.addf %11, %16 : vector<256x96xf32>
    %18 = vector.extract_strided_slice %5 {offsets = [0, 2, 0], sizes = [16, 16, 32], strides = [1, 1, 1]} : vector<16x18x32xbf16> to vector<16x16x32xbf16>
    %19 = vector.shape_cast %18 : vector<16x16x32xbf16> to vector<256x32xbf16>
    %c0_15 = arith.constant 0 : index
    %c2 = arith.constant 2 : index
    %c0_16 = arith.constant 0 : index
    %c0_17 = arith.constant 0 : index
    %20 = vector.load %arg7[%c0_15, %c2, %c0_16, %c0_17] : memref<3x3x32x96xbf16, #tpu.memory_space<vmem>>, vector<1x1x32x96xbf16>
    %21 = vector.shape_cast %20 : vector<1x1x32x96xbf16> to vector<32x96xbf16>
    %cst_18 = arith.constant dense<0.000000e+00> : vector<256x96xf32>
    %22 = tpu.matmul %19, %21, %cst_18 {dimension_numbers = #tpu.dot_dimension_numbers<[1], [0], [0], [1], [0, 0, 1, 1], [], []>} : vector<256x32xbf16>, vector<32x96xbf16>, vector<256x96xf32> -> vector<256x96xf32>
    %23 = arith.addf %17, %22 : vector<256x96xf32>
    %24 = vector.extract_strided_slice %3 {offsets = [1, 0, 0], sizes = [16, 18, 32], strides = [1, 1, 1]} : vector<18x18x32xbf16> to vector<16x18x32xbf16>
    %25 = vector.extract_strided_slice %24 {offsets = [0, 0, 0], sizes = [16, 16, 32], strides = [1, 1, 1]} : vector<16x18x32xbf16> to vector<16x16x32xbf16>
    %26 = vector.shape_cast %25 : vector<16x16x32xbf16> to vector<256x32xbf16>
    %c1_19 = arith.constant 1 : index
    %c0_20 = arith.constant 0 : index
    %c0_21 = arith.constant 0 : index
    %c0_22 = arith.constant 0 : index
    %27 = vector.load %arg7[%c1_19, %c0_20, %c0_21, %c0_22] : memref<3x3x32x96xbf16, #tpu.memory_space<vmem>>, vector<1x1x32x96xbf16>
    %28 = vector.shape_cast %27 : vector<1x1x32x96xbf16> to vector<32x96xbf16>
    %cst_23 = arith.constant dense<0.000000e+00> : vector<256x96xf32>
    %29 = tpu.matmul %26, %28, %cst_23 {dimension_numbers = #tpu.dot_dimension_numbers<[1], [0], [0], [1], [0, 0, 1, 1], [], []>} : vector<256x32xbf16>, vector<32x96xbf16>, vector<256x96xf32> -> vector<256x96xf32>
    %30 = arith.addf %23, %29 : vector<256x96xf32>
    %31 = vector.extract_strided_slice %24 {offsets = [0, 1, 0], sizes = [16, 16, 32], strides = [1, 1, 1]} : vector<16x18x32xbf16> to vector<16x16x32xbf16>
    %32 = vector.shape_cast %31 : vector<16x16x32xbf16> to vector<256x32xbf16>
    %c1_24 = arith.constant 1 : index
    %c1_25 = arith.constant 1 : index
    %c0_26 = arith.constant 0 : index
    %c0_27 = arith.constant 0 : index
    %33 = vector.load %arg7[%c1_24, %c1_25, %c0_26, %c0_27] : memref<3x3x32x96xbf16, #tpu.memory_space<vmem>>, vector<1x1x32x96xbf16>
    %34 = vector.shape_cast %33 : vector<1x1x32x96xbf16> to vector<32x96xbf16>
    %cst_28 = arith.constant dense<0.000000e+00> : vector<256x96xf32>
    %35 = tpu.matmul %32, %34, %cst_28 {dimension_numbers = #tpu.dot_dimension_numbers<[1], [0], [0], [1], [0, 0, 1, 1], [], []>} : vector<256x32xbf16>, vector<32x96xbf16>, vector<256x96xf32> -> vector<256x96xf32>
    %36 = arith.addf %30, %35 : vector<256x96xf32>
    %37 = vector.extract_strided_slice %24 {offsets = [0, 2, 0], sizes = [16, 16, 32], strides = [1, 1, 1]} : vector<16x18x32xbf16> to vector<16x16x32xbf16>
    %38 = vector.shape_cast %37 : vector<16x16x32xbf16> to vector<256x32xbf16>
    %c1_29 = arith.constant 1 : index
    %c2_30 = arith.constant 2 : index
    %c0_31 = arith.constant 0 : index
    %c0_32 = arith.constant 0 : index
    %39 = vector.load %arg7[%c1_29, %c2_30, %c0_31, %c0_32] : memref<3x3x32x96xbf16, #tpu.memory_space<vmem>>, vector<1x1x32x96xbf16>
    %40 = vector.shape_cast %39 : vector<1x1x32x96xbf16> to vector<32x96xbf16>
    %cst_33 = arith.constant dense<0.000000e+00> : vector<256x96xf32>
    %41 = tpu.matmul %38, %40, %cst_33 {dimension_numbers = #tpu.dot_dimension_numbers<[1], [0], [0], [1], [0, 0, 1, 1], [], []>} : vector<256x32xbf16>, vector<32x96xbf16>, vector<256x96xf32> -> vector<256x96xf32>
    %42 = arith.addf %36, %41 : vector<256x96xf32>
    %43 = vector.extract_strided_slice %3 {offsets = [2, 0, 0], sizes = [16, 18, 32], strides = [1, 1, 1]} : vector<18x18x32xbf16> to vector<16x18x32xbf16>
    %44 = vector.extract_strided_slice %43 {offsets = [0, 0, 0], sizes = [16, 16, 32], strides = [1, 1, 1]} : vector<16x18x32xbf16> to vector<16x16x32xbf16>
    %45 = vector.shape_cast %44 : vector<16x16x32xbf16> to vector<256x32xbf16>
    %c2_34 = arith.constant 2 : index
    %c0_35 = arith.constant 0 : index
    %c0_36 = arith.constant 0 : index
    %c0_37 = arith.constant 0 : index
    %46 = vector.load %arg7[%c2_34, %c0_35, %c0_36, %c0_37] : memref<3x3x32x96xbf16, #tpu.memory_space<vmem>>, vector<1x1x32x96xbf16>
    %47 = vector.shape_cast %46 : vector<1x1x32x96xbf16> to vector<32x96xbf16>
    %cst_38 = arith.constant dense<0.000000e+00> : vector<256x96xf32>
    %48 = tpu.matmul %45, %47, %cst_38 {dimension_numbers = #tpu.dot_dimension_numbers<[1], [0], [0], [1], [0, 0, 1, 1], [], []>} : vector<256x32xbf16>, vector<32x96xbf16>, vector<256x96xf32> -> vector<256x96xf32>
    %49 = arith.addf %42, %48 : vector<256x96xf32>
    %50 = vector.extract_strided_slice %43 {offsets = [0, 1, 0], sizes = [16, 16, 32], strides = [1, 1, 1]} : vector<16x18x32xbf16> to vector<16x16x32xbf16>
    %51 = vector.shape_cast %50 : vector<16x16x32xbf16> to vector<256x32xbf16>
    %c2_39 = arith.constant 2 : index
    %c1_40 = arith.constant 1 : index
    %c0_41 = arith.constant 0 : index
    %c0_42 = arith.constant 0 : index
    %52 = vector.load %arg7[%c2_39, %c1_40, %c0_41, %c0_42] : memref<3x3x32x96xbf16, #tpu.memory_space<vmem>>, vector<1x1x32x96xbf16>
    %53 = vector.shape_cast %52 : vector<1x1x32x96xbf16> to vector<32x96xbf16>
    %cst_43 = arith.constant dense<0.000000e+00> : vector<256x96xf32>
    %54 = tpu.matmul %51, %53, %cst_43 {dimension_numbers = #tpu.dot_dimension_numbers<[1], [0], [0], [1], [0, 0, 1, 1], [], []>} : vector<256x32xbf16>, vector<32x96xbf16>, vector<256x96xf32> -> vector<256x96xf32>
    %55 = arith.addf %49, %54 : vector<256x96xf32>
    %56 = vector.extract_strided_slice %43 {offsets = [0, 2, 0], sizes = [16, 16, 32], strides = [1, 1, 1]} : vector<16x18x32xbf16> to vector<16x16x32xbf16>
    %57 = vector.shape_cast %56 : vector<16x16x32xbf16> to vector<256x32xbf16>
    %c2_44 = arith.constant 2 : index
    %c2_45 = arith.constant 2 : index
    %c0_46 = arith.constant 0 : index
    %c0_47 = arith.constant 0 : index
    %58 = vector.load %arg7[%c2_44, %c2_45, %c0_46, %c0_47] : memref<3x3x32x96xbf16, #tpu.memory_space<vmem>>, vector<1x1x32x96xbf16>
    %59 = vector.shape_cast %58 : vector<1x1x32x96xbf16> to vector<32x96xbf16>
    %cst_48 = arith.constant dense<0.000000e+00> : vector<256x96xf32>
    %60 = tpu.matmul %57, %59, %cst_48 {dimension_numbers = #tpu.dot_dimension_numbers<[1], [0], [0], [1], [0, 0, 1, 1], [], []>} : vector<256x32xbf16>, vector<32x96xbf16>, vector<256x96xf32> -> vector<256x96xf32>
    %61 = arith.addf %55, %60 : vector<256x96xf32>
    %62 = tpu.transpose %61, [1, 0] : vector<256x96xf32> -> vector<96x256xf32>
    %c0_49 = arith.constant 0 : index
    %c0_50 = arith.constant 0 : index
    %c0_51 = arith.constant 0 : index
    %c0_52 = arith.constant 0 : index
    %63 = vector.load %arg1[%c0_49, %c0_50, %c0_51, %c0_52] : memref<1x18x18x32xbf16, #tpu.memory_space<vmem>>, vector<1x18x18x32xbf16>
    %64 = vector.shape_cast %63 : vector<1x18x18x32xbf16> to vector<18x18x32xbf16>
    %cst_53 = arith.constant 0.000000e+00 : f32
    %65 = vector.broadcast %cst_53 : f32 to vector<256x64xf32>
    %66 = vector.extract_strided_slice %64 {offsets = [0, 0, 0], sizes = [16, 18, 32], strides = [1, 1, 1]} : vector<18x18x32xbf16> to vector<16x18x32xbf16>
    %67 = vector.extract_strided_slice %66 {offsets = [0, 0, 0], sizes = [16, 16, 32], strides = [1, 1, 1]} : vector<16x18x32xbf16> to vector<16x16x32xbf16>
    %68 = vector.shape_cast %67 : vector<16x16x32xbf16> to vector<256x32xbf16>
    %c0_54 = arith.constant 0 : index
    %c0_55 = arith.constant 0 : index
    %c0_56 = arith.constant 0 : index
    %c0_57 = arith.constant 0 : index
    %69 = vector.load %arg6[%c0_54, %c0_55, %c0_56, %c0_57] : memref<3x3x32x64xbf16, #tpu.memory_space<vmem>>, vector<1x1x32x64xbf16>
    %70 = vector.shape_cast %69 : vector<1x1x32x64xbf16> to vector<32x64xbf16>
    %cst_58 = arith.constant dense<0.000000e+00> : vector<256x64xf32>
    %71 = tpu.matmul %68, %70, %cst_58 {dimension_numbers = #tpu.dot_dimension_numbers<[1], [0], [0], [1], [0, 0, 1, 1], [], []>} : vector<256x32xbf16>, vector<32x64xbf16>, vector<256x64xf32> -> vector<256x64xf32>
    %72 = arith.addf %65, %71 : vector<256x64xf32>
    %73 = vector.extract_strided_slice %66 {offsets = [0, 1, 0], sizes = [16, 16, 32], strides = [1, 1, 1]} : vector<16x18x32xbf16> to vector<16x16x32xbf16>
    %74 = vector.shape_cast %73 : vector<16x16x32xbf16> to vector<256x32xbf16>
    %c0_59 = arith.constant 0 : index
    %c1_60 = arith.constant 1 : index
    %c0_61 = arith.constant 0 : index
    %c0_62 = arith.constant 0 : index
    %75 = vector.load %arg6[%c0_59, %c1_60, %c0_61, %c0_62] : memref<3x3x32x64xbf16, #tpu.memory_space<vmem>>, vector<1x1x32x64xbf16>
    %76 = vector.shape_cast %75 : vector<1x1x32x64xbf16> to vector<32x64xbf16>
    %cst_63 = arith.constant dense<0.000000e+00> : vector<256x64xf32>
    %77 = tpu.matmul %74, %76, %cst_63 {dimension_numbers = #tpu.dot_dimension_numbers<[1], [0], [0], [1], [0, 0, 1, 1], [], []>} : vector<256x32xbf16>, vector<32x64xbf16>, vector<256x64xf32> -> vector<256x64xf32>
    %78 = arith.addf %72, %77 : vector<256x64xf32>
    %79 = vector.extract_strided_slice %66 {offsets = [0, 2, 0], sizes = [16, 16, 32], strides = [1, 1, 1]} : vector<16x18x32xbf16> to vector<16x16x32xbf16>
    %80 = vector.shape_cast %79 : vector<16x16x32xbf16> to vector<256x32xbf16>
    %c0_64 = arith.constant 0 : index
    %c2_65 = arith.constant 2 : index
    %c0_66 = arith.constant 0 : index
    %c0_67 = arith.constant 0 : index
    %81 = vector.load %arg6[%c0_64, %c2_65, %c0_66, %c0_67] : memref<3x3x32x64xbf16, #tpu.memory_space<vmem>>, vector<1x1x32x64xbf16>
    %82 = vector.shape_cast %81 : vector<1x1x32x64xbf16> to vector<32x64xbf16>
    %cst_68 = arith.constant dense<0.000000e+00> : vector<256x64xf32>
    %83 = tpu.matmul %80, %82, %cst_68 {dimension_numbers = #tpu.dot_dimension_numbers<[1], [0], [0], [1], [0, 0, 1, 1], [], []>} : vector<256x32xbf16>, vector<32x64xbf16>, vector<256x64xf32> -> vector<256x64xf32>
    %84 = arith.addf %78, %83 : vector<256x64xf32>
    %85 = vector.extract_strided_slice %64 {offsets = [1, 0, 0], sizes = [16, 18, 32], strides = [1, 1, 1]} : vector<18x18x32xbf16> to vector<16x18x32xbf16>
    %86 = vector.extract_strided_slice %85 {offsets = [0, 0, 0], sizes = [16, 16, 32], strides = [1, 1, 1]} : vector<16x18x32xbf16> to vector<16x16x32xbf16>
    %87 = vector.shape_cast %86 : vector<16x16x32xbf16> to vector<256x32xbf16>
    %c1_69 = arith.constant 1 : index
    %c0_70 = arith.constant 0 : index
    %c0_71 = arith.constant 0 : index
    %c0_72 = arith.constant 0 : index
    %88 = vector.load %arg6[%c1_69, %c0_70, %c0_71, %c0_72] : memref<3x3x32x64xbf16, #tpu.memory_space<vmem>>, vector<1x1x32x64xbf16>
    %89 = vector.shape_cast %88 : vector<1x1x32x64xbf16> to vector<32x64xbf16>
    %cst_73 = arith.constant dense<0.000000e+00> : vector<256x64xf32>
    %90 = tpu.matmul %87, %89, %cst_73 {dimension_numbers = #tpu.dot_dimension_numbers<[1], [0], [0], [1], [0, 0, 1, 1], [], []>} : vector<256x32xbf16>, vector<32x64xbf16>, vector<256x64xf32> -> vector<256x64xf32>
    %91 = arith.addf %84, %90 : vector<256x64xf32>
    %92 = vector.extract_strided_slice %85 {offsets = [0, 1, 0], sizes = [16, 16, 32], strides = [1, 1, 1]} : vector<16x18x32xbf16> to vector<16x16x32xbf16>
    %93 = vector.shape_cast %92 : vector<16x16x32xbf16> to vector<256x32xbf16>
    %c1_74 = arith.constant 1 : index
    %c1_75 = arith.constant 1 : index
    %c0_76 = arith.constant 0 : index
    %c0_77 = arith.constant 0 : index
    %94 = vector.load %arg6[%c1_74, %c1_75, %c0_76, %c0_77] : memref<3x3x32x64xbf16, #tpu.memory_space<vmem>>, vector<1x1x32x64xbf16>
    %95 = vector.shape_cast %94 : vector<1x1x32x64xbf16> to vector<32x64xbf16>
    %cst_78 = arith.constant dense<0.000000e+00> : vector<256x64xf32>
    %96 = tpu.matmul %93, %95, %cst_78 {dimension_numbers = #tpu.dot_dimension_numbers<[1], [0], [0], [1], [0, 0, 1, 1], [], []>} : vector<256x32xbf16>, vector<32x64xbf16>, vector<256x64xf32> -> vector<256x64xf32>
    %97 = arith.addf %91, %96 : vector<256x64xf32>
    %98 = vector.extract_strided_slice %85 {offsets = [0, 2, 0], sizes = [16, 16, 32], strides = [1, 1, 1]} : vector<16x18x32xbf16> to vector<16x16x32xbf16>
    %99 = vector.shape_cast %98 : vector<16x16x32xbf16> to vector<256x32xbf16>
    %c1_79 = arith.constant 1 : index
    %c2_80 = arith.constant 2 : index
    %c0_81 = arith.constant 0 : index
    %c0_82 = arith.constant 0 : index
    %100 = vector.load %arg6[%c1_79, %c2_80, %c0_81, %c0_82] : memref<3x3x32x64xbf16, #tpu.memory_space<vmem>>, vector<1x1x32x64xbf16>
    %101 = vector.shape_cast %100 : vector<1x1x32x64xbf16> to vector<32x64xbf16>
    %cst_83 = arith.constant dense<0.000000e+00> : vector<256x64xf32>
    %102 = tpu.matmul %99, %101, %cst_83 {dimension_numbers = #tpu.dot_dimension_numbers<[1], [0], [0], [1], [0, 0, 1, 1], [], []>} : vector<256x32xbf16>, vector<32x64xbf16>, vector<256x64xf32> -> vector<256x64xf32>
    %103 = arith.addf %97, %102 : vector<256x64xf32>
    %104 = vector.extract_strided_slice %64 {offsets = [2, 0, 0], sizes = [16, 18, 32], strides = [1, 1, 1]} : vector<18x18x32xbf16> to vector<16x18x32xbf16>
    %105 = vector.extract_strided_slice %104 {offsets = [0, 0, 0], sizes = [16, 16, 32], strides = [1, 1, 1]} : vector<16x18x32xbf16> to vector<16x16x32xbf16>
    %106 = vector.shape_cast %105 : vector<16x16x32xbf16> to vector<256x32xbf16>
    %c2_84 = arith.constant 2 : index
    %c0_85 = arith.constant 0 : index
    %c0_86 = arith.constant 0 : index
    %c0_87 = arith.constant 0 : index
    %107 = vector.load %arg6[%c2_84, %c0_85, %c0_86, %c0_87] : memref<3x3x32x64xbf16, #tpu.memory_space<vmem>>, vector<1x1x32x64xbf16>
    %108 = vector.shape_cast %107 : vector<1x1x32x64xbf16> to vector<32x64xbf16>
    %cst_88 = arith.constant dense<0.000000e+00> : vector<256x64xf32>
    %109 = tpu.matmul %106, %108, %cst_88 {dimension_numbers = #tpu.dot_dimension_numbers<[1], [0], [0], [1], [0, 0, 1, 1], [], []>} : vector<256x32xbf16>, vector<32x64xbf16>, vector<256x64xf32> -> vector<256x64xf32>
    %110 = arith.addf %103, %109 : vector<256x64xf32>
    %111 = vector.extract_strided_slice %104 {offsets = [0, 1, 0], sizes = [16, 16, 32], strides = [1, 1, 1]} : vector<16x18x32xbf16> to vector<16x16x32xbf16>
    %112 = vector.shape_cast %111 : vector<16x16x32xbf16> to vector<256x32xbf16>
    %c2_89 = arith.constant 2 : index
    %c1_90 = arith.constant 1 : index
    %c0_91 = arith.constant 0 : index
    %c0_92 = arith.constant 0 : index
    %113 = vector.load %arg6[%c2_89, %c1_90, %c0_91, %c0_92] : memref<3x3x32x64xbf16, #tpu.memory_space<vmem>>, vector<1x1x32x64xbf16>
    %114 = vector.shape_cast %113 : vector<1x1x32x64xbf16> to vector<32x64xbf16>
    %cst_93 = arith.constant dense<0.000000e+00> : vector<256x64xf32>
    %115 = tpu.matmul %112, %114, %cst_93 {dimension_numbers = #tpu.dot_dimension_numbers<[1], [0], [0], [1], [0, 0, 1, 1], [], []>} : vector<256x32xbf16>, vector<32x64xbf16>, vector<256x64xf32> -> vector<256x64xf32>
    %116 = arith.addf %110, %115 : vector<256x64xf32>
    %117 = vector.extract_strided_slice %104 {offsets = [0, 2, 0], sizes = [16, 16, 32], strides = [1, 1, 1]} : vector<16x18x32xbf16> to vector<16x16x32xbf16>
    %118 = vector.shape_cast %117 : vector<16x16x32xbf16> to vector<256x32xbf16>
    %c2_94 = arith.constant 2 : index
    %c2_95 = arith.constant 2 : index
    %c0_96 = arith.constant 0 : index
    %c0_97 = arith.constant 0 : index
    %119 = vector.load %arg6[%c2_94, %c2_95, %c0_96, %c0_97] : memref<3x3x32x64xbf16, #tpu.memory_space<vmem>>, vector<1x1x32x64xbf16>
    %120 = vector.shape_cast %119 : vector<1x1x32x64xbf16> to vector<32x64xbf16>
    %cst_98 = arith.constant dense<0.000000e+00> : vector<256x64xf32>
    %121 = tpu.matmul %118, %120, %cst_98 {dimension_numbers = #tpu.dot_dimension_numbers<[1], [0], [0], [1], [0, 0, 1, 1], [], []>} : vector<256x32xbf16>, vector<32x64xbf16>, vector<256x64xf32> -> vector<256x64xf32>
    %122 = arith.addf %116, %121 : vector<256x64xf32>
    %123 = tpu.transpose %122, [1, 0] : vector<256x64xf32> -> vector<64x256xf32>
    %124 = vector.extract_strided_slice %62 {offsets = [0, 0], sizes = [64, 256], strides = [1, 1]} : vector<96x256xf32> to vector<64x256xf32>
    %125 = arith.addf %124, %123 : vector<64x256xf32>
    %c0_99 = arith.constant 0 : index
    %c0_100 = arith.constant 0 : index
    %c0_101 = arith.constant 0 : index
    %126 = vector.load %arg4[%c0_99, %c0_100, %c0_101] : memref<1x64x256xf32, #tpu.memory_space<vmem>>, vector<1x64x256xf32>
    %127 = vector.shape_cast %126 : vector<1x64x256xf32> to vector<64x256xf32>
    %128 = arith.addf %125, %127 : vector<64x256xf32>
    %129 = arith.negf %128 : vector<64x256xf32>
    %130 = math.exp %129 : vector<64x256xf32>
    %cst_102 = arith.constant 1.000000e+00 : f32
    %131 = vector.broadcast %cst_102 : f32 to vector<64x256xf32>
    %132 = arith.addf %131, %130 : vector<64x256xf32>
    %133 = arith.divf %131, %132 : vector<64x256xf32>
    %134 = vector.extract_strided_slice %133 {offsets = [0, 0], sizes = [32, 256], strides = [1, 1]} : vector<64x256xf32> to vector<32x256xf32>
    %135 = vector.extract_strided_slice %133 {offsets = [32, 0], sizes = [32, 256], strides = [1, 1]} : vector<64x256xf32> to vector<32x256xf32>
    %cst_103 = arith.constant 0.000000e+00 : f32
    %136 = vector.broadcast %cst_103 : f32 to vector<1x18x32xf32>
    %c0_104 = arith.constant 0 : index
    %c0_105 = arith.constant 0 : index
    %c0_106 = arith.constant 0 : index
    %137 = vector.load %arg10[%c0_104, %c0_105, %c0_106] : memref<18x18x32xf32, #tpu.memory_space<vmem>>, vector<1x18x32xf32>
    tpu.vector_store %arg10[%c0_104, %c0_105, %c0_106], %136 {strides = array<i32>} : memref<18x18x32xf32, #tpu.memory_space<vmem>>, vector<1x18x32xf32>,
    %cst_107 = arith.constant 0.000000e+00 : f32
    %138 = vector.broadcast %cst_107 : f32 to vector<1x18x32xf32>
    %c17 = arith.constant 17 : index
    %c0_108 = arith.constant 0 : index
    %c0_109 = arith.constant 0 : index
    %139 = vector.load %arg10[%c17, %c0_108, %c0_109] : memref<18x18x32xf32, #tpu.memory_space<vmem>>, vector<1x18x32xf32>
    tpu.vector_store %arg10[%c17, %c0_108, %c0_109], %138 {strides = array<i32>} : memref<18x18x32xf32, #tpu.memory_space<vmem>>, vector<1x18x32xf32>,
    %cst_110 = arith.constant 0.000000e+00 : f32
    %140 = vector.broadcast %cst_110 : f32 to vector<18x1x32xf32>
    %c0_111 = arith.constant 0 : index
    %c0_112 = arith.constant 0 : index
    %c0_113 = arith.constant 0 : index
    %141 = vector.load %arg10[%c0_111, %c0_112, %c0_113] : memref<18x18x32xf32, #tpu.memory_space<vmem>>, vector<18x1x32xf32>
    tpu.vector_store %arg10[%c0_111, %c0_112, %c0_113], %140 {strides = array<i32>} : memref<18x18x32xf32, #tpu.memory_space<vmem>>, vector<18x1x32xf32>,
    %cst_114 = arith.constant 0.000000e+00 : f32
    %142 = vector.broadcast %cst_114 : f32 to vector<18x1x32xf32>
    %c0_115 = arith.constant 0 : index
    %c17_116 = arith.constant 17 : index
    %c0_117 = arith.constant 0 : index
    %143 = vector.load %arg10[%c0_115, %c17_116, %c0_117] : memref<18x18x32xf32, #tpu.memory_space<vmem>>, vector<18x1x32xf32>
    tpu.vector_store %arg10[%c0_115, %c17_116, %c0_117], %142 {strides = array<i32>} : memref<18x18x32xf32, #tpu.memory_space<vmem>>, vector<18x1x32xf32>,
    %144 = arith.mulf %135, %1 : vector<32x256xf32>
    %145 = tpu.transpose %144, [1, 0] : vector<32x256xf32> -> vector<256x32xf32>
    %146 = vector.shape_cast %145 : vector<256x32xf32> to vector<16x16x32xf32>
    %c1_118 = arith.constant 1 : index
    %c1_119 = arith.constant 1 : index
    %c0_120 = arith.constant 0 : index
    %147 = vector.load %arg10[%c1_118, %c1_119, %c0_120] : memref<18x18x32xf32, #tpu.memory_space<vmem>>, vector<16x16x32xf32>
    tpu.vector_store %arg10[%c1_118, %c1_119, %c0_120], %146 {strides = array<i32>} : memref<18x18x32xf32, #tpu.memory_space<vmem>>, vector<16x16x32xf32>,
    %c0_121 = arith.constant 0 : index
    %c0_122 = arith.constant 0 : index
    %c0_123 = arith.constant 0 : index
    %148 = vector.load %arg10[%c0_121, %c0_122, %c0_123] : memref<18x18x32xf32, #tpu.memory_space<vmem>>, vector<18x18x32xf32>
    %cst_124 = arith.constant 0.000000e+00 : f32
    %149 = vector.broadcast %cst_124 : f32 to vector<256x32xf32>
    %150 = vector.extract_strided_slice %148 {offsets = [0, 0, 0], sizes = [16, 18, 32], strides = [1, 1, 1]} : vector<18x18x32xf32> to vector<16x18x32xf32>
    %151 = vector.extract_strided_slice %150 {offsets = [0, 0, 0], sizes = [16, 16, 32], strides = [1, 1, 1]} : vector<16x18x32xf32> to vector<16x16x32xf32>
    %152 = vector.shape_cast %151 : vector<16x16x32xf32> to vector<256x32xf32>
    %153 = arith.truncf %152 : vector<256x32xf32> to vector<256x32xbf16>
    %c0_125 = arith.constant 0 : index
    %c0_126 = arith.constant 0 : index
    %c0_127 = arith.constant 0 : index
    %c0_128 = arith.constant 0 : index
    %154 = vector.load %arg8[%c0_125, %c0_126, %c0_127, %c0_128] : memref<3x3x32x32xbf16, #tpu.memory_space<vmem>>, vector<1x1x32x32xbf16>
    %155 = vector.shape_cast %154 : vector<1x1x32x32xbf16> to vector<32x32xbf16>
    %cst_129 = arith.constant dense<0.000000e+00> : vector<256x32xf32>
    %156 = tpu.matmul %153, %155, %cst_129 {dimension_numbers = #tpu.dot_dimension_numbers<[1], [0], [0], [1], [0, 0, 1, 1], [], []>} : vector<256x32xbf16>, vector<32x32xbf16>, vector<256x32xf32> -> vector<256x32xf32>
    %157 = arith.addf %149, %156 : vector<256x32xf32>
    %158 = vector.extract_strided_slice %150 {offsets = [0, 1, 0], sizes = [16, 16, 32], strides = [1, 1, 1]} : vector<16x18x32xf32> to vector<16x16x32xf32>
    %159 = vector.shape_cast %158 : vector<16x16x32xf32> to vector<256x32xf32>
    %160 = arith.truncf %159 : vector<256x32xf32> to vector<256x32xbf16>
    %c0_130 = arith.constant 0 : index
    %c1_131 = arith.constant 1 : index
    %c0_132 = arith.constant 0 : index
    %c0_133 = arith.constant 0 : index
    %161 = vector.load %arg8[%c0_130, %c1_131, %c0_132, %c0_133] : memref<3x3x32x32xbf16, #tpu.memory_space<vmem>>, vector<1x1x32x32xbf16>
    %162 = vector.shape_cast %161 : vector<1x1x32x32xbf16> to vector<32x32xbf16>
    %cst_134 = arith.constant dense<0.000000e+00> : vector<256x32xf32>
    %163 = tpu.matmul %160, %162, %cst_134 {dimension_numbers = #tpu.dot_dimension_numbers<[1], [0], [0], [1], [0, 0, 1, 1], [], []>} : vector<256x32xbf16>, vector<32x32xbf16>, vector<256x32xf32> -> vector<256x32xf32>
    %164 = arith.addf %157, %163 : vector<256x32xf32>
    %165 = vector.extract_strided_slice %150 {offsets = [0, 2, 0], sizes = [16, 16, 32], strides = [1, 1, 1]} : vector<16x18x32xf32> to vector<16x16x32xf32>
    %166 = vector.shape_cast %165 : vector<16x16x32xf32> to vector<256x32xf32>
    %167 = arith.truncf %166 : vector<256x32xf32> to vector<256x32xbf16>
    %c0_135 = arith.constant 0 : index
    %c2_136 = arith.constant 2 : index
    %c0_137 = arith.constant 0 : index
    %c0_138 = arith.constant 0 : index
    %168 = vector.load %arg8[%c0_135, %c2_136, %c0_137, %c0_138] : memref<3x3x32x32xbf16, #tpu.memory_space<vmem>>, vector<1x1x32x32xbf16>
    %169 = vector.shape_cast %168 : vector<1x1x32x32xbf16> to vector<32x32xbf16>
    %cst_139 = arith.constant dense<0.000000e+00> : vector<256x32xf32>
    %170 = tpu.matmul %167, %169, %cst_139 {dimension_numbers = #tpu.dot_dimension_numbers<[1], [0], [0], [1], [0, 0, 1, 1], [], []>} : vector<256x32xbf16>, vector<32x32xbf16>, vector<256x32xf32> -> vector<256x32xf32>
    %171 = arith.addf %164, %170 : vector<256x32xf32>
    %172 = vector.extract_strided_slice %148 {offsets = [1, 0, 0], sizes = [16, 18, 32], strides = [1, 1, 1]} : vector<18x18x32xf32> to vector<16x18x32xf32>
    %173 = vector.extract_strided_slice %172 {offsets = [0, 0, 0], sizes = [16, 16, 32], strides = [1, 1, 1]} : vector<16x18x32xf32> to vector<16x16x32xf32>
    %174 = vector.shape_cast %173 : vector<16x16x32xf32> to vector<256x32xf32>
    %175 = arith.truncf %174 : vector<256x32xf32> to vector<256x32xbf16>
    %c1_140 = arith.constant 1 : index
    %c0_141 = arith.constant 0 : index
    %c0_142 = arith.constant 0 : index
    %c0_143 = arith.constant 0 : index
    %176 = vector.load %arg8[%c1_140, %c0_141, %c0_142, %c0_143] : memref<3x3x32x32xbf16, #tpu.memory_space<vmem>>, vector<1x1x32x32xbf16>
    %177 = vector.shape_cast %176 : vector<1x1x32x32xbf16> to vector<32x32xbf16>
    %cst_144 = arith.constant dense<0.000000e+00> : vector<256x32xf32>
    %178 = tpu.matmul %175, %177, %cst_144 {dimension_numbers = #tpu.dot_dimension_numbers<[1], [0], [0], [1], [0, 0, 1, 1], [], []>} : vector<256x32xbf16>, vector<32x32xbf16>, vector<256x32xf32> -> vector<256x32xf32>
    %179 = arith.addf %171, %178 : vector<256x32xf32>
    %180 = vector.extract_strided_slice %172 {offsets = [0, 1, 0], sizes = [16, 16, 32], strides = [1, 1, 1]} : vector<16x18x32xf32> to vector<16x16x32xf32>
    %181 = vector.shape_cast %180 : vector<16x16x32xf32> to vector<256x32xf32>
    %182 = arith.truncf %181 : vector<256x32xf32> to vector<256x32xbf16>
    %c1_145 = arith.constant 1 : index
    %c1_146 = arith.constant 1 : index
    %c0_147 = arith.constant 0 : index
    %c0_148 = arith.constant 0 : index
    %183 = vector.load %arg8[%c1_145, %c1_146, %c0_147, %c0_148] : memref<3x3x32x32xbf16, #tpu.memory_space<vmem>>, vector<1x1x32x32xbf16>
    %184 = vector.shape_cast %183 : vector<1x1x32x32xbf16> to vector<32x32xbf16>
    %cst_149 = arith.constant dense<0.000000e+00> : vector<256x32xf32>
    %185 = tpu.matmul %182, %184, %cst_149 {dimension_numbers = #tpu.dot_dimension_numbers<[1], [0], [0], [1], [0, 0, 1, 1], [], []>} : vector<256x32xbf16>, vector<32x32xbf16>, vector<256x32xf32> -> vector<256x32xf32>
    %186 = arith.addf %179, %185 : vector<256x32xf32>
    %187 = vector.extract_strided_slice %172 {offsets = [0, 2, 0], sizes = [16, 16, 32], strides = [1, 1, 1]} : vector<16x18x32xf32> to vector<16x16x32xf32>
    %188 = vector.shape_cast %187 : vector<16x16x32xf32> to vector<256x32xf32>
    %189 = arith.truncf %188 : vector<256x32xf32> to vector<256x32xbf16>
    %c1_150 = arith.constant 1 : index
    %c2_151 = arith.constant 2 : index
    %c0_152 = arith.constant 0 : index
    %c0_153 = arith.constant 0 : index
    %190 = vector.load %arg8[%c1_150, %c2_151, %c0_152, %c0_153] : memref<3x3x32x32xbf16, #tpu.memory_space<vmem>>, vector<1x1x32x32xbf16>
    %191 = vector.shape_cast %190 : vector<1x1x32x32xbf16> to vector<32x32xbf16>
    %cst_154 = arith.constant dense<0.000000e+00> : vector<256x32xf32>
    %192 = tpu.matmul %189, %191, %cst_154 {dimension_numbers = #tpu.dot_dimension_numbers<[1], [0], [0], [1], [0, 0, 1, 1], [], []>} : vector<256x32xbf16>, vector<32x32xbf16>, vector<256x32xf32> -> vector<256x32xf32>
    %193 = arith.addf %186, %192 : vector<256x32xf32>
    %194 = vector.extract_strided_slice %148 {offsets = [2, 0, 0], sizes = [16, 18, 32], strides = [1, 1, 1]} : vector<18x18x32xf32> to vector<16x18x32xf32>
    %195 = vector.extract_strided_slice %194 {offsets = [0, 0, 0], sizes = [16, 16, 32], strides = [1, 1, 1]} : vector<16x18x32xf32> to vector<16x16x32xf32>
    %196 = vector.shape_cast %195 : vector<16x16x32xf32> to vector<256x32xf32>
    %197 = arith.truncf %196 : vector<256x32xf32> to vector<256x32xbf16>
    %c2_155 = arith.constant 2 : index
    %c0_156 = arith.constant 0 : index
    %c0_157 = arith.constant 0 : index
    %c0_158 = arith.constant 0 : index
    %198 = vector.load %arg8[%c2_155, %c0_156, %c0_157, %c0_158] : memref<3x3x32x32xbf16, #tpu.memory_space<vmem>>, vector<1x1x32x32xbf16>
    %199 = vector.shape_cast %198 : vector<1x1x32x32xbf16> to vector<32x32xbf16>
    %cst_159 = arith.constant dense<0.000000e+00> : vector<256x32xf32>
    %200 = tpu.matmul %197, %199, %cst_159 {dimension_numbers = #tpu.dot_dimension_numbers<[1], [0], [0], [1], [0, 0, 1, 1], [], []>} : vector<256x32xbf16>, vector<32x32xbf16>, vector<256x32xf32> -> vector<256x32xf32>
    %201 = arith.addf %193, %200 : vector<256x32xf32>
    %202 = vector.extract_strided_slice %194 {offsets = [0, 1, 0], sizes = [16, 16, 32], strides = [1, 1, 1]} : vector<16x18x32xf32> to vector<16x16x32xf32>
    %203 = vector.shape_cast %202 : vector<16x16x32xf32> to vector<256x32xf32>
    %204 = arith.truncf %203 : vector<256x32xf32> to vector<256x32xbf16>
    %c2_160 = arith.constant 2 : index
    %c1_161 = arith.constant 1 : index
    %c0_162 = arith.constant 0 : index
    %c0_163 = arith.constant 0 : index
    %205 = vector.load %arg8[%c2_160, %c1_161, %c0_162, %c0_163] : memref<3x3x32x32xbf16, #tpu.memory_space<vmem>>, vector<1x1x32x32xbf16>
    %206 = vector.shape_cast %205 : vector<1x1x32x32xbf16> to vector<32x32xbf16>
    %cst_164 = arith.constant dense<0.000000e+00> : vector<256x32xf32>
    %207 = tpu.matmul %204, %206, %cst_164 {dimension_numbers = #tpu.dot_dimension_numbers<[1], [0], [0], [1], [0, 0, 1, 1], [], []>} : vector<256x32xbf16>, vector<32x32xbf16>, vector<256x32xf32> -> vector<256x32xf32>
    %208 = arith.addf %201, %207 : vector<256x32xf32>
    %209 = vector.extract_strided_slice %194 {offsets = [0, 2, 0], sizes = [16, 16, 32], strides = [1, 1, 1]} : vector<16x18x32xf32> to vector<16x16x32xf32>
    %210 = vector.shape_cast %209 : vector<16x16x32xf32> to vector<256x32xf32>
    %211 = arith.truncf %210 : vector<256x32xf32> to vector<256x32xbf16>
    %c2_165 = arith.constant 2 : index
    %c2_166 = arith.constant 2 : index
    %c0_167 = arith.constant 0 : index
    %c0_168 = arith.constant 0 : index
    %212 = vector.load %arg8[%c2_165, %c2_166, %c0_167, %c0_168] : memref<3x3x32x32xbf16, #tpu.memory_space<vmem>>, vector<1x1x32x32xbf16>
    %213 = vector.shape_cast %212 : vector<1x1x32x32xbf16> to vector<32x32xbf16>
    %cst_169 = arith.constant dense<0.000000e+00> : vector<256x32xf32>
    %214 = tpu.matmul %211, %213, %cst_169 {dimension_numbers = #tpu.dot_dimension_numbers<[1], [0], [0], [1], [0, 0, 1, 1], [], []>} : vector<256x32xbf16>, vector<32x32xbf16>, vector<256x32xf32> -> vector<256x32xf32>
    %215 = arith.addf %208, %214 : vector<256x32xf32>
    %216 = tpu.transpose %215, [1, 0] : vector<256x32xf32> -> vector<32x256xf32>
    %217 = vector.extract_strided_slice %62 {offsets = [64, 0], sizes = [32, 256], strides = [1, 1]} : vector<96x256xf32> to vector<32x256xf32>
    %218 = arith.addf %217, %216 : vector<32x256xf32>
    %c0_170 = arith.constant 0 : index
    %c0_171 = arith.constant 0 : index
    %c0_172 = arith.constant 0 : index
    %219 = vector.load %arg5[%c0_170, %c0_171, %c0_172] : memref<1x32x256xf32, #tpu.memory_space<vmem>>, vector<1x32x256xf32>
    %220 = vector.shape_cast %219 : vector<1x32x256xf32> to vector<32x256xf32>
    %221 = arith.addf %218, %220 : vector<32x256xf32>
    %222 = math.tanh %221 : vector<32x256xf32>
    %cst_173 = arith.constant 1.000000e+00 : f32
    %223 = vector.broadcast %cst_173 : f32 to vector<32x256xf32>
    %224 = arith.subf %223, %134 : vector<32x256xf32>
    %225 = arith.mulf %224, %1 : vector<32x256xf32>
    %226 = arith.mulf %134, %222 : vector<32x256xf32>
    %227 = arith.addf %225, %226 : vector<32x256xf32>
    %c0_174 = arith.constant 0 : index
    %c0_175 = arith.constant 0 : index
    %c0_176 = arith.constant 0 : index
    %228 = vector.load %arg9[%c0_174, %c0_175, %c0_176] : memref<1x32x256xf32, #tpu.memory_space<vmem>>, vector<1x32x256xf32>
    %229 = vector.shape_cast %228 : vector<1x32x256xf32> to vector<32x256xf32>
    %230 = vector.shape_cast %227 : vector<32x256xf32> to vector<1x32x256xf32>
    tpu.vector_store %arg9[%c0_174, %c0_175, %c0_176], %230 {strides = array<i32>} : memref<1x32x256xf32, #tpu.memory_space<vmem>>, vector<1x32x256xf32>,
    return
  }
  func.func @transform_0(%arg0: i32) -> (i32, i32, i32, i32) {
    %c0_i32 = arith.constant 0 : i32
    %c0_i32_0 = arith.constant 0 : i32
    %c0_i32_1 = arith.constant 0 : i32
    %c0_i32_2 = arith.constant 0 : i32
    return %arg0, %c0_i32, %c0_i32_0, %c0_i32_1 : i32, i32, i32, i32
  }
  func.func @transform_1(%arg0: i32) -> (i32, i32, i32, i32) {
    %c0_i32 = arith.constant 0 : i32
    %c0_i32_0 = arith.constant 0 : i32
    %c0_i32_1 = arith.constant 0 : i32
    %c0_i32_2 = arith.constant 0 : i32
    return %arg0, %c0_i32, %c0_i32_0, %c0_i32_1 : i32, i32, i32, i32
  }
  func.func @transform_2(%arg0: i32) -> (i32, i32, i32) {
    %c0_i32 = arith.constant 0 : i32
    %c0_i32_0 = arith.constant 0 : i32
    %c0_i32_1 = arith.constant 0 : i32
    return %arg0, %c0_i32, %c0_i32_0 : i32, i32, i32
  }
  func.func @transform_3(%arg0: i32) -> (i32, i32, i32) {
    %c0_i32 = arith.constant 0 : i32
    %c0_i32_0 = arith.constant 0 : i32
    %c0_i32_1 = arith.constant 0 : i32
    return %arg0, %c0_i32, %c0_i32_0 : i32, i32, i32
  }
  func.func @transform_4(%arg0: i32) -> (i32, i32, i32) {
    %c0_i32 = arith.constant 0 : i32
    %c0_i32_0 = arith.constant 0 : i32
    %c0_i32_1 = arith.constant 0 : i32
    return %arg0, %c0_i32, %c0_i32_0 : i32, i32, i32
  }
  func.func @transform_5(%arg0: i32) -> (i32, i32, i32, i32) {
    %c0_i32 = arith.constant 0 : i32
    %c0_i32_0 = arith.constant 0 : i32
    %c0_i32_1 = arith.constant 0 : i32
    %c0_i32_2 = arith.constant 0 : i32
    %c0_i32_3 = arith.constant 0 : i32
    return %c0_i32, %c0_i32_0, %c0_i32_1, %c0_i32_2 : i32, i32, i32, i32
  }
  func.func @transform_6(%arg0: i32) -> (i32, i32, i32, i32) {
    %c0_i32 = arith.constant 0 : i32
    %c0_i32_0 = arith.constant 0 : i32
    %c0_i32_1 = arith.constant 0 : i32
    %c0_i32_2 = arith.constant 0 : i32
    %c0_i32_3 = arith.constant 0 : i32
    return %c0_i32, %c0_i32_0, %c0_i32_1, %c0_i32_2 : i32, i32, i32, i32
  }
  func.func @transform_7(%arg0: i32) -> (i32, i32, i32, i32) {
    %c0_i32 = arith.constant 0 : i32
    %c0_i32_0 = arith.constant 0 : i32
    %c0_i32_1 = arith.constant 0 : i32
    %c0_i32_2 = arith.constant 0 : i32
    %c0_i32_3 = arith.constant 0 : i32
    return %c0_i32, %c0_i32_0, %c0_i32_1, %c0_i32_2 : i32, i32, i32, i32
  }
  func.func @transform_8(%arg0: i32) -> (i32, i32, i32) {
    %c0_i32 = arith.constant 0 : i32
    %c0_i32_0 = arith.constant 0 : i32
    %c0_i32_1 = arith.constant 0 : i32
    return %arg0, %c0_i32, %c0_i32_0 : i32, i32, i32
  }
}

</mosaic_0001>

<llo_original>
// kernel: tpu_custom_call.1
$region0: #{tpu_custom_call.1}
  #allocation0 [shape = 'u32[]', space=smem, size = 0x4, offset = 0x4, fixed_abs, tag = 'smem constant byte address 0x4 - core index']
  #allocation1 [shape = 'u32[72,128]{1,0:T(1,128)}', space=vmem, size = 0x9000, scoped, tag = 'internal scratch']
  #allocation2 [shape = 'f32[18,18,32]{2,1,0:T(8,128)}', space=vmem, size = 0x36000, scoped, tag = 'scratch operand']
  %s0 = inlined_call_operand.vmem [shape: bf16[2,18,18,32], index: 0, kind: input, shape index: {}]
  %s1 = inlined_call_operand.vmem [shape: bf16[2,18,18,32], index: 1, kind: input, shape index: {}]
  %s2 = inlined_call_operand.vmem [shape: f32[2,32,256], index: 2, kind: input, shape index: {}]
  %s3 = inlined_call_operand.vmem [shape: f32[2,64,256], index: 3, kind: input, shape index: {}]
  %s4 = inlined_call_operand.vmem [shape: f32[2,32,256], index: 4, kind: input, shape index: {}]
  %s5 = inlined_call_operand.vmem [shape: bf16[3,3,32,64], index: 5, kind: input, shape index: {}]
  %s6 = inlined_call_operand.vmem [shape: bf16[3,3,32,96], index: 6, kind: input, shape index: {}]
  %s7 = inlined_call_operand.vmem [shape: bf16[3,3,32,32], index: 7, kind: input, shape index: {}]
  %s8 = inlined_call_operand.hbm [shape: f32[2,32,256], index: 8, kind: output, shape index: {}]
  %s9 = sld [smem:[#allocation0]]
  $region65: #{tpu_custom_call.1} parent=0
    _
  %s11 = ssub.s32 1, %s9
  %s12 = scalar_select 0, %s11, %s9
  $region1: #{tpu_custom_call.1} parent=0
    #allocation3 [shape = 'u8[65536]{0}', space=vmem, size = 0x10000, scoped, tag = 'output window, operand 0']
    #allocation4 [shape = 's32[2]{0}', space=sflag, size = 0x8, scoped, tag = 'scoped memory for tpu_custom_call.1']
    %13 = vsyncpa [#allocation4], 0
    %s14 = scalar_lea.sflag [#allocation4], 1
    %15 = vsyncpa %s14, 0
    loop: start=0, step=1, limit=4
    $region2: #{tpu_custom_call.1} parent=1 // loop_pre_header
      _
    $region3: #{tpu_custom_call.1} parent=1 // loop_header
      %s17 = sphi 0, %s21
      %p18 = scmp.ge.s32.totalorder %s17, 4
      %s27 = sphi 0, %s29
      %s30 = sphi 0, %s27
      %s31 = sphi 0, %s30
      %s47 = sphi 0, %s31
      %s53 = sphi 0, %s55
      %s56 = sphi 0, %s53
      %s57 = sphi 0, %s56
      %s73 = sphi 0, %s57
      %s79 = sphi 0, %s81
      %s82 = sphi 0, %s79
      %s83 = sphi 0, %s82
      %s99 = sphi 0, %s83
      %s105 = sphi 0, %s107
      %s108 = sphi 0, %s105
      %s109 = sphi 0, %s108
      %s125 = sphi 0, %s109
      %s131 = sphi 0, %s133
      %s134 = sphi 0, %s131
      %s135 = sphi 0, %s134
      %s151 = sphi 0, %s135
      %s155 = sphi 0, %s155
      %s157 = sphi 0, %s155
      %s158 = sphi 0, %s157
      %s172 = sphi 0, %s158
      %s176 = sphi 0, %s176
      %s178 = sphi 0, %s176
      %s179 = sphi 0, %s178
      %s193 = sphi 0, %s179
      %s197 = sphi 0, %s197
      %s199 = sphi 0, %s197
      %s200 = sphi 0, %s199
      %s214 = sphi 0, %s200
      %s220 = sphi 0, %s222
      %s223 = sphi 0, %s220
      %s224 = sphi 0, %s223
      %s240 = sphi 0, %s224
    $region4: #{tpu_custom_call.1} parent=1 // loop_header_branch
      %20 = sbr.rel (%p18) target = $region8
    $region5: #{tpu_custom_call.1} parent=1 // loop_body
      %s22 = ssub.s32 %s17, 1
      %s23 = ssub.s32 %s17, 2
      %s24 = sadd.s32 %s17, 1
      %s25 = ssub.s32 %s17, %s24
      %p26 = scmp.eq.s32.totalorder %s25, 0
      %s28 = sadd.s32 %s27, 1
      %s29 = scalar_select %p26, %s27, %s28
      %p32 = pneg %p26
      %p33 = scmp.eq.s32.totalorder %s17, 1
      %p34 = por %p32, %p33
      %p35 = scmp.ne.s32.totalorder %s27, %s30
      %p36 = scmp.eq.s32.totalorder %s17, 0
      %p37 = por %p35, %p36
      %p38 = scmp.ne.s32.totalorder %s27, %s30
      %p39 = scmp.eq.s32.totalorder %s22, 1
      %p40 = por %p38, %p39
      %p41 = scmp.ne.s32.totalorder %s30, %s31
      %p42 = scmp.eq.s32.totalorder %s22, 0
      %p43 = por %p41, %p42
      %p44 = scmp.ne.s32.totalorder %s30, %s31
      %p45 = scmp.eq.s32.totalorder %s23, 1
      %p46 = por %p44, %p45
      %p48 = scmp.ne.s32.totalorder %s31, %s47
      %p49 = scmp.eq.s32.totalorder %s23, 0
      %p50 = por %p48, %p49
      %s51 = ssub.s32 %s17, %s24
      %p52 = scmp.eq.s32.totalorder %s51, 0
      %s54 = sadd.s32 %s53, 1
      %s55 = scalar_select %p52, %s53, %s54
      %p58 = pneg %p52
      %p59 = scmp.eq.s32.totalorder %s17, 1
      %p60 = por %p58, %p59
      %p61 = scmp.ne.s32.totalorder %s53, %s56
      %p62 = scmp.eq.s32.totalorder %s17, 0
      %p63 = por %p61, %p62
      %p64 = scmp.ne.s32.totalorder %s53, %s56
      %p65 = scmp.eq.s32.totalorder %s22, 1
      %p66 = por %p64, %p65
      %p67 = scmp.ne.s32.totalorder %s56, %s57
      %p68 = scmp.eq.s32.totalorder %s22, 0
      %p69 = por %p67, %p68
      %p70 = scmp.ne.s32.totalorder %s56, %s57
      %p71 = scmp.eq.s32.totalorder %s23, 1
      %p72 = por %p70, %p71
      %p74 = scmp.ne.s32.totalorder %s57, %s73
      %p75 = scmp.eq.s32.totalorder %s23, 0
      %p76 = por %p74, %p75
      %s77 = ssub.s32 %s17, %s24
      %p78 = scmp.eq.s32.totalorder %s77, 0
      %s80 = sadd.s32 %s79, 1
      %s81 = scalar_select %p78, %s79, %s80
      %p84 = pneg %p78
      %p85 = scmp.eq.s32.totalorder %s17, 1
      %p86 = por %p84, %p85
      %p87 = scmp.ne.s32.totalorder %s79, %s82
      %p88 = scmp.eq.s32.totalorder %s17, 0
      %p89 = por %p87, %p88
      %p90 = scmp.ne.s32.totalorder %s79, %s82
      %p91 = scmp.eq.s32.totalorder %s22, 1
      %p92 = por %p90, %p91
      %p93 = scmp.ne.s32.totalorder %s82, %s83
      %p94 = scmp.eq.s32.totalorder %s22, 0
      %p95 = por %p93, %p94
      %p96 = scmp.ne.s32.totalorder %s82, %s83
      %p97 = scmp.eq.s32.totalorder %s23, 1
      %p98 = por %p96, %p97
      %p100 = scmp.ne.s32.totalorder %s83, %s99
      %p101 = scmp.eq.s32.totalorder %s23, 0
      %p102 = por %p100, %p101
      %s103 = ssub.s32 %s17, %s24
      %p104 = scmp.eq.s32.totalorder %s103, 0
      %s106 = sadd.s32 %s105, 1
      %s107 = scalar_select %p104, %s105, %s106
      %p110 = pneg %p104
      %p111 = scmp.eq.s32.totalorder %s17, 1
      %p112 = por %p110, %p111
      %p113 = scmp.ne.s32.totalorder %s105, %s108
      %p114 = scmp.eq.s32.totalorder %s17, 0
      %p115 = por %p113, %p114
      %p116 = scmp.ne.s32.totalorder %s105, %s108
      %p117 = scmp.eq.s32.totalorder %s22, 1
      %p118 = por %p116, %p117
      %p119 = scmp.ne.s32.totalorder %s108, %s109
      %p120 = scmp.eq.s32.totalorder %s22, 0
      %p121 = por %p119, %p120
      %p122 = scmp.ne.s32.totalorder %s108, %s109
      %p123 = scmp.eq.s32.totalorder %s23, 1
      %p124 = por %p122, %p123
      %p126 = scmp.ne.s32.totalorder %s109, %s125
      %p127 = scmp.eq.s32.totalorder %s23, 0
      %p128 = por %p126, %p127
      %s129 = ssub.s32 %s17, %s24
      %p130 = scmp.eq.s32.totalorder %s129, 0
      %s132 = sadd.s32 %s131, 1
      %s133 = scalar_select %p130, %s131, %s132
      %p136 = pneg %p130
      %p137 = scmp.eq.s32.totalorder %s17, 1
      %p138 = por %p136, %p137
      %p139 = scmp.ne.s32.totalorder %s131, %s134
      %p140 = scmp.eq.s32.totalorder %s17, 0
      %p141 = por %p139, %p140
      %p142 = scmp.ne.s32.totalorder %s131, %s134
      %p143 = scmp.eq.s32.totalorder %s22, 1
      %p144 = por %p142, %p143
      %p145 = scmp.ne.s32.totalorder %s134, %s135
      %p146 = scmp.eq.s32.totalorder %s22, 0
      %p147 = por %p145, %p146
      %p148 = scmp.ne.s32.totalorder %s134, %s135
      %p149 = scmp.eq.s32.totalorder %s23, 1
      %p150 = por %p148, %p149
      %p152 = scmp.ne.s32.totalorder %s135, %s151
      %p153 = scmp.eq.s32.totalorder %s23, 0
      %p154 = por %p152, %p153
      %s156 = sadd.s32 %s155, 1
      %p159 = scmp.eq.s32.totalorder %s17, 1
      %p160 = scmp.ne.s32.totalorder %s155, %s157
      %p161 = scmp.eq.s32.totalorder %s17, 0
      %p162 = por %p160, %p161
      %p163 = scmp.ne.s32.totalorder %s155, %s157
      %p164 = scmp.eq.s32.totalorder %s22, 1
      %p165 = por %p163, %p164
      %p166 = scmp.ne.s32.totalorder %s157, %s158
      %p167 = scmp.eq.s32.totalorder %s22, 0
      %p168 = por %p166, %p167
      %p169 = scmp.ne.s32.totalorder %s157, %s158
      %p170 = scmp.eq.s32.totalorder %s23, 1
      %p171 = por %p169, %p170
      %p173 = scmp.ne.s32.totalorder %s158, %s172
      %p174 = scmp.eq.s32.totalorder %s23, 0
      %p175 = por %p173, %p174
      %s177 = sadd.s32 %s176, 1
      %p180 = scmp.eq.s32.totalorder %s17, 1
      %p181 = scmp.ne.s32.totalorder %s176, %s178
      %p182 = scmp.eq.s32.totalorder %s17, 0
      %p183 = por %p181, %p182
      %p184 = scmp.ne.s32.totalorder %s176, %s178
      %p185 = scmp.eq.s32.totalorder %s22, 1
      %p186 = por %p184, %p185
      %p187 = scmp.ne.s32.totalorder %s178, %s179
      %p188 = scmp.eq.s32.totalorder %s22, 0
      %p189 = por %p187, %p188
      %p190 = scmp.ne.s32.totalorder %s178, %s179
      %p191 = scmp.eq.s32.totalorder %s23, 1
      %p192 = por %p190, %p191
      %p194 = scmp.ne.s32.totalorder %s179, %s193
      %p195 = scmp.eq.s32.totalorder %s23, 0
      %p196 = por %p194, %p195
      %s198 = sadd.s32 %s197, 1
      %p201 = scmp.eq.s32.totalorder %s17, 1
      %p202 = scmp.ne.s32.totalorder %s197, %s199
      %p203 = scmp.eq.s32.totalorder %s17, 0
      %p204 = por %p202, %p203
      %p205 = scmp.ne.s32.totalorder %s197, %s199
      %p206 = scmp.eq.s32.totalorder %s22, 1
      %p207 = por %p205, %p206
      %p208 = scmp.ne.s32.totalorder %s199, %s200
      %p209 = scmp.eq.s32.totalorder %s22, 0
      %p210 = por %p208, %p209
      %p211 = scmp.ne.s32.totalorder %s199, %s200
      %p212 = scmp.eq.s32.totalorder %s23, 1
      %p213 = por %p211, %p212
      %p215 = scmp.ne.s32.totalorder %s200, %s214
      %p216 = scmp.eq.s32.totalorder %s23, 0
      %p217 = por %p215, %p216
      %s218 = ssub.s32 %s17, %s24
      %p219 = scmp.eq.s32.totalorder %s218, 0
      %s221 = sadd.s32 %s220, 1
      %s222 = scalar_select %p219, %s220, %s221
      %p225 = pneg %p219
      %p226 = scmp.eq.s32.totalorder %s17, 1
      %p227 = por %p225, %p226
      %p228 = scmp.ne.s32.totalorder %s220, %s223
      %p229 = scmp.eq.s32.totalorder %s17, 0
      %p230 = por %p228, %p229
      %p231 = scmp.ne.s32.totalorder %s220, %s223
      %p232 = scmp.eq.s32.totalorder %s22, 1
      %p233 = por %p231, %p232
      %p234 = scmp.ne.s32.totalorder %s223, %s224
      %p235 = scmp.eq.s32.totalorder %s22, 0
      %p236 = por %p234, %p235
      %p237 = scmp.ne.s32.totalorder %s223, %s224
      %p238 = scmp.eq.s32.totalorder %s23, 1
      %p239 = por %p237, %p238
      %p241 = scmp.ne.s32.totalorder %s224, %s240
      %p242 = scmp.eq.s32.totalorder %s23, 0
      %p243 = por %p241, %p242
      %p244 = scmp.le.s32.totalorder 1, %s17
      %p245 = scmp.lt.s32.totalorder %s17, 3
      %p246 = pnand %p244, %p245
      %p247 = pneg %p246
      // Predicated region
      $region9: #{tpu_custom_call.1} parent=5 // pred_check
        _
      $region10: #{tpu_custom_call.1} parent=5 // pred_check_branch
        %249 = sbr.rel (%p246) target = $region12
      $region11: #{tpu_custom_call.1} parent=5 // pred_region
        %s250 = ssub.s32 %s17, 1
        // Predicated region
        $region13: #{tpu_custom_call.1} parent=11 // pred_check
          %p251 = pneg %p168
        $region14: #{tpu_custom_call.1} parent=11 // pred_check_branch
          %253 = sbr.rel (%p251) target = $region16
        $region15: #{tpu_custom_call.1} parent=11 // pred_region
          _
        $region16: #{tpu_custom_call.1} parent=11 // pred_fallthru
          _
        // Predicated region
        $region17: #{tpu_custom_call.1} parent=11 // pred_check
          %p254 = pneg %p189
        $region18: #{tpu_custom_call.1} parent=11 // pred_check_branch
          %256 = sbr.rel (%p254) target = $region20
        $region19: #{tpu_custom_call.1} parent=11 // pred_region
          _
        $region20: #{tpu_custom_call.1} parent=11 // pred_fallthru
          _
        // Predicated region
        $region21: #{tpu_custom_call.1} parent=11 // pred_check
          %p257 = pneg %p210
        $region22: #{tpu_custom_call.1} parent=11 // pred_check_branch
          %259 = sbr.rel (%p257) target = $region24
        $region23: #{tpu_custom_call.1} parent=11 // pred_region
          _
        $region24: #{tpu_custom_call.1} parent=11 // pred_fallthru
          _
      $region12: #{tpu_custom_call.1} parent=5 // pred_fallthru
        _
      %p260 = scmp.lt.s32.totalorder %s17, 2
      // Predicated region
      $region25: #{tpu_custom_call.1} parent=5 // pred_check
        %p261 = pneg %p260
      $region26: #{tpu_custom_call.1} parent=5 // pred_check_branch
        %263 = sbr.rel (%p261) target = $region28
      $region27: #{tpu_custom_call.1} parent=5 // pred_region
        // Predicated region
        $region29: #{tpu_custom_call.1} parent=27 // pred_check
          %p264 = pneg %p37
        $region30: #{tpu_custom_call.1} parent=27 // pred_check_branch
          %266 = sbr.rel (%p264) target = $region32
        $region31: #{tpu_custom_call.1} parent=27 // pred_region
          %p267 = scmp.lt.s32.totalorder %s17, 1
          %s268 = scalar_select %p267, %s17, 1
          %s269 = smul.addr %s268, 54
          %s270 = smul.addr %s269, 4
          %s271 = scalar_lea.vmem %s0, %s270
        $region32: #{tpu_custom_call.1} parent=27 // pred_fallthru
          _
        // Predicated region
        $region33: #{tpu_custom_call.1} parent=27 // pred_check
          %p272 = pneg %p63
        $region34: #{tpu_custom_call.1} parent=27 // pred_check_branch
          %274 = sbr.rel (%p272) target = $region36
        $region35: #{tpu_custom_call.1} parent=27 // pred_region
          %p275 = scmp.lt.s32.totalorder %s17, 1
          %s276 = scalar_select %p275, %s17, 1
          %s277 = smul.addr %s276, 54
          %s278 = smul.addr %s277, 4
          %s279 = scalar_lea.vmem %s1, %s278
        $region36: #{tpu_custom_call.1} parent=27 // pred_fallthru
          _
        // Predicated region
        $region37: #{tpu_custom_call.1} parent=27 // pred_check
          %p280 = pneg %p89
        $region38: #{tpu_custom_call.1} parent=27 // pred_check_branch
          %282 = sbr.rel (%p280) target = $region40
        $region39: #{tpu_custom_call.1} parent=27 // pred_region
          %p283 = scmp.lt.s32.totalorder %s17, 1
          %s284 = scalar_select %p283, %s17, 1
          %s285 = smul.addr %s284, 8
          %s286 = smul.addr %s285, 8
          %s287 = scalar_lea.vmem %s2, %s286
        $region40: #{tpu_custom_call.1} parent=27 // pred_fallthru
          _
        // Predicated region
        $region41: #{tpu_custom_call.1} parent=27 // pred_check
          %p288 = pneg %p115
        $region42: #{tpu_custom_call.1} parent=27 // pred_check_branch
          %290 = sbr.rel (%p288) target = $region44
        $region43: #{tpu_custom_call.1} parent=27 // pred_region
          %p291 = scmp.lt.s32.totalorder %s17, 1
          %s292 = scalar_select %p291, %s17, 1
          %s293 = smul.addr %s292, 16
          %s294 = smul.addr %s293, 8
          %s295 = scalar_lea.vmem %s3, %s294
        $region44: #{tpu_custom_call.1} parent=27 // pred_fallthru
          _
        // Predicated region
        $region45: #{tpu_custom_call.1} parent=27 // pred_check
          %p296 = pneg %p141
        $region46: #{tpu_custom_call.1} parent=27 // pred_check_branch
          %298 = sbr.rel (%p296) target = $region48
        $region47: #{tpu_custom_call.1} parent=27 // pred_region
          %p299 = scmp.lt.s32.totalorder %s17, 1
          %s300 = scalar_select %p299, %s17, 1
          %s301 = smul.addr %s300, 8
          %s302 = smul.addr %s301, 8
          %s303 = scalar_lea.vmem %s4, %s302
        $region48: #{tpu_custom_call.1} parent=27 // pred_fallthru
          _
      $region28: #{tpu_custom_call.1} parent=5 // pred_fallthru
        _
      %p304 = scmp.le.s32.totalorder 1, %s17
      %p305 = scmp.lt.s32.totalorder %s17, 3
      %p306 = pnand %p304, %p305
      %p307 = pneg %p306
      // Predicated region
      $region49: #{tpu_custom_call.1} parent=5 // pred_check
        _
      $region50: #{tpu_custom_call.1} parent=5 // pred_check_branch
        %309 = sbr.rel (%p306) target = $region52
      $region51: #{tpu_custom_call.1} parent=5 // pred_region
        %s310 = ssub.s32 %s17, 1
        %p311 = scmp.lt.s32.totalorder %s22, 1
        %s312 = scalar_select %p311, %s22, 1
        %s313 = smul.addr %s312, 54
        %s314 = smul.addr %s313, 4
        %s315 = scalar_lea.vmem %s0, %s314
        %p316 = pneg %p43
        %p317 = pneg %p40
        %p318 = scmp.lt.s32.totalorder %s22, 1
        %s319 = scalar_select %p318, %s22, 1
        %s320 = smul.addr %s319, 54
        %s321 = smul.addr %s320, 4
        %s322 = scalar_lea.vmem %s1, %s321
        %p323 = pneg %p69
        %p324 = pneg %p66
        %p325 = scmp.lt.s32.totalorder %s22, 1
        %s326 = scalar_select %p325, %s22, 1
        %s327 = smul.addr %s326, 8
        %s328 = smul.addr %s327, 8
        %s329 = scalar_lea.vmem %s2, %s328
        %p330 = pneg %p95
        %p331 = pneg %p92
        %p332 = scmp.lt.s32.totalorder %s22, 1
        %s333 = scalar_select %p332, %s22, 1
        %s334 = smul.addr %s333, 16
        %s335 = smul.addr %s334, 8
        %s336 = scalar_lea.vmem %s3, %s335
        %p337 = pneg %p121
        %p338 = pneg %p118
        %p339 = scmp.lt.s32.totalorder %s22, 1
        %s340 = scalar_select %p339, %s22, 1
        %s341 = smul.addr %s340, 8
        %s342 = smul.addr %s341, 8
        %s343 = scalar_lea.vmem %s4, %s342
        %p344 = pneg %p147
        %p345 = pneg %p144
        %p346 = pneg %p168
        %p347 = pneg %p165
        %p348 = pneg %p189
        %p349 = pneg %p186
        %p350 = pneg %p210
        %p351 = pneg %p207
        %p352 = pneg %p236
        %p353 = pneg %p233
        %s354 = sand.u32 %s223, 1
        %s355 = scalar_lea.sflag [#allocation4], %s354
        %s356 = sand.u32 %s223, 1
        %s357 = smul.addr %s356, 64
        %s358 = scalar_lea.vmem [#allocation3], %s357
        %p359 = scmp.lt.s32.totalorder %s22, 1
        %s360 = scalar_select %p359, %s22, 1
        %s361 = smul.addr %s360, 54
        %s362 = smul.addr %s361, 4
        %s363 = scalar_lea.vmem %s0, %s362
        %p364 = scmp.lt.s32.totalorder %s22, 1
        %s365 = scalar_select %p364, %s22, 1
        %s366 = smul.addr %s365, 54
        %s367 = smul.addr %s366, 4
        %s368 = scalar_lea.vmem %s1, %s367
        %p369 = scmp.lt.s32.totalorder %s22, 1
        %s370 = scalar_select %p369, %s22, 1
        %s371 = smul.addr %s370, 8
        %s372 = smul.addr %s371, 8
        %s373 = scalar_lea.vmem %s2, %s372
        %p374 = scmp.lt.s32.totalorder %s22, 1
        %s375 = scalar_select %p374, %s22, 1
        %s376 = smul.addr %s375, 16
        %s377 = smul.addr %s376, 8
        %s378 = scalar_lea.vmem %s3, %s377
        %p379 = scmp.lt.s32.totalorder %s22, 1
        %s380 = scalar_select %p379, %s22, 1
        %s381 = smul.addr %s380, 8
        %s382 = smul.addr %s381, 8
        %s383 = scalar_lea.vmem %s4, %s382
        %v385 = vld [vmem:[%s373] sm:$0xff]
        %v386 = vld [vmem:[%s373 + $0x8] sm:$0xff]
        %v387 = vld [vmem:[%s373 + $0x10] sm:$0xff]
        %v388 = vld [vmem:[%s373 + $0x18] sm:$0xff]
        %v389 = vld [vmem:[%s373 + $0x20] sm:$0xff]
        %v390 = vld [vmem:[%s373 + $0x28] sm:$0xff]
        %v391 = vld [vmem:[%s373 + $0x30] sm:$0xff]
        %v392 = vld [vmem:[%s373 + $0x38] sm:$0xff]
        %v393 = vld [vmem:[%s368] sm:$0xf]
        %v394 = vld [vmem:[%s368 + $0x4] sm:$0xf]
        %v395 = vld [vmem:[%s368 + $0x8] sm:$0x1]
        %v396 = vld [vmem:[%s368 + $0xc] sm:$0xf]
        %v397 = vld [vmem:[%s368 + $0x10] sm:$0xf]
        %v398 = vld [vmem:[%s368 + $0x14] sm:$0x1]
        %v399 = vld [vmem:[%s368 + $0x18] sm:$0xf]
        %v400 = vld [vmem:[%s368 + $0x1c] sm:$0xf]
        %v401 = vld [vmem:[%s368 + $0x20] sm:$0x1]
        %v402 = vld [vmem:[%s368 + $0x24] sm:$0xf]
        %v403 = vld [vmem:[%s368 + $0x28] sm:$0xf]
        %v404 = vld [vmem:[%s368 + $0x2c] sm:$0x1]
        %v405 = vld [vmem:[%s368 + $0x30] sm:$0xf]
        %v406 = vld [vmem:[%s368 + $0x34] sm:$0xf]
        %v407 = vld [vmem:[%s368 + $0x38] sm:$0x1]
        %v408 = vld [vmem:[%s368 + $0x3c] sm:$0xf]
        %v409 = vld [vmem:[%s368 + $0x40] sm:$0xf]
        %v410 = vld [vmem:[%s368 + $0x44] sm:$0x1]
        %v411 = vld [vmem:[%s368 + $0x48] sm:$0xf]
        %v412 = vld [vmem:[%s368 + $0x4c] sm:$0xf]
        %v413 = vld [vmem:[%s368 + $0x50] sm:$0x1]
        %v414 = vld [vmem:[%s368 + $0x54] sm:$0xf]
        %v415 = vld [vmem:[%s368 + $0x58] sm:$0xf]
        %v416 = vld [vmem:[%s368 + $0x5c] sm:$0x1]
        %v417 = vld [vmem:[%s368 + $0x60] sm:$0xf]
        %v418 = vld [vmem:[%s368 + $0x64] sm:$0xf]
        %v419 = vld [vmem:[%s368 + $0x68] sm:$0x1]
        %v420 = vld [vmem:[%s368 + $0x6c] sm:$0xf]
        %v421 = vld [vmem:[%s368 + $0x70] sm:$0xf]
        %v422 = vld [vmem:[%s368 + $0x74] sm:$0x1]
        %v423 = vld [vmem:[%s368 + $0x78] sm:$0xf]
        %v424 = vld [vmem:[%s368 + $0x7c] sm:$0xf]
        %v425 = vld [vmem:[%s368 + $0x80] sm:$0x1]
        %v426 = vld [vmem:[%s368 + $0x84] sm:$0xf]
        %v427 = vld [vmem:[%s368 + $0x88] sm:$0xf]
        %v428 = vld [vmem:[%s368 + $0x8c] sm:$0x1]
        %v429 = vld [vmem:[%s368 + $0x90] sm:$0xf]
        %v430 = vld [vmem:[%s368 + $0x94] sm:$0xf]
        %v431 = vld [vmem:[%s368 + $0x98] sm:$0x1]
        %v432 = vld [vmem:[%s368 + $0x9c] sm:$0xf]
        %v433 = vld [vmem:[%s368 + $0xa0] sm:$0xf]
        %v434 = vld [vmem:[%s368 + $0xa4] sm:$0x1]
        %v435 = vld [vmem:[%s368 + $0xa8] sm:$0xf]
        %v436 = vld [vmem:[%s368 + $0xac] sm:$0xf]
        %v437 = vld [vmem:[%s368 + $0xb0] sm:$0x1]
        %v438 = vld [vmem:[%s368 + $0xb4] sm:$0xf]
        %v439 = vld [vmem:[%s368 + $0xb8] sm:$0xf]
        %v440 = vld [vmem:[%s368 + $0xbc] sm:$0x1]
        %v441 = vld [vmem:[%s368 + $0xc0] sm:$0xf]
        %v442 = vld [vmem:[%s368 + $0xc4] sm:$0xf]
        %v443 = vld [vmem:[%s368 + $0xc8] sm:$0x1]
        %v444 = vld [vmem:[%s368 + $0xcc] sm:$0xf]
        %v445 = vld [vmem:[%s368 + $0xd0] sm:$0xf]
        %v446 = vld [vmem:[%s368 + $0xd4] sm:$0x1]
        %v447 = vld [vmem:[%s6] sm:$0xf]
        %v448 = vld [vmem:[%s6 + $0x4] sm:$0xf]
        %v449 = vld [vmem:[%s6 + $0x8] sm:$0xf]
        %v450 = vld [vmem:[%s6 + $0xc] sm:$0xf]
        %vm451 = vsmask.f32 3328
        %vm452 = vsmask.f32 7440
        %vm453 = vmor %vm451, %vm452
        %v455 = vshrl.u32 %v393, 16
        %v457 = vrot.slane %v455, 4
        %v458 = vshll.u32 %v393, 16
        %v460 = vrot.slane %v458, 5
        %v461 = vor.u32 %v457, %v460
        %v462 = vrot.slane %v461, 4
        %v464 = vshll.u32 %v394, 16
        %v466 = vrot.slane %v464, 5
        %v467 = vsel %vm453, %v462, %v466
        %v468 = vshrl.u32 %v394, 16
        %v470 = vrot.slane %v468, 4
        %v471 = vor.u32 %v470, %v466
        %v472 = vrot.slane %v471, 4
        %v474 = vshll.u32 %v395, 16
        %v476 = vrot.slane %v474, 5
        %v477 = vsel %vm453, %v472, %v476
        %v479 = vshrl.u32 %v396, 16
        %v481 = vrot.slane %v479, 4
        %v482 = vshll.u32 %v396, 16
        %v484 = vrot.slane %v482, 5
        %v485 = vor.u32 %v481, %v484
        %v486 = vrot.slane %v485, 4
        %v488 = vshll.u32 %v397, 16
        %v490 = vrot.slane %v488, 5
        %v491 = vsel %vm453, %v486, %v490
        %v492 = vshrl.u32 %v397, 16
        %v494 = vrot.slane %v492, 4
        %v495 = vor.u32 %v494, %v490
        %v496 = vrot.slane %v495, 4
        %v498 = vshll.u32 %v398, 16
        %v500 = vrot.slane %v498, 5
        %v501 = vsel %vm453, %v496, %v500
        %v503 = vshrl.u32 %v399, 16
        %v505 = vrot.slane %v503, 4
        %v506 = vshll.u32 %v399, 16
        %v508 = vrot.slane %v506, 5
        %v509 = vor.u32 %v505, %v508
        %v510 = vrot.slane %v509, 4
        %v512 = vshll.u32 %v400, 16
        %v514 = vrot.slane %v512, 5
        %v515 = vsel %vm453, %v510, %v514
        %v516 = vshrl.u32 %v400, 16
        %v518 = vrot.slane %v516, 4
        %v519 = vor.u32 %v518, %v514
        %v520 = vrot.slane %v519, 4
        %v522 = vshll.u32 %v401, 16
        %v524 = vrot.slane %v522, 5
        %v525 = vsel %vm453, %v520, %v524
        %v527 = vshrl.u32 %v402, 16
        %v529 = vrot.slane %v527, 4
        %v530 = vshll.u32 %v402, 16
        %v532 = vrot.slane %v530, 5
        %v533 = vor.u32 %v529, %v532
        %v534 = vrot.slane %v533, 4
        %v536 = vshll.u32 %v403, 16
        %v538 = vrot.slane %v536, 5
        %v539 = vsel %vm453, %v534, %v538
        %v540 = vshrl.u32 %v403, 16
        %v542 = vrot.slane %v540, 4
        %v543 = vor.u32 %v542, %v538
        %v544 = vrot.slane %v543, 4
        %v546 = vshll.u32 %v404, 16
        %v548 = vrot.slane %v546, 5
        %v549 = vsel %vm453, %v544, %v548
        %v551 = vshrl.u32 %v405, 16
        %v553 = vrot.slane %v551, 4
        %v554 = vshll.u32 %v405, 16
        %v556 = vrot.slane %v554, 5
        %v557 = vor.u32 %v553, %v556
        %v558 = vrot.slane %v557, 4
        %v560 = vshll.u32 %v406, 16
        %v562 = vrot.slane %v560, 5
        %v563 = vsel %vm453, %v558, %v562
        %v564 = vshrl.u32 %v406, 16
        %v566 = vrot.slane %v564, 4
        %v567 = vor.u32 %v566, %v562
        %v568 = vrot.slane %v567, 4
        %v570 = vshll.u32 %v407, 16
        %v572 = vrot.slane %v570, 5
        %v573 = vsel %vm453, %v568, %v572
        %v575 = vshrl.u32 %v408, 16
        %v577 = vrot.slane %v575, 4
        %v578 = vshll.u32 %v408, 16
        %v580 = vrot.slane %v578, 5
        %v581 = vor.u32 %v577, %v580
        %v582 = vrot.slane %v581, 4
        %v584 = vshll.u32 %v409, 16
        %v586 = vrot.slane %v584, 5
        %v587 = vsel %vm453, %v582, %v586
        %v588 = vshrl.u32 %v409, 16
        %v590 = vrot.slane %v588, 4
        %v591 = vor.u32 %v590, %v586
        %v592 = vrot.slane %v591, 4
        %v594 = vshll.u32 %v410, 16
        %v596 = vrot.slane %v594, 5
        %v597 = vsel %vm453, %v592, %v596
        %v599 = vshrl.u32 %v411, 16
        %v601 = vrot.slane %v599, 4
        %v602 = vshll.u32 %v411, 16
        %v604 = vrot.slane %v602, 5
        %v605 = vor.u32 %v601, %v604
        %v606 = vrot.slane %v605, 4
        %v608 = vshll.u32 %v412, 16
        %v610 = vrot.slane %v608, 5
        %v611 = vsel %vm453, %v606, %v610
        %v612 = vshrl.u32 %v412, 16
        %v614 = vrot.slane %v612, 4
        %v615 = vor.u32 %v614, %v610
        %v616 = vrot.slane %v615, 4
        %v618 = vshll.u32 %v413, 16
        %v620 = vrot.slane %v618, 5
        %v621 = vsel %vm453, %v616, %v620
        %v623 = vshrl.u32 %v414, 16
        %v625 = vrot.slane %v623, 4
        %v626 = vshll.u32 %v414, 16
        %v628 = vrot.slane %v626, 5
        %v629 = vor.u32 %v625, %v628
        %v630 = vrot.slane %v629, 4
        %v632 = vshll.u32 %v415, 16
        %v634 = vrot.slane %v632, 5
        %v635 = vsel %vm453, %v630, %v634
        %v636 = vshrl.u32 %v415, 16
        %v638 = vrot.slane %v636, 4
        %v639 = vor.u32 %v638, %v634
        %v640 = vrot.slane %v639, 4
        %v642 = vshll.u32 %v416, 16
        %v644 = vrot.slane %v642, 5
        %v645 = vsel %vm453, %v640, %v644
        %v647 = vshrl.u32 %v417, 16
        %v649 = vrot.slane %v647, 4
        %v650 = vshll.u32 %v417, 16
        %v652 = vrot.slane %v650, 5
        %v653 = vor.u32 %v649, %v652
        %v654 = vrot.slane %v653, 4
        %v656 = vshll.u32 %v418, 16
        %v658 = vrot.slane %v656, 5
        %v659 = vsel %vm453, %v654, %v658
        %v660 = vshrl.u32 %v418, 16
        %v662 = vrot.slane %v660, 4
        %v663 = vor.u32 %v662, %v658
        %v664 = vrot.slane %v663, 4
        %v666 = vshll.u32 %v419, 16
        %v668 = vrot.slane %v666, 5
        %v669 = vsel %vm453, %v664, %v668
        %v671 = vshrl.u32 %v420, 16
        %v673 = vrot.slane %v671, 4
        %v674 = vshll.u32 %v420, 16
        %v676 = vrot.slane %v674, 5
        %v677 = vor.u32 %v673, %v676
        %v678 = vrot.slane %v677, 4
        %v680 = vshll.u32 %v421, 16
        %v682 = vrot.slane %v680, 5
        %v683 = vsel %vm453, %v678, %v682
        %v684 = vshrl.u32 %v421, 16
        %v686 = vrot.slane %v684, 4
        %v687 = vor.u32 %v686, %v682
        %v688 = vrot.slane %v687, 4
        %v690 = vshll.u32 %v422, 16
        %v692 = vrot.slane %v690, 5
        %v693 = vsel %vm453, %v688, %v692
        %v695 = vshrl.u32 %v423, 16
        %v697 = vrot.slane %v695, 4
        %v698 = vshll.u32 %v423, 16
        %v700 = vrot.slane %v698, 5
        %v701 = vor.u32 %v697, %v700
        %v702 = vrot.slane %v701, 4
        %v704 = vshll.u32 %v424, 16
        %v706 = vrot.slane %v704, 5
        %v707 = vsel %vm453, %v702, %v706
        %v708 = vshrl.u32 %v424, 16
        %v710 = vrot.slane %v708, 4
        %v711 = vor.u32 %v710, %v706
        %v712 = vrot.slane %v711, 4
        %v714 = vshll.u32 %v425, 16
        %v716 = vrot.slane %v714, 5
        %v717 = vsel %vm453, %v712, %v716
        %v719 = vshrl.u32 %v426, 16
        %v721 = vrot.slane %v719, 4
        %v722 = vshll.u32 %v426, 16
        %v724 = vrot.slane %v722, 5
        %v725 = vor.u32 %v721, %v724
        %v726 = vrot.slane %v725, 4
        %v728 = vshll.u32 %v427, 16
        %v730 = vrot.slane %v728, 5
        %v731 = vsel %vm453, %v726, %v730
        %v732 = vshrl.u32 %v427, 16
        %v734 = vrot.slane %v732, 4
        %v735 = vor.u32 %v734, %v730
        %v736 = vrot.slane %v735, 4
        %v738 = vshll.u32 %v428, 16
        %v740 = vrot.slane %v738, 5
        %v741 = vsel %vm453, %v736, %v740
        %v743 = vshrl.u32 %v429, 16
        %v745 = vrot.slane %v743, 4
        %v746 = vshll.u32 %v429, 16
        %v748 = vrot.slane %v746, 5
        %v749 = vor.u32 %v745, %v748
        %v750 = vrot.slane %v749, 4
        %v752 = vshll.u32 %v430, 16
        %v754 = vrot.slane %v752, 5
        %v755 = vsel %vm453, %v750, %v754
        %v756 = vshrl.u32 %v430, 16
        %v758 = vrot.slane %v756, 4
        %v759 = vor.u32 %v758, %v754
        %v760 = vrot.slane %v759, 4
        %v762 = vshll.u32 %v431, 16
        %v764 = vrot.slane %v762, 5
        %v765 = vsel %vm453, %v760, %v764
        %v767 = vshrl.u32 %v432, 16
        %v769 = vrot.slane %v767, 4
        %v770 = vshll.u32 %v432, 16
        %v772 = vrot.slane %v770, 5
        %v773 = vor.u32 %v769, %v772
        %v774 = vrot.slane %v773, 4
        %v776 = vshll.u32 %v433, 16
        %v778 = vrot.slane %v776, 5
        %v779 = vsel %vm453, %v774, %v778
        %v780 = vshrl.u32 %v433, 16
        %v782 = vrot.slane %v780, 4
        %v783 = vor.u32 %v782, %v778
        %v784 = vrot.slane %v783, 4
        %v786 = vshll.u32 %v434, 16
        %v788 = vrot.slane %v786, 5
        %v789 = vsel %vm453, %v784, %v788
        %v791 = vshrl.u32 %v435, 16
        %v793 = vrot.slane %v791, 4
        %v794 = vshll.u32 %v435, 16
        %v796 = vrot.slane %v794, 5
        %v797 = vor.u32 %v793, %v796
        %v798 = vrot.slane %v797, 4
        %v800 = vshll.u32 %v436, 16
        %v802 = vrot.slane %v800, 5
        %v803 = vsel %vm453, %v798, %v802
        %v804 = vshrl.u32 %v436, 16
        %v806 = vrot.slane %v804, 4
        %v807 = vor.u32 %v806, %v802
        %v808 = vrot.slane %v807, 4
        %v810 = vshll.u32 %v437, 16
        %v812 = vrot.slane %v810, 5
        %v813 = vsel %vm453, %v808, %v812
        %v815 = vshrl.u32 %v438, 16
        %v817 = vrot.slane %v815, 4
        %v818 = vshll.u32 %v438, 16
        %v820 = vrot.slane %v818, 5
        %v821 = vor.u32 %v817, %v820
        %v822 = vrot.slane %v821, 4
        %v824 = vshll.u32 %v439, 16
        %v826 = vrot.slane %v824, 5
        %v827 = vsel %vm453, %v822, %v826
        %v828 = vshrl.u32 %v439, 16
        %v830 = vrot.slane %v828, 4
        %v831 = vor.u32 %v830, %v826
        %v832 = vrot.slane %v831, 4
        %v834 = vshll.u32 %v440, 16
        %v836 = vrot.slane %v834, 5
        %v837 = vsel %vm453, %v832, %v836
        %s838 = scalar_lea.vmem %s6, 16
        %v839 = vld [vmem:[%s838] sm:$0xf]
        %v840 = vld [vmem:[%s838 + $0x4] sm:$0xf]
        %v841 = vld [vmem:[%s838 + $0x8] sm:$0xf]
        %v842 = vld [vmem:[%s838 + $0xc] sm:$0xf]
        %v843 = vunpack.c.l.b16 %v467
        %v844 = vunpack.c.l.b16 %v477
        %v845 = vunpack.c.l.b16 %v491
        %v846 = vunpack.c.l.b16 %v501
        %v847 = vunpack.c.l.b16 %v515
        %v848 = vunpack.c.l.b16 %v525
        %v849 = vunpack.c.l.b16 %v539
        %v850 = vunpack.c.l.b16 %v549
        %v851 = vunpack.c.l.b16 %v563
        %v852 = vunpack.c.l.b16 %v573
        %v853 = vunpack.c.l.b16 %v587
        %v854 = vunpack.c.l.b16 %v597
        %v855 = vunpack.c.l.b16 %v611
        %v856 = vunpack.c.l.b16 %v621
        %v857 = vunpack.c.l.b16 %v635
        %v858 = vunpack.c.l.b16 %v645
        %v859 = vunpack.c.l.b16 %v659
        %v860 = vunpack.c.l.b16 %v669
        %v861 = vunpack.c.l.b16 %v683
        %v862 = vunpack.c.l.b16 %v693
        %v863 = vunpack.c.l.b16 %v707
        %v864 = vunpack.c.l.b16 %v717
        %v865 = vunpack.c.l.b16 %v731
        %v866 = vunpack.c.l.b16 %v741
        %v867 = vunpack.c.l.b16 %v755
        %v868 = vunpack.c.l.b16 %v765
        %v869 = vunpack.c.l.b16 %v779
        %v870 = vunpack.c.l.b16 %v789
        %v871 = vunpack.c.l.b16 %v803
        %v872 = vunpack.c.l.b16 %v813
        %v873 = vunpack.c.l.b16 %v827
        %v874 = vunpack.c.l.b16 %v837
        %v875 = vpack.c.b16 %v844, %v843
        %v876 = vpack.c.b16 %v846, %v845
        %v877 = vpack.c.b16 %v848, %v847
        %v878 = vpack.c.b16 %v850, %v849
        %v879 = vpack.c.b16 %v852, %v851
        %v880 = vpack.c.b16 %v854, %v853
        %v881 = vpack.c.b16 %v856, %v855
        %v882 = vpack.c.b16 %v858, %v857
        %v883 = vpack.c.b16 %v860, %v859
        %v884 = vpack.c.b16 %v862, %v861
        %v885 = vpack.c.b16 %v864, %v863
        %v886 = vpack.c.b16 %v866, %v865
        %v887 = vpack.c.b16 %v868, %v867
        %v888 = vpack.c.b16 %v870, %v869
        %v889 = vpack.c.b16 %v872, %v871
        %v890 = vpack.c.b16 %v874, %v873
        %v895 = vunpack.c.l.b16 %v839
        %v896 = vunpack.c.l.b16 %v840
        %v897 = vunpack.c.l.b16 %v841
        %v898 = vunpack.c.l.b16 %v842
        %v899 = vpack.c.b16 %v896, %v895
        %v900 = vpack.c.b16 %v898, %v897
        %vm903 = vcmask 261120
        %v905 = vsel %vm903, %v875, 0
        %v908 = vsel %vm903, %v876, 0
        %v911 = vsel %vm903, %v877, 0
        %v914 = vsel %vm903, %v878, 0
        %v917 = vsel %vm903, %v879, 0
        %v920 = vsel %vm903, %v880, 0
        %v923 = vsel %vm903, %v881, 0
        %v926 = vsel %vm903, %v882, 0
        %v929 = vsel %vm903, %v883, 0
        %v932 = vsel %vm903, %v884, 0
        %v935 = vsel %vm903, %v885, 0
        %v938 = vsel %vm903, %v886, 0
        %v941 = vsel %vm903, %v887, 0
        %v944 = vsel %vm903, %v888, 0
        %v947 = vsel %vm903, %v889, 0
        %v950 = vsel %vm903, %v890, 0
        %952 = vmatpush.bf16.msra.mxu0 0
        %953 = vmatpush.bf16.msra.mxu0 0
        %954 = vmatpush.bf16.msra.mxu0 0
        %955 = vmatpush.bf16.msra.mxu0 0
        %956 = vmatpush.bf16.msra.mxu0 0
        %957 = vmatpush.bf16.msra.mxu0 0
        %958 = vmatpush.bf16.msra.mxu0 %v900
        %959 = vmatpush.bf16.msra.mxu0 %v899
        %960 = vmatmul.bf16.gmra.mxu0 %v905
        %v961 = vpop.f32.mrf.mxu0
        %v962 = vadd.f32 0.0, %v961
        %v963 = vpop.f32.mrf.mxu0
        %v964 = vadd.f32 0.0, %v963
        %965 = vmatmul.bf16.gmra.mxu0 %v908
        %v966 = vpop.f32.mrf.mxu0
        %v967 = vadd.f32 0.0, %v966
        %v968 = vpop.f32.mrf.mxu0
        %v969 = vadd.f32 0.0, %v968
        %970 = vmatmul.bf16.gmra.mxu0 %v911
        %v971 = vpop.f32.mrf.mxu0
        %v972 = vadd.f32 0.0, %v971
        %v973 = vpop.f32.mrf.mxu0
        %v974 = vadd.f32 0.0, %v973
        %975 = vmatmul.bf16.gmra.mxu0 %v914
        %v976 = vpop.f32.mrf.mxu0
        %v977 = vadd.f32 0.0, %v976
        %v978 = vpop.f32.mrf.mxu0
        %v979 = vadd.f32 0.0, %v978
        %980 = vmatmul.bf16.gmra.mxu0 %v917
        %v981 = vpop.f32.mrf.mxu0
        %v982 = vadd.f32 0.0, %v981
        %v983 = vpop.f32.mrf.mxu0
        %v984 = vadd.f32 0.0, %v983
        %985 = vmatmul.bf16.gmra.mxu0 %v920
        %v986 = vpop.f32.mrf.mxu0
        %v987 = vadd.f32 0.0, %v986
        %v988 = vpop.f32.mrf.mxu0
        %v989 = vadd.f32 0.0, %v988
        %990 = vmatmul.bf16.gmra.mxu0 %v923
        %v991 = vpop.f32.mrf.mxu0
        %v992 = vadd.f32 0.0, %v991
        %v993 = vpop.f32.mrf.mxu0
        %v994 = vadd.f32 0.0, %v993
        %995 = vmatmul.bf16.gmra.mxu0 %v926
        %v996 = vpop.f32.mrf.mxu0
        %v997 = vadd.f32 0.0, %v996
        %v998 = vpop.f32.mrf.mxu0
        %v999 = vadd.f32 0.0, %v998
        %1000 = vmatmul.bf16.gmra.mxu0 %v929
        %v1001 = vpop.f32.mrf.mxu0
        %v1002 = vadd.f32 0.0, %v1001
        %v1003 = vpop.f32.mrf.mxu0
        %v1004 = vadd.f32 0.0, %v1003
        %1005 = vmatmul.bf16.gmra.mxu0 %v932
        %v1006 = vpop.f32.mrf.mxu0
        %v1007 = vadd.f32 0.0, %v1006
        %v1008 = vpop.f32.mrf.mxu0
        %v1009 = vadd.f32 0.0, %v1008
        %1010 = vmatmul.bf16.gmra.mxu0 %v935
        %v1011 = vpop.f32.mrf.mxu0
        %v1012 = vadd.f32 0.0, %v1011
        %v1013 = vpop.f32.mrf.mxu0
        %v1014 = vadd.f32 0.0, %v1013
        %1015 = vmatmul.bf16.gmra.mxu0 %v938
        %v1016 = vpop.f32.mrf.mxu0
        %v1017 = vadd.f32 0.0, %v1016
        %v1018 = vpop.f32.mrf.mxu0
        %v1019 = vadd.f32 0.0, %v1018
        %1020 = vmatmul.bf16.gmra.mxu0 %v941
        %v1021 = vpop.f32.mrf.mxu0
        %v1022 = vadd.f32 0.0, %v1021
        %v1023 = vpop.f32.mrf.mxu0
        %v1024 = vadd.f32 0.0, %v1023
        %1025 = vmatmul.bf16.gmra.mxu0 %v944
        %v1026 = vpop.f32.mrf.mxu0
        %v1027 = vadd.f32 0.0, %v1026
        %v1028 = vpop.f32.mrf.mxu0
        %v1029 = vadd.f32 0.0, %v1028
        %1030 = vmatmul.bf16.gmra.mxu0 %v947
        %v1031 = vpop.f32.mrf.mxu0
        %v1032 = vadd.f32 0.0, %v1031
        %v1033 = vpop.f32.mrf.mxu0
        %v1034 = vadd.f32 0.0, %v1033
        %1035 = vmatmul.bf16.gmra.mxu0 %v950
        %v1036 = vpop.f32.mrf.mxu0
        %v1037 = vadd.f32 0.0, %v1036
        %v1038 = vpop.f32.mrf.mxu0
        %v1039 = vadd.f32 0.0, %v1038
        %1040 = vdwg.mxu0
        %v1073 = vunpack.c.l.b16 %v393
        %v1074 = vunpack.c.l.b16 %v394
        %v1075 = vunpack.c.l.b16 %v396
        %v1076 = vunpack.c.l.b16 %v397
        %v1077 = vunpack.c.l.b16 %v399
        %v1078 = vunpack.c.l.b16 %v400
        %v1079 = vunpack.c.l.b16 %v402
        %v1080 = vunpack.c.l.b16 %v403
        %v1081 = vunpack.c.l.b16 %v405
        %v1082 = vunpack.c.l.b16 %v406
        %v1083 = vunpack.c.l.b16 %v408
        %v1084 = vunpack.c.l.b16 %v409
        %v1085 = vunpack.c.l.b16 %v411
        %v1086 = vunpack.c.l.b16 %v412
        %v1087 = vunpack.c.l.b16 %v414
        %v1088 = vunpack.c.l.b16 %v415
        %v1089 = vunpack.c.l.b16 %v417
        %v1090 = vunpack.c.l.b16 %v418
        %v1091 = vunpack.c.l.b16 %v420
        %v1092 = vunpack.c.l.b16 %v421
        %v1093 = vunpack.c.l.b16 %v423
        %v1094 = vunpack.c.l.b16 %v424
        %v1095 = vunpack.c.l.b16 %v426
        %v1096 = vunpack.c.l.b16 %v427
        %v1097 = vunpack.c.l.b16 %v429
        %v1098 = vunpack.c.l.b16 %v430
        %v1099 = vunpack.c.l.b16 %v432
        %v1100 = vunpack.c.l.b16 %v433
        %v1101 = vunpack.c.l.b16 %v435
        %v1102 = vunpack.c.l.b16 %v436
        %v1103 = vunpack.c.l.b16 %v438
        %v1104 = vunpack.c.l.b16 %v439
        %v1105 = vpack.c.b16 %v1074, %v1073
        %v1106 = vpack.c.b16 %v1076, %v1075
        %v1107 = vpack.c.b16 %v1078, %v1077
        %v1108 = vpack.c.b16 %v1080, %v1079
        %v1109 = vpack.c.b16 %v1082, %v1081
        %v1110 = vpack.c.b16 %v1084, %v1083
        %v1111 = vpack.c.b16 %v1086, %v1085
        %v1112 = vpack.c.b16 %v1088, %v1087
        %v1113 = vpack.c.b16 %v1090, %v1089
        %v1114 = vpack.c.b16 %v1092, %v1091
        %v1115 = vpack.c.b16 %v1094, %v1093
        %v1116 = vpack.c.b16 %v1096, %v1095
        %v1117 = vpack.c.b16 %v1098, %v1097
        %v1118 = vpack.c.b16 %v1100, %v1099
        %v1119 = vpack.c.b16 %v1102, %v1101
        %v1120 = vpack.c.b16 %v1104, %v1103
        %v1125 = vunpack.c.l.b16 %v447
        %v1126 = vunpack.c.l.b16 %v448
        %v1127 = vunpack.c.l.b16 %v449
        %v1128 = vunpack.c.l.b16 %v450
        %v1129 = vpack.c.b16 %v1126, %v1125
        %v1130 = vpack.c.b16 %v1128, %v1127
        %v1134 = vsel %vm903, %v1105, 0
        %v1137 = vsel %vm903, %v1106, 0
        %v1140 = vsel %vm903, %v1107, 0
        %v1143 = vsel %vm903, %v1108, 0
        %v1146 = vsel %vm903, %v1109, 0
        %v1149 = vsel %vm903, %v1110, 0
        %v1152 = vsel %vm903, %v1111, 0
        %v1155 = vsel %vm903, %v1112, 0
        %v1158 = vsel %vm903, %v1113, 0
        %v1161 = vsel %vm903, %v1114, 0
        %v1164 = vsel %vm903, %v1115, 0
        %v1167 = vsel %vm903, %v1116, 0
        %v1170 = vsel %vm903, %v1117, 0
        %v1173 = vsel %vm903, %v1118, 0
        %v1176 = vsel %vm903, %v1119, 0
        %v1179 = vsel %vm903, %v1120, 0
        %1181 = vmatpush.bf16.msra.mxu0 0
        %1182 = vmatpush.bf16.msra.mxu0 0
        %1183 = vmatpush.bf16.msra.mxu0 0
        %1184 = vmatpush.bf16.msra.mxu0 0
        %1185 = vmatpush.bf16.msra.mxu0 0
        %1186 = vmatpush.bf16.msra.mxu0 0
        %1187 = vmatpush.bf16.msra.mxu0 %v1130
        %1188 = vmatpush.bf16.msra.mxu0 %v1129
        %1189 = vmatmul.bf16.gmra.mxu0 %v1134
        %v1190 = vpop.f32.mrf.mxu0
        %v1191 = vadd.f32 %v962, %v1190
        %v1192 = vpop.f32.mrf.mxu0
        %v1193 = vadd.f32 %v964, %v1192
        %1194 = vmatmul.bf16.gmra.mxu0 %v1137
        %v1195 = vpop.f32.mrf.mxu0
        %v1196 = vadd.f32 %v967, %v1195
        %v1197 = vpop.f32.mrf.mxu0
        %v1198 = vadd.f32 %v969, %v1197
        %1199 = vmatmul.bf16.gmra.mxu0 %v1140
        %v1200 = vpop.f32.mrf.mxu0
        %v1201 = vadd.f32 %v972, %v1200
        %v1202 = vpop.f32.mrf.mxu0
        %v1203 = vadd.f32 %v974, %v1202
        %1204 = vmatmul.bf16.gmra.mxu0 %v1143
        %v1205 = vpop.f32.mrf.mxu0
        %v1206 = vadd.f32 %v977, %v1205
        %v1207 = vpop.f32.mrf.mxu0
        %v1208 = vadd.f32 %v979, %v1207
        %1209 = vmatmul.bf16.gmra.mxu0 %v1146
        %v1210 = vpop.f32.mrf.mxu0
        %v1211 = vadd.f32 %v982, %v1210
        %v1212 = vpop.f32.mrf.mxu0
        %v1213 = vadd.f32 %v984, %v1212
        %1214 = vmatmul.bf16.gmra.mxu0 %v1149
        %v1215 = vpop.f32.mrf.mxu0
        %v1216 = vadd.f32 %v987, %v1215
        %v1217 = vpop.f32.mrf.mxu0
        %v1218 = vadd.f32 %v989, %v1217
        %1219 = vmatmul.bf16.gmra.mxu0 %v1152
        %v1220 = vpop.f32.mrf.mxu0
        %v1221 = vadd.f32 %v992, %v1220
        %v1222 = vpop.f32.mrf.mxu0
        %v1223 = vadd.f32 %v994, %v1222
        %1224 = vmatmul.bf16.gmra.mxu0 %v1155
        %v1225 = vpop.f32.mrf.mxu0
        %v1226 = vadd.f32 %v997, %v1225
        %v1227 = vpop.f32.mrf.mxu0
        %v1228 = vadd.f32 %v999, %v1227
        %1229 = vmatmul.bf16.gmra.mxu0 %v1158
        %v1230 = vpop.f32.mrf.mxu0
        %v1231 = vadd.f32 %v1002, %v1230
        %v1232 = vpop.f32.mrf.mxu0
        %v1233 = vadd.f32 %v1004, %v1232
        %1234 = vmatmul.bf16.gmra.mxu0 %v1161
        %v1235 = vpop.f32.mrf.mxu0
        %v1236 = vadd.f32 %v1007, %v1235
        %v1237 = vpop.f32.mrf.mxu0
        %v1238 = vadd.f32 %v1009, %v1237
        %1239 = vmatmul.bf16.gmra.mxu0 %v1164
        %v1240 = vpop.f32.mrf.mxu0
        %v1241 = vadd.f32 %v1012, %v1240
        %v1242 = vpop.f32.mrf.mxu0
        %v1243 = vadd.f32 %v1014, %v1242
        %1244 = vmatmul.bf16.gmra.mxu0 %v1167
        %v1245 = vpop.f32.mrf.mxu0
        %v1246 = vadd.f32 %v1017, %v1245
        %v1247 = vpop.f32.mrf.mxu0
        %v1248 = vadd.f32 %v1019, %v1247
        %1249 = vmatmul.bf16.gmra.mxu0 %v1170
        %v1250 = vpop.f32.mrf.mxu0
        %v1251 = vadd.f32 %v1022, %v1250
        %v1252 = vpop.f32.mrf.mxu0
        %v1253 = vadd.f32 %v1024, %v1252
        %1254 = vmatmul.bf16.gmra.mxu0 %v1173
        %v1255 = vpop.f32.mrf.mxu0
        %v1256 = vadd.f32 %v1027, %v1255
        %v1257 = vpop.f32.mrf.mxu0
        %v1258 = vadd.f32 %v1029, %v1257
        %1259 = vmatmul.bf16.gmra.mxu0 %v1176
        %v1260 = vpop.f32.mrf.mxu0
        %v1261 = vadd.f32 %v1032, %v1260
        %v1262 = vpop.f32.mrf.mxu0
        %v1263 = vadd.f32 %v1034, %v1262
        %1264 = vmatmul.bf16.gmra.mxu0 %v1179
        %v1265 = vpop.f32.mrf.mxu0
        %v1266 = vadd.f32 %v1037, %v1265
        %v1267 = vpop.f32.mrf.mxu0
        %v1268 = vadd.f32 %v1039, %v1267
        %1269 = vdwg.mxu0
        %vm1286 = vcmask 1042432
        %vm1287 = vcmask 1046532
        %vm1288 = vmor %vm1286, %vm1287
        %v1289 = vrot.slane %v393, 5
        %v1290 = vrot.slane %v1289, 4
        %v1291 = vrot.slane %v394, 5
        %v1292 = vsel %vm1288, %v1290, %v1291
        %v1293 = vrot.slane %v1291, 4
        %v1294 = vrot.slane %v395, 5
        %v1295 = vsel %vm1288, %v1293, %v1294
        %v1296 = vrot.slane %v396, 5
        %v1297 = vrot.slane %v1296, 4
        %v1298 = vrot.slane %v397, 5
        %v1299 = vsel %vm1288, %v1297, %v1298
        %v1300 = vrot.slane %v1298, 4
        %v1301 = vrot.slane %v398, 5
        %v1302 = vsel %vm1288, %v1300, %v1301
        %v1303 = vrot.slane %v399, 5
        %v1304 = vrot.slane %v1303, 4
        %v1305 = vrot.slane %v400, 5
        %v1306 = vsel %vm1288, %v1304, %v1305
        %v1307 = vrot.slane %v1305, 4
        %v1308 = vrot.slane %v401, 5
        %v1309 = vsel %vm1288, %v1307, %v1308
        %v1310 = vrot.slane %v402, 5
        %v1311 = vrot.slane %v1310, 4
        %v1312 = vrot.slane %v403, 5
        %v1313 = vsel %vm1288, %v1311, %v1312
        %v1314 = vrot.slane %v1312, 4
        %v1315 = vrot.slane %v404, 5
        %v1316 = vsel %vm1288, %v1314, %v1315
        %v1317 = vrot.slane %v405, 5
        %v1318 = vrot.slane %v1317, 4
        %v1319 = vrot.slane %v406, 5
        %v1320 = vsel %vm1288, %v1318, %v1319
        %v1321 = vrot.slane %v1319, 4
        %v1322 = vrot.slane %v407, 5
        %v1323 = vsel %vm1288, %v1321, %v1322
        %v1324 = vrot.slane %v408, 5
        %v1325 = vrot.slane %v1324, 4
        %v1326 = vrot.slane %v409, 5
        %v1327 = vsel %vm1288, %v1325, %v1326
        %v1328 = vrot.slane %v1326, 4
        %v1329 = vrot.slane %v410, 5
        %v1330 = vsel %vm1288, %v1328, %v1329
        %v1331 = vrot.slane %v411, 5
        %v1332 = vrot.slane %v1331, 4
        %v1333 = vrot.slane %v412, 5
        %v1334 = vsel %vm1288, %v1332, %v1333
        %v1335 = vrot.slane %v1333, 4
        %v1336 = vrot.slane %v413, 5
        %v1337 = vsel %vm1288, %v1335, %v1336
        %v1338 = vrot.slane %v414, 5
        %v1339 = vrot.slane %v1338, 4
        %v1340 = vrot.slane %v415, 5
        %v1341 = vsel %vm1288, %v1339, %v1340
        %v1342 = vrot.slane %v1340, 4
        %v1343 = vrot.slane %v416, 5
        %v1344 = vsel %vm1288, %v1342, %v1343
        %v1345 = vrot.slane %v417, 5
        %v1346 = vrot.slane %v1345, 4
        %v1347 = vrot.slane %v418, 5
        %v1348 = vsel %vm1288, %v1346, %v1347
        %v1349 = vrot.slane %v1347, 4
        %v1350 = vrot.slane %v419, 5
        %v1351 = vsel %vm1288, %v1349, %v1350
        %v1352 = vrot.slane %v420, 5
        %v1353 = vrot.slane %v1352, 4
        %v1354 = vrot.slane %v421, 5
        %v1355 = vsel %vm1288, %v1353, %v1354
        %v1356 = vrot.slane %v1354, 4
        %v1357 = vrot.slane %v422, 5
        %v1358 = vsel %vm1288, %v1356, %v1357
        %v1359 = vrot.slane %v423, 5
        %v1360 = vrot.slane %v1359, 4
        %v1361 = vrot.slane %v424, 5
        %v1362 = vsel %vm1288, %v1360, %v1361
        %v1363 = vrot.slane %v1361, 4
        %v1364 = vrot.slane %v425, 5
        %v1365 = vsel %vm1288, %v1363, %v1364
        %v1366 = vrot.slane %v426, 5
        %v1367 = vrot.slane %v1366, 4
        %v1368 = vrot.slane %v427, 5
        %v1369 = vsel %vm1288, %v1367, %v1368
        %v1370 = vrot.slane %v1368, 4
        %v1371 = vrot.slane %v428, 5
        %v1372 = vsel %vm1288, %v1370, %v1371
        %v1373 = vrot.slane %v429, 5
        %v1374 = vrot.slane %v1373, 4
        %v1375 = vrot.slane %v430, 5
        %v1376 = vsel %vm1288, %v1374, %v1375
        %v1377 = vrot.slane %v1375, 4
        %v1378 = vrot.slane %v431, 5
        %v1379 = vsel %vm1288, %v1377, %v1378
        %v1380 = vrot.slane %v432, 5
        %v1381 = vrot.slane %v1380, 4
        %v1382 = vrot.slane %v433, 5
        %v1383 = vsel %vm1288, %v1381, %v1382
        %v1384 = vrot.slane %v1382, 4
        %v1385 = vrot.slane %v434, 5
        %v1386 = vsel %vm1288, %v1384, %v1385
        %v1387 = vrot.slane %v435, 5
        %v1388 = vrot.slane %v1387, 4
        %v1389 = vrot.slane %v436, 5
        %v1390 = vsel %vm1288, %v1388, %v1389
        %v1391 = vrot.slane %v1389, 4
        %v1392 = vrot.slane %v437, 5
        %v1393 = vsel %vm1288, %v1391, %v1392
        %v1394 = vrot.slane %v438, 5
        %v1395 = vrot.slane %v1394, 4
        %v1396 = vrot.slane %v439, 5
        %v1397 = vsel %vm1288, %v1395, %v1396
        %v1398 = vrot.slane %v1396, 4
        %v1399 = vrot.slane %v440, 5
        %v1400 = vsel %vm1288, %v1398, %v1399
        %s1401 = scalar_lea.vmem %s6, 32
        %v1402 = vld [vmem:[%s1401] sm:$0xf]
        %v1403 = vld [vmem:[%s1401 + $0x4] sm:$0xf]
        %v1404 = vld [vmem:[%s1401 + $0x8] sm:$0xf]
        %v1405 = vld [vmem:[%s1401 + $0xc] sm:$0xf]
        %v1406 = vunpack.c.l.b16 %v1292
        %v1407 = vunpack.c.l.b16 %v1295
        %v1408 = vunpack.c.l.b16 %v1299
        %v1409 = vunpack.c.l.b16 %v1302
        %v1410 = vunpack.c.l.b16 %v1306
        %v1411 = vunpack.c.l.b16 %v1309
        %v1412 = vunpack.c.l.b16 %v1313
        %v1413 = vunpack.c.l.b16 %v1316
        %v1414 = vunpack.c.l.b16 %v1320
        %v1415 = vunpack.c.l.b16 %v1323
        %v1416 = vunpack.c.l.b16 %v1327
        %v1417 = vunpack.c.l.b16 %v1330
        %v1418 = vunpack.c.l.b16 %v1334
        %v1419 = vunpack.c.l.b16 %v1337
        %v1420 = vunpack.c.l.b16 %v1341
        %v1421 = vunpack.c.l.b16 %v1344
        %v1422 = vunpack.c.l.b16 %v1348
        %v1423 = vunpack.c.l.b16 %v1351
        %v1424 = vunpack.c.l.b16 %v1355
        %v1425 = vunpack.c.l.b16 %v1358
        %v1426 = vunpack.c.l.b16 %v1362
        %v1427 = vunpack.c.l.b16 %v1365
        %v1428 = vunpack.c.l.b16 %v1369
        %v1429 = vunpack.c.l.b16 %v1372
        %v1430 = vunpack.c.l.b16 %v1376
        %v1431 = vunpack.c.l.b16 %v1379
        %v1432 = vunpack.c.l.b16 %v1383
        %v1433 = vunpack.c.l.b16 %v1386
        %v1434 = vunpack.c.l.b16 %v1390
        %v1435 = vunpack.c.l.b16 %v1393
        %v1436 = vunpack.c.l.b16 %v1397
        %v1437 = vunpack.c.l.b16 %v1400
        %v1438 = vpack.c.b16 %v1407, %v1406
        %v1439 = vpack.c.b16 %v1409, %v1408
        %v1440 = vpack.c.b16 %v1411, %v1410
        %v1441 = vpack.c.b16 %v1413, %v1412
        %v1442 = vpack.c.b16 %v1415, %v1414
        %v1443 = vpack.c.b16 %v1417, %v1416
        %v1444 = vpack.c.b16 %v1419, %v1418
        %v1445 = vpack.c.b16 %v1421, %v1420
        %v1446 = vpack.c.b16 %v1423, %v1422
        %v1447 = vpack.c.b16 %v1425, %v1424
        %v1448 = vpack.c.b16 %v1427, %v1426
        %v1449 = vpack.c.b16 %v1429, %v1428
        %v1450 = vpack.c.b16 %v1431, %v1430
        %v1451 = vpack.c.b16 %v1433, %v1432
        %v1452 = vpack.c.b16 %v1435, %v1434
        %v1453 = vpack.c.b16 %v1437, %v1436
        %v1458 = vunpack.c.l.b16 %v1402
        %v1459 = vunpack.c.l.b16 %v1403
        %v1460 = vunpack.c.l.b16 %v1404
        %v1461 = vunpack.c.l.b16 %v1405
        %v1462 = vpack.c.b16 %v1459, %v1458
        %v1463 = vpack.c.b16 %v1461, %v1460
        %v1467 = vsel %vm903, %v1438, 0
        %v1470 = vsel %vm903, %v1439, 0
        %v1473 = vsel %vm903, %v1440, 0
        %v1476 = vsel %vm903, %v1441, 0
        %v1479 = vsel %vm903, %v1442, 0
        %v1482 = vsel %vm903, %v1443, 0
        %v1485 = vsel %vm903, %v1444, 0
        %v1488 = vsel %vm903, %v1445, 0
        %v1491 = vsel %vm903, %v1446, 0
        %v1494 = vsel %vm903, %v1447, 0
        %v1497 = vsel %vm903, %v1448, 0
        %v1500 = vsel %vm903, %v1449, 0
        %v1503 = vsel %vm903, %v1450, 0
        %v1506 = vsel %vm903, %v1451, 0
        %v1509 = vsel %vm903, %v1452, 0
        %v1512 = vsel %vm903, %v1453, 0
        %1514 = vmatpush.bf16.msra.mxu0 0
        %1515 = vmatpush.bf16.msra.mxu0 0
        %1516 = vmatpush.bf16.msra.mxu0 0
        %1517 = vmatpush.bf16.msra.mxu0 0
        %1518 = vmatpush.bf16.msra.mxu0 0
        %1519 = vmatpush.bf16.msra.mxu0 0
        %1520 = vmatpush.bf16.msra.mxu0 %v1463
        %1521 = vmatpush.bf16.msra.mxu0 %v1462
        %1522 = vmatmul.bf16.gmra.mxu0 %v1467
        %v1523 = vpop.f32.mrf.mxu0
        %v1524 = vadd.f32 0.0, %v1523
        %v1525 = vpop.f32.mrf.mxu0
        %v1526 = vadd.f32 0.0, %v1525
        %1527 = vmatmul.bf16.gmra.mxu0 %v1470
        %v1528 = vpop.f32.mrf.mxu0
        %v1529 = vadd.f32 0.0, %v1528
        %v1530 = vpop.f32.mrf.mxu0
        %v1531 = vadd.f32 0.0, %v1530
        %1532 = vmatmul.bf16.gmra.mxu0 %v1473
        %v1533 = vpop.f32.mrf.mxu0
        %v1534 = vadd.f32 0.0, %v1533
        %v1535 = vpop.f32.mrf.mxu0
        %v1536 = vadd.f32 0.0, %v1535
        %1537 = vmatmul.bf16.gmra.mxu0 %v1476
        %v1538 = vpop.f32.mrf.mxu0
        %v1539 = vadd.f32 0.0, %v1538
        %v1540 = vpop.f32.mrf.mxu0
        %v1541 = vadd.f32 0.0, %v1540
        %1542 = vmatmul.bf16.gmra.mxu0 %v1479
        %v1543 = vpop.f32.mrf.mxu0
        %v1544 = vadd.f32 0.0, %v1543
        %v1545 = vpop.f32.mrf.mxu0
        %v1546 = vadd.f32 0.0, %v1545
        %1547 = vmatmul.bf16.gmra.mxu0 %v1482
        %v1548 = vpop.f32.mrf.mxu0
        %v1549 = vadd.f32 0.0, %v1548
        %v1550 = vpop.f32.mrf.mxu0
        %v1551 = vadd.f32 0.0, %v1550
        %1552 = vmatmul.bf16.gmra.mxu0 %v1485
        %v1553 = vpop.f32.mrf.mxu0
        %v1554 = vadd.f32 0.0, %v1553
        %v1555 = vpop.f32.mrf.mxu0
        %v1556 = vadd.f32 0.0, %v1555
        %1557 = vmatmul.bf16.gmra.mxu0 %v1488
        %v1558 = vpop.f32.mrf.mxu0
        %v1559 = vadd.f32 0.0, %v1558
        %v1560 = vpop.f32.mrf.mxu0
        %v1561 = vadd.f32 0.0, %v1560
        %1562 = vmatmul.bf16.gmra.mxu0 %v1491
        %v1563 = vpop.f32.mrf.mxu0
        %v1564 = vadd.f32 0.0, %v1563
        %v1565 = vpop.f32.mrf.mxu0
        %v1566 = vadd.f32 0.0, %v1565
        %1567 = vmatmul.bf16.gmra.mxu0 %v1494
        %v1568 = vpop.f32.mrf.mxu0
        %v1569 = vadd.f32 0.0, %v1568
        %v1570 = vpop.f32.mrf.mxu0
        %v1571 = vadd.f32 0.0, %v1570
        %1572 = vmatmul.bf16.gmra.mxu0 %v1497
        %v1573 = vpop.f32.mrf.mxu0
        %v1574 = vadd.f32 0.0, %v1573
        %v1575 = vpop.f32.mrf.mxu0
        %v1576 = vadd.f32 0.0, %v1575
        %1577 = vmatmul.bf16.gmra.mxu0 %v1500
        %v1578 = vpop.f32.mrf.mxu0
        %v1579 = vadd.f32 0.0, %v1578
        %v1580 = vpop.f32.mrf.mxu0
        %v1581 = vadd.f32 0.0, %v1580
        %1582 = vmatmul.bf16.gmra.mxu0 %v1503
        %v1583 = vpop.f32.mrf.mxu0
        %v1584 = vadd.f32 0.0, %v1583
        %v1585 = vpop.f32.mrf.mxu0
        %v1586 = vadd.f32 0.0, %v1585
        %1587 = vmatmul.bf16.gmra.mxu0 %v1506
        %v1588 = vpop.f32.mrf.mxu0
        %v1589 = vadd.f32 0.0, %v1588
        %v1590 = vpop.f32.mrf.mxu0
        %v1591 = vadd.f32 0.0, %v1590
        %1592 = vmatmul.bf16.gmra.mxu0 %v1509
        %v1593 = vpop.f32.mrf.mxu0
        %v1594 = vadd.f32 0.0, %v1593
        %v1595 = vpop.f32.mrf.mxu0
        %v1596 = vadd.f32 0.0, %v1595
        %1597 = vmatmul.bf16.gmra.mxu0 %v1512
        %v1598 = vpop.f32.mrf.mxu0
        %v1599 = vadd.f32 0.0, %v1598
        %v1600 = vpop.f32.mrf.mxu0
        %v1601 = vadd.f32 0.0, %v1600
        %1602 = vdwg.mxu0
        %v1603 = vadd.f32 %v1191, %v1524
        %v1604 = vadd.f32 %v1193, %v1526
        %v1605 = vadd.f32 %v1196, %v1529
        %v1606 = vadd.f32 %v1198, %v1531
        %v1607 = vadd.f32 %v1201, %v1534
        %v1608 = vadd.f32 %v1203, %v1536
        %v1609 = vadd.f32 %v1206, %v1539
        %v1610 = vadd.f32 %v1208, %v1541
        %v1611 = vadd.f32 %v1211, %v1544
        %v1612 = vadd.f32 %v1213, %v1546
        %v1613 = vadd.f32 %v1216, %v1549
        %v1614 = vadd.f32 %v1218, %v1551
        %v1615 = vadd.f32 %v1221, %v1554
        %v1616 = vadd.f32 %v1223, %v1556
        %v1617 = vadd.f32 %v1226, %v1559
        %v1618 = vadd.f32 %v1228, %v1561
        %v1619 = vadd.f32 %v1231, %v1564
        %v1620 = vadd.f32 %v1233, %v1566
        %v1621 = vadd.f32 %v1236, %v1569
        %v1622 = vadd.f32 %v1238, %v1571
        %v1623 = vadd.f32 %v1241, %v1574
        %v1624 = vadd.f32 %v1243, %v1576
        %v1625 = vadd.f32 %v1246, %v1579
        %v1626 = vadd.f32 %v1248, %v1581
        %v1627 = vadd.f32 %v1251, %v1584
        %v1628 = vadd.f32 %v1253, %v1586
        %v1629 = vadd.f32 %v1256, %v1589
        %v1630 = vadd.f32 %v1258, %v1591
        %v1631 = vadd.f32 %v1261, %v1594
        %v1632 = vadd.f32 %v1263, %v1596
        %v1633 = vadd.f32 %v1266, %v1599
        %v1634 = vadd.f32 %v1268, %v1601
        %s1635 = scalar_lea.vmem %s6, 48
        %v1636 = vld [vmem:[%s1635] sm:$0xf]
        %v1637 = vld [vmem:[%s1635 + $0x4] sm:$0xf]
        %v1638 = vld [vmem:[%s1635 + $0x8] sm:$0xf]
        %v1639 = vld [vmem:[%s1635 + $0xc] sm:$0xf]
        %v1642 = vunpack.c.l.b16 %v441
        %v1643 = vunpack.c.l.b16 %v442
        %v1644 = vpack.c.b16 %v1643, %v1642
        %v1649 = vunpack.c.l.b16 %v1636
        %v1650 = vunpack.c.l.b16 %v1637
        %v1651 = vunpack.c.l.b16 %v1638
        %v1652 = vunpack.c.l.b16 %v1639
        %v1653 = vpack.c.b16 %v1650, %v1649
        %v1654 = vpack.c.b16 %v1652, %v1651
        %v1658 = vsel %vm903, %v1644, 0
        %1660 = vmatpush.bf16.msra.mxu0 0
        %1661 = vmatpush.bf16.msra.mxu0 0
        %1662 = vmatpush.bf16.msra.mxu0 0
        %1663 = vmatpush.bf16.msra.mxu0 0
        %1664 = vmatpush.bf16.msra.mxu0 0
        %1665 = vmatpush.bf16.msra.mxu0 0
        %1666 = vmatpush.bf16.msra.mxu0 %v1654
        %1667 = vmatpush.bf16.msra.mxu0 %v1653
        %1668 = vmatmul.bf16.gmra.mxu0 %v1137
        %v1669 = vpop.f32.mrf.mxu0
        %v1670 = vadd.f32 0.0, %v1669
        %v1671 = vpop.f32.mrf.mxu0
        %v1672 = vadd.f32 0.0, %v1671
        %1673 = vmatmul.bf16.gmra.mxu0 %v1140
        %v1674 = vpop.f32.mrf.mxu0
        %v1675 = vadd.f32 0.0, %v1674
        %v1676 = vpop.f32.mrf.mxu0
        %v1677 = vadd.f32 0.0, %v1676
        %1678 = vmatmul.bf16.gmra.mxu0 %v1143
        %v1679 = vpop.f32.mrf.mxu0
        %v1680 = vadd.f32 0.0, %v1679
        %v1681 = vpop.f32.mrf.mxu0
        %v1682 = vadd.f32 0.0, %v1681
        %1683 = vmatmul.bf16.gmra.mxu0 %v1146
        %v1684 = vpop.f32.mrf.mxu0
        %v1685 = vadd.f32 0.0, %v1684
        %v1686 = vpop.f32.mrf.mxu0
        %v1687 = vadd.f32 0.0, %v1686
        %1688 = vmatmul.bf16.gmra.mxu0 %v1149
        %v1689 = vpop.f32.mrf.mxu0
        %v1690 = vadd.f32 0.0, %v1689
        %v1691 = vpop.f32.mrf.mxu0
        %v1692 = vadd.f32 0.0, %v1691
        %1693 = vmatmul.bf16.gmra.mxu0 %v1152
        %v1694 = vpop.f32.mrf.mxu0
        %v1695 = vadd.f32 0.0, %v1694
        %v1696 = vpop.f32.mrf.mxu0
        %v1697 = vadd.f32 0.0, %v1696
        %1698 = vmatmul.bf16.gmra.mxu0 %v1155
        %v1699 = vpop.f32.mrf.mxu0
        %v1700 = vadd.f32 0.0, %v1699
        %v1701 = vpop.f32.mrf.mxu0
        %v1702 = vadd.f32 0.0, %v1701
        %1703 = vmatmul.bf16.gmra.mxu0 %v1158
        %v1704 = vpop.f32.mrf.mxu0
        %v1705 = vadd.f32 0.0, %v1704
        %v1706 = vpop.f32.mrf.mxu0
        %v1707 = vadd.f32 0.0, %v1706
        %1708 = vmatmul.bf16.gmra.mxu0 %v1161
        %v1709 = vpop.f32.mrf.mxu0
        %v1710 = vadd.f32 0.0, %v1709
        %v1711 = vpop.f32.mrf.mxu0
        %v1712 = vadd.f32 0.0, %v1711
        %1713 = vmatmul.bf16.gmra.mxu0 %v1164
        %v1714 = vpop.f32.mrf.mxu0
        %v1715 = vadd.f32 0.0, %v1714
        %v1716 = vpop.f32.mrf.mxu0
        %v1717 = vadd.f32 0.0, %v1716
        %1718 = vmatmul.bf16.gmra.mxu0 %v1167
        %v1719 = vpop.f32.mrf.mxu0
        %v1720 = vadd.f32 0.0, %v1719
        %v1721 = vpop.f32.mrf.mxu0
        %v1722 = vadd.f32 0.0, %v1721
        %1723 = vmatmul.bf16.gmra.mxu0 %v1170
        %v1724 = vpop.f32.mrf.mxu0
        %v1725 = vadd.f32 0.0, %v1724
        %v1726 = vpop.f32.mrf.mxu0
        %v1727 = vadd.f32 0.0, %v1726
        %1728 = vmatmul.bf16.gmra.mxu0 %v1173
        %v1729 = vpop.f32.mrf.mxu0
        %v1730 = vadd.f32 0.0, %v1729
        %v1731 = vpop.f32.mrf.mxu0
        %v1732 = vadd.f32 0.0, %v1731
        %1733 = vmatmul.bf16.gmra.mxu0 %v1176
        %v1734 = vpop.f32.mrf.mxu0
        %v1735 = vadd.f32 0.0, %v1734
        %v1736 = vpop.f32.mrf.mxu0
        %v1737 = vadd.f32 0.0, %v1736
        %1738 = vmatmul.bf16.gmra.mxu0 %v1179
        %v1739 = vpop.f32.mrf.mxu0
        %v1740 = vadd.f32 0.0, %v1739
        %v1741 = vpop.f32.mrf.mxu0
        %v1742 = vadd.f32 0.0, %v1741
        %1743 = vmatmul.bf16.gmra.mxu0 %v1658
        %v1744 = vpop.f32.mrf.mxu0
        %v1745 = vadd.f32 0.0, %v1744
        %v1746 = vpop.f32.mrf.mxu0
        %v1747 = vadd.f32 0.0, %v1746
        %1748 = vdwg.mxu0
        %v1749 = vadd.f32 %v1603, %v1670
        %v1750 = vadd.f32 %v1604, %v1672
        %v1751 = vadd.f32 %v1605, %v1675
        %v1752 = vadd.f32 %v1606, %v1677
        %v1753 = vadd.f32 %v1607, %v1680
        %v1754 = vadd.f32 %v1608, %v1682
        %v1755 = vadd.f32 %v1609, %v1685
        %v1756 = vadd.f32 %v1610, %v1687
        %v1757 = vadd.f32 %v1611, %v1690
        %v1758 = vadd.f32 %v1612, %v1692
        %v1759 = vadd.f32 %v1613, %v1695
        %v1760 = vadd.f32 %v1614, %v1697
        %v1761 = vadd.f32 %v1615, %v1700
        %v1762 = vadd.f32 %v1616, %v1702
        %v1763 = vadd.f32 %v1617, %v1705
        %v1764 = vadd.f32 %v1618, %v1707
        %v1765 = vadd.f32 %v1619, %v1710
        %v1766 = vadd.f32 %v1620, %v1712
        %v1767 = vadd.f32 %v1621, %v1715
        %v1768 = vadd.f32 %v1622, %v1717
        %v1769 = vadd.f32 %v1623, %v1720
        %v1770 = vadd.f32 %v1624, %v1722
        %v1771 = vadd.f32 %v1625, %v1725
        %v1772 = vadd.f32 %v1626, %v1727
        %v1773 = vadd.f32 %v1627, %v1730
        %v1774 = vadd.f32 %v1628, %v1732
        %v1775 = vadd.f32 %v1629, %v1735
        %v1776 = vadd.f32 %v1630, %v1737
        %v1777 = vadd.f32 %v1631, %v1740
        %v1778 = vadd.f32 %v1632, %v1742
        %v1779 = vadd.f32 %v1633, %v1745
        %v1780 = vadd.f32 %v1634, %v1747
        %v1782 = vshrl.u32 %v441, 16
        %v1784 = vrot.slane %v1782, 4
        %v1785 = vshll.u32 %v441, 16
        %v1787 = vrot.slane %v1785, 5
        %v1788 = vor.u32 %v1784, %v1787
        %v1789 = vrot.slane %v1788, 4
        %v1791 = vshll.u32 %v442, 16
        %v1793 = vrot.slane %v1791, 5
        %v1794 = vsel %vm453, %v1789, %v1793
        %v1795 = vshrl.u32 %v442, 16
        %v1797 = vrot.slane %v1795, 4
        %v1798 = vor.u32 %v1797, %v1793
        %v1799 = vrot.slane %v1798, 4
        %v1801 = vshll.u32 %v443, 16
        %v1803 = vrot.slane %v1801, 5
        %v1804 = vsel %vm453, %v1799, %v1803
        %s1805 = scalar_lea.vmem %s6, 64
        %v1806 = vld [vmem:[%s1805] sm:$0xf]
        %v1807 = vld [vmem:[%s1805 + $0x4] sm:$0xf]
        %v1808 = vld [vmem:[%s1805 + $0x8] sm:$0xf]
        %v1809 = vld [vmem:[%s1805 + $0xc] sm:$0xf]
        %v1810 = vunpack.c.l.b16 %v1794
        %v1811 = vunpack.c.l.b16 %v1804
        %v1812 = vpack.c.b16 %v1811, %v1810
        %v1817 = vunpack.c.l.b16 %v1806
        %v1818 = vunpack.c.l.b16 %v1807
        %v1819 = vunpack.c.l.b16 %v1808
        %v1820 = vunpack.c.l.b16 %v1809
        %v1821 = vpack.c.b16 %v1818, %v1817
        %v1822 = vpack.c.b16 %v1820, %v1819
        %v1826 = vsel %vm903, %v1812, 0
        %1828 = vmatpush.bf16.msra.mxu0 0
        %1829 = vmatpush.bf16.msra.mxu0 0
        %1830 = vmatpush.bf16.msra.mxu0 0
        %1831 = vmatpush.bf16.msra.mxu0 0
        %1832 = vmatpush.bf16.msra.mxu0 0
        %1833 = vmatpush.bf16.msra.mxu0 0
        %1834 = vmatpush.bf16.msra.mxu0 %v1822
        %1835 = vmatpush.bf16.msra.mxu0 %v1821
        %1836 = vmatmul.bf16.gmra.mxu0 %v908
        %v1837 = vpop.f32.mrf.mxu0
        %v1838 = vadd.f32 0.0, %v1837
        %v1839 = vpop.f32.mrf.mxu0
        %v1840 = vadd.f32 0.0, %v1839
        %1841 = vmatmul.bf16.gmra.mxu0 %v911
        %v1842 = vpop.f32.mrf.mxu0
        %v1843 = vadd.f32 0.0, %v1842
        %v1844 = vpop.f32.mrf.mxu0
        %v1845 = vadd.f32 0.0, %v1844
        %1846 = vmatmul.bf16.gmra.mxu0 %v914
        %v1847 = vpop.f32.mrf.mxu0
        %v1848 = vadd.f32 0.0, %v1847
        %v1849 = vpop.f32.mrf.mxu0
        %v1850 = vadd.f32 0.0, %v1849
        %1851 = vmatmul.bf16.gmra.mxu0 %v917
        %v1852 = vpop.f32.mrf.mxu0
        %v1853 = vadd.f32 0.0, %v1852
        %v1854 = vpop.f32.mrf.mxu0
        %v1855 = vadd.f32 0.0, %v1854
        %1856 = vmatmul.bf16.gmra.mxu0 %v920
        %v1857 = vpop.f32.mrf.mxu0
        %v1858 = vadd.f32 0.0, %v1857
        %v1859 = vpop.f32.mrf.mxu0
        %v1860 = vadd.f32 0.0, %v1859
        %1861 = vmatmul.bf16.gmra.mxu0 %v923
        %v1862 = vpop.f32.mrf.mxu0
        %v1863 = vadd.f32 0.0, %v1862
        %v1864 = vpop.f32.mrf.mxu0
        %v1865 = vadd.f32 0.0, %v1864
        %1866 = vmatmul.bf16.gmra.mxu0 %v926
        %v1867 = vpop.f32.mrf.mxu0
        %v1868 = vadd.f32 0.0, %v1867
        %v1869 = vpop.f32.mrf.mxu0
        %v1870 = vadd.f32 0.0, %v1869
        %1871 = vmatmul.bf16.gmra.mxu0 %v929
        %v1872 = vpop.f32.mrf.mxu0
        %v1873 = vadd.f32 0.0, %v1872
        %v1874 = vpop.f32.mrf.mxu0
        %v1875 = vadd.f32 0.0, %v1874
        %1876 = vmatmul.bf16.gmra.mxu0 %v932
        %v1877 = vpop.f32.mrf.mxu0
        %v1878 = vadd.f32 0.0, %v1877
        %v1879 = vpop.f32.mrf.mxu0
        %v1880 = vadd.f32 0.0, %v1879
        %1881 = vmatmul.bf16.gmra.mxu0 %v935
        %v1882 = vpop.f32.mrf.mxu0
        %v1883 = vadd.f32 0.0, %v1882
        %v1884 = vpop.f32.mrf.mxu0
        %v1885 = vadd.f32 0.0, %v1884
        %1886 = vmatmul.bf16.gmra.mxu0 %v938
        %v1887 = vpop.f32.mrf.mxu0
        %v1888 = vadd.f32 0.0, %v1887
        %v1889 = vpop.f32.mrf.mxu0
        %v1890 = vadd.f32 0.0, %v1889
        %1891 = vmatmul.bf16.gmra.mxu0 %v941
        %v1892 = vpop.f32.mrf.mxu0
        %v1893 = vadd.f32 0.0, %v1892
        %v1894 = vpop.f32.mrf.mxu0
        %v1895 = vadd.f32 0.0, %v1894
        %1896 = vmatmul.bf16.gmra.mxu0 %v944
        %v1897 = vpop.f32.mrf.mxu0
        %v1898 = vadd.f32 0.0, %v1897
        %v1899 = vpop.f32.mrf.mxu0
        %v1900 = vadd.f32 0.0, %v1899
        %1901 = vmatmul.bf16.gmra.mxu0 %v947
        %v1902 = vpop.f32.mrf.mxu0
        %v1903 = vadd.f32 0.0, %v1902
        %v1904 = vpop.f32.mrf.mxu0
        %v1905 = vadd.f32 0.0, %v1904
        %1906 = vmatmul.bf16.gmra.mxu0 %v950
        %v1907 = vpop.f32.mrf.mxu0
        %v1908 = vadd.f32 0.0, %v1907
        %v1909 = vpop.f32.mrf.mxu0
        %v1910 = vadd.f32 0.0, %v1909
        %1911 = vmatmul.bf16.gmra.mxu0 %v1826
        %v1912 = vpop.f32.mrf.mxu0
        %v1913 = vadd.f32 0.0, %v1912
        %v1914 = vpop.f32.mrf.mxu0
        %v1915 = vadd.f32 0.0, %v1914
        %1916 = vdwg.mxu0
        %v1917 = vadd.f32 %v1749, %v1838
        %v1918 = vadd.f32 %v1750, %v1840
        %v1919 = vadd.f32 %v1751, %v1843
        %v1920 = vadd.f32 %v1752, %v1845
        %v1921 = vadd.f32 %v1753, %v1848
        %v1922 = vadd.f32 %v1754, %v1850
        %v1923 = vadd.f32 %v1755, %v1853
        %v1924 = vadd.f32 %v1756, %v1855
        %v1925 = vadd.f32 %v1757, %v1858
        %v1926 = vadd.f32 %v1758, %v1860
        %v1927 = vadd.f32 %v1759, %v1863
        %v1928 = vadd.f32 %v1760, %v1865
        %v1929 = vadd.f32 %v1761, %v1868
        %v1930 = vadd.f32 %v1762, %v1870
        %v1931 = vadd.f32 %v1763, %v1873
        %v1932 = vadd.f32 %v1764, %v1875
        %v1933 = vadd.f32 %v1765, %v1878
        %v1934 = vadd.f32 %v1766, %v1880
        %v1935 = vadd.f32 %v1767, %v1883
        %v1936 = vadd.f32 %v1768, %v1885
        %v1937 = vadd.f32 %v1769, %v1888
        %v1938 = vadd.f32 %v1770, %v1890
        %v1939 = vadd.f32 %v1771, %v1893
        %v1940 = vadd.f32 %v1772, %v1895
        %v1941 = vadd.f32 %v1773, %v1898
        %v1942 = vadd.f32 %v1774, %v1900
        %v1943 = vadd.f32 %v1775, %v1903
        %v1944 = vadd.f32 %v1776, %v1905
        %v1945 = vadd.f32 %v1777, %v1908
        %v1946 = vadd.f32 %v1778, %v1910
        %v1947 = vadd.f32 %v1779, %v1913
        %v1948 = vadd.f32 %v1780, %v1915
        %v1950 = vrot.slane %v441, 5
        %v1951 = vrot.slane %v1950, 4
        %v1952 = vrot.slane %v442, 5
        %v1953 = vsel %vm1288, %v1951, %v1952
        %v1954 = vrot.slane %v1952, 4
        %v1955 = vrot.slane %v443, 5
        %v1956 = vsel %vm1288, %v1954, %v1955
        %s1957 = scalar_lea.vmem %s6, 80
        %v1958 = vld [vmem:[%s1957] sm:$0xf]
        %v1959 = vld [vmem:[%s1957 + $0x4] sm:$0xf]
        %v1960 = vld [vmem:[%s1957 + $0x8] sm:$0xf]
        %v1961 = vld [vmem:[%s1957 + $0xc] sm:$0xf]
        %v1962 = vunpack.c.l.b16 %v1953
        %v1963 = vunpack.c.l.b16 %v1956
        %v1964 = vpack.c.b16 %v1963, %v1962
        %v1969 = vunpack.c.l.b16 %v1958
        %v1970 = vunpack.c.l.b16 %v1959
        %v1971 = vunpack.c.l.b16 %v1960
        %v1972 = vunpack.c.l.b16 %v1961
        %v1973 = vpack.c.b16 %v1970, %v1969
        %v1974 = vpack.c.b16 %v1972, %v1971
        %v1978 = vsel %vm903, %v1964, 0
        %1980 = vmatpush.bf16.msra.mxu0 0
        %1981 = vmatpush.bf16.msra.mxu0 0
        %1982 = vmatpush.bf16.msra.mxu0 0
        %1983 = vmatpush.bf16.msra.mxu0 0
        %1984 = vmatpush.bf16.msra.mxu0 0
        %1985 = vmatpush.bf16.msra.mxu0 0
        %1986 = vmatpush.bf16.msra.mxu0 %v1974
        %1987 = vmatpush.bf16.msra.mxu0 %v1973
        %1988 = vmatmul.bf16.gmra.mxu0 %v1470
        %v1989 = vpop.f32.mrf.mxu0
        %v1990 = vadd.f32 0.0, %v1989
        %v1991 = vpop.f32.mrf.mxu0
        %v1992 = vadd.f32 0.0, %v1991
        %1993 = vmatmul.bf16.gmra.mxu0 %v1473
        %v1994 = vpop.f32.mrf.mxu0
        %v1995 = vadd.f32 0.0, %v1994
        %v1996 = vpop.f32.mrf.mxu0
        %v1997 = vadd.f32 0.0, %v1996
        %1998 = vmatmul.bf16.gmra.mxu0 %v1476
        %v1999 = vpop.f32.mrf.mxu0
        %v2000 = vadd.f32 0.0, %v1999
        %v2001 = vpop.f32.mrf.mxu0
        %v2002 = vadd.f32 0.0, %v2001
        %2003 = vmatmul.bf16.gmra.mxu0 %v1479
        %v2004 = vpop.f32.mrf.mxu0
        %v2005 = vadd.f32 0.0, %v2004
        %v2006 = vpop.f32.mrf.mxu0
        %v2007 = vadd.f32 0.0, %v2006
        %2008 = vmatmul.bf16.gmra.mxu0 %v1482
        %v2009 = vpop.f32.mrf.mxu0
        %v2010 = vadd.f32 0.0, %v2009
        %v2011 = vpop.f32.mrf.mxu0
        %v2012 = vadd.f32 0.0, %v2011
        %2013 = vmatmul.bf16.gmra.mxu0 %v1485
        %v2014 = vpop.f32.mrf.mxu0
        %v2015 = vadd.f32 0.0, %v2014
        %v2016 = vpop.f32.mrf.mxu0
        %v2017 = vadd.f32 0.0, %v2016
        %2018 = vmatmul.bf16.gmra.mxu0 %v1488
        %v2019 = vpop.f32.mrf.mxu0
        %v2020 = vadd.f32 0.0, %v2019
        %v2021 = vpop.f32.mrf.mxu0
        %v2022 = vadd.f32 0.0, %v2021
        %2023 = vmatmul.bf16.gmra.mxu0 %v1491
        %v2024 = vpop.f32.mrf.mxu0
        %v2025 = vadd.f32 0.0, %v2024
        %v2026 = vpop.f32.mrf.mxu0
        %v2027 = vadd.f32 0.0, %v2026
        %2028 = vmatmul.bf16.gmra.mxu0 %v1494
        %v2029 = vpop.f32.mrf.mxu0
        %v2030 = vadd.f32 0.0, %v2029
        %v2031 = vpop.f32.mrf.mxu0
        %v2032 = vadd.f32 0.0, %v2031
        %2033 = vmatmul.bf16.gmra.mxu0 %v1497
        %v2034 = vpop.f32.mrf.mxu0
        %v2035 = vadd.f32 0.0, %v2034
        %v2036 = vpop.f32.mrf.mxu0
        %v2037 = vadd.f32 0.0, %v2036
        %2038 = vmatmul.bf16.gmra.mxu0 %v1500
        %v2039 = vpop.f32.mrf.mxu0
        %v2040 = vadd.f32 0.0, %v2039
        %v2041 = vpop.f32.mrf.mxu0
        %v2042 = vadd.f32 0.0, %v2041
        %2043 = vmatmul.bf16.gmra.mxu0 %v1503
        %v2044 = vpop.f32.mrf.mxu0
        %v2045 = vadd.f32 0.0, %v2044
        %v2046 = vpop.f32.mrf.mxu0
        %v2047 = vadd.f32 0.0, %v2046
        %2048 = vmatmul.bf16.gmra.mxu0 %v1506
        %v2049 = vpop.f32.mrf.mxu0
        %v2050 = vadd.f32 0.0, %v2049
        %v2051 = vpop.f32.mrf.mxu0
        %v2052 = vadd.f32 0.0, %v2051
        %2053 = vmatmul.bf16.gmra.mxu0 %v1509
        %v2054 = vpop.f32.mrf.mxu0
        %v2055 = vadd.f32 0.0, %v2054
        %v2056 = vpop.f32.mrf.mxu0
        %v2057 = vadd.f32 0.0, %v2056
        %2058 = vmatmul.bf16.gmra.mxu0 %v1512
        %v2059 = vpop.f32.mrf.mxu0
        %v2060 = vadd.f32 0.0, %v2059
        %v2061 = vpop.f32.mrf.mxu0
        %v2062 = vadd.f32 0.0, %v2061
        %2063 = vmatmul.bf16.gmra.mxu0 %v1978
        %v2064 = vpop.f32.mrf.mxu0
        %v2065 = vadd.f32 0.0, %v2064
        %v2066 = vpop.f32.mrf.mxu0
        %v2067 = vadd.f32 0.0, %v2066
        %2068 = vdwg.mxu0
        %v2069 = vadd.f32 %v1917, %v1990
        %v2070 = vadd.f32 %v1918, %v1992
        %v2071 = vadd.f32 %v1919, %v1995
        %v2072 = vadd.f32 %v1920, %v1997
        %v2073 = vadd.f32 %v1921, %v2000
        %v2074 = vadd.f32 %v1922, %v2002
        %v2075 = vadd.f32 %v1923, %v2005
        %v2076 = vadd.f32 %v1924, %v2007
        %v2077 = vadd.f32 %v1925, %v2010
        %v2078 = vadd.f32 %v1926, %v2012
        %v2079 = vadd.f32 %v1927, %v2015
        %v2080 = vadd.f32 %v1928, %v2017
        %v2081 = vadd.f32 %v1929, %v2020
        %v2082 = vadd.f32 %v1930, %v2022
        %v2083 = vadd.f32 %v1931, %v2025
        %v2084 = vadd.f32 %v1932, %v2027
        %v2085 = vadd.f32 %v1933, %v2030
        %v2086 = vadd.f32 %v1934, %v2032
        %v2087 = vadd.f32 %v1935, %v2035
        %v2088 = vadd.f32 %v1936, %v2037
        %v2089 = vadd.f32 %v1937, %v2040
        %v2090 = vadd.f32 %v1938, %v2042
        %v2091 = vadd.f32 %v1939, %v2045
        %v2092 = vadd.f32 %v1940, %v2047
        %v2093 = vadd.f32 %v1941, %v2050
        %v2094 = vadd.f32 %v1942, %v2052
        %v2095 = vadd.f32 %v1943, %v2055
        %v2096 = vadd.f32 %v1944, %v2057
        %v2097 = vadd.f32 %v1945, %v2060
        %v2098 = vadd.f32 %v1946, %v2062
        %v2099 = vadd.f32 %v1947, %v2065
        %v2100 = vadd.f32 %v1948, %v2067
        %s2101 = scalar_lea.vmem %s6, 96
        %v2102 = vld [vmem:[%s2101] sm:$0xf]
        %v2103 = vld [vmem:[%s2101 + $0x4] sm:$0xf]
        %v2104 = vld [vmem:[%s2101 + $0x8] sm:$0xf]
        %v2105 = vld [vmem:[%s2101 + $0xc] sm:$0xf]
        %v2108 = vunpack.c.l.b16 %v444
        %v2109 = vunpack.c.l.b16 %v445
        %v2110 = vpack.c.b16 %v2109, %v2108
        %v2115 = vunpack.c.l.b16 %v2102
        %v2116 = vunpack.c.l.b16 %v2103
        %v2117 = vunpack.c.l.b16 %v2104
        %v2118 = vunpack.c.l.b16 %v2105
        %v2119 = vpack.c.b16 %v2116, %v2115
        %v2120 = vpack.c.b16 %v2118, %v2117
        %v2124 = vsel %vm903, %v2110, 0
        %2126 = vmatpush.bf16.msra.mxu0 0
        %2127 = vmatpush.bf16.msra.mxu0 0
        %2128 = vmatpush.bf16.msra.mxu0 0
        %2129 = vmatpush.bf16.msra.mxu0 0
        %2130 = vmatpush.bf16.msra.mxu0 0
        %2131 = vmatpush.bf16.msra.mxu0 0
        %2132 = vmatpush.bf16.msra.mxu0 %v2120
        %2133 = vmatpush.bf16.msra.mxu0 %v2119
        %2134 = vmatmul.bf16.gmra.mxu0 %v1140
        %v2135 = vpop.f32.mrf.mxu0
        %v2136 = vadd.f32 0.0, %v2135
        %v2137 = vpop.f32.mrf.mxu0
        %v2138 = vadd.f32 0.0, %v2137
        %2139 = vmatmul.bf16.gmra.mxu0 %v1143
        %v2140 = vpop.f32.mrf.mxu0
        %v2141 = vadd.f32 0.0, %v2140
        %v2142 = vpop.f32.mrf.mxu0
        %v2143 = vadd.f32 0.0, %v2142
        %2144 = vmatmul.bf16.gmra.mxu0 %v1146
        %v2145 = vpop.f32.mrf.mxu0
        %v2146 = vadd.f32 0.0, %v2145
        %v2147 = vpop.f32.mrf.mxu0
        %v2148 = vadd.f32 0.0, %v2147
        %2149 = vmatmul.bf16.gmra.mxu0 %v1149
        %v2150 = vpop.f32.mrf.mxu0
        %v2151 = vadd.f32 0.0, %v2150
        %v2152 = vpop.f32.mrf.mxu0
        %v2153 = vadd.f32 0.0, %v2152
        %2154 = vmatmul.bf16.gmra.mxu0 %v1152
        %v2155 = vpop.f32.mrf.mxu0
        %v2156 = vadd.f32 0.0, %v2155
        %v2157 = vpop.f32.mrf.mxu0
        %v2158 = vadd.f32 0.0, %v2157
        %2159 = vmatmul.bf16.gmra.mxu0 %v1155
        %v2160 = vpop.f32.mrf.mxu0
        %v2161 = vadd.f32 0.0, %v2160
        %v2162 = vpop.f32.mrf.mxu0
        %v2163 = vadd.f32 0.0, %v2162
        %2164 = vmatmul.bf16.gmra.mxu0 %v1158
        %v2165 = vpop.f32.mrf.mxu0
        %v2166 = vadd.f32 0.0, %v2165
        %v2167 = vpop.f32.mrf.mxu0
        %v2168 = vadd.f32 0.0, %v2167
        %2169 = vmatmul.bf16.gmra.mxu0 %v1161
        %v2170 = vpop.f32.mrf.mxu0
        %v2171 = vadd.f32 0.0, %v2170
        %v2172 = vpop.f32.mrf.mxu0
        %v2173 = vadd.f32 0.0, %v2172
        %2174 = vmatmul.bf16.gmra.mxu0 %v1164
        %v2175 = vpop.f32.mrf.mxu0
        %v2176 = vadd.f32 0.0, %v2175
        %v2177 = vpop.f32.mrf.mxu0
        %v2178 = vadd.f32 0.0, %v2177
        %2179 = vmatmul.bf16.gmra.mxu0 %v1167
        %v2180 = vpop.f32.mrf.mxu0
        %v2181 = vadd.f32 0.0, %v2180
        %v2182 = vpop.f32.mrf.mxu0
        %v2183 = vadd.f32 0.0, %v2182
        %2184 = vmatmul.bf16.gmra.mxu0 %v1170
        %v2185 = vpop.f32.mrf.mxu0
        %v2186 = vadd.f32 0.0, %v2185
        %v2187 = vpop.f32.mrf.mxu0
        %v2188 = vadd.f32 0.0, %v2187
        %2189 = vmatmul.bf16.gmra.mxu0 %v1173
        %v2190 = vpop.f32.mrf.mxu0
        %v2191 = vadd.f32 0.0, %v2190
        %v2192 = vpop.f32.mrf.mxu0
        %v2193 = vadd.f32 0.0, %v2192
        %2194 = vmatmul.bf16.gmra.mxu0 %v1176
        %v2195 = vpop.f32.mrf.mxu0
        %v2196 = vadd.f32 0.0, %v2195
        %v2197 = vpop.f32.mrf.mxu0
        %v2198 = vadd.f32 0.0, %v2197
        %2199 = vmatmul.bf16.gmra.mxu0 %v1179
        %v2200 = vpop.f32.mrf.mxu0
        %v2201 = vadd.f32 0.0, %v2200
        %v2202 = vpop.f32.mrf.mxu0
        %v2203 = vadd.f32 0.0, %v2202
        %2204 = vmatmul.bf16.gmra.mxu0 %v1658
        %v2205 = vpop.f32.mrf.mxu0
        %v2206 = vadd.f32 0.0, %v2205
        %v2207 = vpop.f32.mrf.mxu0
        %v2208 = vadd.f32 0.0, %v2207
        %2209 = vmatmul.bf16.gmra.mxu0 %v2124
        %v2210 = vpop.f32.mrf.mxu0
        %v2211 = vadd.f32 0.0, %v2210
        %v2212 = vpop.f32.mrf.mxu0
        %v2213 = vadd.f32 0.0, %v2212
        %2214 = vdwg.mxu0
        %v2215 = vadd.f32 %v2069, %v2136
        %v2216 = vadd.f32 %v2070, %v2138
        %v2217 = vadd.f32 %v2071, %v2141
        %v2218 = vadd.f32 %v2072, %v2143
        %v2219 = vadd.f32 %v2073, %v2146
        %v2220 = vadd.f32 %v2074, %v2148
        %v2221 = vadd.f32 %v2075, %v2151
        %v2222 = vadd.f32 %v2076, %v2153
        %v2223 = vadd.f32 %v2077, %v2156
        %v2224 = vadd.f32 %v2078, %v2158
        %v2225 = vadd.f32 %v2079, %v2161
        %v2226 = vadd.f32 %v2080, %v2163
        %v2227 = vadd.f32 %v2081, %v2166
        %v2228 = vadd.f32 %v2082, %v2168
        %v2229 = vadd.f32 %v2083, %v2171
        %v2230 = vadd.f32 %v2084, %v2173
        %v2231 = vadd.f32 %v2085, %v2176
        %v2232 = vadd.f32 %v2086, %v2178
        %v2233 = vadd.f32 %v2087, %v2181
        %v2234 = vadd.f32 %v2088, %v2183
        %v2235 = vadd.f32 %v2089, %v2186
        %v2236 = vadd.f32 %v2090, %v2188
        %v2237 = vadd.f32 %v2091, %v2191
        %v2238 = vadd.f32 %v2092, %v2193
        %v2239 = vadd.f32 %v2093, %v2196
        %v2240 = vadd.f32 %v2094, %v2198
        %v2241 = vadd.f32 %v2095, %v2201
        %v2242 = vadd.f32 %v2096, %v2203
        %v2243 = vadd.f32 %v2097, %v2206
        %v2244 = vadd.f32 %v2098, %v2208
        %v2245 = vadd.f32 %v2099, %v2211
        %v2246 = vadd.f32 %v2100, %v2213
        %v2248 = vshrl.u32 %v444, 16
        %v2250 = vrot.slane %v2248, 4
        %v2251 = vshll.u32 %v444, 16
        %v2253 = vrot.slane %v2251, 5
        %v2254 = vor.u32 %v2250, %v2253
        %v2255 = vrot.slane %v2254, 4
        %v2257 = vshll.u32 %v445, 16
        %v2259 = vrot.slane %v2257, 5
        %v2260 = vsel %vm453, %v2255, %v2259
        %v2261 = vshrl.u32 %v445, 16
        %v2263 = vrot.slane %v2261, 4
        %v2264 = vor.u32 %v2263, %v2259
        %v2265 = vrot.slane %v2264, 4
        %v2267 = vshll.u32 %v446, 16
        %v2269 = vrot.slane %v2267, 5
        %v2270 = vsel %vm453, %v2265, %v2269
        %s2271 = scalar_lea.vmem %s6, 112
        %v2272 = vld [vmem:[%s2271] sm:$0xf]
        %v2273 = vld [vmem:[%s2271 + $0x4] sm:$0xf]
        %v2274 = vld [vmem:[%s2271 + $0x8] sm:$0xf]
        %v2275 = vld [vmem:[%s2271 + $0xc] sm:$0xf]
        %v2276 = vunpack.c.l.b16 %v2260
        %v2277 = vunpack.c.l.b16 %v2270
        %v2278 = vpack.c.b16 %v2277, %v2276
        %v2283 = vunpack.c.l.b16 %v2272
        %v2284 = vunpack.c.l.b16 %v2273
        %v2285 = vunpack.c.l.b16 %v2274
        %v2286 = vunpack.c.l.b16 %v2275
        %v2287 = vpack.c.b16 %v2284, %v2283
        %v2288 = vpack.c.b16 %v2286, %v2285
        %v2292 = vsel %vm903, %v2278, 0
        %2294 = vmatpush.bf16.msra.mxu0 0
        %2295 = vmatpush.bf16.msra.mxu0 0
        %2296 = vmatpush.bf16.msra.mxu0 0
        %2297 = vmatpush.bf16.msra.mxu0 0
        %2298 = vmatpush.bf16.msra.mxu0 0
        %2299 = vmatpush.bf16.msra.mxu0 0
        %2300 = vmatpush.bf16.msra.mxu0 %v2288
        %2301 = vmatpush.bf16.msra.mxu0 %v2287
        %2302 = vmatmul.bf16.gmra.mxu0 %v911
        %v2303 = vpop.f32.mrf.mxu0
        %v2304 = vadd.f32 0.0, %v2303
        %v2305 = vpop.f32.mrf.mxu0
        %v2306 = vadd.f32 0.0, %v2305
        %2307 = vmatmul.bf16.gmra.mxu0 %v914
        %v2308 = vpop.f32.mrf.mxu0
        %v2309 = vadd.f32 0.0, %v2308
        %v2310 = vpop.f32.mrf.mxu0
        %v2311 = vadd.f32 0.0, %v2310
        %2312 = vmatmul.bf16.gmra.mxu0 %v917
        %v2313 = vpop.f32.mrf.mxu0
        %v2314 = vadd.f32 0.0, %v2313
        %v2315 = vpop.f32.mrf.mxu0
        %v2316 = vadd.f32 0.0, %v2315
        %2317 = vmatmul.bf16.gmra.mxu0 %v920
        %v2318 = vpop.f32.mrf.mxu0
        %v2319 = vadd.f32 0.0, %v2318
        %v2320 = vpop.f32.mrf.mxu0
        %v2321 = vadd.f32 0.0, %v2320
        %2322 = vmatmul.bf16.gmra.mxu0 %v923
        %v2323 = vpop.f32.mrf.mxu0
        %v2324 = vadd.f32 0.0, %v2323
        %v2325 = vpop.f32.mrf.mxu0
        %v2326 = vadd.f32 0.0, %v2325
        %2327 = vmatmul.bf16.gmra.mxu0 %v926
        %v2328 = vpop.f32.mrf.mxu0
        %v2329 = vadd.f32 0.0, %v2328
        %v2330 = vpop.f32.mrf.mxu0
        %v2331 = vadd.f32 0.0, %v2330
        %2332 = vmatmul.bf16.gmra.mxu0 %v929
        %v2333 = vpop.f32.mrf.mxu0
        %v2334 = vadd.f32 0.0, %v2333
        %v2335 = vpop.f32.mrf.mxu0
        %v2336 = vadd.f32 0.0, %v2335
        %2337 = vmatmul.bf16.gmra.mxu0 %v932
        %v2338 = vpop.f32.mrf.mxu0
        %v2339 = vadd.f32 0.0, %v2338
        %v2340 = vpop.f32.mrf.mxu0
        %v2341 = vadd.f32 0.0, %v2340
        %2342 = vmatmul.bf16.gmra.mxu0 %v935
        %v2343 = vpop.f32.mrf.mxu0
        %v2344 = vadd.f32 0.0, %v2343
        %v2345 = vpop.f32.mrf.mxu0
        %v2346 = vadd.f32 0.0, %v2345
        %2347 = vmatmul.bf16.gmra.mxu0 %v938
        %v2348 = vpop.f32.mrf.mxu0
        %v2349 = vadd.f32 0.0, %v2348
        %v2350 = vpop.f32.mrf.mxu0
        %v2351 = vadd.f32 0.0, %v2350
        %2352 = vmatmul.bf16.gmra.mxu0 %v941
        %v2353 = vpop.f32.mrf.mxu0
        %v2354 = vadd.f32 0.0, %v2353
        %v2355 = vpop.f32.mrf.mxu0
        %v2356 = vadd.f32 0.0, %v2355
        %2357 = vmatmul.bf16.gmra.mxu0 %v944
        %v2358 = vpop.f32.mrf.mxu0
        %v2359 = vadd.f32 0.0, %v2358
        %v2360 = vpop.f32.mrf.mxu0
        %v2361 = vadd.f32 0.0, %v2360
        %2362 = vmatmul.bf16.gmra.mxu0 %v947
        %v2363 = vpop.f32.mrf.mxu0
        %v2364 = vadd.f32 0.0, %v2363
        %v2365 = vpop.f32.mrf.mxu0
        %v2366 = vadd.f32 0.0, %v2365
        %2367 = vmatmul.bf16.gmra.mxu0 %v950
        %v2368 = vpop.f32.mrf.mxu0
        %v2369 = vadd.f32 0.0, %v2368
        %v2370 = vpop.f32.mrf.mxu0
        %v2371 = vadd.f32 0.0, %v2370
        %2372 = vmatmul.bf16.gmra.mxu0 %v1826
        %v2373 = vpop.f32.mrf.mxu0
        %v2374 = vadd.f32 0.0, %v2373
        %v2375 = vpop.f32.mrf.mxu0
        %v2376 = vadd.f32 0.0, %v2375
        %2377 = vmatmul.bf16.gmra.mxu0 %v2292
        %v2378 = vpop.f32.mrf.mxu0
        %v2379 = vadd.f32 0.0, %v2378
        %v2380 = vpop.f32.mrf.mxu0
        %v2381 = vadd.f32 0.0, %v2380
        %2382 = vdwg.mxu0
        %v2383 = vadd.f32 %v2215, %v2304
        %v2384 = vadd.f32 %v2216, %v2306
        %v2385 = vadd.f32 %v2217, %v2309
        %v2386 = vadd.f32 %v2218, %v2311
        %v2387 = vadd.f32 %v2219, %v2314
        %v2388 = vadd.f32 %v2220, %v2316
        %v2389 = vadd.f32 %v2221, %v2319
        %v2390 = vadd.f32 %v2222, %v2321
        %v2391 = vadd.f32 %v2223, %v2324
        %v2392 = vadd.f32 %v2224, %v2326
        %v2393 = vadd.f32 %v2225, %v2329
        %v2394 = vadd.f32 %v2226, %v2331
        %v2395 = vadd.f32 %v2227, %v2334
        %v2396 = vadd.f32 %v2228, %v2336
        %v2397 = vadd.f32 %v2229, %v2339
        %v2398 = vadd.f32 %v2230, %v2341
        %v2399 = vadd.f32 %v2231, %v2344
        %v2400 = vadd.f32 %v2232, %v2346
        %v2401 = vadd.f32 %v2233, %v2349
        %v2402 = vadd.f32 %v2234, %v2351
        %v2403 = vadd.f32 %v2235, %v2354
        %v2404 = vadd.f32 %v2236, %v2356
        %v2405 = vadd.f32 %v2237, %v2359
        %v2406 = vadd.f32 %v2238, %v2361
        %v2407 = vadd.f32 %v2239, %v2364
        %v2408 = vadd.f32 %v2240, %v2366
        %v2409 = vadd.f32 %v2241, %v2369
        %v2410 = vadd.f32 %v2242, %v2371
        %v2411 = vadd.f32 %v2243, %v2374
        %v2412 = vadd.f32 %v2244, %v2376
        %v2413 = vadd.f32 %v2245, %v2379
        %v2414 = vadd.f32 %v2246, %v2381
        %v2416 = vrot.slane %v444, 5
        %v2417 = vrot.slane %v2416, 4
        %v2418 = vrot.slane %v445, 5
        %v2419 = vsel %vm1288, %v2417, %v2418
        %v2420 = vrot.slane %v2418, 4
        %v2421 = vrot.slane %v446, 5
        %v2422 = vsel %vm1288, %v2420, %v2421
        %s2423 = scalar_lea.vmem %s6, 128
        %v2424 = vld [vmem:[%s2423] sm:$0xf]
        %v2425 = vld [vmem:[%s2423 + $0x4] sm:$0xf]
        %v2426 = vld [vmem:[%s2423 + $0x8] sm:$0xf]
        %v2427 = vld [vmem:[%s2423 + $0xc] sm:$0xf]
        %v2428 = vunpack.c.l.b16 %v2419
        %v2429 = vunpack.c.l.b16 %v2422
        %v2430 = vpack.c.b16 %v2429, %v2428
        %v2435 = vunpack.c.l.b16 %v2424
        %v2436 = vunpack.c.l.b16 %v2425
        %v2437 = vunpack.c.l.b16 %v2426
        %v2438 = vunpack.c.l.b16 %v2427
        %v2439 = vpack.c.b16 %v2436, %v2435
        %v2440 = vpack.c.b16 %v2438, %v2437
        %v2444 = vsel %vm903, %v2430, 0
        %2446 = vmatpush.bf16.msra.mxu0 0
        %2447 = vmatpush.bf16.msra.mxu0 0
        %2448 = vmatpush.bf16.msra.mxu0 0
        %2449 = vmatpush.bf16.msra.mxu0 0
        %2450 = vmatpush.bf16.msra.mxu0 0
        %2451 = vmatpush.bf16.msra.mxu0 0
        %2452 = vmatpush.bf16.msra.mxu0 %v2440
        %2453 = vmatpush.bf16.msra.mxu0 %v2439
        %2454 = vmatmul.bf16.gmra.mxu0 %v1473
        %v2455 = vpop.f32.mrf.mxu0
        %v2456 = vadd.f32 0.0, %v2455
        %v2457 = vpop.f32.mrf.mxu0
        %v2458 = vadd.f32 0.0, %v2457
        %2459 = vmatmul.bf16.gmra.mxu0 %v1476
        %v2460 = vpop.f32.mrf.mxu0
        %v2461 = vadd.f32 0.0, %v2460
        %v2462 = vpop.f32.mrf.mxu0
        %v2463 = vadd.f32 0.0, %v2462
        %2464 = vmatmul.bf16.gmra.mxu0 %v1479
        %v2465 = vpop.f32.mrf.mxu0
        %v2466 = vadd.f32 0.0, %v2465
        %v2467 = vpop.f32.mrf.mxu0
        %v2468 = vadd.f32 0.0, %v2467
        %2469 = vmatmul.bf16.gmra.mxu0 %v1482
        %v2470 = vpop.f32.mrf.mxu0
        %v2471 = vadd.f32 0.0, %v2470
        %v2472 = vpop.f32.mrf.mxu0
        %v2473 = vadd.f32 0.0, %v2472
        %2474 = vmatmul.bf16.gmra.mxu0 %v1485
        %v2475 = vpop.f32.mrf.mxu0
        %v2476 = vadd.f32 0.0, %v2475
        %v2477 = vpop.f32.mrf.mxu0
        %v2478 = vadd.f32 0.0, %v2477
        %2479 = vmatmul.bf16.gmra.mxu0 %v1488
        %v2480 = vpop.f32.mrf.mxu0
        %v2481 = vadd.f32 0.0, %v2480
        %v2482 = vpop.f32.mrf.mxu0
        %v2483 = vadd.f32 0.0, %v2482
        %2484 = vmatmul.bf16.gmra.mxu0 %v1491
        %v2485 = vpop.f32.mrf.mxu0
        %v2486 = vadd.f32 0.0, %v2485
        %v2487 = vpop.f32.mrf.mxu0
        %v2488 = vadd.f32 0.0, %v2487
        %2489 = vmatmul.bf16.gmra.mxu0 %v1494
        %v2490 = vpop.f32.mrf.mxu0
        %v2491 = vadd.f32 0.0, %v2490
        %v2492 = vpop.f32.mrf.mxu0
        %v2493 = vadd.f32 0.0, %v2492
        %2494 = vmatmul.bf16.gmra.mxu0 %v1497
        %v2495 = vpop.f32.mrf.mxu0
        %v2496 = vadd.f32 0.0, %v2495
        %v2497 = vpop.f32.mrf.mxu0
        %v2498 = vadd.f32 0.0, %v2497
        %2499 = vmatmul.bf16.gmra.mxu0 %v1500
        %v2500 = vpop.f32.mrf.mxu0
        %v2501 = vadd.f32 0.0, %v2500
        %v2502 = vpop.f32.mrf.mxu0
        %v2503 = vadd.f32 0.0, %v2502
        %2504 = vmatmul.bf16.gmra.mxu0 %v1503
        %v2505 = vpop.f32.mrf.mxu0
        %v2506 = vadd.f32 0.0, %v2505
        %v2507 = vpop.f32.mrf.mxu0
        %v2508 = vadd.f32 0.0, %v2507
        %2509 = vmatmul.bf16.gmra.mxu0 %v1506
        %v2510 = vpop.f32.mrf.mxu0
        %v2511 = vadd.f32 0.0, %v2510
        %v2512 = vpop.f32.mrf.mxu0
        %v2513 = vadd.f32 0.0, %v2512
        %2514 = vmatmul.bf16.gmra.mxu0 %v1509
        %v2515 = vpop.f32.mrf.mxu0
        %v2516 = vadd.f32 0.0, %v2515
        %v2517 = vpop.f32.mrf.mxu0
        %v2518 = vadd.f32 0.0, %v2517
        %2519 = vmatmul.bf16.gmra.mxu0 %v1512
        %v2520 = vpop.f32.mrf.mxu0
        %v2521 = vadd.f32 0.0, %v2520
        %v2522 = vpop.f32.mrf.mxu0
        %v2523 = vadd.f32 0.0, %v2522
        %2524 = vmatmul.bf16.gmra.mxu0 %v1978
        %v2525 = vpop.f32.mrf.mxu0
        %v2526 = vadd.f32 0.0, %v2525
        %v2527 = vpop.f32.mrf.mxu0
        %v2528 = vadd.f32 0.0, %v2527
        %2529 = vmatmul.bf16.gmra.mxu0 %v2444
        %v2530 = vpop.f32.mrf.mxu0
        %v2531 = vadd.f32 0.0, %v2530
        %v2532 = vpop.f32.mrf.mxu0
        %v2533 = vadd.f32 0.0, %v2532
        %2534 = vdwg.mxu0
        %v2535 = vadd.f32 %v2383, %v2456
        %v2536 = vadd.f32 %v2384, %v2458
        %v2537 = vadd.f32 %v2385, %v2461
        %v2538 = vadd.f32 %v2386, %v2463
        %v2539 = vadd.f32 %v2387, %v2466
        %v2540 = vadd.f32 %v2388, %v2468
        %v2541 = vadd.f32 %v2389, %v2471
        %v2542 = vadd.f32 %v2390, %v2473
        %v2543 = vadd.f32 %v2391, %v2476
        %v2544 = vadd.f32 %v2392, %v2478
        %v2545 = vadd.f32 %v2393, %v2481
        %v2546 = vadd.f32 %v2394, %v2483
        %v2547 = vadd.f32 %v2395, %v2486
        %v2548 = vadd.f32 %v2396, %v2488
        %v2549 = vadd.f32 %v2397, %v2491
        %v2550 = vadd.f32 %v2398, %v2493
        %v2551 = vadd.f32 %v2399, %v2496
        %v2552 = vadd.f32 %v2400, %v2498
        %v2553 = vadd.f32 %v2401, %v2501
        %v2554 = vadd.f32 %v2402, %v2503
        %v2555 = vadd.f32 %v2403, %v2506
        %v2556 = vadd.f32 %v2404, %v2508
        %v2557 = vadd.f32 %v2405, %v2511
        %v2558 = vadd.f32 %v2406, %v2513
        %v2559 = vadd.f32 %v2407, %v2516
        %v2560 = vadd.f32 %v2408, %v2518
        %v2561 = vadd.f32 %v2409, %v2521
        %v2562 = vadd.f32 %v2410, %v2523
        %v2563 = vadd.f32 %v2411, %v2526
        %v2564 = vadd.f32 %v2412, %v2528
        %v2565 = vadd.f32 %v2413, %v2531
        %v2566 = vadd.f32 %v2414, %v2533
        %2567 = vxpose.xlu0.b32.start [1/16] %v2535, 128
        %2568 = vxpose.xlu0.b32.cont [2/16] %v2536, 128
        %2569 = vxpose.xlu0.b32.cont [3/16] %v2537, 128
        %2570 = vxpose.xlu0.b32.cont [4/16] %v2538, 128
        %2571 = vxpose.xlu0.b32.cont [5/16] %v2539, 128
        %2572 = vxpose.xlu0.b32.cont [6/16] %v2540, 128
        %2573 = vxpose.xlu0.b32.cont [7/16] %v2541, 128
        %2574 = vxpose.xlu0.b32.cont [8/16] %v2542, 128
        %2575 = vxpose.xlu0.b32.cont [9/16] %v2543, 128
        %2576 = vxpose.xlu0.b32.cont [10/16] %v2544, 128
        %2577 = vxpose.xlu0.b32.cont [11/16] %v2545, 128
        %2578 = vxpose.xlu0.b32.cont [12/16] %v2546, 128
        %2579 = vxpose.xlu0.b32.cont [13/16] %v2547, 128
        %2580 = vxpose.xlu0.b32.cont [14/16] %v2548, 128
        %2581 = vxpose.xlu0.b32.cont [15/16] %v2549, 128
        %2582 = vxpose.xlu0.b32.end [16/16] %v2550, 128
        %v2583 = vpop.trf.xlu0
        %v2584 = vpop.trf.xlu0
        %v2585 = vpop.trf.xlu0
        %v2586 = vpop.trf.xlu0
        %v2587 = vpop.trf.xlu0
        %v2588 = vpop.trf.xlu0
        %v2589 = vpop.trf.xlu0
        %v2590 = vpop.trf.xlu0
        %v2591 = vpop.trf.xlu0
        %v2592 = vpop.trf.xlu0
        %v2593 = vpop.trf.xlu0
        %v2594 = vpop.trf.xlu0
        %v2595 = vpop.trf.xlu0
        %v2596 = vpop.trf.xlu0
        %v2597 = vpop.trf.xlu0
        %v2598 = vpop.trf.xlu0
        %2599 = vxpose.xlu0.b32.start [1/16] %v2551, 128
        %2600 = vxpose.xlu0.b32.cont [2/16] %v2552, 128
        %2601 = vxpose.xlu0.b32.cont [3/16] %v2553, 128
        %2602 = vxpose.xlu0.b32.cont [4/16] %v2554, 128
        %2603 = vxpose.xlu0.b32.cont [5/16] %v2555, 128
        %2604 = vxpose.xlu0.b32.cont [6/16] %v2556, 128
        %2605 = vxpose.xlu0.b32.cont [7/16] %v2557, 128
        %2606 = vxpose.xlu0.b32.cont [8/16] %v2558, 128
        %2607 = vxpose.xlu0.b32.cont [9/16] %v2559, 128
        %2608 = vxpose.xlu0.b32.cont [10/16] %v2560, 128
        %2609 = vxpose.xlu0.b32.cont [11/16] %v2561, 128
        %2610 = vxpose.xlu0.b32.cont [12/16] %v2562, 128
        %2611 = vxpose.xlu0.b32.cont [13/16] %v2563, 128
        %2612 = vxpose.xlu0.b32.cont [14/16] %v2564, 128
        %2613 = vxpose.xlu0.b32.cont [15/16] %v2565, 128
        %2614 = vxpose.xlu0.b32.end [16/16] %v2566, 128
        %v2615 = vpop.trf.xlu0
        %v2616 = vpop.trf.xlu0
        %v2617 = vpop.trf.xlu0
        %v2618 = vpop.trf.xlu0
        %v2619 = vpop.trf.xlu0
        %v2620 = vpop.trf.xlu0
        %v2621 = vpop.trf.xlu0
        %v2622 = vpop.trf.xlu0
        %v2623 = vpop.trf.xlu0
        %v2624 = vpop.trf.xlu0
        %v2625 = vpop.trf.xlu0
        %v2626 = vpop.trf.xlu0
        %v2627 = vpop.trf.xlu0
        %v2628 = vpop.trf.xlu0
        %v2629 = vpop.trf.xlu0
        %v2630 = vpop.trf.xlu0
        %v2631 = vld [vmem:[%s363] sm:$0xf]
        %v2632 = vld [vmem:[%s363 + $0x4] sm:$0xf]
        %v2633 = vld [vmem:[%s363 + $0x8] sm:$0x1]
        %v2634 = vld [vmem:[%s363 + $0xc] sm:$0xf]
        %v2635 = vld [vmem:[%s363 + $0x10] sm:$0xf]
        %v2636 = vld [vmem:[%s363 + $0x14] sm:$0x1]
        %v2637 = vld [vmem:[%s363 + $0x18] sm:$0xf]
        %v2638 = vld [vmem:[%s363 + $0x1c] sm:$0xf]
        %v2639 = vld [vmem:[%s363 + $0x20] sm:$0x1]
        %v2640 = vld [vmem:[%s363 + $0x24] sm:$0xf]
        %v2641 = vld [vmem:[%s363 + $0x28] sm:$0xf]
        %v2642 = vld [vmem:[%s363 + $0x2c] sm:$0x1]
        %v2643 = vld [vmem:[%s363 + $0x30] sm:$0xf]
        %v2644 = vld [vmem:[%s363 + $0x34] sm:$0xf]
        %v2645 = vld [vmem:[%s363 + $0x38] sm:$0x1]
        %v2646 = vld [vmem:[%s363 + $0x3c] sm:$0xf]
        %v2647 = vld [vmem:[%s363 + $0x40] sm:$0xf]
        %v2648 = vld [vmem:[%s363 + $0x44] sm:$0x1]
        %v2649 = vld [vmem:[%s363 + $0x48] sm:$0xf]
        %v2650 = vld [vmem:[%s363 + $0x4c] sm:$0xf]
        %v2651 = vld [vmem:[%s363 + $0x50] sm:$0x1]
        %v2652 = vld [vmem:[%s363 + $0x54] sm:$0xf]
        %v2653 = vld [vmem:[%s363 + $0x58] sm:$0xf]
        %v2654 = vld [vmem:[%s363 + $0x5c] sm:$0x1]
        %v2655 = vld [vmem:[%s363 + $0x60] sm:$0xf]
        %v2656 = vld [vmem:[%s363 + $0x64] sm:$0xf]
        %v2657 = vld [vmem:[%s363 + $0x68] sm:$0x1]
        %v2658 = vld [vmem:[%s363 + $0x6c] sm:$0xf]
        %v2659 = vld [vmem:[%s363 + $0x70] sm:$0xf]
        %v2660 = vld [vmem:[%s363 + $0x74] sm:$0x1]
        %v2661 = vld [vmem:[%s363 + $0x78] sm:$0xf]
        %v2662 = vld [vmem:[%s363 + $0x7c] sm:$0xf]
        %v2663 = vld [vmem:[%s363 + $0x80] sm:$0x1]
        %v2664 = vld [vmem:[%s363 + $0x84] sm:$0xf]
        %v2665 = vld [vmem:[%s363 + $0x88] sm:$0xf]
        %v2666 = vld [vmem:[%s363 + $0x8c] sm:$0x1]
        %v2667 = vld [vmem:[%s363 + $0x90] sm:$0xf]
        %v2668 = vld [vmem:[%s363 + $0x94] sm:$0xf]
        %v2669 = vld [vmem:[%s363 + $0x98] sm:$0x1]
        %v2670 = vld [vmem:[%s363 + $0x9c] sm:$0xf]
        %v2671 = vld [vmem:[%s363 + $0xa0] sm:$0xf]
        %v2672 = vld [vmem:[%s363 + $0xa4] sm:$0x1]
        %v2673 = vld [vmem:[%s363 + $0xa8] sm:$0xf]
        %v2674 = vld [vmem:[%s363 + $0xac] sm:$0xf]
        %v2675 = vld [vmem:[%s363 + $0xb0] sm:$0x1]
        %v2676 = vld [vmem:[%s363 + $0xb4] sm:$0xf]
        %v2677 = vld [vmem:[%s363 + $0xb8] sm:$0xf]
        %v2678 = vld [vmem:[%s363 + $0xbc] sm:$0x1]
        %v2679 = vld [vmem:[%s363 + $0xc0] sm:$0xf]
        %v2680 = vld [vmem:[%s363 + $0xc4] sm:$0xf]
        %v2681 = vld [vmem:[%s363 + $0xc8] sm:$0x1]
        %v2682 = vld [vmem:[%s363 + $0xcc] sm:$0xf]
        %v2683 = vld [vmem:[%s363 + $0xd0] sm:$0xf]
        %v2684 = vld [vmem:[%s363 + $0xd4] sm:$0x1]
        %v2685 = vld [vmem:[%s5] sm:$0xf]
        %v2686 = vld [vmem:[%s5 + $0x4] sm:$0xf]
        %v2687 = vld [vmem:[%s5 + $0x8] sm:$0xf]
        %v2688 = vld [vmem:[%s5 + $0xc] sm:$0xf]
        %v2690 = vshrl.u32 %v2631, 16
        %v2692 = vrot.slane %v2690, 4
        %v2693 = vshll.u32 %v2631, 16
        %v2695 = vrot.slane %v2693, 5
        %v2696 = vor.u32 %v2692, %v2695
        %v2697 = vrot.slane %v2696, 4
        %v2699 = vshll.u32 %v2632, 16
        %v2701 = vrot.slane %v2699, 5
        %v2702 = vsel %vm453, %v2697, %v2701
        %v2703 = vshrl.u32 %v2632, 16
        %v2705 = vrot.slane %v2703, 4
        %v2706 = vor.u32 %v2705, %v2701
        %v2707 = vrot.slane %v2706, 4
        %v2709 = vshll.u32 %v2633, 16
        %v2711 = vrot.slane %v2709, 5
        %v2712 = vsel %vm453, %v2707, %v2711
        %v2714 = vshrl.u32 %v2634, 16
        %v2716 = vrot.slane %v2714, 4
        %v2717 = vshll.u32 %v2634, 16
        %v2719 = vrot.slane %v2717, 5
        %v2720 = vor.u32 %v2716, %v2719
        %v2721 = vrot.slane %v2720, 4
        %v2723 = vshll.u32 %v2635, 16
        %v2725 = vrot.slane %v2723, 5
        %v2726 = vsel %vm453, %v2721, %v2725
        %v2727 = vshrl.u32 %v2635, 16
        %v2729 = vrot.slane %v2727, 4
        %v2730 = vor.u32 %v2729, %v2725
        %v2731 = vrot.slane %v2730, 4
        %v2733 = vshll.u32 %v2636, 16
        %v2735 = vrot.slane %v2733, 5
        %v2736 = vsel %vm453, %v2731, %v2735
        %v2738 = vshrl.u32 %v2637, 16
        %v2740 = vrot.slane %v2738, 4
        %v2741 = vshll.u32 %v2637, 16
        %v2743 = vrot.slane %v2741, 5
        %v2744 = vor.u32 %v2740, %v2743
        %v2745 = vrot.slane %v2744, 4
        %v2747 = vshll.u32 %v2638, 16
        %v2749 = vrot.slane %v2747, 5
        %v2750 = vsel %vm453, %v2745, %v2749
        %v2751 = vshrl.u32 %v2638, 16
        %v2753 = vrot.slane %v2751, 4
        %v2754 = vor.u32 %v2753, %v2749
        %v2755 = vrot.slane %v2754, 4
        %v2757 = vshll.u32 %v2639, 16
        %v2759 = vrot.slane %v2757, 5
        %v2760 = vsel %vm453, %v2755, %v2759
        %v2762 = vshrl.u32 %v2640, 16
        %v2764 = vrot.slane %v2762, 4
        %v2765 = vshll.u32 %v2640, 16
        %v2767 = vrot.slane %v2765, 5
        %v2768 = vor.u32 %v2764, %v2767
        %v2769 = vrot.slane %v2768, 4
        %v2771 = vshll.u32 %v2641, 16
        %v2773 = vrot.slane %v2771, 5
        %v2774 = vsel %vm453, %v2769, %v2773
        %v2775 = vshrl.u32 %v2641, 16
        %v2777 = vrot.slane %v2775, 4
        %v2778 = vor.u32 %v2777, %v2773
        %v2779 = vrot.slane %v2778, 4
        %v2781 = vshll.u32 %v2642, 16
        %v2783 = vrot.slane %v2781, 5
        %v2784 = vsel %vm453, %v2779, %v2783
        %v2786 = vshrl.u32 %v2643, 16
        %v2788 = vrot.slane %v2786, 4
        %v2789 = vshll.u32 %v2643, 16
        %v2791 = vrot.slane %v2789, 5
        %v2792 = vor.u32 %v2788, %v2791
        %v2793 = vrot.slane %v2792, 4
        %v2795 = vshll.u32 %v2644, 16
        %v2797 = vrot.slane %v2795, 5
        %v2798 = vsel %vm453, %v2793, %v2797
        %v2799 = vshrl.u32 %v2644, 16
        %v2801 = vrot.slane %v2799, 4
        %v2802 = vor.u32 %v2801, %v2797
        %v2803 = vrot.slane %v2802, 4
        %v2805 = vshll.u32 %v2645, 16
        %v2807 = vrot.slane %v2805, 5
        %v2808 = vsel %vm453, %v2803, %v2807
        %v2810 = vshrl.u32 %v2646, 16
        %v2812 = vrot.slane %v2810, 4
        %v2813 = vshll.u32 %v2646, 16
        %v2815 = vrot.slane %v2813, 5
        %v2816 = vor.u32 %v2812, %v2815
        %v2817 = vrot.slane %v2816, 4
        %v2819 = vshll.u32 %v2647, 16
        %v2821 = vrot.slane %v2819, 5
        %v2822 = vsel %vm453, %v2817, %v2821
        %v2823 = vshrl.u32 %v2647, 16
        %v2825 = vrot.slane %v2823, 4
        %v2826 = vor.u32 %v2825, %v2821
        %v2827 = vrot.slane %v2826, 4
        %v2829 = vshll.u32 %v2648, 16
        %v2831 = vrot.slane %v2829, 5
        %v2832 = vsel %vm453, %v2827, %v2831
        %v2834 = vshrl.u32 %v2649, 16
        %v2836 = vrot.slane %v2834, 4
        %v2837 = vshll.u32 %v2649, 16
        %v2839 = vrot.slane %v2837, 5
        %v2840 = vor.u32 %v2836, %v2839
        %v2841 = vrot.slane %v2840, 4
        %v2843 = vshll.u32 %v2650, 16
        %v2845 = vrot.slane %v2843, 5
        %v2846 = vsel %vm453, %v2841, %v2845
        %v2847 = vshrl.u32 %v2650, 16
        %v2849 = vrot.slane %v2847, 4
        %v2850 = vor.u32 %v2849, %v2845
        %v2851 = vrot.slane %v2850, 4
        %v2853 = vshll.u32 %v2651, 16
        %v2855 = vrot.slane %v2853, 5
        %v2856 = vsel %vm453, %v2851, %v2855
        %v2858 = vshrl.u32 %v2652, 16
        %v2860 = vrot.slane %v2858, 4
        %v2861 = vshll.u32 %v2652, 16
        %v2863 = vrot.slane %v2861, 5
        %v2864 = vor.u32 %v2860, %v2863
        %v2865 = vrot.slane %v2864, 4
        %v2867 = vshll.u32 %v2653, 16
        %v2869 = vrot.slane %v2867, 5
        %v2870 = vsel %vm453, %v2865, %v2869
        %v2871 = vshrl.u32 %v2653, 16
        %v2873 = vrot.slane %v2871, 4
        %v2874 = vor.u32 %v2873, %v2869
        %v2875 = vrot.slane %v2874, 4
        %v2877 = vshll.u32 %v2654, 16
        %v2879 = vrot.slane %v2877, 5
        %v2880 = vsel %vm453, %v2875, %v2879
        %v2882 = vshrl.u32 %v2655, 16
        %v2884 = vrot.slane %v2882, 4
        %v2885 = vshll.u32 %v2655, 16
        %v2887 = vrot.slane %v2885, 5
        %v2888 = vor.u32 %v2884, %v2887
        %v2889 = vrot.slane %v2888, 4
        %v2891 = vshll.u32 %v2656, 16
        %v2893 = vrot.slane %v2891, 5
        %v2894 = vsel %vm453, %v2889, %v2893
        %v2895 = vshrl.u32 %v2656, 16
        %v2897 = vrot.slane %v2895, 4
        %v2898 = vor.u32 %v2897, %v2893
        %v2899 = vrot.slane %v2898, 4
        %v2901 = vshll.u32 %v2657, 16
        %v2903 = vrot.slane %v2901, 5
        %v2904 = vsel %vm453, %v2899, %v2903
        %v2906 = vshrl.u32 %v2658, 16
        %v2908 = vrot.slane %v2906, 4
        %v2909 = vshll.u32 %v2658, 16
        %v2911 = vrot.slane %v2909, 5
        %v2912 = vor.u32 %v2908, %v2911
        %v2913 = vrot.slane %v2912, 4
        %v2915 = vshll.u32 %v2659, 16
        %v2917 = vrot.slane %v2915, 5
        %v2918 = vsel %vm453, %v2913, %v2917
        %v2919 = vshrl.u32 %v2659, 16
        %v2921 = vrot.slane %v2919, 4
        %v2922 = vor.u32 %v2921, %v2917
        %v2923 = vrot.slane %v2922, 4
        %v2925 = vshll.u32 %v2660, 16
        %v2927 = vrot.slane %v2925, 5
        %v2928 = vsel %vm453, %v2923, %v2927
        %v2930 = vshrl.u32 %v2661, 16
        %v2932 = vrot.slane %v2930, 4
        %v2933 = vshll.u32 %v2661, 16
        %v2935 = vrot.slane %v2933, 5
        %v2936 = vor.u32 %v2932, %v2935
        %v2937 = vrot.slane %v2936, 4
        %v2939 = vshll.u32 %v2662, 16
        %v2941 = vrot.slane %v2939, 5
        %v2942 = vsel %vm453, %v2937, %v2941
        %v2943 = vshrl.u32 %v2662, 16
        %v2945 = vrot.slane %v2943, 4
        %v2946 = vor.u32 %v2945, %v2941
        %v2947 = vrot.slane %v2946, 4
        %v2949 = vshll.u32 %v2663, 16
        %v2951 = vrot.slane %v2949, 5
        %v2952 = vsel %vm453, %v2947, %v2951
        %v2954 = vshrl.u32 %v2664, 16
        %v2956 = vrot.slane %v2954, 4
        %v2957 = vshll.u32 %v2664, 16
        %v2959 = vrot.slane %v2957, 5
        %v2960 = vor.u32 %v2956, %v2959
        %v2961 = vrot.slane %v2960, 4
        %v2963 = vshll.u32 %v2665, 16
        %v2965 = vrot.slane %v2963, 5
        %v2966 = vsel %vm453, %v2961, %v2965
        %v2967 = vshrl.u32 %v2665, 16
        %v2969 = vrot.slane %v2967, 4
        %v2970 = vor.u32 %v2969, %v2965
        %v2971 = vrot.slane %v2970, 4
        %v2973 = vshll.u32 %v2666, 16
        %v2975 = vrot.slane %v2973, 5
        %v2976 = vsel %vm453, %v2971, %v2975
        %v2978 = vshrl.u32 %v2667, 16
        %v2980 = vrot.slane %v2978, 4
        %v2981 = vshll.u32 %v2667, 16
        %v2983 = vrot.slane %v2981, 5
        %v2984 = vor.u32 %v2980, %v2983
        %v2985 = vrot.slane %v2984, 4
        %v2987 = vshll.u32 %v2668, 16
        %v2989 = vrot.slane %v2987, 5
        %v2990 = vsel %vm453, %v2985, %v2989
        %v2991 = vshrl.u32 %v2668, 16
        %v2993 = vrot.slane %v2991, 4
        %v2994 = vor.u32 %v2993, %v2989
        %v2995 = vrot.slane %v2994, 4
        %v2997 = vshll.u32 %v2669, 16
        %v2999 = vrot.slane %v2997, 5
        %v3000 = vsel %vm453, %v2995, %v2999
        %v3002 = vshrl.u32 %v2670, 16
        %v3004 = vrot.slane %v3002, 4
        %v3005 = vshll.u32 %v2670, 16
        %v3007 = vrot.slane %v3005, 5
        %v3008 = vor.u32 %v3004, %v3007
        %v3009 = vrot.slane %v3008, 4
        %v3011 = vshll.u32 %v2671, 16
        %v3013 = vrot.slane %v3011, 5
        %v3014 = vsel %vm453, %v3009, %v3013
        %v3015 = vshrl.u32 %v2671, 16
        %v3017 = vrot.slane %v3015, 4
        %v3018 = vor.u32 %v3017, %v3013
        %v3019 = vrot.slane %v3018, 4
        %v3021 = vshll.u32 %v2672, 16
        %v3023 = vrot.slane %v3021, 5
        %v3024 = vsel %vm453, %v3019, %v3023
        %v3026 = vshrl.u32 %v2673, 16
        %v3028 = vrot.slane %v3026, 4
        %v3029 = vshll.u32 %v2673, 16
        %v3031 = vrot.slane %v3029, 5
        %v3032 = vor.u32 %v3028, %v3031
        %v3033 = vrot.slane %v3032, 4
        %v3035 = vshll.u32 %v2674, 16
        %v3037 = vrot.slane %v3035, 5
        %v3038 = vsel %vm453, %v3033, %v3037
        %v3039 = vshrl.u32 %v2674, 16
        %v3041 = vrot.slane %v3039, 4
        %v3042 = vor.u32 %v3041, %v3037
        %v3043 = vrot.slane %v3042, 4
        %v3045 = vshll.u32 %v2675, 16
        %v3047 = vrot.slane %v3045, 5
        %v3048 = vsel %vm453, %v3043, %v3047
        %v3050 = vshrl.u32 %v2676, 16
        %v3052 = vrot.slane %v3050, 4
        %v3053 = vshll.u32 %v2676, 16
        %v3055 = vrot.slane %v3053, 5
        %v3056 = vor.u32 %v3052, %v3055
        %v3057 = vrot.slane %v3056, 4
        %v3059 = vshll.u32 %v2677, 16
        %v3061 = vrot.slane %v3059, 5
        %v3062 = vsel %vm453, %v3057, %v3061
        %v3063 = vshrl.u32 %v2677, 16
        %v3065 = vrot.slane %v3063, 4
        %v3066 = vor.u32 %v3065, %v3061
        %v3067 = vrot.slane %v3066, 4
        %v3069 = vshll.u32 %v2678, 16
        %v3071 = vrot.slane %v3069, 5
        %v3072 = vsel %vm453, %v3067, %v3071
        %s3073 = scalar_lea.vmem %s5, 16
        %v3074 = vld [vmem:[%s3073] sm:$0xf]
        %v3075 = vld [vmem:[%s3073 + $0x4] sm:$0xf]
        %v3076 = vld [vmem:[%s3073 + $0x8] sm:$0xf]
        %v3077 = vld [vmem:[%s3073 + $0xc] sm:$0xf]
        %v3078 = vunpack.c.l.b16 %v2702
        %v3079 = vunpack.c.l.b16 %v2712
        %v3080 = vunpack.c.l.b16 %v2726
        %v3081 = vunpack.c.l.b16 %v2736
        %v3082 = vunpack.c.l.b16 %v2750
        %v3083 = vunpack.c.l.b16 %v2760
        %v3084 = vunpack.c.l.b16 %v2774
        %v3085 = vunpack.c.l.b16 %v2784
        %v3086 = vunpack.c.l.b16 %v2798
        %v3087 = vunpack.c.l.b16 %v2808
        %v3088 = vunpack.c.l.b16 %v2822
        %v3089 = vunpack.c.l.b16 %v2832
        %v3090 = vunpack.c.l.b16 %v2846
        %v3091 = vunpack.c.l.b16 %v2856
        %v3092 = vunpack.c.l.b16 %v2870
        %v3093 = vunpack.c.l.b16 %v2880
        %v3094 = vunpack.c.l.b16 %v2894
        %v3095 = vunpack.c.l.b16 %v2904
        %v3096 = vunpack.c.l.b16 %v2918
        %v3097 = vunpack.c.l.b16 %v2928
        %v3098 = vunpack.c.l.b16 %v2942
        %v3099 = vunpack.c.l.b16 %v2952
        %v3100 = vunpack.c.l.b16 %v2966
        %v3101 = vunpack.c.l.b16 %v2976
        %v3102 = vunpack.c.l.b16 %v2990
        %v3103 = vunpack.c.l.b16 %v3000
        %v3104 = vunpack.c.l.b16 %v3014
        %v3105 = vunpack.c.l.b16 %v3024
        %v3106 = vunpack.c.l.b16 %v3038
        %v3107 = vunpack.c.l.b16 %v3048
        %v3108 = vunpack.c.l.b16 %v3062
        %v3109 = vunpack.c.l.b16 %v3072
        %v3110 = vpack.c.b16 %v3079, %v3078
        %v3111 = vpack.c.b16 %v3081, %v3080
        %v3112 = vpack.c.b16 %v3083, %v3082
        %v3113 = vpack.c.b16 %v3085, %v3084
        %v3114 = vpack.c.b16 %v3087, %v3086
        %v3115 = vpack.c.b16 %v3089, %v3088
        %v3116 = vpack.c.b16 %v3091, %v3090
        %v3117 = vpack.c.b16 %v3093, %v3092
        %v3118 = vpack.c.b16 %v3095, %v3094
        %v3119 = vpack.c.b16 %v3097, %v3096
        %v3120 = vpack.c.b16 %v3099, %v3098
        %v3121 = vpack.c.b16 %v3101, %v3100
        %v3122 = vpack.c.b16 %v3103, %v3102
        %v3123 = vpack.c.b16 %v3105, %v3104
        %v3124 = vpack.c.b16 %v3107, %v3106
        %v3125 = vpack.c.b16 %v3109, %v3108
        %v3130 = vunpack.c.l.b16 %v3074
        %v3131 = vunpack.c.l.b16 %v3075
        %v3132 = vunpack.c.l.b16 %v3076
        %v3133 = vunpack.c.l.b16 %v3077
        %v3134 = vpack.c.b16 %v3131, %v3130
        %v3135 = vpack.c.b16 %v3133, %v3132
        %v3139 = vsel %vm903, %v3110, 0
        %v3142 = vsel %vm903, %v3111, 0
        %v3145 = vsel %vm903, %v3112, 0
        %v3148 = vsel %vm903, %v3113, 0
        %v3151 = vsel %vm903, %v3114, 0
        %v3154 = vsel %vm903, %v3115, 0
        %v3157 = vsel %vm903, %v3116, 0
        %v3160 = vsel %vm903, %v3117, 0
        %v3163 = vsel %vm903, %v3118, 0
        %v3166 = vsel %vm903, %v3119, 0
        %v3169 = vsel %vm903, %v3120, 0
        %v3172 = vsel %vm903, %v3121, 0
        %v3175 = vsel %vm903, %v3122, 0
        %v3178 = vsel %vm903, %v3123, 0
        %v3181 = vsel %vm903, %v3124, 0
        %v3184 = vsel %vm903, %v3125, 0
        %3186 = vmatpush.bf16.msra.mxu0 0
        %3187 = vmatpush.bf16.msra.mxu0 0
        %3188 = vmatpush.bf16.msra.mxu0 0
        %3189 = vmatpush.bf16.msra.mxu0 0
        %3190 = vmatpush.bf16.msra.mxu0 0
        %3191 = vmatpush.bf16.msra.mxu0 0
        %3192 = vmatpush.bf16.msra.mxu0 %v3135
        %3193 = vmatpush.bf16.msra.mxu0 %v3134
        %3194 = vmatmul.bf16.gmra.mxu0 %v3139
        %v3195 = vpop.f32.mrf.mxu0
        %v3196 = vadd.f32 0.0, %v3195
        %v3197 = vpop.f32.mrf.mxu0
        %v3198 = vadd.f32 0.0, %v3197
        %3199 = vmatmul.bf16.gmra.mxu0 %v3142
        %v3200 = vpop.f32.mrf.mxu0
        %v3201 = vadd.f32 0.0, %v3200
        %v3202 = vpop.f32.mrf.mxu0
        %v3203 = vadd.f32 0.0, %v3202
        %3204 = vmatmul.bf16.gmra.mxu0 %v3145
        %v3205 = vpop.f32.mrf.mxu0
        %v3206 = vadd.f32 0.0, %v3205
        %v3207 = vpop.f32.mrf.mxu0
        %v3208 = vadd.f32 0.0, %v3207
        %3209 = vmatmul.bf16.gmra.mxu0 %v3148
        %v3210 = vpop.f32.mrf.mxu0
        %v3211 = vadd.f32 0.0, %v3210
        %v3212 = vpop.f32.mrf.mxu0
        %v3213 = vadd.f32 0.0, %v3212
        %3214 = vmatmul.bf16.gmra.mxu0 %v3151
        %v3215 = vpop.f32.mrf.mxu0
        %v3216 = vadd.f32 0.0, %v3215
        %v3217 = vpop.f32.mrf.mxu0
        %v3218 = vadd.f32 0.0, %v3217
        %3219 = vmatmul.bf16.gmra.mxu0 %v3154
        %v3220 = vpop.f32.mrf.mxu0
        %v3221 = vadd.f32 0.0, %v3220
        %v3222 = vpop.f32.mrf.mxu0
        %v3223 = vadd.f32 0.0, %v3222
        %3224 = vmatmul.bf16.gmra.mxu0 %v3157
        %v3225 = vpop.f32.mrf.mxu0
        %v3226 = vadd.f32 0.0, %v3225
        %v3227 = vpop.f32.mrf.mxu0
        %v3228 = vadd.f32 0.0, %v3227
        %3229 = vmatmul.bf16.gmra.mxu0 %v3160
        %v3230 = vpop.f32.mrf.mxu0
        %v3231 = vadd.f32 0.0, %v3230
        %v3232 = vpop.f32.mrf.mxu0
        %v3233 = vadd.f32 0.0, %v3232
        %3234 = vmatmul.bf16.gmra.mxu0 %v3163
        %v3235 = vpop.f32.mrf.mxu0
        %v3236 = vadd.f32 0.0, %v3235
        %v3237 = vpop.f32.mrf.mxu0
        %v3238 = vadd.f32 0.0, %v3237
        %3239 = vmatmul.bf16.gmra.mxu0 %v3166
        %v3240 = vpop.f32.mrf.mxu0
        %v3241 = vadd.f32 0.0, %v3240
        %v3242 = vpop.f32.mrf.mxu0
        %v3243 = vadd.f32 0.0, %v3242
        %3244 = vmatmul.bf16.gmra.mxu0 %v3169
        %v3245 = vpop.f32.mrf.mxu0
        %v3246 = vadd.f32 0.0, %v3245
        %v3247 = vpop.f32.mrf.mxu0
        %v3248 = vadd.f32 0.0, %v3247
        %3249 = vmatmul.bf16.gmra.mxu0 %v3172
        %v3250 = vpop.f32.mrf.mxu0
        %v3251 = vadd.f32 0.0, %v3250
        %v3252 = vpop.f32.mrf.mxu0
        %v3253 = vadd.f32 0.0, %v3252
        %3254 = vmatmul.bf16.gmra.mxu0 %v3175
        %v3255 = vpop.f32.mrf.mxu0
        %v3256 = vadd.f32 0.0, %v3255
        %v3257 = vpop.f32.mrf.mxu0
        %v3258 = vadd.f32 0.0, %v3257
        %3259 = vmatmul.bf16.gmra.mxu0 %v3178
        %v3260 = vpop.f32.mrf.mxu0
        %v3261 = vadd.f32 0.0, %v3260
        %v3262 = vpop.f32.mrf.mxu0
        %v3263 = vadd.f32 0.0, %v3262
        %3264 = vmatmul.bf16.gmra.mxu0 %v3181
        %v3265 = vpop.f32.mrf.mxu0
        %v3266 = vadd.f32 0.0, %v3265
        %v3267 = vpop.f32.mrf.mxu0
        %v3268 = vadd.f32 0.0, %v3267
        %3269 = vmatmul.bf16.gmra.mxu0 %v3184
        %v3270 = vpop.f32.mrf.mxu0
        %v3271 = vadd.f32 0.0, %v3270
        %v3272 = vpop.f32.mrf.mxu0
        %v3273 = vadd.f32 0.0, %v3272
        %3274 = vdwg.mxu0
        %v3307 = vunpack.c.l.b16 %v2631
        %v3308 = vunpack.c.l.b16 %v2632
        %v3309 = vunpack.c.l.b16 %v2634
        %v3310 = vunpack.c.l.b16 %v2635
        %v3311 = vunpack.c.l.b16 %v2637
        %v3312 = vunpack.c.l.b16 %v2638
        %v3313 = vunpack.c.l.b16 %v2640
        %v3314 = vunpack.c.l.b16 %v2641
        %v3315 = vunpack.c.l.b16 %v2643
        %v3316 = vunpack.c.l.b16 %v2644
        %v3317 = vunpack.c.l.b16 %v2646
        %v3318 = vunpack.c.l.b16 %v2647
        %v3319 = vunpack.c.l.b16 %v2649
        %v3320 = vunpack.c.l.b16 %v2650
        %v3321 = vunpack.c.l.b16 %v2652
        %v3322 = vunpack.c.l.b16 %v2653
        %v3323 = vunpack.c.l.b16 %v2655
        %v3324 = vunpack.c.l.b16 %v2656
        %v3325 = vunpack.c.l.b16 %v2658
        %v3326 = vunpack.c.l.b16 %v2659
        %v3327 = vunpack.c.l.b16 %v2661
        %v3328 = vunpack.c.l.b16 %v2662
        %v3329 = vunpack.c.l.b16 %v2664
        %v3330 = vunpack.c.l.b16 %v2665
        %v3331 = vunpack.c.l.b16 %v2667
        %v3332 = vunpack.c.l.b16 %v2668
        %v3333 = vunpack.c.l.b16 %v2670
        %v3334 = vunpack.c.l.b16 %v2671
        %v3335 = vunpack.c.l.b16 %v2673
        %v3336 = vunpack.c.l.b16 %v2674
        %v3337 = vunpack.c.l.b16 %v2676
        %v3338 = vunpack.c.l.b16 %v2677
        %v3339 = vpack.c.b16 %v3308, %v3307
        %v3340 = vpack.c.b16 %v3310, %v3309
        %v3341 = vpack.c.b16 %v3312, %v3311
        %v3342 = vpack.c.b16 %v3314, %v3313
        %v3343 = vpack.c.b16 %v3316, %v3315
        %v3344 = vpack.c.b16 %v3318, %v3317
        %v3345 = vpack.c.b16 %v3320, %v3319
        %v3346 = vpack.c.b16 %v3322, %v3321
        %v3347 = vpack.c.b16 %v3324, %v3323
        %v3348 = vpack.c.b16 %v3326, %v3325
        %v3349 = vpack.c.b16 %v3328, %v3327
        %v3350 = vpack.c.b16 %v3330, %v3329
        %v3351 = vpack.c.b16 %v3332, %v3331
        %v3352 = vpack.c.b16 %v3334, %v3333
        %v3353 = vpack.c.b16 %v3336, %v3335
        %v3354 = vpack.c.b16 %v3338, %v3337
        %v3359 = vunpack.c.l.b16 %v2685
        %v3360 = vunpack.c.l.b16 %v2686
        %v3361 = vunpack.c.l.b16 %v2687
        %v3362 = vunpack.c.l.b16 %v2688
        %v3363 = vpack.c.b16 %v3360, %v3359
        %v3364 = vpack.c.b16 %v3362, %v3361
        %v3368 = vsel %vm903, %v3339, 0
        %v3371 = vsel %vm903, %v3340, 0
        %v3374 = vsel %vm903, %v3341, 0
        %v3377 = vsel %vm903, %v3342, 0
        %v3380 = vsel %vm903, %v3343, 0
        %v3383 = vsel %vm903, %v3344, 0
        %v3386 = vsel %vm903, %v3345, 0
        %v3389 = vsel %vm903, %v3346, 0
        %v3392 = vsel %vm903, %v3347, 0
        %v3395 = vsel %vm903, %v3348, 0
        %v3398 = vsel %vm903, %v3349, 0
        %v3401 = vsel %vm903, %v3350, 0
        %v3404 = vsel %vm903, %v3351, 0
        %v3407 = vsel %vm903, %v3352, 0
        %v3410 = vsel %vm903, %v3353, 0
        %v3413 = vsel %vm903, %v3354, 0
        %3415 = vmatpush.bf16.msra.mxu0 0
        %3416 = vmatpush.bf16.msra.mxu0 0
        %3417 = vmatpush.bf16.msra.mxu0 0
        %3418 = vmatpush.bf16.msra.mxu0 0
        %3419 = vmatpush.bf16.msra.mxu0 0
        %3420 = vmatpush.bf16.msra.mxu0 0
        %3421 = vmatpush.bf16.msra.mxu0 %v3364
        %3422 = vmatpush.bf16.msra.mxu0 %v3363
        %3423 = vmatmul.bf16.gmra.mxu0 %v3368
        %v3424 = vpop.f32.mrf.mxu0
        %v3425 = vadd.f32 %v3196, %v3424
        %v3426 = vpop.f32.mrf.mxu0
        %v3427 = vadd.f32 %v3198, %v3426
        %3428 = vmatmul.bf16.gmra.mxu0 %v3371
        %v3429 = vpop.f32.mrf.mxu0
        %v3430 = vadd.f32 %v3201, %v3429
        %v3431 = vpop.f32.mrf.mxu0
        %v3432 = vadd.f32 %v3203, %v3431
        %3433 = vmatmul.bf16.gmra.mxu0 %v3374
        %v3434 = vpop.f32.mrf.mxu0
        %v3435 = vadd.f32 %v3206, %v3434
        %v3436 = vpop.f32.mrf.mxu0
        %v3437 = vadd.f32 %v3208, %v3436
        %3438 = vmatmul.bf16.gmra.mxu0 %v3377
        %v3439 = vpop.f32.mrf.mxu0
        %v3440 = vadd.f32 %v3211, %v3439
        %v3441 = vpop.f32.mrf.mxu0
        %v3442 = vadd.f32 %v3213, %v3441
        %3443 = vmatmul.bf16.gmra.mxu0 %v3380
        %v3444 = vpop.f32.mrf.mxu0
        %v3445 = vadd.f32 %v3216, %v3444
        %v3446 = vpop.f32.mrf.mxu0
        %v3447 = vadd.f32 %v3218, %v3446
        %3448 = vmatmul.bf16.gmra.mxu0 %v3383
        %v3449 = vpop.f32.mrf.mxu0
        %v3450 = vadd.f32 %v3221, %v3449
        %v3451 = vpop.f32.mrf.mxu0
        %v3452 = vadd.f32 %v3223, %v3451
        %3453 = vmatmul.bf16.gmra.mxu0 %v3386
        %v3454 = vpop.f32.mrf.mxu0
        %v3455 = vadd.f32 %v3226, %v3454
        %v3456 = vpop.f32.mrf.mxu0
        %v3457 = vadd.f32 %v3228, %v3456
        %3458 = vmatmul.bf16.gmra.mxu0 %v3389
        %v3459 = vpop.f32.mrf.mxu0
        %v3460 = vadd.f32 %v3231, %v3459
        %v3461 = vpop.f32.mrf.mxu0
        %v3462 = vadd.f32 %v3233, %v3461
        %3463 = vmatmul.bf16.gmra.mxu0 %v3392
        %v3464 = vpop.f32.mrf.mxu0
        %v3465 = vadd.f32 %v3236, %v3464
        %v3466 = vpop.f32.mrf.mxu0
        %v3467 = vadd.f32 %v3238, %v3466
        %3468 = vmatmul.bf16.gmra.mxu0 %v3395
        %v3469 = vpop.f32.mrf.mxu0
        %v3470 = vadd.f32 %v3241, %v3469
        %v3471 = vpop.f32.mrf.mxu0
        %v3472 = vadd.f32 %v3243, %v3471
        %3473 = vmatmul.bf16.gmra.mxu0 %v3398
        %v3474 = vpop.f32.mrf.mxu0
        %v3475 = vadd.f32 %v3246, %v3474
        %v3476 = vpop.f32.mrf.mxu0
        %v3477 = vadd.f32 %v3248, %v3476
        %3478 = vmatmul.bf16.gmra.mxu0 %v3401
        %v3479 = vpop.f32.mrf.mxu0
        %v3480 = vadd.f32 %v3251, %v3479
        %v3481 = vpop.f32.mrf.mxu0
        %v3482 = vadd.f32 %v3253, %v3481
        %3483 = vmatmul.bf16.gmra.mxu0 %v3404
        %v3484 = vpop.f32.mrf.mxu0
        %v3485 = vadd.f32 %v3256, %v3484
        %v3486 = vpop.f32.mrf.mxu0
        %v3487 = vadd.f32 %v3258, %v3486
        %3488 = vmatmul.bf16.gmra.mxu0 %v3407
        %v3489 = vpop.f32.mrf.mxu0
        %v3490 = vadd.f32 %v3261, %v3489
        %v3491 = vpop.f32.mrf.mxu0
        %v3492 = vadd.f32 %v3263, %v3491
        %3493 = vmatmul.bf16.gmra.mxu0 %v3410
        %v3494 = vpop.f32.mrf.mxu0
        %v3495 = vadd.f32 %v3266, %v3494
        %v3496 = vpop.f32.mrf.mxu0
        %v3497 = vadd.f32 %v3268, %v3496
        %3498 = vmatmul.bf16.gmra.mxu0 %v3413
        %v3499 = vpop.f32.mrf.mxu0
        %v3500 = vadd.f32 %v3271, %v3499
        %v3501 = vpop.f32.mrf.mxu0
        %v3502 = vadd.f32 %v3273, %v3501
        %3503 = vdwg.mxu0
        %v3520 = vrot.slane %v2631, 5
        %v3521 = vrot.slane %v3520, 4
        %v3522 = vrot.slane %v2632, 5
        %v3523 = vsel %vm1288, %v3521, %v3522
        %v3524 = vrot.slane %v3522, 4
        %v3525 = vrot.slane %v2633, 5
        %v3526 = vsel %vm1288, %v3524, %v3525
        %v3527 = vrot.slane %v2634, 5
        %v3528 = vrot.slane %v3527, 4
        %v3529 = vrot.slane %v2635, 5
        %v3530 = vsel %vm1288, %v3528, %v3529
        %v3531 = vrot.slane %v3529, 4
        %v3532 = vrot.slane %v2636, 5
        %v3533 = vsel %vm1288, %v3531, %v3532
        %v3534 = vrot.slane %v2637, 5
        %v3535 = vrot.slane %v3534, 4
        %v3536 = vrot.slane %v2638, 5
        %v3537 = vsel %vm1288, %v3535, %v3536
        %v3538 = vrot.slane %v3536, 4
        %v3539 = vrot.slane %v2639, 5
        %v3540 = vsel %vm1288, %v3538, %v3539
        %v3541 = vrot.slane %v2640, 5
        %v3542 = vrot.slane %v3541, 4
        %v3543 = vrot.slane %v2641, 5
        %v3544 = vsel %vm1288, %v3542, %v3543
        %v3545 = vrot.slane %v3543, 4
        %v3546 = vrot.slane %v2642, 5
        %v3547 = vsel %vm1288, %v3545, %v3546
        %v3548 = vrot.slane %v2643, 5
        %v3549 = vrot.slane %v3548, 4
        %v3550 = vrot.slane %v2644, 5
        %v3551 = vsel %vm1288, %v3549, %v3550
        %v3552 = vrot.slane %v3550, 4
        %v3553 = vrot.slane %v2645, 5
        %v3554 = vsel %vm1288, %v3552, %v3553
        %v3555 = vrot.slane %v2646, 5
        %v3556 = vrot.slane %v3555, 4
        %v3557 = vrot.slane %v2647, 5
        %v3558 = vsel %vm1288, %v3556, %v3557
        %v3559 = vrot.slane %v3557, 4
        %v3560 = vrot.slane %v2648, 5
        %v3561 = vsel %vm1288, %v3559, %v3560
        %v3562 = vrot.slane %v2649, 5
        %v3563 = vrot.slane %v3562, 4
        %v3564 = vrot.slane %v2650, 5
        %v3565 = vsel %vm1288, %v3563, %v3564
        %v3566 = vrot.slane %v3564, 4
        %v3567 = vrot.slane %v2651, 5
        %v3568 = vsel %vm1288, %v3566, %v3567
        %v3569 = vrot.slane %v2652, 5
        %v3570 = vrot.slane %v3569, 4
        %v3571 = vrot.slane %v2653, 5
        %v3572 = vsel %vm1288, %v3570, %v3571
        %v3573 = vrot.slane %v3571, 4
        %v3574 = vrot.slane %v2654, 5
        %v3575 = vsel %vm1288, %v3573, %v3574
        %v3576 = vrot.slane %v2655, 5
        %v3577 = vrot.slane %v3576, 4
        %v3578 = vrot.slane %v2656, 5
        %v3579 = vsel %vm1288, %v3577, %v3578
        %v3580 = vrot.slane %v3578, 4
        %v3581 = vrot.slane %v2657, 5
        %v3582 = vsel %vm1288, %v3580, %v3581
        %v3583 = vrot.slane %v2658, 5
        %v3584 = vrot.slane %v3583, 4
        %v3585 = vrot.slane %v2659, 5
        %v3586 = vsel %vm1288, %v3584, %v3585
        %v3587 = vrot.slane %v3585, 4
        %v3588 = vrot.slane %v2660, 5
        %v3589 = vsel %vm1288, %v3587, %v3588
        %v3590 = vrot.slane %v2661, 5
        %v3591 = vrot.slane %v3590, 4
        %v3592 = vrot.slane %v2662, 5
        %v3593 = vsel %vm1288, %v3591, %v3592
        %v3594 = vrot.slane %v3592, 4
        %v3595 = vrot.slane %v2663, 5
        %v3596 = vsel %vm1288, %v3594, %v3595
        %v3597 = vrot.slane %v2664, 5
        %v3598 = vrot.slane %v3597, 4
        %v3599 = vrot.slane %v2665, 5
        %v3600 = vsel %vm1288, %v3598, %v3599
        %v3601 = vrot.slane %v3599, 4
        %v3602 = vrot.slane %v2666, 5
        %v3603 = vsel %vm1288, %v3601, %v3602
        %v3604 = vrot.slane %v2667, 5
        %v3605 = vrot.slane %v3604, 4
        %v3606 = vrot.slane %v2668, 5
        %v3607 = vsel %vm1288, %v3605, %v3606
        %v3608 = vrot.slane %v3606, 4
        %v3609 = vrot.slane %v2669, 5
        %v3610 = vsel %vm1288, %v3608, %v3609
        %v3611 = vrot.slane %v2670, 5
        %v3612 = vrot.slane %v3611, 4
        %v3613 = vrot.slane %v2671, 5
        %v3614 = vsel %vm1288, %v3612, %v3613
        %v3615 = vrot.slane %v3613, 4
        %v3616 = vrot.slane %v2672, 5
        %v3617 = vsel %vm1288, %v3615, %v3616
        %v3618 = vrot.slane %v2673, 5
        %v3619 = vrot.slane %v3618, 4
        %v3620 = vrot.slane %v2674, 5
        %v3621 = vsel %vm1288, %v3619, %v3620
        %v3622 = vrot.slane %v3620, 4
        %v3623 = vrot.slane %v2675, 5
        %v3624 = vsel %vm1288, %v3622, %v3623
        %v3625 = vrot.slane %v2676, 5
        %v3626 = vrot.slane %v3625, 4
        %v3627 = vrot.slane %v2677, 5
        %v3628 = vsel %vm1288, %v3626, %v3627
        %v3629 = vrot.slane %v3627, 4
        %v3630 = vrot.slane %v2678, 5
        %v3631 = vsel %vm1288, %v3629, %v3630
        %s3632 = scalar_lea.vmem %s5, 32
        %v3633 = vld [vmem:[%s3632] sm:$0xf]
        %v3634 = vld [vmem:[%s3632 + $0x4] sm:$0xf]
        %v3635 = vld [vmem:[%s3632 + $0x8] sm:$0xf]
        %v3636 = vld [vmem:[%s3632 + $0xc] sm:$0xf]
        %v3637 = vunpack.c.l.b16 %v3523
        %v3638 = vunpack.c.l.b16 %v3526
        %v3639 = vunpack.c.l.b16 %v3530
        %v3640 = vunpack.c.l.b16 %v3533
        %v3641 = vunpack.c.l.b16 %v3537
        %v3642 = vunpack.c.l.b16 %v3540
        %v3643 = vunpack.c.l.b16 %v3544
        %v3644 = vunpack.c.l.b16 %v3547
        %v3645 = vunpack.c.l.b16 %v3551
        %v3646 = vunpack.c.l.b16 %v3554
        %v3647 = vunpack.c.l.b16 %v3558
        %v3648 = vunpack.c.l.b16 %v3561
        %v3649 = vunpack.c.l.b16 %v3565
        %v3650 = vunpack.c.l.b16 %v3568
        %v3651 = vunpack.c.l.b16 %v3572
        %v3652 = vunpack.c.l.b16 %v3575
        %v3653 = vunpack.c.l.b16 %v3579
        %v3654 = vunpack.c.l.b16 %v3582
        %v3655 = vunpack.c.l.b16 %v3586
        %v3656 = vunpack.c.l.b16 %v3589
        %v3657 = vunpack.c.l.b16 %v3593
        %v3658 = vunpack.c.l.b16 %v3596
        %v3659 = vunpack.c.l.b16 %v3600
        %v3660 = vunpack.c.l.b16 %v3603
        %v3661 = vunpack.c.l.b16 %v3607
        %v3662 = vunpack.c.l.b16 %v3610
        %v3663 = vunpack.c.l.b16 %v3614
        %v3664 = vunpack.c.l.b16 %v3617
        %v3665 = vunpack.c.l.b16 %v3621
        %v3666 = vunpack.c.l.b16 %v3624
        %v3667 = vunpack.c.l.b16 %v3628
        %v3668 = vunpack.c.l.b16 %v3631
        %v3669 = vpack.c.b16 %v3638, %v3637
        %v3670 = vpack.c.b16 %v3640, %v3639
        %v3671 = vpack.c.b16 %v3642, %v3641
        %v3672 = vpack.c.b16 %v3644, %v3643
        %v3673 = vpack.c.b16 %v3646, %v3645
        %v3674 = vpack.c.b16 %v3648, %v3647
        %v3675 = vpack.c.b16 %v3650, %v3649
        %v3676 = vpack.c.b16 %v3652, %v3651
        %v3677 = vpack.c.b16 %v3654, %v3653
        %v3678 = vpack.c.b16 %v3656, %v3655
        %v3679 = vpack.c.b16 %v3658, %v3657
        %v3680 = vpack.c.b16 %v3660, %v3659
        %v3681 = vpack.c.b16 %v3662, %v3661
        %v3682 = vpack.c.b16 %v3664, %v3663
        %v3683 = vpack.c.b16 %v3666, %v3665
        %v3684 = vpack.c.b16 %v3668, %v3667
        %v3689 = vunpack.c.l.b16 %v3633
        %v3690 = vunpack.c.l.b16 %v3634
        %v3691 = vunpack.c.l.b16 %v3635
        %v3692 = vunpack.c.l.b16 %v3636
        %v3693 = vpack.c.b16 %v3690, %v3689
        %v3694 = vpack.c.b16 %v3692, %v3691
        %v3698 = vsel %vm903, %v3669, 0
        %v3701 = vsel %vm903, %v3670, 0
        %v3704 = vsel %vm903, %v3671, 0
        %v3707 = vsel %vm903, %v3672, 0
        %v3710 = vsel %vm903, %v3673, 0
        %v3713 = vsel %vm903, %v3674, 0
        %v3716 = vsel %vm903, %v3675, 0
        %v3719 = vsel %vm903, %v3676, 0
        %v3722 = vsel %vm903, %v3677, 0
        %v3725 = vsel %vm903, %v3678, 0
        %v3728 = vsel %vm903, %v3679, 0
        %v3731 = vsel %vm903, %v3680, 0
        %v3734 = vsel %vm903, %v3681, 0
        %v3737 = vsel %vm903, %v3682, 0
        %v3740 = vsel %vm903, %v3683, 0
        %v3743 = vsel %vm903, %v3684, 0
        %3745 = vmatpush.bf16.msra.mxu0 0
        %3746 = vmatpush.bf16.msra.mxu0 0
        %3747 = vmatpush.bf16.msra.mxu0 0
        %3748 = vmatpush.bf16.msra.mxu0 0
        %3749 = vmatpush.bf16.msra.mxu0 0
        %3750 = vmatpush.bf16.msra.mxu0 0
        %3751 = vmatpush.bf16.msra.mxu0 %v3694
        %3752 = vmatpush.bf16.msra.mxu0 %v3693
        %3753 = vmatmul.bf16.gmra.mxu0 %v3698
        %v3754 = vpop.f32.mrf.mxu0
        %v3755 = vadd.f32 0.0, %v3754
        %v3756 = vpop.f32.mrf.mxu0
        %v3757 = vadd.f32 0.0, %v3756
        %3758 = vmatmul.bf16.gmra.mxu0 %v3701
        %v3759 = vpop.f32.mrf.mxu0
        %v3760 = vadd.f32 0.0, %v3759
        %v3761 = vpop.f32.mrf.mxu0
        %v3762 = vadd.f32 0.0, %v3761
        %3763 = vmatmul.bf16.gmra.mxu0 %v3704
        %v3764 = vpop.f32.mrf.mxu0
        %v3765 = vadd.f32 0.0, %v3764
        %v3766 = vpop.f32.mrf.mxu0
        %v3767 = vadd.f32 0.0, %v3766
        %3768 = vmatmul.bf16.gmra.mxu0 %v3707
        %v3769 = vpop.f32.mrf.mxu0
        %v3770 = vadd.f32 0.0, %v3769
        %v3771 = vpop.f32.mrf.mxu0
        %v3772 = vadd.f32 0.0, %v3771
        %3773 = vmatmul.bf16.gmra.mxu0 %v3710
        %v3774 = vpop.f32.mrf.mxu0
        %v3775 = vadd.f32 0.0, %v3774
        %v3776 = vpop.f32.mrf.mxu0
        %v3777 = vadd.f32 0.0, %v3776
        %3778 = vmatmul.bf16.gmra.mxu0 %v3713
        %v3779 = vpop.f32.mrf.mxu0
        %v3780 = vadd.f32 0.0, %v3779
        %v3781 = vpop.f32.mrf.mxu0
        %v3782 = vadd.f32 0.0, %v3781
        %3783 = vmatmul.bf16.gmra.mxu0 %v3716
        %v3784 = vpop.f32.mrf.mxu0
        %v3785 = vadd.f32 0.0, %v3784
        %v3786 = vpop.f32.mrf.mxu0
        %v3787 = vadd.f32 0.0, %v3786
        %3788 = vmatmul.bf16.gmra.mxu0 %v3719
        %v3789 = vpop.f32.mrf.mxu0
        %v3790 = vadd.f32 0.0, %v3789
        %v3791 = vpop.f32.mrf.mxu0
        %v3792 = vadd.f32 0.0, %v3791
        %3793 = vmatmul.bf16.gmra.mxu0 %v3722
        %v3794 = vpop.f32.mrf.mxu0
        %v3795 = vadd.f32 0.0, %v3794
        %v3796 = vpop.f32.mrf.mxu0
        %v3797 = vadd.f32 0.0, %v3796
        %3798 = vmatmul.bf16.gmra.mxu0 %v3725
        %v3799 = vpop.f32.mrf.mxu0
        %v3800 = vadd.f32 0.0, %v3799
        %v3801 = vpop.f32.mrf.mxu0
        %v3802 = vadd.f32 0.0, %v3801
        %3803 = vmatmul.bf16.gmra.mxu0 %v3728
        %v3804 = vpop.f32.mrf.mxu0
        %v3805 = vadd.f32 0.0, %v3804
        %v3806 = vpop.f32.mrf.mxu0
        %v3807 = vadd.f32 0.0, %v3806
        %3808 = vmatmul.bf16.gmra.mxu0 %v3731
        %v3809 = vpop.f32.mrf.mxu0
        %v3810 = vadd.f32 0.0, %v3809
        %v3811 = vpop.f32.mrf.mxu0
        %v3812 = vadd.f32 0.0, %v3811
        %3813 = vmatmul.bf16.gmra.mxu0 %v3734
        %v3814 = vpop.f32.mrf.mxu0
        %v3815 = vadd.f32 0.0, %v3814
        %v3816 = vpop.f32.mrf.mxu0
        %v3817 = vadd.f32 0.0, %v3816
        %3818 = vmatmul.bf16.gmra.mxu0 %v3737
        %v3819 = vpop.f32.mrf.mxu0
        %v3820 = vadd.f32 0.0, %v3819
        %v3821 = vpop.f32.mrf.mxu0
        %v3822 = vadd.f32 0.0, %v3821
        %3823 = vmatmul.bf16.gmra.mxu0 %v3740
        %v3824 = vpop.f32.mrf.mxu0
        %v3825 = vadd.f32 0.0, %v3824
        %v3826 = vpop.f32.mrf.mxu0
        %v3827 = vadd.f32 0.0, %v3826
        %3828 = vmatmul.bf16.gmra.mxu0 %v3743
        %v3829 = vpop.f32.mrf.mxu0
        %v3830 = vadd.f32 0.0, %v3829
        %v3831 = vpop.f32.mrf.mxu0
        %v3832 = vadd.f32 0.0, %v3831
        %3833 = vdwg.mxu0
        %v3834 = vadd.f32 %v3425, %v3755
        %v3835 = vadd.f32 %v3427, %v3757
        %v3836 = vadd.f32 %v3430, %v3760
        %v3837 = vadd.f32 %v3432, %v3762
        %v3838 = vadd.f32 %v3435, %v3765
        %v3839 = vadd.f32 %v3437, %v3767
        %v3840 = vadd.f32 %v3440, %v3770
        %v3841 = vadd.f32 %v3442, %v3772
        %v3842 = vadd.f32 %v3445, %v3775
        %v3843 = vadd.f32 %v3447, %v3777
        %v3844 = vadd.f32 %v3450, %v3780
        %v3845 = vadd.f32 %v3452, %v3782
        %v3846 = vadd.f32 %v3455, %v3785
        %v3847 = vadd.f32 %v3457, %v3787
        %v3848 = vadd.f32 %v3460, %v3790
        %v3849 = vadd.f32 %v3462, %v3792
        %v3850 = vadd.f32 %v3465, %v3795
        %v3851 = vadd.f32 %v3467, %v3797
        %v3852 = vadd.f32 %v3470, %v3800
        %v3853 = vadd.f32 %v3472, %v3802
        %v3854 = vadd.f32 %v3475, %v3805
        %v3855 = vadd.f32 %v3477, %v3807
        %v3856 = vadd.f32 %v3480, %v3810
        %v3857 = vadd.f32 %v3482, %v3812
        %v3858 = vadd.f32 %v3485, %v3815
        %v3859 = vadd.f32 %v3487, %v3817
        %v3860 = vadd.f32 %v3490, %v3820
        %v3861 = vadd.f32 %v3492, %v3822
        %v3862 = vadd.f32 %v3495, %v3825
        %v3863 = vadd.f32 %v3497, %v3827
        %v3864 = vadd.f32 %v3500, %v3830
        %v3865 = vadd.f32 %v3502, %v3832
        %s3866 = scalar_lea.vmem %s5, 48
        %v3867 = vld [vmem:[%s3866] sm:$0xf]
        %v3868 = vld [vmem:[%s3866 + $0x4] sm:$0xf]
        %v3869 = vld [vmem:[%s3866 + $0x8] sm:$0xf]
        %v3870 = vld [vmem:[%s3866 + $0xc] sm:$0xf]
        %v3873 = vunpack.c.l.b16 %v2679
        %v3874 = vunpack.c.l.b16 %v2680
        %v3875 = vpack.c.b16 %v3874, %v3873
        %v3880 = vunpack.c.l.b16 %v3867
        %v3881 = vunpack.c.l.b16 %v3868
        %v3882 = vunpack.c.l.b16 %v3869
        %v3883 = vunpack.c.l.b16 %v3870
        %v3884 = vpack.c.b16 %v3881, %v3880
        %v3885 = vpack.c.b16 %v3883, %v3882
        %v3889 = vsel %vm903, %v3875, 0
        %3891 = vmatpush.bf16.msra.mxu0 0
        %3892 = vmatpush.bf16.msra.mxu0 0
        %3893 = vmatpush.bf16.msra.mxu0 0
        %3894 = vmatpush.bf16.msra.mxu0 0
        %3895 = vmatpush.bf16.msra.mxu0 0
        %3896 = vmatpush.bf16.msra.mxu0 0
        %3897 = vmatpush.bf16.msra.mxu0 %v3885
        %3898 = vmatpush.bf16.msra.mxu0 %v3884
        %3899 = vmatmul.bf16.gmra.mxu0 %v3371
        %v3900 = vpop.f32.mrf.mxu0
        %v3901 = vadd.f32 0.0, %v3900
        %v3902 = vpop.f32.mrf.mxu0
        %v3903 = vadd.f32 0.0, %v3902
        %3904 = vmatmul.bf16.gmra.mxu0 %v3374
        %v3905 = vpop.f32.mrf.mxu0
        %v3906 = vadd.f32 0.0, %v3905
        %v3907 = vpop.f32.mrf.mxu0
        %v3908 = vadd.f32 0.0, %v3907
        %3909 = vmatmul.bf16.gmra.mxu0 %v3377
        %v3910 = vpop.f32.mrf.mxu0
        %v3911 = vadd.f32 0.0, %v3910
        %v3912 = vpop.f32.mrf.mxu0
        %v3913 = vadd.f32 0.0, %v3912
        %3914 = vmatmul.bf16.gmra.mxu0 %v3380
        %v3915 = vpop.f32.mrf.mxu0
        %v3916 = vadd.f32 0.0, %v3915
        %v3917 = vpop.f32.mrf.mxu0
        %v3918 = vadd.f32 0.0, %v3917
        %3919 = vmatmul.bf16.gmra.mxu0 %v3383
        %v3920 = vpop.f32.mrf.mxu0
        %v3921 = vadd.f32 0.0, %v3920
        %v3922 = vpop.f32.mrf.mxu0
        %v3923 = vadd.f32 0.0, %v3922
        %3924 = vmatmul.bf16.gmra.mxu0 %v3386
        %v3925 = vpop.f32.mrf.mxu0
        %v3926 = vadd.f32 0.0, %v3925
        %v3927 = vpop.f32.mrf.mxu0
        %v3928 = vadd.f32 0.0, %v3927
        %3929 = vmatmul.bf16.gmra.mxu0 %v3389
        %v3930 = vpop.f32.mrf.mxu0
        %v3931 = vadd.f32 0.0, %v3930
        %v3932 = vpop.f32.mrf.mxu0
        %v3933 = vadd.f32 0.0, %v3932
        %3934 = vmatmul.bf16.gmra.mxu0 %v3392
        %v3935 = vpop.f32.mrf.mxu0
        %v3936 = vadd.f32 0.0, %v3935
        %v3937 = vpop.f32.mrf.mxu0
        %v3938 = vadd.f32 0.0, %v3937
        %3939 = vmatmul.bf16.gmra.mxu0 %v3395
        %v3940 = vpop.f32.mrf.mxu0
        %v3941 = vadd.f32 0.0, %v3940
        %v3942 = vpop.f32.mrf.mxu0
        %v3943 = vadd.f32 0.0, %v3942
        %3944 = vmatmul.bf16.gmra.mxu0 %v3398
        %v3945 = vpop.f32.mrf.mxu0
        %v3946 = vadd.f32 0.0, %v3945
        %v3947 = vpop.f32.mrf.mxu0
        %v3948 = vadd.f32 0.0, %v3947
        %3949 = vmatmul.bf16.gmra.mxu0 %v3401
        %v3950 = vpop.f32.mrf.mxu0
        %v3951 = vadd.f32 0.0, %v3950
        %v3952 = vpop.f32.mrf.mxu0
        %v3953 = vadd.f32 0.0, %v3952
        %3954 = vmatmul.bf16.gmra.mxu0 %v3404
        %v3955 = vpop.f32.mrf.mxu0
        %v3956 = vadd.f32 0.0, %v3955
        %v3957 = vpop.f32.mrf.mxu0
        %v3958 = vadd.f32 0.0, %v3957
        %3959 = vmatmul.bf16.gmra.mxu0 %v3407
        %v3960 = vpop.f32.mrf.mxu0
        %v3961 = vadd.f32 0.0, %v3960
        %v3962 = vpop.f32.mrf.mxu0
        %v3963 = vadd.f32 0.0, %v3962
        %3964 = vmatmul.bf16.gmra.mxu0 %v3410
        %v3965 = vpop.f32.mrf.mxu0
        %v3966 = vadd.f32 0.0, %v3965
        %v3967 = vpop.f32.mrf.mxu0
        %v3968 = vadd.f32 0.0, %v3967
        %3969 = vmatmul.bf16.gmra.mxu0 %v3413
        %v3970 = vpop.f32.mrf.mxu0
        %v3971 = vadd.f32 0.0, %v3970
        %v3972 = vpop.f32.mrf.mxu0
        %v3973 = vadd.f32 0.0, %v3972
        %3974 = vmatmul.bf16.gmra.mxu0 %v3889
        %v3975 = vpop.f32.mrf.mxu0
        %v3976 = vadd.f32 0.0, %v3975
        %v3977 = vpop.f32.mrf.mxu0
        %v3978 = vadd.f32 0.0, %v3977
        %3979 = vdwg.mxu0
        %v3980 = vadd.f32 %v3834, %v3901
        %v3981 = vadd.f32 %v3835, %v3903
        %v3982 = vadd.f32 %v3836, %v3906
        %v3983 = vadd.f32 %v3837, %v3908
        %v3984 = vadd.f32 %v3838, %v3911
        %v3985 = vadd.f32 %v3839, %v3913
        %v3986 = vadd.f32 %v3840, %v3916
        %v3987 = vadd.f32 %v3841, %v3918
        %v3988 = vadd.f32 %v3842, %v3921
        %v3989 = vadd.f32 %v3843, %v3923
        %v3990 = vadd.f32 %v3844, %v3926
        %v3991 = vadd.f32 %v3845, %v3928
        %v3992 = vadd.f32 %v3846, %v3931
        %v3993 = vadd.f32 %v3847, %v3933
        %v3994 = vadd.f32 %v3848, %v3936
        %v3995 = vadd.f32 %v3849, %v3938
        %v3996 = vadd.f32 %v3850, %v3941
        %v3997 = vadd.f32 %v3851, %v3943
        %v3998 = vadd.f32 %v3852, %v3946
        %v3999 = vadd.f32 %v3853, %v3948
        %v4000 = vadd.f32 %v3854, %v3951
        %v4001 = vadd.f32 %v3855, %v3953
        %v4002 = vadd.f32 %v3856, %v3956
        %v4003 = vadd.f32 %v3857, %v3958
        %v4004 = vadd.f32 %v3858, %v3961
        %v4005 = vadd.f32 %v3859, %v3963
        %v4006 = vadd.f32 %v3860, %v3966
        %v4007 = vadd.f32 %v3861, %v3968
        %v4008 = vadd.f32 %v3862, %v3971
        %v4009 = vadd.f32 %v3863, %v3973
        %v4010 = vadd.f32 %v3864, %v3976
        %v4011 = vadd.f32 %v3865, %v3978
        %v4013 = vshrl.u32 %v2679, 16
        %v4015 = vrot.slane %v4013, 4
        %v4016 = vshll.u32 %v2679, 16
        %v4018 = vrot.slane %v4016, 5
        %v4019 = vor.u32 %v4015, %v4018
        %v4020 = vrot.slane %v4019, 4
        %v4022 = vshll.u32 %v2680, 16
        %v4024 = vrot.slane %v4022, 5
        %v4025 = vsel %vm453, %v4020, %v4024
        %v4026 = vshrl.u32 %v2680, 16
        %v4028 = vrot.slane %v4026, 4
        %v4029 = vor.u32 %v4028, %v4024
        %v4030 = vrot.slane %v4029, 4
        %v4032 = vshll.u32 %v2681, 16
        %v4034 = vrot.slane %v4032, 5
        %v4035 = vsel %vm453, %v4030, %v4034
        %s4036 = scalar_lea.vmem %s5, 64
        %v4037 = vld [vmem:[%s4036] sm:$0xf]
        %v4038 = vld [vmem:[%s4036 + $0x4] sm:$0xf]
        %v4039 = vld [vmem:[%s4036 + $0x8] sm:$0xf]
        %v4040 = vld [vmem:[%s4036 + $0xc] sm:$0xf]
        %v4041 = vunpack.c.l.b16 %v4025
        %v4042 = vunpack.c.l.b16 %v4035
        %v4043 = vpack.c.b16 %v4042, %v4041
        %v4048 = vunpack.c.l.b16 %v4037
        %v4049 = vunpack.c.l.b16 %v4038
        %v4050 = vunpack.c.l.b16 %v4039
        %v4051 = vunpack.c.l.b16 %v4040
        %v4052 = vpack.c.b16 %v4049, %v4048
        %v4053 = vpack.c.b16 %v4051, %v4050
        %v4057 = vsel %vm903, %v4043, 0
        %4059 = vmatpush.bf16.msra.mxu0 0
        %4060 = vmatpush.bf16.msra.mxu0 0
        %4061 = vmatpush.bf16.msra.mxu0 0
        %4062 = vmatpush.bf16.msra.mxu0 0
        %4063 = vmatpush.bf16.msra.mxu0 0
        %4064 = vmatpush.bf16.msra.mxu0 0
        %4065 = vmatpush.bf16.msra.mxu0 %v4053
        %4066 = vmatpush.bf16.msra.mxu0 %v4052
        %4067 = vmatmul.bf16.gmra.mxu0 %v3142
        %v4068 = vpop.f32.mrf.mxu0
        %v4069 = vadd.f32 0.0, %v4068
        %v4070 = vpop.f32.mrf.mxu0
        %v4071 = vadd.f32 0.0, %v4070
        %4072 = vmatmul.bf16.gmra.mxu0 %v3145
        %v4073 = vpop.f32.mrf.mxu0
        %v4074 = vadd.f32 0.0, %v4073
        %v4075 = vpop.f32.mrf.mxu0
        %v4076 = vadd.f32 0.0, %v4075
        %4077 = vmatmul.bf16.gmra.mxu0 %v3148
        %v4078 = vpop.f32.mrf.mxu0
        %v4079 = vadd.f32 0.0, %v4078
        %v4080 = vpop.f32.mrf.mxu0
        %v4081 = vadd.f32 0.0, %v4080
        %4082 = vmatmul.bf16.gmra.mxu0 %v3151
        %v4083 = vpop.f32.mrf.mxu0
        %v4084 = vadd.f32 0.0, %v4083
        %v4085 = vpop.f32.mrf.mxu0
        %v4086 = vadd.f32 0.0, %v4085
        %4087 = vmatmul.bf16.gmra.mxu0 %v3154
        %v4088 = vpop.f32.mrf.mxu0
        %v4089 = vadd.f32 0.0, %v4088
        %v4090 = vpop.f32.mrf.mxu0
        %v4091 = vadd.f32 0.0, %v4090
        %4092 = vmatmul.bf16.gmra.mxu0 %v3157
        %v4093 = vpop.f32.mrf.mxu0
        %v4094 = vadd.f32 0.0, %v4093
        %v4095 = vpop.f32.mrf.mxu0
        %v4096 = vadd.f32 0.0, %v4095
        %4097 = vmatmul.bf16.gmra.mxu0 %v3160
        %v4098 = vpop.f32.mrf.mxu0
        %v4099 = vadd.f32 0.0, %v4098
        %v4100 = vpop.f32.mrf.mxu0
        %v4101 = vadd.f32 0.0, %v4100
        %4102 = vmatmul.bf16.gmra.mxu0 %v3163
        %v4103 = vpop.f32.mrf.mxu0
        %v4104 = vadd.f32 0.0, %v4103
        %v4105 = vpop.f32.mrf.mxu0
        %v4106 = vadd.f32 0.0, %v4105
        %4107 = vmatmul.bf16.gmra.mxu0 %v3166
        %v4108 = vpop.f32.mrf.mxu0
        %v4109 = vadd.f32 0.0, %v4108
        %v4110 = vpop.f32.mrf.mxu0
        %v4111 = vadd.f32 0.0, %v4110
        %4112 = vmatmul.bf16.gmra.mxu0 %v3169
        %v4113 = vpop.f32.mrf.mxu0
        %v4114 = vadd.f32 0.0, %v4113
        %v4115 = vpop.f32.mrf.mxu0
        %v4116 = vadd.f32 0.0, %v4115
        %4117 = vmatmul.bf16.gmra.mxu0 %v3172
        %v4118 = vpop.f32.mrf.mxu0
        %v4119 = vadd.f32 0.0, %v4118
        %v4120 = vpop.f32.mrf.mxu0
        %v4121 = vadd.f32 0.0, %v4120
        %4122 = vmatmul.bf16.gmra.mxu0 %v3175
        %v4123 = vpop.f32.mrf.mxu0
        %v4124 = vadd.f32 0.0, %v4123
        %v4125 = vpop.f32.mrf.mxu0
        %v4126 = vadd.f32 0.0, %v4125
        %4127 = vmatmul.bf16.gmra.mxu0 %v3178
        %v4128 = vpop.f32.mrf.mxu0
        %v4129 = vadd.f32 0.0, %v4128
        %v4130 = vpop.f32.mrf.mxu0
        %v4131 = vadd.f32 0.0, %v4130
        %4132 = vmatmul.bf16.gmra.mxu0 %v3181
        %v4133 = vpop.f32.mrf.mxu0
        %v4134 = vadd.f32 0.0, %v4133
        %v4135 = vpop.f32.mrf.mxu0
        %v4136 = vadd.f32 0.0, %v4135
        %4137 = vmatmul.bf16.gmra.mxu0 %v3184
        %v4138 = vpop.f32.mrf.mxu0
        %v4139 = vadd.f32 0.0, %v4138
        %v4140 = vpop.f32.mrf.mxu0
        %v4141 = vadd.f32 0.0, %v4140
        %4142 = vmatmul.bf16.gmra.mxu0 %v4057
        %v4143 = vpop.f32.mrf.mxu0
        %v4144 = vadd.f32 0.0, %v4143
        %v4145 = vpop.f32.mrf.mxu0
        %v4146 = vadd.f32 0.0, %v4145
        %4147 = vdwg.mxu0
        %v4148 = vadd.f32 %v3980, %v4069
        %v4149 = vadd.f32 %v3981, %v4071
        %v4150 = vadd.f32 %v3982, %v4074
        %v4151 = vadd.f32 %v3983, %v4076
        %v4152 = vadd.f32 %v3984, %v4079
        %v4153 = vadd.f32 %v3985, %v4081
        %v4154 = vadd.f32 %v3986, %v4084
        %v4155 = vadd.f32 %v3987, %v4086
        %v4156 = vadd.f32 %v3988, %v4089
        %v4157 = vadd.f32 %v3989, %v4091
        %v4158 = vadd.f32 %v3990, %v4094
        %v4159 = vadd.f32 %v3991, %v4096
        %v4160 = vadd.f32 %v3992, %v4099
        %v4161 = vadd.f32 %v3993, %v4101
        %v4162 = vadd.f32 %v3994, %v4104
        %v4163 = vadd.f32 %v3995, %v4106
        %v4164 = vadd.f32 %v3996, %v4109
        %v4165 = vadd.f32 %v3997, %v4111
        %v4166 = vadd.f32 %v3998, %v4114
        %v4167 = vadd.f32 %v3999, %v4116
        %v4168 = vadd.f32 %v4000, %v4119
        %v4169 = vadd.f32 %v4001, %v4121
        %v4170 = vadd.f32 %v4002, %v4124
        %v4171 = vadd.f32 %v4003, %v4126
        %v4172 = vadd.f32 %v4004, %v4129
        %v4173 = vadd.f32 %v4005, %v4131
        %v4174 = vadd.f32 %v4006, %v4134
        %v4175 = vadd.f32 %v4007, %v4136
        %v4176 = vadd.f32 %v4008, %v4139
        %v4177 = vadd.f32 %v4009, %v4141
        %v4178 = vadd.f32 %v4010, %v4144
        %v4179 = vadd.f32 %v4011, %v4146
        %v4181 = vrot.slane %v2679, 5
        %v4182 = vrot.slane %v4181, 4
        %v4183 = vrot.slane %v2680, 5
        %v4184 = vsel %vm1288, %v4182, %v4183
        %v4185 = vrot.slane %v4183, 4
        %v4186 = vrot.slane %v2681, 5
        %v4187 = vsel %vm1288, %v4185, %v4186
        %s4188 = scalar_lea.vmem %s5, 80
        %v4189 = vld [vmem:[%s4188] sm:$0xf]
        %v4190 = vld [vmem:[%s4188 + $0x4] sm:$0xf]
        %v4191 = vld [vmem:[%s4188 + $0x8] sm:$0xf]
        %v4192 = vld [vmem:[%s4188 + $0xc] sm:$0xf]
        %v4193 = vunpack.c.l.b16 %v4184
        %v4194 = vunpack.c.l.b16 %v4187
        %v4195 = vpack.c.b16 %v4194, %v4193
        %v4200 = vunpack.c.l.b16 %v4189
        %v4201 = vunpack.c.l.b16 %v4190
        %v4202 = vunpack.c.l.b16 %v4191
        %v4203 = vunpack.c.l.b16 %v4192
        %v4204 = vpack.c.b16 %v4201, %v4200
        %v4205 = vpack.c.b16 %v4203, %v4202
        %v4209 = vsel %vm903, %v4195, 0
        %4211 = vmatpush.bf16.msra.mxu0 0
        %4212 = vmatpush.bf16.msra.mxu0 0
        %4213 = vmatpush.bf16.msra.mxu0 0
        %4214 = vmatpush.bf16.msra.mxu0 0
        %4215 = vmatpush.bf16.msra.mxu0 0
        %4216 = vmatpush.bf16.msra.mxu0 0
        %4217 = vmatpush.bf16.msra.mxu0 %v4205
        %4218 = vmatpush.bf16.msra.mxu0 %v4204
        %4219 = vmatmul.bf16.gmra.mxu0 %v3701
        %v4220 = vpop.f32.mrf.mxu0
        %v4221 = vadd.f32 0.0, %v4220
        %v4222 = vpop.f32.mrf.mxu0
        %v4223 = vadd.f32 0.0, %v4222
        %4224 = vmatmul.bf16.gmra.mxu0 %v3704
        %v4225 = vpop.f32.mrf.mxu0
        %v4226 = vadd.f32 0.0, %v4225
        %v4227 = vpop.f32.mrf.mxu0
        %v4228 = vadd.f32 0.0, %v4227
        %4229 = vmatmul.bf16.gmra.mxu0 %v3707
        %v4230 = vpop.f32.mrf.mxu0
        %v4231 = vadd.f32 0.0, %v4230
        %v4232 = vpop.f32.mrf.mxu0
        %v4233 = vadd.f32 0.0, %v4232
        %4234 = vmatmul.bf16.gmra.mxu0 %v3710
        %v4235 = vpop.f32.mrf.mxu0
        %v4236 = vadd.f32 0.0, %v4235
        %v4237 = vpop.f32.mrf.mxu0
        %v4238 = vadd.f32 0.0, %v4237
        %4239 = vmatmul.bf16.gmra.mxu0 %v3713
        %v4240 = vpop.f32.mrf.mxu0
        %v4241 = vadd.f32 0.0, %v4240
        %v4242 = vpop.f32.mrf.mxu0
        %v4243 = vadd.f32 0.0, %v4242
        %4244 = vmatmul.bf16.gmra.mxu0 %v3716
        %v4245 = vpop.f32.mrf.mxu0
        %v4246 = vadd.f32 0.0, %v4245
        %v4247 = vpop.f32.mrf.mxu0
        %v4248 = vadd.f32 0.0, %v4247
        %4249 = vmatmul.bf16.gmra.mxu0 %v3719
        %v4250 = vpop.f32.mrf.mxu0
        %v4251 = vadd.f32 0.0, %v4250
        %v4252 = vpop.f32.mrf.mxu0
        %v4253 = vadd.f32 0.0, %v4252
        %4254 = vmatmul.bf16.gmra.mxu0 %v3722
        %v4255 = vpop.f32.mrf.mxu0
        %v4256 = vadd.f32 0.0, %v4255
        %v4257 = vpop.f32.mrf.mxu0
        %v4258 = vadd.f32 0.0, %v4257
        %4259 = vmatmul.bf16.gmra.mxu0 %v3725
        %v4260 = vpop.f32.mrf.mxu0
        %v4261 = vadd.f32 0.0, %v4260
        %v4262 = vpop.f32.mrf.mxu0
        %v4263 = vadd.f32 0.0, %v4262
        %4264 = vmatmul.bf16.gmra.mxu0 %v3728
        %v4265 = vpop.f32.mrf.mxu0
        %v4266 = vadd.f32 0.0, %v4265
        %v4267 = vpop.f32.mrf.mxu0
        %v4268 = vadd.f32 0.0, %v4267
        %4269 = vmatmul.bf16.gmra.mxu0 %v3731
        %v4270 = vpop.f32.mrf.mxu0
        %v4271 = vadd.f32 0.0, %v4270
        %v4272 = vpop.f32.mrf.mxu0
        %v4273 = vadd.f32 0.0, %v4272
        %4274 = vmatmul.bf16.gmra.mxu0 %v3734
        %v4275 = vpop.f32.mrf.mxu0
        %v4276 = vadd.f32 0.0, %v4275
        %v4277 = vpop.f32.mrf.mxu0
        %v4278 = vadd.f32 0.0, %v4277
        %4279 = vmatmul.bf16.gmra.mxu0 %v3737
        %v4280 = vpop.f32.mrf.mxu0
        %v4281 = vadd.f32 0.0, %v4280
        %v4282 = vpop.f32.mrf.mxu0
        %v4283 = vadd.f32 0.0, %v4282
        %4284 = vmatmul.bf16.gmra.mxu0 %v3740
        %v4285 = vpop.f32.mrf.mxu0
        %v4286 = vadd.f32 0.0, %v4285
        %v4287 = vpop.f32.mrf.mxu0
        %v4288 = vadd.f32 0.0, %v4287
        %4289 = vmatmul.bf16.gmra.mxu0 %v3743
        %v4290 = vpop.f32.mrf.mxu0
        %v4291 = vadd.f32 0.0, %v4290
        %v4292 = vpop.f32.mrf.mxu0
        %v4293 = vadd.f32 0.0, %v4292
        %4294 = vmatmul.bf16.gmra.mxu0 %v4209
        %v4295 = vpop.f32.mrf.mxu0
        %v4296 = vadd.f32 0.0, %v4295
        %v4297 = vpop.f32.mrf.mxu0
        %v4298 = vadd.f32 0.0, %v4297
        %4299 = vdwg.mxu0
        %v4300 = vadd.f32 %v4148, %v4221
        %v4301 = vadd.f32 %v4149, %v4223
        %v4302 = vadd.f32 %v4150, %v4226
        %v4303 = vadd.f32 %v4151, %v4228
        %v4304 = vadd.f32 %v4152, %v4231
        %v4305 = vadd.f32 %v4153, %v4233
        %v4306 = vadd.f32 %v4154, %v4236
        %v4307 = vadd.f32 %v4155, %v4238
        %v4308 = vadd.f32 %v4156, %v4241
        %v4309 = vadd.f32 %v4157, %v4243
        %v4310 = vadd.f32 %v4158, %v4246
        %v4311 = vadd.f32 %v4159, %v4248
        %v4312 = vadd.f32 %v4160, %v4251
        %v4313 = vadd.f32 %v4161, %v4253
        %v4314 = vadd.f32 %v4162, %v4256
        %v4315 = vadd.f32 %v4163, %v4258
        %v4316 = vadd.f32 %v4164, %v4261
        %v4317 = vadd.f32 %v4165, %v4263
        %v4318 = vadd.f32 %v4166, %v4266
        %v4319 = vadd.f32 %v4167, %v4268
        %v4320 = vadd.f32 %v4168, %v4271
        %v4321 = vadd.f32 %v4169, %v4273
        %v4322 = vadd.f32 %v4170, %v4276
        %v4323 = vadd.f32 %v4171, %v4278
        %v4324 = vadd.f32 %v4172, %v4281
        %v4325 = vadd.f32 %v4173, %v4283
        %v4326 = vadd.f32 %v4174, %v4286
        %v4327 = vadd.f32 %v4175, %v4288
        %v4328 = vadd.f32 %v4176, %v4291
        %v4329 = vadd.f32 %v4177, %v4293
        %v4330 = vadd.f32 %v4178, %v4296
        %v4331 = vadd.f32 %v4179, %v4298
        %s4332 = scalar_lea.vmem %s5, 96
        %v4333 = vld [vmem:[%s4332] sm:$0xf]
        %v4334 = vld [vmem:[%s4332 + $0x4] sm:$0xf]
        %v4335 = vld [vmem:[%s4332 + $0x8] sm:$0xf]
        %v4336 = vld [vmem:[%s4332 + $0xc] sm:$0xf]
        %v4339 = vunpack.c.l.b16 %v2682
        %v4340 = vunpack.c.l.b16 %v2683
        %v4341 = vpack.c.b16 %v4340, %v4339
        %v4346 = vunpack.c.l.b16 %v4333
        %v4347 = vunpack.c.l.b16 %v4334
        %v4348 = vunpack.c.l.b16 %v4335
        %v4349 = vunpack.c.l.b16 %v4336
        %v4350 = vpack.c.b16 %v4347, %v4346
        %v4351 = vpack.c.b16 %v4349, %v4348
        %v4355 = vsel %vm903, %v4341, 0
        %4357 = vmatpush.bf16.msra.mxu0 0
        %4358 = vmatpush.bf16.msra.mxu0 0
        %4359 = vmatpush.bf16.msra.mxu0 0
        %4360 = vmatpush.bf16.msra.mxu0 0
        %4361 = vmatpush.bf16.msra.mxu0 0
        %4362 = vmatpush.bf16.msra.mxu0 0
        %4363 = vmatpush.bf16.msra.mxu0 %v4351
        %4364 = vmatpush.bf16.msra.mxu0 %v4350
        %4365 = vmatmul.bf16.gmra.mxu0 %v3374
        %v4366 = vpop.f32.mrf.mxu0
        %v4367 = vadd.f32 0.0, %v4366
        %v4368 = vpop.f32.mrf.mxu0
        %v4369 = vadd.f32 0.0, %v4368
        %4370 = vmatmul.bf16.gmra.mxu0 %v3377
        %v4371 = vpop.f32.mrf.mxu0
        %v4372 = vadd.f32 0.0, %v4371
        %v4373 = vpop.f32.mrf.mxu0
        %v4374 = vadd.f32 0.0, %v4373
        %4375 = vmatmul.bf16.gmra.mxu0 %v3380
        %v4376 = vpop.f32.mrf.mxu0
        %v4377 = vadd.f32 0.0, %v4376
        %v4378 = vpop.f32.mrf.mxu0
        %v4379 = vadd.f32 0.0, %v4378
        %4380 = vmatmul.bf16.gmra.mxu0 %v3383
        %v4381 = vpop.f32.mrf.mxu0
        %v4382 = vadd.f32 0.0, %v4381
        %v4383 = vpop.f32.mrf.mxu0
        %v4384 = vadd.f32 0.0, %v4383
        %4385 = vmatmul.bf16.gmra.mxu0 %v3386
        %v4386 = vpop.f32.mrf.mxu0
        %v4387 = vadd.f32 0.0, %v4386
        %v4388 = vpop.f32.mrf.mxu0
        %v4389 = vadd.f32 0.0, %v4388
        %4390 = vmatmul.bf16.gmra.mxu0 %v3389
        %v4391 = vpop.f32.mrf.mxu0
        %v4392 = vadd.f32 0.0, %v4391
        %v4393 = vpop.f32.mrf.mxu0
        %v4394 = vadd.f32 0.0, %v4393
        %4395 = vmatmul.bf16.gmra.mxu0 %v3392
        %v4396 = vpop.f32.mrf.mxu0
        %v4397 = vadd.f32 0.0, %v4396
        %v4398 = vpop.f32.mrf.mxu0
        %v4399 = vadd.f32 0.0, %v4398
        %4400 = vmatmul.bf16.gmra.mxu0 %v3395
        %v4401 = vpop.f32.mrf.mxu0
        %v4402 = vadd.f32 0.0, %v4401
        %v4403 = vpop.f32.mrf.mxu0
        %v4404 = vadd.f32 0.0, %v4403
        %4405 = vmatmul.bf16.gmra.mxu0 %v3398
        %v4406 = vpop.f32.mrf.mxu0
        %v4407 = vadd.f32 0.0, %v4406
        %v4408 = vpop.f32.mrf.mxu0
        %v4409 = vadd.f32 0.0, %v4408
        %4410 = vmatmul.bf16.gmra.mxu0 %v3401
        %v4411 = vpop.f32.mrf.mxu0
        %v4412 = vadd.f32 0.0, %v4411
        %v4413 = vpop.f32.mrf.mxu0
        %v4414 = vadd.f32 0.0, %v4413
        %4415 = vmatmul.bf16.gmra.mxu0 %v3404
        %v4416 = vpop.f32.mrf.mxu0
        %v4417 = vadd.f32 0.0, %v4416
        %v4418 = vpop.f32.mrf.mxu0
        %v4419 = vadd.f32 0.0, %v4418
        %4420 = vmatmul.bf16.gmra.mxu0 %v3407
        %v4421 = vpop.f32.mrf.mxu0
        %v4422 = vadd.f32 0.0, %v4421
        %v4423 = vpop.f32.mrf.mxu0
        %v4424 = vadd.f32 0.0, %v4423
        %4425 = vmatmul.bf16.gmra.mxu0 %v3410
        %v4426 = vpop.f32.mrf.mxu0
        %v4427 = vadd.f32 0.0, %v4426
        %v4428 = vpop.f32.mrf.mxu0
        %v4429 = vadd.f32 0.0, %v4428
        %4430 = vmatmul.bf16.gmra.mxu0 %v3413
        %v4431 = vpop.f32.mrf.mxu0
        %v4432 = vadd.f32 0.0, %v4431
        %v4433 = vpop.f32.mrf.mxu0
        %v4434 = vadd.f32 0.0, %v4433
        %4435 = vmatmul.bf16.gmra.mxu0 %v3889
        %v4436 = vpop.f32.mrf.mxu0
        %v4437 = vadd.f32 0.0, %v4436
        %v4438 = vpop.f32.mrf.mxu0
        %v4439 = vadd.f32 0.0, %v4438
        %4440 = vmatmul.bf16.gmra.mxu0 %v4355
        %v4441 = vpop.f32.mrf.mxu0
        %v4442 = vadd.f32 0.0, %v4441
        %v4443 = vpop.f32.mrf.mxu0
        %v4444 = vadd.f32 0.0, %v4443
        %4445 = vdwg.mxu0
        %v4446 = vadd.f32 %v4300, %v4367
        %v4447 = vadd.f32 %v4301, %v4369
        %v4448 = vadd.f32 %v4302, %v4372
        %v4449 = vadd.f32 %v4303, %v4374
        %v4450 = vadd.f32 %v4304, %v4377
        %v4451 = vadd.f32 %v4305, %v4379
        %v4452 = vadd.f32 %v4306, %v4382
        %v4453 = vadd.f32 %v4307, %v4384
        %v4454 = vadd.f32 %v4308, %v4387
        %v4455 = vadd.f32 %v4309, %v4389
        %v4456 = vadd.f32 %v4310, %v4392
        %v4457 = vadd.f32 %v4311, %v4394
        %v4458 = vadd.f32 %v4312, %v4397
        %v4459 = vadd.f32 %v4313, %v4399
        %v4460 = vadd.f32 %v4314, %v4402
        %v4461 = vadd.f32 %v4315, %v4404
        %v4462 = vadd.f32 %v4316, %v4407
        %v4463 = vadd.f32 %v4317, %v4409
        %v4464 = vadd.f32 %v4318, %v4412
        %v4465 = vadd.f32 %v4319, %v4414
        %v4466 = vadd.f32 %v4320, %v4417
        %v4467 = vadd.f32 %v4321, %v4419
        %v4468 = vadd.f32 %v4322, %v4422
        %v4469 = vadd.f32 %v4323, %v4424
        %v4470 = vadd.f32 %v4324, %v4427
        %v4471 = vadd.f32 %v4325, %v4429
        %v4472 = vadd.f32 %v4326, %v4432
        %v4473 = vadd.f32 %v4327, %v4434
        %v4474 = vadd.f32 %v4328, %v4437
        %v4475 = vadd.f32 %v4329, %v4439
        %v4476 = vadd.f32 %v4330, %v4442
        %v4477 = vadd.f32 %v4331, %v4444
        %v4479 = vshrl.u32 %v2682, 16
        %v4481 = vrot.slane %v4479, 4
        %v4482 = vshll.u32 %v2682, 16
        %v4484 = vrot.slane %v4482, 5
        %v4485 = vor.u32 %v4481, %v4484
        %v4486 = vrot.slane %v4485, 4
        %v4488 = vshll.u32 %v2683, 16
        %v4490 = vrot.slane %v4488, 5
        %v4491 = vsel %vm453, %v4486, %v4490
        %v4492 = vshrl.u32 %v2683, 16
        %v4494 = vrot.slane %v4492, 4
        %v4495 = vor.u32 %v4494, %v4490
        %v4496 = vrot.slane %v4495, 4
        %v4498 = vshll.u32 %v2684, 16
        %v4500 = vrot.slane %v4498, 5
        %v4501 = vsel %vm453, %v4496, %v4500
        %s4502 = scalar_lea.vmem %s5, 112
        %v4503 = vld [vmem:[%s4502] sm:$0xf]
        %v4504 = vld [vmem:[%s4502 + $0x4] sm:$0xf]
        %v4505 = vld [vmem:[%s4502 + $0x8] sm:$0xf]
        %v4506 = vld [vmem:[%s4502 + $0xc] sm:$0xf]
        %v4507 = vunpack.c.l.b16 %v4491
        %v4508 = vunpack.c.l.b16 %v4501
        %v4509 = vpack.c.b16 %v4508, %v4507
        %v4514 = vunpack.c.l.b16 %v4503
        %v4515 = vunpack.c.l.b16 %v4504
        %v4516 = vunpack.c.l.b16 %v4505
        %v4517 = vunpack.c.l.b16 %v4506
        %v4518 = vpack.c.b16 %v4515, %v4514
        %v4519 = vpack.c.b16 %v4517, %v4516
        %v4523 = vsel %vm903, %v4509, 0
        %4525 = vmatpush.bf16.msra.mxu0 0
        %4526 = vmatpush.bf16.msra.mxu0 0
        %4527 = vmatpush.bf16.msra.mxu0 0
        %4528 = vmatpush.bf16.msra.mxu0 0
        %4529 = vmatpush.bf16.msra.mxu0 0
        %4530 = vmatpush.bf16.msra.mxu0 0
        %4531 = vmatpush.bf16.msra.mxu0 %v4519
        %4532 = vmatpush.bf16.msra.mxu0 %v4518
        %4533 = vmatmul.bf16.gmra.mxu0 %v3145
        %v4534 = vpop.f32.mrf.mxu0
        %v4535 = vadd.f32 0.0, %v4534
        %v4536 = vpop.f32.mrf.mxu0
        %v4537 = vadd.f32 0.0, %v4536
        %4538 = vmatmul.bf16.gmra.mxu0 %v3148
        %v4539 = vpop.f32.mrf.mxu0
        %v4540 = vadd.f32 0.0, %v4539
        %v4541 = vpop.f32.mrf.mxu0
        %v4542 = vadd.f32 0.0, %v4541
        %4543 = vmatmul.bf16.gmra.mxu0 %v3151
        %v4544 = vpop.f32.mrf.mxu0
        %v4545 = vadd.f32 0.0, %v4544
        %v4546 = vpop.f32.mrf.mxu0
        %v4547 = vadd.f32 0.0, %v4546
        %4548 = vmatmul.bf16.gmra.mxu0 %v3154
        %v4549 = vpop.f32.mrf.mxu0
        %v4550 = vadd.f32 0.0, %v4549
        %v4551 = vpop.f32.mrf.mxu0
        %v4552 = vadd.f32 0.0, %v4551
        %4553 = vmatmul.bf16.gmra.mxu0 %v3157
        %v4554 = vpop.f32.mrf.mxu0
        %v4555 = vadd.f32 0.0, %v4554
        %v4556 = vpop.f32.mrf.mxu0
        %v4557 = vadd.f32 0.0, %v4556
        %4558 = vmatmul.bf16.gmra.mxu0 %v3160
        %v4559 = vpop.f32.mrf.mxu0
        %v4560 = vadd.f32 0.0, %v4559
        %v4561 = vpop.f32.mrf.mxu0
        %v4562 = vadd.f32 0.0, %v4561
        %4563 = vmatmul.bf16.gmra.mxu0 %v3163
        %v4564 = vpop.f32.mrf.mxu0
        %v4565 = vadd.f32 0.0, %v4564
        %v4566 = vpop.f32.mrf.mxu0
        %v4567 = vadd.f32 0.0, %v4566
        %4568 = vmatmul.bf16.gmra.mxu0 %v3166
        %v4569 = vpop.f32.mrf.mxu0
        %v4570 = vadd.f32 0.0, %v4569
        %v4571 = vpop.f32.mrf.mxu0
        %v4572 = vadd.f32 0.0, %v4571
        %4573 = vmatmul.bf16.gmra.mxu0 %v3169
        %v4574 = vpop.f32.mrf.mxu0
        %v4575 = vadd.f32 0.0, %v4574
        %v4576 = vpop.f32.mrf.mxu0
        %v4577 = vadd.f32 0.0, %v4576
        %4578 = vmatmul.bf16.gmra.mxu0 %v3172
        %v4579 = vpop.f32.mrf.mxu0
        %v4580 = vadd.f32 0.0, %v4579
        %v4581 = vpop.f32.mrf.mxu0
        %v4582 = vadd.f32 0.0, %v4581
        %4583 = vmatmul.bf16.gmra.mxu0 %v3175
        %v4584 = vpop.f32.mrf.mxu0
        %v4585 = vadd.f32 0.0, %v4584
        %v4586 = vpop.f32.mrf.mxu0
        %v4587 = vadd.f32 0.0, %v4586
        %4588 = vmatmul.bf16.gmra.mxu0 %v3178
        %v4589 = vpop.f32.mrf.mxu0
        %v4590 = vadd.f32 0.0, %v4589
        %v4591 = vpop.f32.mrf.mxu0
        %v4592 = vadd.f32 0.0, %v4591
        %4593 = vmatmul.bf16.gmra.mxu0 %v3181
        %v4594 = vpop.f32.mrf.mxu0
        %v4595 = vadd.f32 0.0, %v4594
        %v4596 = vpop.f32.mrf.mxu0
        %v4597 = vadd.f32 0.0, %v4596
        %4598 = vmatmul.bf16.gmra.mxu0 %v3184
        %v4599 = vpop.f32.mrf.mxu0
        %v4600 = vadd.f32 0.0, %v4599
        %v4601 = vpop.f32.mrf.mxu0
        %v4602 = vadd.f32 0.0, %v4601
        %4603 = vmatmul.bf16.gmra.mxu0 %v4057
        %v4604 = vpop.f32.mrf.mxu0
        %v4605 = vadd.f32 0.0, %v4604
        %v4606 = vpop.f32.mrf.mxu0
        %v4607 = vadd.f32 0.0, %v4606
        %4608 = vmatmul.bf16.gmra.mxu0 %v4523
        %v4609 = vpop.f32.mrf.mxu0
        %v4610 = vadd.f32 0.0, %v4609
        %v4611 = vpop.f32.mrf.mxu0
        %v4612 = vadd.f32 0.0, %v4611
        %4613 = vdwg.mxu0
        %v4614 = vadd.f32 %v4446, %v4535
        %v4615 = vadd.f32 %v4447, %v4537
        %v4616 = vadd.f32 %v4448, %v4540
        %v4617 = vadd.f32 %v4449, %v4542
        %v4618 = vadd.f32 %v4450, %v4545
        %v4619 = vadd.f32 %v4451, %v4547
        %v4620 = vadd.f32 %v4452, %v4550
        %v4621 = vadd.f32 %v4453, %v4552
        %v4622 = vadd.f32 %v4454, %v4555
        %v4623 = vadd.f32 %v4455, %v4557
        %v4624 = vadd.f32 %v4456, %v4560
        %v4625 = vadd.f32 %v4457, %v4562
        %v4626 = vadd.f32 %v4458, %v4565
        %v4627 = vadd.f32 %v4459, %v4567
        %v4628 = vadd.f32 %v4460, %v4570
        %v4629 = vadd.f32 %v4461, %v4572
        %v4630 = vadd.f32 %v4462, %v4575
        %v4631 = vadd.f32 %v4463, %v4577
        %v4632 = vadd.f32 %v4464, %v4580
        %v4633 = vadd.f32 %v4465, %v4582
        %v4634 = vadd.f32 %v4466, %v4585
        %v4635 = vadd.f32 %v4467, %v4587
        %v4636 = vadd.f32 %v4468, %v4590
        %v4637 = vadd.f32 %v4469, %v4592
        %v4638 = vadd.f32 %v4470, %v4595
        %v4639 = vadd.f32 %v4471, %v4597
        %v4640 = vadd.f32 %v4472, %v4600
        %v4641 = vadd.f32 %v4473, %v4602
        %v4642 = vadd.f32 %v4474, %v4605
        %v4643 = vadd.f32 %v4475, %v4607
        %v4644 = vadd.f32 %v4476, %v4610
        %v4645 = vadd.f32 %v4477, %v4612
        %v4647 = vrot.slane %v2682, 5
        %v4648 = vrot.slane %v4647, 4
        %v4649 = vrot.slane %v2683, 5
        %v4650 = vsel %vm1288, %v4648, %v4649
        %v4651 = vrot.slane %v4649, 4
        %v4652 = vrot.slane %v2684, 5
        %v4653 = vsel %vm1288, %v4651, %v4652
        %s4654 = scalar_lea.vmem %s5, 128
        %v4655 = vld [vmem:[%s4654] sm:$0xf]
        %v4656 = vld [vmem:[%s4654 + $0x4] sm:$0xf]
        %v4657 = vld [vmem:[%s4654 + $0x8] sm:$0xf]
        %v4658 = vld [vmem:[%s4654 + $0xc] sm:$0xf]
        %v4659 = vunpack.c.l.b16 %v4650
        %v4660 = vunpack.c.l.b16 %v4653
        %v4661 = vpack.c.b16 %v4660, %v4659
        %v4666 = vunpack.c.l.b16 %v4655
        %v4667 = vunpack.c.l.b16 %v4656
        %v4668 = vunpack.c.l.b16 %v4657
        %v4669 = vunpack.c.l.b16 %v4658
        %v4670 = vpack.c.b16 %v4667, %v4666
        %v4671 = vpack.c.b16 %v4669, %v4668
        %v4675 = vsel %vm903, %v4661, 0
        %4677 = vmatpush.bf16.msra.mxu0 0
        %4678 = vmatpush.bf16.msra.mxu0 0
        %4679 = vmatpush.bf16.msra.mxu0 0
        %4680 = vmatpush.bf16.msra.mxu0 0
        %4681 = vmatpush.bf16.msra.mxu0 0
        %4682 = vmatpush.bf16.msra.mxu0 0
        %4683 = vmatpush.bf16.msra.mxu0 %v4671
        %4684 = vmatpush.bf16.msra.mxu0 %v4670
        %4685 = vmatmul.bf16.gmra.mxu0 %v3704
        %v4686 = vpop.f32.mrf.mxu0
        %v4687 = vadd.f32 0.0, %v4686
        %v4688 = vpop.f32.mrf.mxu0
        %v4689 = vadd.f32 0.0, %v4688
        %4690 = vmatmul.bf16.gmra.mxu0 %v3707
        %v4691 = vpop.f32.mrf.mxu0
        %v4692 = vadd.f32 0.0, %v4691
        %v4693 = vpop.f32.mrf.mxu0
        %v4694 = vadd.f32 0.0, %v4693
        %4695 = vmatmul.bf16.gmra.mxu0 %v3710
        %v4696 = vpop.f32.mrf.mxu0
        %v4697 = vadd.f32 0.0, %v4696
        %v4698 = vpop.f32.mrf.mxu0
        %v4699 = vadd.f32 0.0, %v4698
        %4700 = vmatmul.bf16.gmra.mxu0 %v3713
        %v4701 = vpop.f32.mrf.mxu0
        %v4702 = vadd.f32 0.0, %v4701
        %v4703 = vpop.f32.mrf.mxu0
        %v4704 = vadd.f32 0.0, %v4703
        %4705 = vmatmul.bf16.gmra.mxu0 %v3716
        %v4706 = vpop.f32.mrf.mxu0
        %v4707 = vadd.f32 0.0, %v4706
        %v4708 = vpop.f32.mrf.mxu0
        %v4709 = vadd.f32 0.0, %v4708
        %4710 = vmatmul.bf16.gmra.mxu0 %v3719
        %v4711 = vpop.f32.mrf.mxu0
        %v4712 = vadd.f32 0.0, %v4711
        %v4713 = vpop.f32.mrf.mxu0
        %v4714 = vadd.f32 0.0, %v4713
        %4715 = vmatmul.bf16.gmra.mxu0 %v3722
        %v4716 = vpop.f32.mrf.mxu0
        %v4717 = vadd.f32 0.0, %v4716
        %v4718 = vpop.f32.mrf.mxu0
        %v4719 = vadd.f32 0.0, %v4718
        %4720 = vmatmul.bf16.gmra.mxu0 %v3725
        %v4721 = vpop.f32.mrf.mxu0
        %v4722 = vadd.f32 0.0, %v4721
        %v4723 = vpop.f32.mrf.mxu0
        %v4724 = vadd.f32 0.0, %v4723
        %4725 = vmatmul.bf16.gmra.mxu0 %v3728
        %v4726 = vpop.f32.mrf.mxu0
        %v4727 = vadd.f32 0.0, %v4726
        %v4728 = vpop.f32.mrf.mxu0
        %v4729 = vadd.f32 0.0, %v4728
        %4730 = vmatmul.bf16.gmra.mxu0 %v3731
        %v4731 = vpop.f32.mrf.mxu0
        %v4732 = vadd.f32 0.0, %v4731
        %v4733 = vpop.f32.mrf.mxu0
        %v4734 = vadd.f32 0.0, %v4733
        %4735 = vmatmul.bf16.gmra.mxu0 %v3734
        %v4736 = vpop.f32.mrf.mxu0
        %v4737 = vadd.f32 0.0, %v4736
        %v4738 = vpop.f32.mrf.mxu0
        %v4739 = vadd.f32 0.0, %v4738
        %4740 = vmatmul.bf16.gmra.mxu0 %v3737
        %v4741 = vpop.f32.mrf.mxu0
        %v4742 = vadd.f32 0.0, %v4741
        %v4743 = vpop.f32.mrf.mxu0
        %v4744 = vadd.f32 0.0, %v4743
        %4745 = vmatmul.bf16.gmra.mxu0 %v3740
        %v4746 = vpop.f32.mrf.mxu0
        %v4747 = vadd.f32 0.0, %v4746
        %v4748 = vpop.f32.mrf.mxu0
        %v4749 = vadd.f32 0.0, %v4748
        %4750 = vmatmul.bf16.gmra.mxu0 %v3743
        %v4751 = vpop.f32.mrf.mxu0
        %v4752 = vadd.f32 0.0, %v4751
        %v4753 = vpop.f32.mrf.mxu0
        %v4754 = vadd.f32 0.0, %v4753
        %4755 = vmatmul.bf16.gmra.mxu0 %v4209
        %v4756 = vpop.f32.mrf.mxu0
        %v4757 = vadd.f32 0.0, %v4756
        %v4758 = vpop.f32.mrf.mxu0
        %v4759 = vadd.f32 0.0, %v4758
        %4760 = vmatmul.bf16.gmra.mxu0 %v4675
        %v4761 = vpop.f32.mrf.mxu0
        %v4762 = vadd.f32 0.0, %v4761
        %v4763 = vpop.f32.mrf.mxu0
        %v4764 = vadd.f32 0.0, %v4763
        %4765 = vdwg.mxu0
        %v4766 = vadd.f32 %v4614, %v4687
        %v4767 = vadd.f32 %v4615, %v4689
        %v4768 = vadd.f32 %v4616, %v4692
        %v4769 = vadd.f32 %v4617, %v4694
        %v4770 = vadd.f32 %v4618, %v4697
        %v4771 = vadd.f32 %v4619, %v4699
        %v4772 = vadd.f32 %v4620, %v4702
        %v4773 = vadd.f32 %v4621, %v4704
        %v4774 = vadd.f32 %v4622, %v4707
        %v4775 = vadd.f32 %v4623, %v4709
        %v4776 = vadd.f32 %v4624, %v4712
        %v4777 = vadd.f32 %v4625, %v4714
        %v4778 = vadd.f32 %v4626, %v4717
        %v4779 = vadd.f32 %v4627, %v4719
        %v4780 = vadd.f32 %v4628, %v4722
        %v4781 = vadd.f32 %v4629, %v4724
        %v4782 = vadd.f32 %v4630, %v4727
        %v4783 = vadd.f32 %v4631, %v4729
        %v4784 = vadd.f32 %v4632, %v4732
        %v4785 = vadd.f32 %v4633, %v4734
        %v4786 = vadd.f32 %v4634, %v4737
        %v4787 = vadd.f32 %v4635, %v4739
        %v4788 = vadd.f32 %v4636, %v4742
        %v4789 = vadd.f32 %v4637, %v4744
        %v4790 = vadd.f32 %v4638, %v4747
        %v4791 = vadd.f32 %v4639, %v4749
        %v4792 = vadd.f32 %v4640, %v4752
        %v4793 = vadd.f32 %v4641, %v4754
        %v4794 = vadd.f32 %v4642, %v4757
        %v4795 = vadd.f32 %v4643, %v4759
        %v4796 = vadd.f32 %v4644, %v4762
        %v4797 = vadd.f32 %v4645, %v4764
        %4798 = vxpose.xlu0.b32.start [1/16] %v4766, 128
        %4799 = vxpose.xlu0.b32.cont [2/16] %v4767, 128
        %4800 = vxpose.xlu0.b32.cont [3/16] %v4768, 128
        %4801 = vxpose.xlu0.b32.cont [4/16] %v4769, 128
        %4802 = vxpose.xlu0.b32.cont [5/16] %v4770, 128
        %4803 = vxpose.xlu0.b32.cont [6/16] %v4771, 128
        %4804 = vxpose.xlu0.b32.cont [7/16] %v4772, 128
        %4805 = vxpose.xlu0.b32.cont [8/16] %v4773, 128
        %4806 = vxpose.xlu0.b32.cont [9/16] %v4774, 128
        %4807 = vxpose.xlu0.b32.cont [10/16] %v4775, 128
        %4808 = vxpose.xlu0.b32.cont [11/16] %v4776, 128
        %4809 = vxpose.xlu0.b32.cont [12/16] %v4777, 128
        %4810 = vxpose.xlu0.b32.cont [13/16] %v4778, 128
        %4811 = vxpose.xlu0.b32.cont [14/16] %v4779, 128
        %4812 = vxpose.xlu0.b32.cont [15/16] %v4780, 128
        %4813 = vxpose.xlu0.b32.end [16/16] %v4781, 128
        %v4814 = vpop.trf.xlu0
        %v4815 = vpop.trf.xlu0
        %v4816 = vpop.trf.xlu0
        %v4817 = vpop.trf.xlu0
        %v4818 = vpop.trf.xlu0
        %v4819 = vpop.trf.xlu0
        %v4820 = vpop.trf.xlu0
        %v4821 = vpop.trf.xlu0
        %v4822 = vpop.trf.xlu0
        %v4823 = vpop.trf.xlu0
        %v4824 = vpop.trf.xlu0
        %v4825 = vpop.trf.xlu0
        %v4826 = vpop.trf.xlu0
        %v4827 = vpop.trf.xlu0
        %v4828 = vpop.trf.xlu0
        %v4829 = vpop.trf.xlu0
        %4830 = vxpose.xlu0.b32.start [1/16] %v4782, 128
        %4831 = vxpose.xlu0.b32.cont [2/16] %v4783, 128
        %4832 = vxpose.xlu0.b32.cont [3/16] %v4784, 128
        %4833 = vxpose.xlu0.b32.cont [4/16] %v4785, 128
        %4834 = vxpose.xlu0.b32.cont [5/16] %v4786, 128
        %4835 = vxpose.xlu0.b32.cont [6/16] %v4787, 128
        %4836 = vxpose.xlu0.b32.cont [7/16] %v4788, 128
        %4837 = vxpose.xlu0.b32.cont [8/16] %v4789, 128
        %4838 = vxpose.xlu0.b32.cont [9/16] %v4790, 128
        %4839 = vxpose.xlu0.b32.cont [10/16] %v4791, 128
        %4840 = vxpose.xlu0.b32.cont [11/16] %v4792, 128
        %4841 = vxpose.xlu0.b32.cont [12/16] %v4793, 128
        %4842 = vxpose.xlu0.b32.cont [13/16] %v4794, 128
        %4843 = vxpose.xlu0.b32.cont [14/16] %v4795, 128
        %4844 = vxpose.xlu0.b32.cont [15/16] %v4796, 128
        %4845 = vxpose.xlu0.b32.end [16/16] %v4797, 128
        %v4846 = vpop.trf.xlu0
        %v4847 = vpop.trf.xlu0
        %v4848 = vpop.trf.xlu0
        %v4849 = vpop.trf.xlu0
        %v4850 = vpop.trf.xlu0
        %v4851 = vpop.trf.xlu0
        %v4852 = vpop.trf.xlu0
        %v4853 = vpop.trf.xlu0
        %v4854 = vpop.trf.xlu0
        %v4855 = vpop.trf.xlu0
        %v4856 = vpop.trf.xlu0
        %v4857 = vpop.trf.xlu0
        %v4858 = vpop.trf.xlu0
        %v4859 = vpop.trf.xlu0
        %v4860 = vpop.trf.xlu0
        %v4861 = vpop.trf.xlu0
        %v4862 = vadd.f32 %v2583, %v4814
        %v4863 = vadd.f32 %v2615, %v4846
        %v4864 = vadd.f32 %v2584, %v4815
        %v4865 = vadd.f32 %v2616, %v4847
        %v4866 = vadd.f32 %v2585, %v4816
        %v4867 = vadd.f32 %v2617, %v4848
        %v4868 = vadd.f32 %v2586, %v4817
        %v4869 = vadd.f32 %v2618, %v4849
        %v4870 = vadd.f32 %v2587, %v4818
        %v4871 = vadd.f32 %v2619, %v4850
        %v4872 = vadd.f32 %v2588, %v4819
        %v4873 = vadd.f32 %v2620, %v4851
        %v4874 = vadd.f32 %v2589, %v4820
        %v4875 = vadd.f32 %v2621, %v4852
        %v4876 = vadd.f32 %v2590, %v4821
        %v4877 = vadd.f32 %v2622, %v4853
        %v4878 = vld [vmem:[%s378] sm:$0xff]
        %v4879 = vld [vmem:[%s378 + $0x8] sm:$0xff]
        %v4880 = vld [vmem:[%s378 + $0x10] sm:$0xff]
        %v4881 = vld [vmem:[%s378 + $0x18] sm:$0xff]
        %v4882 = vld [vmem:[%s378 + $0x20] sm:$0xff]
        %v4883 = vld [vmem:[%s378 + $0x28] sm:$0xff]
        %v4884 = vld [vmem:[%s378 + $0x30] sm:$0xff]
        %v4885 = vld [vmem:[%s378 + $0x38] sm:$0xff]
        %v4886 = vld [vmem:[%s378 + $0x40] sm:$0xff]
        %v4887 = vld [vmem:[%s378 + $0x48] sm:$0xff]
        %v4888 = vld [vmem:[%s378 + $0x50] sm:$0xff]
        %v4889 = vld [vmem:[%s378 + $0x58] sm:$0xff]
        %v4890 = vld [vmem:[%s378 + $0x60] sm:$0xff]
        %v4891 = vld [vmem:[%s378 + $0x68] sm:$0xff]
        %v4892 = vld [vmem:[%s378 + $0x70] sm:$0xff]
        %v4893 = vld [vmem:[%s378 + $0x78] sm:$0xff]
        %v4894 = vadd.f32 %v4862, %v4878
        %v4895 = vadd.f32 %v4863, %v4879
        %v4896 = vadd.f32 %v4864, %v4880
        %v4897 = vadd.f32 %v4865, %v4881
        %v4898 = vadd.f32 %v4866, %v4882
        %v4899 = vadd.f32 %v4867, %v4883
        %v4900 = vadd.f32 %v4868, %v4884
        %v4901 = vadd.f32 %v4869, %v4885
        %v4902 = vadd.f32 %v4870, %v4886
        %v4903 = vadd.f32 %v4871, %v4887
        %v4904 = vadd.f32 %v4872, %v4888
        %v4905 = vadd.f32 %v4873, %v4889
        %v4906 = vadd.f32 %v4874, %v4890
        %v4907 = vadd.f32 %v4875, %v4891
        %v4908 = vadd.f32 %v4876, %v4892
        %v4909 = vadd.f32 %v4877, %v4893
        %v4910 = vxor.u32 %v4894, 2147483648
        %v4911 = vxor.u32 %v4895, 2147483648
        %v4912 = vxor.u32 %v4896, 2147483648
        %v4913 = vxor.u32 %v4897, 2147483648
        %v4914 = vxor.u32 %v4898, 2147483648
        %v4915 = vxor.u32 %v4899, 2147483648
        %v4916 = vxor.u32 %v4900, 2147483648
        %v4917 = vxor.u32 %v4901, 2147483648
        %v4918 = vxor.u32 %v4902, 2147483648
        %v4919 = vxor.u32 %v4903, 2147483648
        %v4920 = vxor.u32 %v4904, 2147483648
        %v4921 = vxor.u32 %v4905, 2147483648
        %v4922 = vxor.u32 %v4906, 2147483648
        %v4923 = vxor.u32 %v4907, 2147483648
        %v4924 = vxor.u32 %v4908, 2147483648
        %v4925 = vxor.u32 %v4909, 2147483648
        %v4926 = vmul.f32 %v4910, 1.442695
        %v4927 = vpow.pop %v4926
        %v4928 = vmul.f32 %v4911, 1.442695
        %v4929 = vpow.pop %v4928
        %v4930 = vmul.f32 %v4912, 1.442695
        %v4931 = vpow.pop %v4930
        %v4932 = vmul.f32 %v4913, 1.442695
        %v4933 = vpow.pop %v4932
        %v4934 = vmul.f32 %v4914, 1.442695
        %v4935 = vpow.pop %v4934
        %v4936 = vmul.f32 %v4915, 1.442695
        %v4937 = vpow.pop %v4936
        %v4938 = vmul.f32 %v4916, 1.442695
        %v4939 = vpow.pop %v4938
        %v4940 = vmul.f32 %v4917, 1.442695
        %v4941 = vpow.pop %v4940
        %v4942 = vmul.f32 %v4918, 1.442695
        %v4943 = vpow.pop %v4942
        %v4944 = vmul.f32 %v4919, 1.442695
        %v4945 = vpow.pop %v4944
        %v4946 = vmul.f32 %v4920, 1.442695
        %v4947 = vpow.pop %v4946
        %v4948 = vmul.f32 %v4921, 1.442695
        %v4949 = vpow.pop %v4948
        %v4950 = vmul.f32 %v4922, 1.442695
        %v4951 = vpow.pop %v4950
        %v4952 = vmul.f32 %v4923, 1.442695
        %v4953 = vpow.pop %v4952
        %v4954 = vmul.f32 %v4924, 1.442695
        %v4955 = vpow.pop %v4954
        %v4956 = vmul.f32 %v4925, 1.442695
        %v4957 = vpow.pop %v4956
        %v4958 = vadd.f32 %v4927, 1.0
        %v4959 = vadd.f32 %v4929, 1.0
        %v4960 = vadd.f32 %v4931, 1.0
        %v4961 = vadd.f32 %v4933, 1.0
        %v4962 = vadd.f32 %v4935, 1.0
        %v4963 = vadd.f32 %v4937, 1.0
        %v4964 = vadd.f32 %v4939, 1.0
        %v4965 = vadd.f32 %v4941, 1.0
        %v4966 = vadd.f32 %v4943, 1.0
        %v4967 = vadd.f32 %v4945, 1.0
        %v4968 = vadd.f32 %v4947, 1.0
        %v4969 = vadd.f32 %v4949, 1.0
        %v4970 = vadd.f32 %v4951, 1.0
        %v4971 = vadd.f32 %v4953, 1.0
        %v4972 = vadd.f32 %v4955, 1.0
        %v4973 = vadd.f32 %v4957, 1.0
        %v4974 = vrcp.pop %v4958
        %v4975 = vmul.f32 %v4958, %v4974
        %v4976 = vsub.f32 1.0, %v4975
        %v4977 = vmul.f32 %v4974, %v4976
        %v4978 = vadd.f32 %v4974, %v4977
        %vm4979 = vweird.f32 %v4958
        %vm4980 = vweird.f32 %v4974
        %vm4981 = vmor %vm4979, %vm4980
        %v4982 = vsel %vm4981, %v4974, %v4978
        %v4983 = vand.u32 2147483647, %v4958
        %vm4984 = vcmp.eq.f32.partialorder %v4983, 8.507059e+37
        %v4985 = vand.u32 %v4958, 2147483648
        %v4986 = vor.u32 1.1754944e-38, %v4985
        %v4987 = vsel %vm4984, %v4986, %v4982
        %v4988 = vmul.f32 1.0, %v4987
        %v4989 = vrcp.pop %v4959
        %v4990 = vmul.f32 %v4959, %v4989
        %v4991 = vsub.f32 1.0, %v4990
        %v4992 = vmul.f32 %v4989, %v4991
        %v4993 = vadd.f32 %v4989, %v4992
        %vm4994 = vweird.f32 %v4959
        %vm4995 = vweird.f32 %v4989
        %vm4996 = vmor %vm4994, %vm4995
        %v4997 = vsel %vm4996, %v4989, %v4993
        %v4998 = vand.u32 2147483647, %v4959
        %vm4999 = vcmp.eq.f32.partialorder %v4998, 8.507059e+37
        %v5000 = vand.u32 %v4959, 2147483648
        %v5001 = vor.u32 1.1754944e-38, %v5000
        %v5002 = vsel %vm4999, %v5001, %v4997
        %v5003 = vmul.f32 1.0, %v5002
        %v5004 = vrcp.pop %v4960
        %v5005 = vmul.f32 %v4960, %v5004
        %v5006 = vsub.f32 1.0, %v5005
        %v5007 = vmul.f32 %v5004, %v5006
        %v5008 = vadd.f32 %v5004, %v5007
        %vm5009 = vweird.f32 %v4960
        %vm5010 = vweird.f32 %v5004
        %vm5011 = vmor %vm5009, %vm5010
        %v5012 = vsel %vm5011, %v5004, %v5008
        %v5013 = vand.u32 2147483647, %v4960
        %vm5014 = vcmp.eq.f32.partialorder %v5013, 8.507059e+37
        %v5015 = vand.u32 %v4960, 2147483648
        %v5016 = vor.u32 1.1754944e-38, %v5015
        %v5017 = vsel %vm5014, %v5016, %v5012
        %v5018 = vmul.f32 1.0, %v5017
        %v5019 = vrcp.pop %v4961
        %v5020 = vmul.f32 %v4961, %v5019
        %v5021 = vsub.f32 1.0, %v5020
        %v5022 = vmul.f32 %v5019, %v5021
        %v5023 = vadd.f32 %v5019, %v5022
        %vm5024 = vweird.f32 %v4961
        %vm5025 = vweird.f32 %v5019
        %vm5026 = vmor %vm5024, %vm5025
        %v5027 = vsel %vm5026, %v5019, %v5023
        %v5028 = vand.u32 2147483647, %v4961
        %vm5029 = vcmp.eq.f32.partialorder %v5028, 8.507059e+37
        %v5030 = vand.u32 %v4961, 2147483648
        %v5031 = vor.u32 1.1754944e-38, %v5030
        %v5032 = vsel %vm5029, %v5031, %v5027
        %v5033 = vmul.f32 1.0, %v5032
        %v5034 = vrcp.pop %v4962
        %v5035 = vmul.f32 %v4962, %v5034
        %v5036 = vsub.f32 1.0, %v5035
        %v5037 = vmul.f32 %v5034, %v5036
        %v5038 = vadd.f32 %v5034, %v5037
        %vm5039 = vweird.f32 %v4962
        %vm5040 = vweird.f32 %v5034
        %vm5041 = vmor %vm5039, %vm5040
        %v5042 = vsel %vm5041, %v5034, %v5038
        %v5043 = vand.u32 2147483647, %v4962
        %vm5044 = vcmp.eq.f32.partialorder %v5043, 8.507059e+37
        %v5045 = vand.u32 %v4962, 2147483648
        %v5046 = vor.u32 1.1754944e-38, %v5045
        %v5047 = vsel %vm5044, %v5046, %v5042
        %v5048 = vmul.f32 1.0, %v5047
        %v5049 = vrcp.pop %v4963
        %v5050 = vmul.f32 %v4963, %v5049
        %v5051 = vsub.f32 1.0, %v5050
        %v5052 = vmul.f32 %v5049, %v5051
        %v5053 = vadd.f32 %v5049, %v5052
        %vm5054 = vweird.f32 %v4963
        %vm5055 = vweird.f32 %v5049
        %vm5056 = vmor %vm5054, %vm5055
        %v5057 = vsel %vm5056, %v5049, %v5053
        %v5058 = vand.u32 2147483647, %v4963
        %vm5059 = vcmp.eq.f32.partialorder %v5058, 8.507059e+37
        %v5060 = vand.u32 %v4963, 2147483648
        %v5061 = vor.u32 1.1754944e-38, %v5060
        %v5062 = vsel %vm5059, %v5061, %v5057
        %v5063 = vmul.f32 1.0, %v5062
        %v5064 = vrcp.pop %v4964
        %v5065 = vmul.f32 %v4964, %v5064
        %v5066 = vsub.f32 1.0, %v5065
        %v5067 = vmul.f32 %v5064, %v5066
        %v5068 = vadd.f32 %v5064, %v5067
        %vm5069 = vweird.f32 %v4964
        %vm5070 = vweird.f32 %v5064
        %vm5071 = vmor %vm5069, %vm5070
        %v5072 = vsel %vm5071, %v5064, %v5068
        %v5073 = vand.u32 2147483647, %v4964
        %vm5074 = vcmp.eq.f32.partialorder %v5073, 8.507059e+37
        %v5075 = vand.u32 %v4964, 2147483648
        %v5076 = vor.u32 1.1754944e-38, %v5075
        %v5077 = vsel %vm5074, %v5076, %v5072
        %v5078 = vmul.f32 1.0, %v5077
        %v5079 = vrcp.pop %v4965
        %v5080 = vmul.f32 %v4965, %v5079
        %v5081 = vsub.f32 1.0, %v5080
        %v5082 = vmul.f32 %v5079, %v5081
        %v5083 = vadd.f32 %v5079, %v5082
        %vm5084 = vweird.f32 %v4965
        %vm5085 = vweird.f32 %v5079
        %vm5086 = vmor %vm5084, %vm5085
        %v5087 = vsel %vm5086, %v5079, %v5083
        %v5088 = vand.u32 2147483647, %v4965
        %vm5089 = vcmp.eq.f32.partialorder %v5088, 8.507059e+37
        %v5090 = vand.u32 %v4965, 2147483648
        %v5091 = vor.u32 1.1754944e-38, %v5090
        %v5092 = vsel %vm5089, %v5091, %v5087
        %v5093 = vmul.f32 1.0, %v5092
        %v5094 = vrcp.pop %v4966
        %v5095 = vmul.f32 %v4966, %v5094
        %v5096 = vsub.f32 1.0, %v5095
        %v5097 = vmul.f32 %v5094, %v5096
        %v5098 = vadd.f32 %v5094, %v5097
        %vm5099 = vweird.f32 %v4966
        %vm5100 = vweird.f32 %v5094
        %vm5101 = vmor %vm5099, %vm5100
        %v5102 = vsel %vm5101, %v5094, %v5098
        %v5103 = vand.u32 2147483647, %v4966
        %vm5104 = vcmp.eq.f32.partialorder %v5103, 8.507059e+37
        %v5105 = vand.u32 %v4966, 2147483648
        %v5106 = vor.u32 1.1754944e-38, %v5105
        %v5107 = vsel %vm5104, %v5106, %v5102
        %v5108 = vmul.f32 1.0, %v5107
        %v5109 = vrcp.pop %v4967
        %v5110 = vmul.f32 %v4967, %v5109
        %v5111 = vsub.f32 1.0, %v5110
        %v5112 = vmul.f32 %v5109, %v5111
        %v5113 = vadd.f32 %v5109, %v5112
        %vm5114 = vweird.f32 %v4967
        %vm5115 = vweird.f32 %v5109
        %vm5116 = vmor %vm5114, %vm5115
        %v5117 = vsel %vm5116, %v5109, %v5113
        %v5118 = vand.u32 2147483647, %v4967
        %vm5119 = vcmp.eq.f32.partialorder %v5118, 8.507059e+37
        %v5120 = vand.u32 %v4967, 2147483648
        %v5121 = vor.u32 1.1754944e-38, %v5120
        %v5122 = vsel %vm5119, %v5121, %v5117
        %v5123 = vmul.f32 1.0, %v5122
        %v5124 = vrcp.pop %v4968
        %v5125 = vmul.f32 %v4968, %v5124
        %v5126 = vsub.f32 1.0, %v5125
        %v5127 = vmul.f32 %v5124, %v5126
        %v5128 = vadd.f32 %v5124, %v5127
        %vm5129 = vweird.f32 %v4968
        %vm5130 = vweird.f32 %v5124
        %vm5131 = vmor %vm5129, %vm5130
        %v5132 = vsel %vm5131, %v5124, %v5128
        %v5133 = vand.u32 2147483647, %v4968
        %vm5134 = vcmp.eq.f32.partialorder %v5133, 8.507059e+37
        %v5135 = vand.u32 %v4968, 2147483648
        %v5136 = vor.u32 1.1754944e-38, %v5135
        %v5137 = vsel %vm5134, %v5136, %v5132
        %v5138 = vmul.f32 1.0, %v5137
        %v5139 = vrcp.pop %v4969
        %v5140 = vmul.f32 %v4969, %v5139
        %v5141 = vsub.f32 1.0, %v5140
        %v5142 = vmul.f32 %v5139, %v5141
        %v5143 = vadd.f32 %v5139, %v5142
        %vm5144 = vweird.f32 %v4969
        %vm5145 = vweird.f32 %v5139
        %vm5146 = vmor %vm5144, %vm5145
        %v5147 = vsel %vm5146, %v5139, %v5143
        %v5148 = vand.u32 2147483647, %v4969
        %vm5149 = vcmp.eq.f32.partialorder %v5148, 8.507059e+37
        %v5150 = vand.u32 %v4969, 2147483648
        %v5151 = vor.u32 1.1754944e-38, %v5150
        %v5152 = vsel %vm5149, %v5151, %v5147
        %v5153 = vmul.f32 1.0, %v5152
        %v5154 = vrcp.pop %v4970
        %v5155 = vmul.f32 %v4970, %v5154
        %v5156 = vsub.f32 1.0, %v5155
        %v5157 = vmul.f32 %v5154, %v5156
        %v5158 = vadd.f32 %v5154, %v5157
        %vm5159 = vweird.f32 %v4970
        %vm5160 = vweird.f32 %v5154
        %vm5161 = vmor %vm5159, %vm5160
        %v5162 = vsel %vm5161, %v5154, %v5158
        %v5163 = vand.u32 2147483647, %v4970
        %vm5164 = vcmp.eq.f32.partialorder %v5163, 8.507059e+37
        %v5165 = vand.u32 %v4970, 2147483648
        %v5166 = vor.u32 1.1754944e-38, %v5165
        %v5167 = vsel %vm5164, %v5166, %v5162
        %v5168 = vmul.f32 1.0, %v5167
        %v5169 = vrcp.pop %v4971
        %v5170 = vmul.f32 %v4971, %v5169
        %v5171 = vsub.f32 1.0, %v5170
        %v5172 = vmul.f32 %v5169, %v5171
        %v5173 = vadd.f32 %v5169, %v5172
        %vm5174 = vweird.f32 %v4971
        %vm5175 = vweird.f32 %v5169
        %vm5176 = vmor %vm5174, %vm5175
        %v5177 = vsel %vm5176, %v5169, %v5173
        %v5178 = vand.u32 2147483647, %v4971
        %vm5179 = vcmp.eq.f32.partialorder %v5178, 8.507059e+37
        %v5180 = vand.u32 %v4971, 2147483648
        %v5181 = vor.u32 1.1754944e-38, %v5180
        %v5182 = vsel %vm5179, %v5181, %v5177
        %v5183 = vmul.f32 1.0, %v5182
        %v5184 = vrcp.pop %v4972
        %v5185 = vmul.f32 %v4972, %v5184
        %v5186 = vsub.f32 1.0, %v5185
        %v5187 = vmul.f32 %v5184, %v5186
        %v5188 = vadd.f32 %v5184, %v5187
        %vm5189 = vweird.f32 %v4972
        %vm5190 = vweird.f32 %v5184
        %vm5191 = vmor %vm5189, %vm5190
        %v5192 = vsel %vm5191, %v5184, %v5188
        %v5193 = vand.u32 2147483647, %v4972
        %vm5194 = vcmp.eq.f32.partialorder %v5193, 8.507059e+37
        %v5195 = vand.u32 %v4972, 2147483648
        %v5196 = vor.u32 1.1754944e-38, %v5195
        %v5197 = vsel %vm5194, %v5196, %v5192
        %v5198 = vmul.f32 1.0, %v5197
        %v5199 = vrcp.pop %v4973
        %v5200 = vmul.f32 %v4973, %v5199
        %v5201 = vsub.f32 1.0, %v5200
        %v5202 = vmul.f32 %v5199, %v5201
        %v5203 = vadd.f32 %v5199, %v5202
        %vm5204 = vweird.f32 %v4973
        %vm5205 = vweird.f32 %v5199
        %vm5206 = vmor %vm5204, %vm5205
        %v5207 = vsel %vm5206, %v5199, %v5203
        %v5208 = vand.u32 2147483647, %v4973
        %vm5209 = vcmp.eq.f32.partialorder %v5208, 8.507059e+37
        %v5210 = vand.u32 %v4973, 2147483648
        %v5211 = vor.u32 1.1754944e-38, %v5210
        %v5212 = vsel %vm5209, %v5211, %v5207
        %v5213 = vmul.f32 1.0, %v5212
        %5214 = vst.msk [vmem:[#allocation2] sm:$0xff] %vm903, 0.0
        %5215 = vst.msk [vmem:[#allocation2 + $0x8] sm:$0xff] %vm903, 0.0
        %vm5216 = vcmask 254976
        %5217 = vst.msk [vmem:[#allocation2 + $0x10] sm:$0x3] %vm5216, 0.0
        %s5218 = scalar_lea.vmem [#allocation2], 408
        %5219 = vst.msk [vmem:[%s5218] sm:$0xff] %vm903, 0.0
        %5220 = vst.msk [vmem:[%s5218 + $0x8] sm:$0xff] %vm903, 0.0
        %5221 = vst.msk [vmem:[%s5218 + $0x10] sm:$0x3] %vm5216, 0.0
        %vm5222 = vcmask 253952
        %5223 = vst.msk [vmem:[#allocation2] sm:$0x1] %vm5222, 0.0
        %5224 = vst.msk [vmem:[#allocation2 + $0x18] sm:$0x1] %vm5222, 0.0
        %5225 = vst.msk [vmem:[#allocation2 + $0x30] sm:$0x1] %vm5222, 0.0
        %5226 = vst.msk [vmem:[#allocation2 + $0x48] sm:$0x1] %vm5222, 0.0
        %5227 = vst.msk [vmem:[#allocation2 + $0x60] sm:$0x1] %vm5222, 0.0
        %5228 = vst.msk [vmem:[#allocation2 + $0x78] sm:$0x1] %vm5222, 0.0
        %5229 = vst.msk [vmem:[#allocation2 + $0x90] sm:$0x1] %vm5222, 0.0
        %5230 = vst.msk [vmem:[#allocation2 + $0xa8] sm:$0x1] %vm5222, 0.0
        %5231 = vst.msk [vmem:[#allocation2 + $0xc0] sm:$0x1] %vm5222, 0.0
        %5232 = vst.msk [vmem:[#allocation2 + $0xd8] sm:$0x1] %vm5222, 0.0
        %5233 = vst.msk [vmem:[#allocation2 + $0xf0] sm:$0x1] %vm5222, 0.0
        %5234 = vst.msk [vmem:[#allocation2 + $0x108] sm:$0x1] %vm5222, 0.0
        %5235 = vst.msk [vmem:[#allocation2 + $0x120] sm:$0x1] %vm5222, 0.0
        %5236 = vst.msk [vmem:[#allocation2 + $0x138] sm:$0x1] %vm5222, 0.0
        %5237 = vst.msk [vmem:[#allocation2 + $0x150] sm:$0x1] %vm5222, 0.0
        %5238 = vst.msk [vmem:[#allocation2 + $0x168] sm:$0x1] %vm5222, 0.0
        %5239 = vst.msk [vmem:[#allocation2 + $0x180] sm:$0x1] %vm5222, 0.0
        %5240 = vst.msk [vmem:[#allocation2 + $0x198] sm:$0x1] %vm5222, 0.0
        %5241 = vst.msk [vmem:[#allocation2 + $0x11] sm:$0x1] %vm5222, 0.0
        %5242 = vst.msk [vmem:[#allocation2 + $0x29] sm:$0x1] %vm5222, 0.0
        %5243 = vst.msk [vmem:[#allocation2 + $0x41] sm:$0x1] %vm5222, 0.0
        %5244 = vst.msk [vmem:[#allocation2 + $0x59] sm:$0x1] %vm5222, 0.0
        %5245 = vst.msk [vmem:[#allocation2 + $0x71] sm:$0x1] %vm5222, 0.0
        %5246 = vst.msk [vmem:[#allocation2 + $0x89] sm:$0x1] %vm5222, 0.0
        %5247 = vst.msk [vmem:[#allocation2 + $0xa1] sm:$0x1] %vm5222, 0.0
        %5248 = vst.msk [vmem:[#allocation2 + $0xb9] sm:$0x1] %vm5222, 0.0
        %5249 = vst.msk [vmem:[#allocation2 + $0xd1] sm:$0x1] %vm5222, 0.0
        %5250 = vst.msk [vmem:[#allocation2 + $0xe9] sm:$0x1] %vm5222, 0.0
        %5251 = vst.msk [vmem:[#allocation2 + $0x101] sm:$0x1] %vm5222, 0.0
        %5252 = vst.msk [vmem:[#allocation2 + $0x119] sm:$0x1] %vm5222, 0.0
        %5253 = vst.msk [vmem:[#allocation2 + $0x131] sm:$0x1] %vm5222, 0.0
        %5254 = vst.msk [vmem:[#allocation2 + $0x149] sm:$0x1] %vm5222, 0.0
        %5255 = vst.msk [vmem:[#allocation2 + $0x161] sm:$0x1] %vm5222, 0.0
        %5256 = vst.msk [vmem:[#allocation2 + $0x179] sm:$0x1] %vm5222, 0.0
        %5257 = vst.msk [vmem:[#allocation2 + $0x191] sm:$0x1] %vm5222, 0.0
        %5258 = vst.msk [vmem:[#allocation2 + $0x1a9] sm:$0x1] %vm5222, 0.0
        %v5259 = vmul.f32 %v5108, %v385
        %v5260 = vmul.f32 %v5123, %v386
        %v5261 = vmul.f32 %v5138, %v387
        %v5262 = vmul.f32 %v5153, %v388
        %v5263 = vmul.f32 %v5168, %v389
        %v5264 = vmul.f32 %v5183, %v390
        %v5265 = vmul.f32 %v5198, %v391
        %v5266 = vmul.f32 %v5213, %v392
        %5267 = vxpose.xlu0.b32.start [1/16] %v5259, 128
        %5268 = vxpose.xlu0.b32.cont [2/16] %v5261, 128
        %5269 = vxpose.xlu0.b32.cont [3/16] %v5263, 128
        %5270 = vxpose.xlu0.b32.cont [4/16] %v5265, 128
        %5271 = vxpose.xlu0.b32.cont [5/16] 0.0, 128
        %5272 = vxpose.xlu0.b32.cont [6/16] 0.0, 128
        %5273 = vxpose.xlu0.b32.cont [7/16] 0.0, 128
        %5274 = vxpose.xlu0.b32.cont [8/16] 0.0, 128
        %5275 = vxpose.xlu0.b32.cont [9/16] 0.0, 128
        %5276 = vxpose.xlu0.b32.cont [10/16] 0.0, 128
        %5277 = vxpose.xlu0.b32.cont [11/16] 0.0, 128
        %5278 = vxpose.xlu0.b32.cont [12/16] 0.0, 128
        %5279 = vxpose.xlu0.b32.cont [13/16] 0.0, 128
        %5280 = vxpose.xlu0.b32.cont [14/16] 0.0, 128
        %5281 = vxpose.xlu0.b32.cont [15/16] 0.0, 128
        %5282 = vxpose.xlu0.b32.end [16/16] 0.0, 128
        %v5283 = vpop.trf.xlu0
        %v5284 = vpop.trf.xlu0
        %v5285 = vpop.trf.xlu0
        %v5286 = vpop.trf.xlu0
        %v5287 = vpop.trf.xlu0
        %v5288 = vpop.trf.xlu0
        %v5289 = vpop.trf.xlu0
        %v5290 = vpop.trf.xlu0
        %v5291 = vpop.trf.xlu0
        %v5292 = vpop.trf.xlu0
        %v5293 = vpop.trf.xlu0
        %v5294 = vpop.trf.xlu0
        %v5295 = vpop.trf.xlu0
        %v5296 = vpop.trf.xlu0
        %v5297 = vpop.trf.xlu0
        %v5298 = vpop.trf.xlu0
        %5299 = vxpose.xlu0.b32.start [1/16] %v5260, 128
        %5300 = vxpose.xlu0.b32.cont [2/16] %v5262, 128
        %5301 = vxpose.xlu0.b32.cont [3/16] %v5264, 128
        %5302 = vxpose.xlu0.b32.cont [4/16] %v5266, 128
        %5303 = vxpose.xlu0.b32.cont [5/16] 0.0, 128
        %5304 = vxpose.xlu0.b32.cont [6/16] 0.0, 128
        %5305 = vxpose.xlu0.b32.cont [7/16] 0.0, 128
        %5306 = vxpose.xlu0.b32.cont [8/16] 0.0, 128
        %5307 = vxpose.xlu0.b32.cont [9/16] 0.0, 128
        %5308 = vxpose.xlu0.b32.cont [10/16] 0.0, 128
        %5309 = vxpose.xlu0.b32.cont [11/16] 0.0, 128
        %5310 = vxpose.xlu0.b32.cont [12/16] 0.0, 128
        %5311 = vxpose.xlu0.b32.cont [13/16] 0.0, 128
        %5312 = vxpose.xlu0.b32.cont [14/16] 0.0, 128
        %5313 = vxpose.xlu0.b32.cont [15/16] 0.0, 128
        %5314 = vxpose.xlu0.b32.end [16/16] 0.0, 128
        %v5315 = vpop.trf.xlu0
        %v5316 = vpop.trf.xlu0
        %v5317 = vpop.trf.xlu0
        %v5318 = vpop.trf.xlu0
        %v5319 = vpop.trf.xlu0
        %v5320 = vpop.trf.xlu0
        %v5321 = vpop.trf.xlu0
        %v5322 = vpop.trf.xlu0
        %v5323 = vpop.trf.xlu0
        %v5324 = vpop.trf.xlu0
        %v5325 = vpop.trf.xlu0
        %v5326 = vpop.trf.xlu0
        %v5327 = vpop.trf.xlu0
        %v5328 = vpop.trf.xlu0
        %v5329 = vpop.trf.xlu0
        %v5330 = vpop.trf.xlu0
        %s5331 = scalar_lea.vmem [#allocation2], 24
        %5332 = vst.msk [vmem:[%s5331 + $0x1] sm:$0xff] %vm903, %v5283
        %5333 = vst.msk [vmem:[%s5331 + $0x9] sm:$0xff] %vm903, %v5284
        %5334 = vst.msk [vmem:[%s5331 + $0x19] sm:$0xff] %vm903, %v5285
        %5335 = vst.msk [vmem:[%s5331 + $0x21] sm:$0xff] %vm903, %v5286
        %5336 = vst.msk [vmem:[%s5331 + $0x31] sm:$0xff] %vm903, %v5287
        %5337 = vst.msk [vmem:[%s5331 + $0x39] sm:$0xff] %vm903, %v5288
        %5338 = vst.msk [vmem:[%s5331 + $0x49] sm:$0xff] %vm903, %v5289
        %5339 = vst.msk [vmem:[%s5331 + $0x51] sm:$0xff] %vm903, %v5290
        %5340 = vst.msk [vmem:[%s5331 + $0x61] sm:$0xff] %vm903, %v5291
        %5341 = vst.msk [vmem:[%s5331 + $0x69] sm:$0xff] %vm903, %v5292
        %5342 = vst.msk [vmem:[%s5331 + $0x79] sm:$0xff] %vm903, %v5293
        %5343 = vst.msk [vmem:[%s5331 + $0x81] sm:$0xff] %vm903, %v5294
        %5344 = vst.msk [vmem:[%s5331 + $0x91] sm:$0xff] %vm903, %v5295
        %5345 = vst.msk [vmem:[%s5331 + $0x99] sm:$0xff] %vm903, %v5296
        %5346 = vst.msk [vmem:[%s5331 + $0xa9] sm:$0xff] %vm903, %v5297
        %5347 = vst.msk [vmem:[%s5331 + $0xb1] sm:$0xff] %vm903, %v5298
        %5348 = vst.msk [vmem:[%s5331 + $0xc1] sm:$0xff] %vm903, %v5315
        %5349 = vst.msk [vmem:[%s5331 + $0xc9] sm:$0xff] %vm903, %v5316
        %5350 = vst.msk [vmem:[%s5331 + $0xd9] sm:$0xff] %vm903, %v5317
        %5351 = vst.msk [vmem:[%s5331 + $0xe1] sm:$0xff] %vm903, %v5318
        %5352 = vst.msk [vmem:[%s5331 + $0xf1] sm:$0xff] %vm903, %v5319
        %5353 = vst.msk [vmem:[%s5331 + $0xf9] sm:$0xff] %vm903, %v5320
        %5354 = vst.msk [vmem:[%s5331 + $0x109] sm:$0xff] %vm903, %v5321
        %5355 = vst.msk [vmem:[%s5331 + $0x111] sm:$0xff] %vm903, %v5322
        %5356 = vst.msk [vmem:[%s5331 + $0x121] sm:$0xff] %vm903, %v5323
        %5357 = vst.msk [vmem:[%s5331 + $0x129] sm:$0xff] %vm903, %v5324
        %5358 = vst.msk [vmem:[%s5331 + $0x139] sm:$0xff] %vm903, %v5325
        %5359 = vst.msk [vmem:[%s5331 + $0x141] sm:$0xff] %vm903, %v5326
        %5360 = vst.msk [vmem:[%s5331 + $0x151] sm:$0xff] %vm903, %v5327
        %5361 = vst.msk [vmem:[%s5331 + $0x159] sm:$0xff] %vm903, %v5328
        %5362 = vst.msk [vmem:[%s5331 + $0x169] sm:$0xff] %vm903, %v5329
        %5363 = vst.msk [vmem:[%s5331 + $0x171] sm:$0xff] %vm903, %v5330
        %v5364 = vld [vmem:[#allocation2] sm:$0xff]
        %v5365 = vld [vmem:[#allocation2 + $0x8] sm:$0xff]
        %v5366 = vld [vmem:[#allocation2 + $0x10] sm:$0x3]
        %v5367 = vld [vmem:[#allocation2 + $0x18] sm:$0xff]
        %v5368 = vld [vmem:[#allocation2 + $0x20] sm:$0xff]
        %v5369 = vld [vmem:[#allocation2 + $0x28] sm:$0x3]
        %v5370 = vld [vmem:[#allocation2 + $0x30] sm:$0xff]
        %v5371 = vld [vmem:[#allocation2 + $0x38] sm:$0xff]
        %v5372 = vld [vmem:[#allocation2 + $0x40] sm:$0x3]
        %v5373 = vld [vmem:[#allocation2 + $0x48] sm:$0xff]
        %v5374 = vld [vmem:[#allocation2 + $0x50] sm:$0xff]
        %v5375 = vld [vmem:[#allocation2 + $0x58] sm:$0x3]
        %v5376 = vld [vmem:[#allocation2 + $0x60] sm:$0xff]
        %v5377 = vld [vmem:[#allocation2 + $0x68] sm:$0xff]
        %v5378 = vld [vmem:[#allocation2 + $0x70] sm:$0x3]
        %v5379 = vld [vmem:[#allocation2 + $0x78] sm:$0xff]
        %v5380 = vld [vmem:[#allocation2 + $0x80] sm:$0xff]
        %v5381 = vld [vmem:[#allocation2 + $0x88] sm:$0x3]
        %v5382 = vld [vmem:[#allocation2 + $0x90] sm:$0xff]
        %v5383 = vld [vmem:[#allocation2 + $0x98] sm:$0xff]
        %v5384 = vld [vmem:[#allocation2 + $0xa0] sm:$0x3]
        %v5385 = vld [vmem:[#allocation2 + $0xa8] sm:$0xff]
        %v5386 = vld [vmem:[#allocation2 + $0xb0] sm:$0xff]
        %v5387 = vld [vmem:[#allocation2 + $0xb8] sm:$0x3]
        %v5388 = vld [vmem:[#allocation2 + $0xc0] sm:$0xff]
        %v5389 = vld [vmem:[#allocation2 + $0xc8] sm:$0xff]
        %v5390 = vld [vmem:[#allocation2 + $0xd0] sm:$0x3]
        %v5391 = vld [vmem:[#allocation2 + $0xd8] sm:$0xff]
        %v5392 = vld [vmem:[#allocation2 + $0xe0] sm:$0xff]
        %v5393 = vld [vmem:[#allocation2 + $0xe8] sm:$0x3]
        %v5394 = vld [vmem:[#allocation2 + $0xf0] sm:$0xff]
        %v5395 = vld [vmem:[#allocation2 + $0xf8] sm:$0xff]
        %v5396 = vld [vmem:[#allocation2 + $0x100] sm:$0x3]
        %v5397 = vld [vmem:[#allocation2 + $0x108] sm:$0xff]
        %v5398 = vld [vmem:[#allocation2 + $0x110] sm:$0xff]
        %v5399 = vld [vmem:[#allocation2 + $0x118] sm:$0x3]
        %v5400 = vld [vmem:[#allocation2 + $0x120] sm:$0xff]
        %v5401 = vld [vmem:[#allocation2 + $0x128] sm:$0xff]
        %v5402 = vld [vmem:[#allocation2 + $0x130] sm:$0x3]
        %v5403 = vld [vmem:[#allocation2 + $0x138] sm:$0xff]
        %v5404 = vld [vmem:[#allocation2 + $0x140] sm:$0xff]
        %v5405 = vld [vmem:[#allocation2 + $0x148] sm:$0x3]
        %v5406 = vld [vmem:[#allocation2 + $0x150] sm:$0xff]
        %v5407 = vld [vmem:[#allocation2 + $0x158] sm:$0xff]
        %v5408 = vld [vmem:[#allocation2 + $0x160] sm:$0x3]
        %v5409 = vld [vmem:[#allocation2 + $0x168] sm:$0xff]
        %v5410 = vld [vmem:[#allocation2 + $0x170] sm:$0xff]
        %v5411 = vld [vmem:[#allocation2 + $0x178] sm:$0x3]
        %v5412 = vld [vmem:[#allocation2 + $0x180] sm:$0xff]
        %v5413 = vld [vmem:[#allocation2 + $0x188] sm:$0xff]
        %v5414 = vld [vmem:[#allocation2 + $0x190] sm:$0x3]
        %v5415 = vld [vmem:[#allocation2 + $0x198] sm:$0xff]
        %v5416 = vld [vmem:[#allocation2 + $0x1a0] sm:$0xff]
        %v5417 = vld [vmem:[#allocation2 + $0x1a8] sm:$0x3]
        %v5418 = vpack.c.bf16 %v5365, %v5364
        %v5419 = vpack.c.bf16 %v5368, %v5367
        %v5420 = vpack.c.bf16 %v5371, %v5370
        %v5421 = vpack.c.bf16 %v5374, %v5373
        %v5422 = vpack.c.bf16 %v5377, %v5376
        %v5423 = vpack.c.bf16 %v5380, %v5379
        %v5424 = vpack.c.bf16 %v5383, %v5382
        %v5425 = vpack.c.bf16 %v5386, %v5385
        %v5426 = vpack.c.bf16 %v5389, %v5388
        %v5427 = vpack.c.bf16 %v5392, %v5391
        %v5428 = vpack.c.bf16 %v5395, %v5394
        %v5429 = vpack.c.bf16 %v5398, %v5397
        %v5430 = vpack.c.bf16 %v5401, %v5400
        %v5431 = vpack.c.bf16 %v5404, %v5403
        %v5432 = vpack.c.bf16 %v5407, %v5406
        %v5433 = vpack.c.bf16 %v5410, %v5409
        %v5434 = vld [vmem:[%s7] sm:$0xf]
        %v5435 = vld [vmem:[%s7 + $0x4] sm:$0xf]
        %v5436 = vld [vmem:[%s7 + $0x8] sm:$0xf]
        %v5437 = vld [vmem:[%s7 + $0xc] sm:$0xf]
        %vm5486 = vcmask 1046528
        %v5487 = vrot.slane %v5364, 1
        %v5488 = vrot.slane %v5365, 1
        %v5489 = vsel %vm5486, %v5487, %v5488
        %v5490 = vrot.slane %v5366, 1
        %v5491 = vsel %vm5486, %v5488, %v5490
        %v5492 = vrot.slane %v5367, 1
        %v5493 = vrot.slane %v5368, 1
        %v5494 = vsel %vm5486, %v5492, %v5493
        %v5495 = vrot.slane %v5369, 1
        %v5496 = vsel %vm5486, %v5493, %v5495
        %v5497 = vrot.slane %v5370, 1
        %v5498 = vrot.slane %v5371, 1
        %v5499 = vsel %vm5486, %v5497, %v5498
        %v5500 = vrot.slane %v5372, 1
        %v5501 = vsel %vm5486, %v5498, %v5500
        %v5502 = vrot.slane %v5373, 1
        %v5503 = vrot.slane %v5374, 1
        %v5504 = vsel %vm5486, %v5502, %v5503
        %v5505 = vrot.slane %v5375, 1
        %v5506 = vsel %vm5486, %v5503, %v5505
        %v5507 = vrot.slane %v5376, 1
        %v5508 = vrot.slane %v5377, 1
        %v5509 = vsel %vm5486, %v5507, %v5508
        %v5510 = vrot.slane %v5378, 1
        %v5511 = vsel %vm5486, %v5508, %v5510
        %v5512 = vrot.slane %v5379, 1
        %v5513 = vrot.slane %v5380, 1
        %v5514 = vsel %vm5486, %v5512, %v5513
        %v5515 = vrot.slane %v5381, 1
        %v5516 = vsel %vm5486, %v5513, %v5515
        %v5517 = vrot.slane %v5382, 1
        %v5518 = vrot.slane %v5383, 1
        %v5519 = vsel %vm5486, %v5517, %v5518
        %v5520 = vrot.slane %v5384, 1
        %v5521 = vsel %vm5486, %v5518, %v5520
        %v5522 = vrot.slane %v5385, 1
        %v5523 = vrot.slane %v5386, 1
        %v5524 = vsel %vm5486, %v5522, %v5523
        %v5525 = vrot.slane %v5387, 1
        %v5526 = vsel %vm5486, %v5523, %v5525
        %v5527 = vrot.slane %v5388, 1
        %v5528 = vrot.slane %v5389, 1
        %v5529 = vsel %vm5486, %v5527, %v5528
        %v5530 = vrot.slane %v5390, 1
        %v5531 = vsel %vm5486, %v5528, %v5530
        %v5532 = vrot.slane %v5391, 1
        %v5533 = vrot.slane %v5392, 1
        %v5534 = vsel %vm5486, %v5532, %v5533
        %v5535 = vrot.slane %v5393, 1
        %v5536 = vsel %vm5486, %v5533, %v5535
        %v5537 = vrot.slane %v5394, 1
        %v5538 = vrot.slane %v5395, 1
        %v5539 = vsel %vm5486, %v5537, %v5538
        %v5540 = vrot.slane %v5396, 1
        %v5541 = vsel %vm5486, %v5538, %v5540
        %v5542 = vrot.slane %v5397, 1
        %v5543 = vrot.slane %v5398, 1
        %v5544 = vsel %vm5486, %v5542, %v5543
        %v5545 = vrot.slane %v5399, 1
        %v5546 = vsel %vm5486, %v5543, %v5545
        %v5547 = vrot.slane %v5400, 1
        %v5548 = vrot.slane %v5401, 1
        %v5549 = vsel %vm5486, %v5547, %v5548
        %v5550 = vrot.slane %v5402, 1
        %v5551 = vsel %vm5486, %v5548, %v5550
        %v5552 = vrot.slane %v5403, 1
        %v5553 = vrot.slane %v5404, 1
        %v5554 = vsel %vm5486, %v5552, %v5553
        %v5555 = vrot.slane %v5405, 1
        %v5556 = vsel %vm5486, %v5553, %v5555
        %v5557 = vrot.slane %v5406, 1
        %v5558 = vrot.slane %v5407, 1
        %v5559 = vsel %vm5486, %v5557, %v5558
        %v5560 = vrot.slane %v5408, 1
        %v5561 = vsel %vm5486, %v5558, %v5560
        %v5562 = vrot.slane %v5409, 1
        %v5563 = vrot.slane %v5410, 1
        %v5564 = vsel %vm5486, %v5562, %v5563
        %v5565 = vrot.slane %v5411, 1
        %v5566 = vsel %vm5486, %v5563, %v5565
        %v5599 = vpack.c.bf16 %v5491, %v5489
        %v5600 = vpack.c.bf16 %v5496, %v5494
        %v5601 = vpack.c.bf16 %v5501, %v5499
        %v5602 = vpack.c.bf16 %v5506, %v5504
        %v5603 = vpack.c.bf16 %v5511, %v5509
        %v5604 = vpack.c.bf16 %v5516, %v5514
        %v5605 = vpack.c.bf16 %v5521, %v5519
        %v5606 = vpack.c.bf16 %v5526, %v5524
        %v5607 = vpack.c.bf16 %v5531, %v5529
        %v5608 = vpack.c.bf16 %v5536, %v5534
        %v5609 = vpack.c.bf16 %v5541, %v5539
        %v5610 = vpack.c.bf16 %v5546, %v5544
        %v5611 = vpack.c.bf16 %v5551, %v5549
        %v5612 = vpack.c.bf16 %v5556, %v5554
        %v5613 = vpack.c.bf16 %v5561, %v5559
        %v5614 = vpack.c.bf16 %v5566, %v5564
        %s5615 = scalar_lea.vmem %s7, 16
        %v5616 = vld [vmem:[%s5615] sm:$0xf]
        %v5617 = vld [vmem:[%s5615 + $0x4] sm:$0xf]
        %v5618 = vld [vmem:[%s5615 + $0x8] sm:$0xf]
        %v5619 = vld [vmem:[%s5615 + $0xc] sm:$0xf]
        %v5624 = vunpack.c.l.b16 %v5616
        %v5625 = vunpack.c.l.b16 %v5617
        %v5626 = vunpack.c.l.b16 %v5618
        %v5627 = vunpack.c.l.b16 %v5619
        %v5628 = vpack.c.b16 %v5625, %v5624
        %v5629 = vpack.c.b16 %v5627, %v5626
        %v5633 = vsel %vm903, %v5599, 0
        %v5636 = vsel %vm903, %v5600, 0
        %v5639 = vsel %vm903, %v5601, 0
        %v5642 = vsel %vm903, %v5602, 0
        %v5645 = vsel %vm903, %v5603, 0
        %v5648 = vsel %vm903, %v5604, 0
        %v5651 = vsel %vm903, %v5605, 0
        %v5654 = vsel %vm903, %v5606, 0
        %v5657 = vsel %vm903, %v5607, 0
        %v5660 = vsel %vm903, %v5608, 0
        %v5663 = vsel %vm903, %v5609, 0
        %v5666 = vsel %vm903, %v5610, 0
        %v5669 = vsel %vm903, %v5611, 0
        %v5672 = vsel %vm903, %v5612, 0
        %v5675 = vsel %vm903, %v5613, 0
        %v5678 = vsel %vm903, %v5614, 0
        %5680 = vmatpush.bf16.msra.mxu0 0
        %5681 = vmatpush.bf16.msra.mxu0 0
        %5682 = vmatpush.bf16.msra.mxu0 0
        %5683 = vmatpush.bf16.msra.mxu0 0
        %5684 = vmatpush.bf16.msra.mxu0 0
        %5685 = vmatpush.bf16.msra.mxu0 0
        %5686 = vmatpush.bf16.msra.mxu0 %v5629
        %5687 = vmatpush.bf16.msra.mxu0 %v5628
        %5688 = vmatmul.bf16.gmra.mxu0 %v5633
        %v5689 = vpop.f32.mrf.mxu0
        %v5690 = vadd.f32 0.0, %v5689
        %v5691 = vpop.f32.mrf.mxu0
        %v5692 = vadd.f32 0.0, %v5691
        %5693 = vmatmul.bf16.gmra.mxu0 %v5636
        %v5694 = vpop.f32.mrf.mxu0
        %v5695 = vadd.f32 0.0, %v5694
        %v5696 = vpop.f32.mrf.mxu0
        %v5697 = vadd.f32 0.0, %v5696
        %5698 = vmatmul.bf16.gmra.mxu0 %v5639
        %v5699 = vpop.f32.mrf.mxu0
        %v5700 = vadd.f32 0.0, %v5699
        %v5701 = vpop.f32.mrf.mxu0
        %v5702 = vadd.f32 0.0, %v5701
        %5703 = vmatmul.bf16.gmra.mxu0 %v5642
        %v5704 = vpop.f32.mrf.mxu0
        %v5705 = vadd.f32 0.0, %v5704
        %v5706 = vpop.f32.mrf.mxu0
        %v5707 = vadd.f32 0.0, %v5706
        %5708 = vmatmul.bf16.gmra.mxu0 %v5645
        %v5709 = vpop.f32.mrf.mxu0
        %v5710 = vadd.f32 0.0, %v5709
        %v5711 = vpop.f32.mrf.mxu0
        %v5712 = vadd.f32 0.0, %v5711
        %5713 = vmatmul.bf16.gmra.mxu0 %v5648
        %v5714 = vpop.f32.mrf.mxu0
        %v5715 = vadd.f32 0.0, %v5714
        %v5716 = vpop.f32.mrf.mxu0
        %v5717 = vadd.f32 0.0, %v5716
        %5718 = vmatmul.bf16.gmra.mxu0 %v5651
        %v5719 = vpop.f32.mrf.mxu0
        %v5720 = vadd.f32 0.0, %v5719
        %v5721 = vpop.f32.mrf.mxu0
        %v5722 = vadd.f32 0.0, %v5721
        %5723 = vmatmul.bf16.gmra.mxu0 %v5654
        %v5724 = vpop.f32.mrf.mxu0
        %v5725 = vadd.f32 0.0, %v5724
        %v5726 = vpop.f32.mrf.mxu0
        %v5727 = vadd.f32 0.0, %v5726
        %5728 = vmatmul.bf16.gmra.mxu0 %v5657
        %v5729 = vpop.f32.mrf.mxu0
        %v5730 = vadd.f32 0.0, %v5729
        %v5731 = vpop.f32.mrf.mxu0
        %v5732 = vadd.f32 0.0, %v5731
        %5733 = vmatmul.bf16.gmra.mxu0 %v5660
        %v5734 = vpop.f32.mrf.mxu0
        %v5735 = vadd.f32 0.0, %v5734
        %v5736 = vpop.f32.mrf.mxu0
        %v5737 = vadd.f32 0.0, %v5736
        %5738 = vmatmul.bf16.gmra.mxu0 %v5663
        %v5739 = vpop.f32.mrf.mxu0
        %v5740 = vadd.f32 0.0, %v5739
        %v5741 = vpop.f32.mrf.mxu0
        %v5742 = vadd.f32 0.0, %v5741
        %5743 = vmatmul.bf16.gmra.mxu0 %v5666
        %v5744 = vpop.f32.mrf.mxu0
        %v5745 = vadd.f32 0.0, %v5744
        %v5746 = vpop.f32.mrf.mxu0
        %v5747 = vadd.f32 0.0, %v5746
        %5748 = vmatmul.bf16.gmra.mxu0 %v5669
        %v5749 = vpop.f32.mrf.mxu0
        %v5750 = vadd.f32 0.0, %v5749
        %v5751 = vpop.f32.mrf.mxu0
        %v5752 = vadd.f32 0.0, %v5751
        %5753 = vmatmul.bf16.gmra.mxu0 %v5672
        %v5754 = vpop.f32.mrf.mxu0
        %v5755 = vadd.f32 0.0, %v5754
        %v5756 = vpop.f32.mrf.mxu0
        %v5757 = vadd.f32 0.0, %v5756
        %5758 = vmatmul.bf16.gmra.mxu0 %v5675
        %v5759 = vpop.f32.mrf.mxu0
        %v5760 = vadd.f32 0.0, %v5759
        %v5761 = vpop.f32.mrf.mxu0
        %v5762 = vadd.f32 0.0, %v5761
        %5763 = vmatmul.bf16.gmra.mxu0 %v5678
        %v5764 = vpop.f32.mrf.mxu0
        %v5765 = vadd.f32 0.0, %v5764
        %v5766 = vpop.f32.mrf.mxu0
        %v5767 = vadd.f32 0.0, %v5766
        %5768 = vdwg.mxu0
        %v5773 = vunpack.c.l.b16 %v5434
        %v5774 = vunpack.c.l.b16 %v5435
        %v5775 = vunpack.c.l.b16 %v5436
        %v5776 = vunpack.c.l.b16 %v5437
        %v5777 = vpack.c.b16 %v5774, %v5773
        %v5778 = vpack.c.b16 %v5776, %v5775
        %v5782 = vsel %vm903, %v5418, 0
        %v5785 = vsel %vm903, %v5419, 0
        %v5788 = vsel %vm903, %v5420, 0
        %v5791 = vsel %vm903, %v5421, 0
        %v5794 = vsel %vm903, %v5422, 0
        %v5797 = vsel %vm903, %v5423, 0
        %v5800 = vsel %vm903, %v5424, 0
        %v5803 = vsel %vm903, %v5425, 0
        %v5806 = vsel %vm903, %v5426, 0
        %v5809 = vsel %vm903, %v5427, 0
        %v5812 = vsel %vm903, %v5428, 0
        %v5815 = vsel %vm903, %v5429, 0
        %v5818 = vsel %vm903, %v5430, 0
        %v5821 = vsel %vm903, %v5431, 0
        %v5824 = vsel %vm903, %v5432, 0
        %v5827 = vsel %vm903, %v5433, 0
        %5829 = vmatpush.bf16.msra.mxu0 0
        %5830 = vmatpush.bf16.msra.mxu0 0
        %5831 = vmatpush.bf16.msra.mxu0 0
        %5832 = vmatpush.bf16.msra.mxu0 0
        %5833 = vmatpush.bf16.msra.mxu0 0
        %5834 = vmatpush.bf16.msra.mxu0 0
        %5835 = vmatpush.bf16.msra.mxu0 %v5778
        %5836 = vmatpush.bf16.msra.mxu0 %v5777
        %5837 = vmatmul.bf16.gmra.mxu0 %v5782
        %v5838 = vpop.f32.mrf.mxu0
        %v5839 = vadd.f32 %v5690, %v5838
        %v5840 = vpop.f32.mrf.mxu0
        %v5841 = vadd.f32 %v5692, %v5840
        %5842 = vmatmul.bf16.gmra.mxu0 %v5785
        %v5843 = vpop.f32.mrf.mxu0
        %v5844 = vadd.f32 %v5695, %v5843
        %v5845 = vpop.f32.mrf.mxu0
        %v5846 = vadd.f32 %v5697, %v5845
        %5847 = vmatmul.bf16.gmra.mxu0 %v5788
        %v5848 = vpop.f32.mrf.mxu0
        %v5849 = vadd.f32 %v5700, %v5848
        %v5850 = vpop.f32.mrf.mxu0
        %v5851 = vadd.f32 %v5702, %v5850
        %5852 = vmatmul.bf16.gmra.mxu0 %v5791
        %v5853 = vpop.f32.mrf.mxu0
        %v5854 = vadd.f32 %v5705, %v5853
        %v5855 = vpop.f32.mrf.mxu0
        %v5856 = vadd.f32 %v5707, %v5855
        %5857 = vmatmul.bf16.gmra.mxu0 %v5794
        %v5858 = vpop.f32.mrf.mxu0
        %v5859 = vadd.f32 %v5710, %v5858
        %v5860 = vpop.f32.mrf.mxu0
        %v5861 = vadd.f32 %v5712, %v5860
        %5862 = vmatmul.bf16.gmra.mxu0 %v5797
        %v5863 = vpop.f32.mrf.mxu0
        %v5864 = vadd.f32 %v5715, %v5863
        %v5865 = vpop.f32.mrf.mxu0
        %v5866 = vadd.f32 %v5717, %v5865
        %5867 = vmatmul.bf16.gmra.mxu0 %v5800
        %v5868 = vpop.f32.mrf.mxu0
        %v5869 = vadd.f32 %v5720, %v5868
        %v5870 = vpop.f32.mrf.mxu0
        %v5871 = vadd.f32 %v5722, %v5870
        %5872 = vmatmul.bf16.gmra.mxu0 %v5803
        %v5873 = vpop.f32.mrf.mxu0
        %v5874 = vadd.f32 %v5725, %v5873
        %v5875 = vpop.f32.mrf.mxu0
        %v5876 = vadd.f32 %v5727, %v5875
        %5877 = vmatmul.bf16.gmra.mxu0 %v5806
        %v5878 = vpop.f32.mrf.mxu0
        %v5879 = vadd.f32 %v5730, %v5878
        %v5880 = vpop.f32.mrf.mxu0
        %v5881 = vadd.f32 %v5732, %v5880
        %5882 = vmatmul.bf16.gmra.mxu0 %v5809
        %v5883 = vpop.f32.mrf.mxu0
        %v5884 = vadd.f32 %v5735, %v5883
        %v5885 = vpop.f32.mrf.mxu0
        %v5886 = vadd.f32 %v5737, %v5885
        %5887 = vmatmul.bf16.gmra.mxu0 %v5812
        %v5888 = vpop.f32.mrf.mxu0
        %v5889 = vadd.f32 %v5740, %v5888
        %v5890 = vpop.f32.mrf.mxu0
        %v5891 = vadd.f32 %v5742, %v5890
        %5892 = vmatmul.bf16.gmra.mxu0 %v5815
        %v5893 = vpop.f32.mrf.mxu0
        %v5894 = vadd.f32 %v5745, %v5893
        %v5895 = vpop.f32.mrf.mxu0
        %v5896 = vadd.f32 %v5747, %v5895
        %5897 = vmatmul.bf16.gmra.mxu0 %v5818
        %v5898 = vpop.f32.mrf.mxu0
        %v5899 = vadd.f32 %v5750, %v5898
        %v5900 = vpop.f32.mrf.mxu0
        %v5901 = vadd.f32 %v5752, %v5900
        %5902 = vmatmul.bf16.gmra.mxu0 %v5821
        %v5903 = vpop.f32.mrf.mxu0
        %v5904 = vadd.f32 %v5755, %v5903
        %v5905 = vpop.f32.mrf.mxu0
        %v5906 = vadd.f32 %v5757, %v5905
        %5907 = vmatmul.bf16.gmra.mxu0 %v5824
        %v5908 = vpop.f32.mrf.mxu0
        %v5909 = vadd.f32 %v5760, %v5908
        %v5910 = vpop.f32.mrf.mxu0
        %v5911 = vadd.f32 %v5762, %v5910
        %5912 = vmatmul.bf16.gmra.mxu0 %v5827
        %v5913 = vpop.f32.mrf.mxu0
        %v5914 = vadd.f32 %v5765, %v5913
        %v5915 = vpop.f32.mrf.mxu0
        %v5916 = vadd.f32 %v5767, %v5915
        %5917 = vdwg.mxu0
        %vm5918 = vcmask 1045504
        %v5919 = vrot.slane %v5364, 2
        %v5920 = vrot.slane %v5365, 2
        %v5921 = vsel %vm5918, %v5919, %v5920
        %v5922 = vrot.slane %v5366, 2
        %v5923 = vsel %vm5918, %v5920, %v5922
        %v5924 = vrot.slane %v5367, 2
        %v5925 = vrot.slane %v5368, 2
        %v5926 = vsel %vm5918, %v5924, %v5925
        %v5927 = vrot.slane %v5369, 2
        %v5928 = vsel %vm5918, %v5925, %v5927
        %v5929 = vrot.slane %v5370, 2
        %v5930 = vrot.slane %v5371, 2
        %v5931 = vsel %vm5918, %v5929, %v5930
        %v5932 = vrot.slane %v5372, 2
        %v5933 = vsel %vm5918, %v5930, %v5932
        %v5934 = vrot.slane %v5373, 2
        %v5935 = vrot.slane %v5374, 2
        %v5936 = vsel %vm5918, %v5934, %v5935
        %v5937 = vrot.slane %v5375, 2
        %v5938 = vsel %vm5918, %v5935, %v5937
        %v5939 = vrot.slane %v5376, 2
        %v5940 = vrot.slane %v5377, 2
        %v5941 = vsel %vm5918, %v5939, %v5940
        %v5942 = vrot.slane %v5378, 2
        %v5943 = vsel %vm5918, %v5940, %v5942
        %v5944 = vrot.slane %v5379, 2
        %v5945 = vrot.slane %v5380, 2
        %v5946 = vsel %vm5918, %v5944, %v5945
        %v5947 = vrot.slane %v5381, 2
        %v5948 = vsel %vm5918, %v5945, %v5947
        %v5949 = vrot.slane %v5382, 2
        %v5950 = vrot.slane %v5383, 2
        %v5951 = vsel %vm5918, %v5949, %v5950
        %v5952 = vrot.slane %v5384, 2
        %v5953 = vsel %vm5918, %v5950, %v5952
        %v5954 = vrot.slane %v5385, 2
        %v5955 = vrot.slane %v5386, 2
        %v5956 = vsel %vm5918, %v5954, %v5955
        %v5957 = vrot.slane %v5387, 2
        %v5958 = vsel %vm5918, %v5955, %v5957
        %v5959 = vrot.slane %v5388, 2
        %v5960 = vrot.slane %v5389, 2
        %v5961 = vsel %vm5918, %v5959, %v5960
        %v5962 = vrot.slane %v5390, 2
        %v5963 = vsel %vm5918, %v5960, %v5962
        %v5964 = vrot.slane %v5391, 2
        %v5965 = vrot.slane %v5392, 2
        %v5966 = vsel %vm5918, %v5964, %v5965
        %v5967 = vrot.slane %v5393, 2
        %v5968 = vsel %vm5918, %v5965, %v5967
        %v5969 = vrot.slane %v5394, 2
        %v5970 = vrot.slane %v5395, 2
        %v5971 = vsel %vm5918, %v5969, %v5970
        %v5972 = vrot.slane %v5396, 2
        %v5973 = vsel %vm5918, %v5970, %v5972
        %v5974 = vrot.slane %v5397, 2
        %v5975 = vrot.slane %v5398, 2
        %v5976 = vsel %vm5918, %v5974, %v5975
        %v5977 = vrot.slane %v5399, 2
        %v5978 = vsel %vm5918, %v5975, %v5977
        %v5979 = vrot.slane %v5400, 2
        %v5980 = vrot.slane %v5401, 2
        %v5981 = vsel %vm5918, %v5979, %v5980
        %v5982 = vrot.slane %v5402, 2
        %v5983 = vsel %vm5918, %v5980, %v5982
        %v5984 = vrot.slane %v5403, 2
        %v5985 = vrot.slane %v5404, 2
        %v5986 = vsel %vm5918, %v5984, %v5985
        %v5987 = vrot.slane %v5405, 2
        %v5988 = vsel %vm5918, %v5985, %v5987
        %v5989 = vrot.slane %v5406, 2
        %v5990 = vrot.slane %v5407, 2
        %v5991 = vsel %vm5918, %v5989, %v5990
        %v5992 = vrot.slane %v5408, 2
        %v5993 = vsel %vm5918, %v5990, %v5992
        %v5994 = vrot.slane %v5409, 2
        %v5995 = vrot.slane %v5410, 2
        %v5996 = vsel %vm5918, %v5994, %v5995
        %v5997 = vrot.slane %v5411, 2
        %v5998 = vsel %vm5918, %v5995, %v5997
        %v6031 = vpack.c.bf16 %v5923, %v5921
        %v6032 = vpack.c.bf16 %v5928, %v5926
        %v6033 = vpack.c.bf16 %v5933, %v5931
        %v6034 = vpack.c.bf16 %v5938, %v5936
        %v6035 = vpack.c.bf16 %v5943, %v5941
        %v6036 = vpack.c.bf16 %v5948, %v5946
        %v6037 = vpack.c.bf16 %v5953, %v5951
        %v6038 = vpack.c.bf16 %v5958, %v5956
        %v6039 = vpack.c.bf16 %v5963, %v5961
        %v6040 = vpack.c.bf16 %v5968, %v5966
        %v6041 = vpack.c.bf16 %v5973, %v5971
        %v6042 = vpack.c.bf16 %v5978, %v5976
        %v6043 = vpack.c.bf16 %v5983, %v5981
        %v6044 = vpack.c.bf16 %v5988, %v5986
        %v6045 = vpack.c.bf16 %v5993, %v5991
        %v6046 = vpack.c.bf16 %v5998, %v5996
        %s6047 = scalar_lea.vmem %s7, 32
        %v6048 = vld [vmem:[%s6047] sm:$0xf]
        %v6049 = vld [vmem:[%s6047 + $0x4] sm:$0xf]
        %v6050 = vld [vmem:[%s6047 + $0x8] sm:$0xf]
        %v6051 = vld [vmem:[%s6047 + $0xc] sm:$0xf]
        %v6056 = vunpack.c.l.b16 %v6048
        %v6057 = vunpack.c.l.b16 %v6049
        %v6058 = vunpack.c.l.b16 %v6050
        %v6059 = vunpack.c.l.b16 %v6051
        %v6060 = vpack.c.b16 %v6057, %v6056
        %v6061 = vpack.c.b16 %v6059, %v6058
        %v6065 = vsel %vm903, %v6031, 0
        %v6068 = vsel %vm903, %v6032, 0
        %v6071 = vsel %vm903, %v6033, 0
        %v6074 = vsel %vm903, %v6034, 0
        %v6077 = vsel %vm903, %v6035, 0
        %v6080 = vsel %vm903, %v6036, 0
        %v6083 = vsel %vm903, %v6037, 0
        %v6086 = vsel %vm903, %v6038, 0
        %v6089 = vsel %vm903, %v6039, 0
        %v6092 = vsel %vm903, %v6040, 0
        %v6095 = vsel %vm903, %v6041, 0
        %v6098 = vsel %vm903, %v6042, 0
        %v6101 = vsel %vm903, %v6043, 0
        %v6104 = vsel %vm903, %v6044, 0
        %v6107 = vsel %vm903, %v6045, 0
        %v6110 = vsel %vm903, %v6046, 0
        %6112 = vmatpush.bf16.msra.mxu0 0
        %6113 = vmatpush.bf16.msra.mxu0 0
        %6114 = vmatpush.bf16.msra.mxu0 0
        %6115 = vmatpush.bf16.msra.mxu0 0
        %6116 = vmatpush.bf16.msra.mxu0 0
        %6117 = vmatpush.bf16.msra.mxu0 0
        %6118 = vmatpush.bf16.msra.mxu0 %v6061
        %6119 = vmatpush.bf16.msra.mxu0 %v6060
        %6120 = vmatmul.bf16.gmra.mxu0 %v6065
        %v6121 = vpop.f32.mrf.mxu0
        %v6122 = vadd.f32 0.0, %v6121
        %v6123 = vpop.f32.mrf.mxu0
        %v6124 = vadd.f32 0.0, %v6123
        %6125 = vmatmul.bf16.gmra.mxu0 %v6068
        %v6126 = vpop.f32.mrf.mxu0
        %v6127 = vadd.f32 0.0, %v6126
        %v6128 = vpop.f32.mrf.mxu0
        %v6129 = vadd.f32 0.0, %v6128
        %6130 = vmatmul.bf16.gmra.mxu0 %v6071
        %v6131 = vpop.f32.mrf.mxu0
        %v6132 = vadd.f32 0.0, %v6131
        %v6133 = vpop.f32.mrf.mxu0
        %v6134 = vadd.f32 0.0, %v6133
        %6135 = vmatmul.bf16.gmra.mxu0 %v6074
        %v6136 = vpop.f32.mrf.mxu0
        %v6137 = vadd.f32 0.0, %v6136
        %v6138 = vpop.f32.mrf.mxu0
        %v6139 = vadd.f32 0.0, %v6138
        %6140 = vmatmul.bf16.gmra.mxu0 %v6077
        %v6141 = vpop.f32.mrf.mxu0
        %v6142 = vadd.f32 0.0, %v6141
        %v6143 = vpop.f32.mrf.mxu0
        %v6144 = vadd.f32 0.0, %v6143
        %6145 = vmatmul.bf16.gmra.mxu0 %v6080
        %v6146 = vpop.f32.mrf.mxu0
        %v6147 = vadd.f32 0.0, %v6146
        %v6148 = vpop.f32.mrf.mxu0
        %v6149 = vadd.f32 0.0, %v6148
        %6150 = vmatmul.bf16.gmra.mxu0 %v6083
        %v6151 = vpop.f32.mrf.mxu0
        %v6152 = vadd.f32 0.0, %v6151
        %v6153 = vpop.f32.mrf.mxu0
        %v6154 = vadd.f32 0.0, %v6153
        %6155 = vmatmul.bf16.gmra.mxu0 %v6086
        %v6156 = vpop.f32.mrf.mxu0
        %v6157 = vadd.f32 0.0, %v6156
        %v6158 = vpop.f32.mrf.mxu0
        %v6159 = vadd.f32 0.0, %v6158
        %6160 = vmatmul.bf16.gmra.mxu0 %v6089
        %v6161 = vpop.f32.mrf.mxu0
        %v6162 = vadd.f32 0.0, %v6161
        %v6163 = vpop.f32.mrf.mxu0
        %v6164 = vadd.f32 0.0, %v6163
        %6165 = vmatmul.bf16.gmra.mxu0 %v6092
        %v6166 = vpop.f32.mrf.mxu0
        %v6167 = vadd.f32 0.0, %v6166
        %v6168 = vpop.f32.mrf.mxu0
        %v6169 = vadd.f32 0.0, %v6168
        %6170 = vmatmul.bf16.gmra.mxu0 %v6095
        %v6171 = vpop.f32.mrf.mxu0
        %v6172 = vadd.f32 0.0, %v6171
        %v6173 = vpop.f32.mrf.mxu0
        %v6174 = vadd.f32 0.0, %v6173
        %6175 = vmatmul.bf16.gmra.mxu0 %v6098
        %v6176 = vpop.f32.mrf.mxu0
        %v6177 = vadd.f32 0.0, %v6176
        %v6178 = vpop.f32.mrf.mxu0
        %v6179 = vadd.f32 0.0, %v6178
        %6180 = vmatmul.bf16.gmra.mxu0 %v6101
        %v6181 = vpop.f32.mrf.mxu0
        %v6182 = vadd.f32 0.0, %v6181
        %v6183 = vpop.f32.mrf.mxu0
        %v6184 = vadd.f32 0.0, %v6183
        %6185 = vmatmul.bf16.gmra.mxu0 %v6104
        %v6186 = vpop.f32.mrf.mxu0
        %v6187 = vadd.f32 0.0, %v6186
        %v6188 = vpop.f32.mrf.mxu0
        %v6189 = vadd.f32 0.0, %v6188
        %6190 = vmatmul.bf16.gmra.mxu0 %v6107
        %v6191 = vpop.f32.mrf.mxu0
        %v6192 = vadd.f32 0.0, %v6191
        %v6193 = vpop.f32.mrf.mxu0
        %v6194 = vadd.f32 0.0, %v6193
        %6195 = vmatmul.bf16.gmra.mxu0 %v6110
        %v6196 = vpop.f32.mrf.mxu0
        %v6197 = vadd.f32 0.0, %v6196
        %v6198 = vpop.f32.mrf.mxu0
        %v6199 = vadd.f32 0.0, %v6198
        %6200 = vdwg.mxu0
        %v6201 = vadd.f32 %v5839, %v6122
        %v6202 = vadd.f32 %v5841, %v6124
        %v6203 = vadd.f32 %v5844, %v6127
        %v6204 = vadd.f32 %v5846, %v6129
        %v6205 = vadd.f32 %v5849, %v6132
        %v6206 = vadd.f32 %v5851, %v6134
        %v6207 = vadd.f32 %v5854, %v6137
        %v6208 = vadd.f32 %v5856, %v6139
        %v6209 = vadd.f32 %v5859, %v6142
        %v6210 = vadd.f32 %v5861, %v6144
        %v6211 = vadd.f32 %v5864, %v6147
        %v6212 = vadd.f32 %v5866, %v6149
        %v6213 = vadd.f32 %v5869, %v6152
        %v6214 = vadd.f32 %v5871, %v6154
        %v6215 = vadd.f32 %v5874, %v6157
        %v6216 = vadd.f32 %v5876, %v6159
        %v6217 = vadd.f32 %v5879, %v6162
        %v6218 = vadd.f32 %v5881, %v6164
        %v6219 = vadd.f32 %v5884, %v6167
        %v6220 = vadd.f32 %v5886, %v6169
        %v6221 = vadd.f32 %v5889, %v6172
        %v6222 = vadd.f32 %v5891, %v6174
        %v6223 = vadd.f32 %v5894, %v6177
        %v6224 = vadd.f32 %v5896, %v6179
        %v6225 = vadd.f32 %v5899, %v6182
        %v6226 = vadd.f32 %v5901, %v6184
        %v6227 = vadd.f32 %v5904, %v6187
        %v6228 = vadd.f32 %v5906, %v6189
        %v6229 = vadd.f32 %v5909, %v6192
        %v6230 = vadd.f32 %v5911, %v6194
        %v6231 = vadd.f32 %v5914, %v6197
        %v6232 = vadd.f32 %v5916, %v6199
        %v6233 = vpack.c.bf16 %v5413, %v5412
        %s6234 = scalar_lea.vmem %s7, 48
        %v6235 = vld [vmem:[%s6234] sm:$0xf]
        %v6236 = vld [vmem:[%s6234 + $0x4] sm:$0xf]
        %v6237 = vld [vmem:[%s6234 + $0x8] sm:$0xf]
        %v6238 = vld [vmem:[%s6234 + $0xc] sm:$0xf]
        %v6243 = vunpack.c.l.b16 %v6235
        %v6244 = vunpack.c.l.b16 %v6236
        %v6245 = vunpack.c.l.b16 %v6237
        %v6246 = vunpack.c.l.b16 %v6238
        %v6247 = vpack.c.b16 %v6244, %v6243
        %v6248 = vpack.c.b16 %v6246, %v6245
        %v6252 = vsel %vm903, %v6233, 0
        %6254 = vmatpush.bf16.msra.mxu0 0
        %6255 = vmatpush.bf16.msra.mxu0 0
        %6256 = vmatpush.bf16.msra.mxu0 0
        %6257 = vmatpush.bf16.msra.mxu0 0
        %6258 = vmatpush.bf16.msra.mxu0 0
        %6259 = vmatpush.bf16.msra.mxu0 0
        %6260 = vmatpush.bf16.msra.mxu0 %v6248
        %6261 = vmatpush.bf16.msra.mxu0 %v6247
        %6262 = vmatmul.bf16.gmra.mxu0 %v5785
        %v6263 = vpop.f32.mrf.mxu0
        %v6264 = vadd.f32 0.0, %v6263
        %v6265 = vpop.f32.mrf.mxu0
        %v6266 = vadd.f32 0.0, %v6265
        %6267 = vmatmul.bf16.gmra.mxu0 %v5788
        %v6268 = vpop.f32.mrf.mxu0
        %v6269 = vadd.f32 0.0, %v6268
        %v6270 = vpop.f32.mrf.mxu0
        %v6271 = vadd.f32 0.0, %v6270
        %6272 = vmatmul.bf16.gmra.mxu0 %v5791
        %v6273 = vpop.f32.mrf.mxu0
        %v6274 = vadd.f32 0.0, %v6273
        %v6275 = vpop.f32.mrf.mxu0
        %v6276 = vadd.f32 0.0, %v6275
        %6277 = vmatmul.bf16.gmra.mxu0 %v5794
        %v6278 = vpop.f32.mrf.mxu0
        %v6279 = vadd.f32 0.0, %v6278
        %v6280 = vpop.f32.mrf.mxu0
        %v6281 = vadd.f32 0.0, %v6280
        %6282 = vmatmul.bf16.gmra.mxu0 %v5797
        %v6283 = vpop.f32.mrf.mxu0
        %v6284 = vadd.f32 0.0, %v6283
        %v6285 = vpop.f32.mrf.mxu0
        %v6286 = vadd.f32 0.0, %v6285
        %6287 = vmatmul.bf16.gmra.mxu0 %v5800
        %v6288 = vpop.f32.mrf.mxu0
        %v6289 = vadd.f32 0.0, %v6288
        %v6290 = vpop.f32.mrf.mxu0
        %v6291 = vadd.f32 0.0, %v6290
        %6292 = vmatmul.bf16.gmra.mxu0 %v5803
        %v6293 = vpop.f32.mrf.mxu0
        %v6294 = vadd.f32 0.0, %v6293
        %v6295 = vpop.f32.mrf.mxu0
        %v6296 = vadd.f32 0.0, %v6295
        %6297 = vmatmul.bf16.gmra.mxu0 %v5806
        %v6298 = vpop.f32.mrf.mxu0
        %v6299 = vadd.f32 0.0, %v6298
        %v6300 = vpop.f32.mrf.mxu0
        %v6301 = vadd.f32 0.0, %v6300
        %6302 = vmatmul.bf16.gmra.mxu0 %v5809
        %v6303 = vpop.f32.mrf.mxu0
        %v6304 = vadd.f32 0.0, %v6303
        %v6305 = vpop.f32.mrf.mxu0
        %v6306 = vadd.f32 0.0, %v6305
        %6307 = vmatmul.bf16.gmra.mxu0 %v5812
        %v6308 = vpop.f32.mrf.mxu0
        %v6309 = vadd.f32 0.0, %v6308
        %v6310 = vpop.f32.mrf.mxu0
        %v6311 = vadd.f32 0.0, %v6310
        %6312 = vmatmul.bf16.gmra.mxu0 %v5815
        %v6313 = vpop.f32.mrf.mxu0
        %v6314 = vadd.f32 0.0, %v6313
        %v6315 = vpop.f32.mrf.mxu0
        %v6316 = vadd.f32 0.0, %v6315
        %6317 = vmatmul.bf16.gmra.mxu0 %v5818
        %v6318 = vpop.f32.mrf.mxu0
        %v6319 = vadd.f32 0.0, %v6318
        %v6320 = vpop.f32.mrf.mxu0
        %v6321 = vadd.f32 0.0, %v6320
        %6322 = vmatmul.bf16.gmra.mxu0 %v5821
        %v6323 = vpop.f32.mrf.mxu0
        %v6324 = vadd.f32 0.0, %v6323
        %v6325 = vpop.f32.mrf.mxu0
        %v6326 = vadd.f32 0.0, %v6325
        %6327 = vmatmul.bf16.gmra.mxu0 %v5824
        %v6328 = vpop.f32.mrf.mxu0
        %v6329 = vadd.f32 0.0, %v6328
        %v6330 = vpop.f32.mrf.mxu0
        %v6331 = vadd.f32 0.0, %v6330
        %6332 = vmatmul.bf16.gmra.mxu0 %v5827
        %v6333 = vpop.f32.mrf.mxu0
        %v6334 = vadd.f32 0.0, %v6333
        %v6335 = vpop.f32.mrf.mxu0
        %v6336 = vadd.f32 0.0, %v6335
        %6337 = vmatmul.bf16.gmra.mxu0 %v6252
        %v6338 = vpop.f32.mrf.mxu0
        %v6339 = vadd.f32 0.0, %v6338
        %v6340 = vpop.f32.mrf.mxu0
        %v6341 = vadd.f32 0.0, %v6340
        %6342 = vdwg.mxu0
        %v6343 = vadd.f32 %v6201, %v6264
        %v6344 = vadd.f32 %v6202, %v6266
        %v6345 = vadd.f32 %v6203, %v6269
        %v6346 = vadd.f32 %v6204, %v6271
        %v6347 = vadd.f32 %v6205, %v6274
        %v6348 = vadd.f32 %v6206, %v6276
        %v6349 = vadd.f32 %v6207, %v6279
        %v6350 = vadd.f32 %v6208, %v6281
        %v6351 = vadd.f32 %v6209, %v6284
        %v6352 = vadd.f32 %v6210, %v6286
        %v6353 = vadd.f32 %v6211, %v6289
        %v6354 = vadd.f32 %v6212, %v6291
        %v6355 = vadd.f32 %v6213, %v6294
        %v6356 = vadd.f32 %v6214, %v6296
        %v6357 = vadd.f32 %v6215, %v6299
        %v6358 = vadd.f32 %v6216, %v6301
        %v6359 = vadd.f32 %v6217, %v6304
        %v6360 = vadd.f32 %v6218, %v6306
        %v6361 = vadd.f32 %v6219, %v6309
        %v6362 = vadd.f32 %v6220, %v6311
        %v6363 = vadd.f32 %v6221, %v6314
        %v6364 = vadd.f32 %v6222, %v6316
        %v6365 = vadd.f32 %v6223, %v6319
        %v6366 = vadd.f32 %v6224, %v6321
        %v6367 = vadd.f32 %v6225, %v6324
        %v6368 = vadd.f32 %v6226, %v6326
        %v6369 = vadd.f32 %v6227, %v6329
        %v6370 = vadd.f32 %v6228, %v6331
        %v6371 = vadd.f32 %v6229, %v6334
        %v6372 = vadd.f32 %v6230, %v6336
        %v6373 = vadd.f32 %v6231, %v6339
        %v6374 = vadd.f32 %v6232, %v6341
        %v6378 = vrot.slane %v5412, 1
        %v6379 = vrot.slane %v5413, 1
        %v6380 = vsel %vm5486, %v6378, %v6379
        %v6381 = vrot.slane %v5414, 1
        %v6382 = vsel %vm5486, %v6379, %v6381
        %v6385 = vpack.c.bf16 %v6382, %v6380
        %s6386 = scalar_lea.vmem %s7, 64
        %v6387 = vld [vmem:[%s6386] sm:$0xf]
        %v6388 = vld [vmem:[%s6386 + $0x4] sm:$0xf]
        %v6389 = vld [vmem:[%s6386 + $0x8] sm:$0xf]
        %v6390 = vld [vmem:[%s6386 + $0xc] sm:$0xf]
        %v6395 = vunpack.c.l.b16 %v6387
        %v6396 = vunpack.c.l.b16 %v6388
        %v6397 = vunpack.c.l.b16 %v6389
        %v6398 = vunpack.c.l.b16 %v6390
        %v6399 = vpack.c.b16 %v6396, %v6395
        %v6400 = vpack.c.b16 %v6398, %v6397
        %v6404 = vsel %vm903, %v6385, 0
        %6406 = vmatpush.bf16.msra.mxu0 0
        %6407 = vmatpush.bf16.msra.mxu0 0
        %6408 = vmatpush.bf16.msra.mxu0 0
        %6409 = vmatpush.bf16.msra.mxu0 0
        %6410 = vmatpush.bf16.msra.mxu0 0
        %6411 = vmatpush.bf16.msra.mxu0 0
        %6412 = vmatpush.bf16.msra.mxu0 %v6400
        %6413 = vmatpush.bf16.msra.mxu0 %v6399
        %6414 = vmatmul.bf16.gmra.mxu0 %v5636
        %v6415 = vpop.f32.mrf.mxu0
        %v6416 = vadd.f32 0.0, %v6415
        %v6417 = vpop.f32.mrf.mxu0
        %v6418 = vadd.f32 0.0, %v6417
        %6419 = vmatmul.bf16.gmra.mxu0 %v5639
        %v6420 = vpop.f32.mrf.mxu0
        %v6421 = vadd.f32 0.0, %v6420
        %v6422 = vpop.f32.mrf.mxu0
        %v6423 = vadd.f32 0.0, %v6422
        %6424 = vmatmul.bf16.gmra.mxu0 %v5642
        %v6425 = vpop.f32.mrf.mxu0
        %v6426 = vadd.f32 0.0, %v6425
        %v6427 = vpop.f32.mrf.mxu0
        %v6428 = vadd.f32 0.0, %v6427
        %6429 = vmatmul.bf16.gmra.mxu0 %v5645
        %v6430 = vpop.f32.mrf.mxu0
        %v6431 = vadd.f32 0.0, %v6430
        %v6432 = vpop.f32.mrf.mxu0
        %v6433 = vadd.f32 0.0, %v6432
        %6434 = vmatmul.bf16.gmra.mxu0 %v5648
        %v6435 = vpop.f32.mrf.mxu0
        %v6436 = vadd.f32 0.0, %v6435
        %v6437 = vpop.f32.mrf.mxu0
        %v6438 = vadd.f32 0.0, %v6437
        %6439 = vmatmul.bf16.gmra.mxu0 %v5651
        %v6440 = vpop.f32.mrf.mxu0
        %v6441 = vadd.f32 0.0, %v6440
        %v6442 = vpop.f32.mrf.mxu0
        %v6443 = vadd.f32 0.0, %v6442
        %6444 = vmatmul.bf16.gmra.mxu0 %v5654
        %v6445 = vpop.f32.mrf.mxu0
        %v6446 = vadd.f32 0.0, %v6445
        %v6447 = vpop.f32.mrf.mxu0
        %v6448 = vadd.f32 0.0, %v6447
        %6449 = vmatmul.bf16.gmra.mxu0 %v5657
        %v6450 = vpop.f32.mrf.mxu0
        %v6451 = vadd.f32 0.0, %v6450
        %v6452 = vpop.f32.mrf.mxu0
        %v6453 = vadd.f32 0.0, %v6452
        %6454 = vmatmul.bf16.gmra.mxu0 %v5660
        %v6455 = vpop.f32.mrf.mxu0
        %v6456 = vadd.f32 0.0, %v6455
        %v6457 = vpop.f32.mrf.mxu0
        %v6458 = vadd.f32 0.0, %v6457
        %6459 = vmatmul.bf16.gmra.mxu0 %v5663
        %v6460 = vpop.f32.mrf.mxu0
        %v6461 = vadd.f32 0.0, %v6460
        %v6462 = vpop.f32.mrf.mxu0
        %v6463 = vadd.f32 0.0, %v6462
        %6464 = vmatmul.bf16.gmra.mxu0 %v5666
        %v6465 = vpop.f32.mrf.mxu0
        %v6466 = vadd.f32 0.0, %v6465
        %v6467 = vpop.f32.mrf.mxu0
        %v6468 = vadd.f32 0.0, %v6467
        %6469 = vmatmul.bf16.gmra.mxu0 %v5669
        %v6470 = vpop.f32.mrf.mxu0
        %v6471 = vadd.f32 0.0, %v6470
        %v6472 = vpop.f32.mrf.mxu0
        %v6473 = vadd.f32 0.0, %v6472
        %6474 = vmatmul.bf16.gmra.mxu0 %v5672
        %v6475 = vpop.f32.mrf.mxu0
        %v6476 = vadd.f32 0.0, %v6475
        %v6477 = vpop.f32.mrf.mxu0
        %v6478 = vadd.f32 0.0, %v6477
        %6479 = vmatmul.bf16.gmra.mxu0 %v5675
        %v6480 = vpop.f32.mrf.mxu0
        %v6481 = vadd.f32 0.0, %v6480
        %v6482 = vpop.f32.mrf.mxu0
        %v6483 = vadd.f32 0.0, %v6482
        %6484 = vmatmul.bf16.gmra.mxu0 %v5678
        %v6485 = vpop.f32.mrf.mxu0
        %v6486 = vadd.f32 0.0, %v6485
        %v6487 = vpop.f32.mrf.mxu0
        %v6488 = vadd.f32 0.0, %v6487
        %6489 = vmatmul.bf16.gmra.mxu0 %v6404
        %v6490 = vpop.f32.mrf.mxu0
        %v6491 = vadd.f32 0.0, %v6490
        %v6492 = vpop.f32.mrf.mxu0
        %v6493 = vadd.f32 0.0, %v6492
        %6494 = vdwg.mxu0
        %v6495 = vadd.f32 %v6343, %v6416
        %v6496 = vadd.f32 %v6344, %v6418
        %v6497 = vadd.f32 %v6345, %v6421
        %v6498 = vadd.f32 %v6346, %v6423
        %v6499 = vadd.f32 %v6347, %v6426
        %v6500 = vadd.f32 %v6348, %v6428
        %v6501 = vadd.f32 %v6349, %v6431
        %v6502 = vadd.f32 %v6350, %v6433
        %v6503 = vadd.f32 %v6351, %v6436
        %v6504 = vadd.f32 %v6352, %v6438
        %v6505 = vadd.f32 %v6353, %v6441
        %v6506 = vadd.f32 %v6354, %v6443
        %v6507 = vadd.f32 %v6355, %v6446
        %v6508 = vadd.f32 %v6356, %v6448
        %v6509 = vadd.f32 %v6357, %v6451
        %v6510 = vadd.f32 %v6358, %v6453
        %v6511 = vadd.f32 %v6359, %v6456
        %v6512 = vadd.f32 %v6360, %v6458
        %v6513 = vadd.f32 %v6361, %v6461
        %v6514 = vadd.f32 %v6362, %v6463
        %v6515 = vadd.f32 %v6363, %v6466
        %v6516 = vadd.f32 %v6364, %v6468
        %v6517 = vadd.f32 %v6365, %v6471
        %v6518 = vadd.f32 %v6366, %v6473
        %v6519 = vadd.f32 %v6367, %v6476
        %v6520 = vadd.f32 %v6368, %v6478
        %v6521 = vadd.f32 %v6369, %v6481
        %v6522 = vadd.f32 %v6370, %v6483
        %v6523 = vadd.f32 %v6371, %v6486
        %v6524 = vadd.f32 %v6372, %v6488
        %v6525 = vadd.f32 %v6373, %v6491
        %v6526 = vadd.f32 %v6374, %v6493
        %v6527 = vrot.slane %v5412, 2
        %v6528 = vrot.slane %v5413, 2
        %v6529 = vsel %vm5918, %v6527, %v6528
        %v6530 = vrot.slane %v5414, 2
        %v6531 = vsel %vm5918, %v6528, %v6530
        %v6534 = vpack.c.bf16 %v6531, %v6529
        %s6535 = scalar_lea.vmem %s7, 80
        %v6536 = vld [vmem:[%s6535] sm:$0xf]
        %v6537 = vld [vmem:[%s6535 + $0x4] sm:$0xf]
        %v6538 = vld [vmem:[%s6535 + $0x8] sm:$0xf]
        %v6539 = vld [vmem:[%s6535 + $0xc] sm:$0xf]
        %v6544 = vunpack.c.l.b16 %v6536
        %v6545 = vunpack.c.l.b16 %v6537
        %v6546 = vunpack.c.l.b16 %v6538
        %v6547 = vunpack.c.l.b16 %v6539
        %v6548 = vpack.c.b16 %v6545, %v6544
        %v6549 = vpack.c.b16 %v6547, %v6546
        %v6553 = vsel %vm903, %v6534, 0
        %6555 = vmatpush.bf16.msra.mxu0 0
        %6556 = vmatpush.bf16.msra.mxu0 0
        %6557 = vmatpush.bf16.msra.mxu0 0
        %6558 = vmatpush.bf16.msra.mxu0 0
        %6559 = vmatpush.bf16.msra.mxu0 0
        %6560 = vmatpush.bf16.msra.mxu0 0
        %6561 = vmatpush.bf16.msra.mxu0 %v6549
        %6562 = vmatpush.bf16.msra.mxu0 %v6548
        %6563 = vmatmul.bf16.gmra.mxu0 %v6068
        %v6564 = vpop.f32.mrf.mxu0
        %v6565 = vadd.f32 0.0, %v6564
        %v6566 = vpop.f32.mrf.mxu0
        %v6567 = vadd.f32 0.0, %v6566
        %6568 = vmatmul.bf16.gmra.mxu0 %v6071
        %v6569 = vpop.f32.mrf.mxu0
        %v6570 = vadd.f32 0.0, %v6569
        %v6571 = vpop.f32.mrf.mxu0
        %v6572 = vadd.f32 0.0, %v6571
        %6573 = vmatmul.bf16.gmra.mxu0 %v6074
        %v6574 = vpop.f32.mrf.mxu0
        %v6575 = vadd.f32 0.0, %v6574
        %v6576 = vpop.f32.mrf.mxu0
        %v6577 = vadd.f32 0.0, %v6576
        %6578 = vmatmul.bf16.gmra.mxu0 %v6077
        %v6579 = vpop.f32.mrf.mxu0
        %v6580 = vadd.f32 0.0, %v6579
        %v6581 = vpop.f32.mrf.mxu0
        %v6582 = vadd.f32 0.0, %v6581
        %6583 = vmatmul.bf16.gmra.mxu0 %v6080
        %v6584 = vpop.f32.mrf.mxu0
        %v6585 = vadd.f32 0.0, %v6584
        %v6586 = vpop.f32.mrf.mxu0
        %v6587 = vadd.f32 0.0, %v6586
        %6588 = vmatmul.bf16.gmra.mxu0 %v6083
        %v6589 = vpop.f32.mrf.mxu0
        %v6590 = vadd.f32 0.0, %v6589
        %v6591 = vpop.f32.mrf.mxu0
        %v6592 = vadd.f32 0.0, %v6591
        %6593 = vmatmul.bf16.gmra.mxu0 %v6086
        %v6594 = vpop.f32.mrf.mxu0
        %v6595 = vadd.f32 0.0, %v6594
        %v6596 = vpop.f32.mrf.mxu0
        %v6597 = vadd.f32 0.0, %v6596
        %6598 = vmatmul.bf16.gmra.mxu0 %v6089
        %v6599 = vpop.f32.mrf.mxu0
        %v6600 = vadd.f32 0.0, %v6599
        %v6601 = vpop.f32.mrf.mxu0
        %v6602 = vadd.f32 0.0, %v6601
        %6603 = vmatmul.bf16.gmra.mxu0 %v6092
        %v6604 = vpop.f32.mrf.mxu0
        %v6605 = vadd.f32 0.0, %v6604
        %v6606 = vpop.f32.mrf.mxu0
        %v6607 = vadd.f32 0.0, %v6606
        %6608 = vmatmul.bf16.gmra.mxu0 %v6095
        %v6609 = vpop.f32.mrf.mxu0
        %v6610 = vadd.f32 0.0, %v6609
        %v6611 = vpop.f32.mrf.mxu0
        %v6612 = vadd.f32 0.0, %v6611
        %6613 = vmatmul.bf16.gmra.mxu0 %v6098
        %v6614 = vpop.f32.mrf.mxu0
        %v6615 = vadd.f32 0.0, %v6614
        %v6616 = vpop.f32.mrf.mxu0
        %v6617 = vadd.f32 0.0, %v6616
        %6618 = vmatmul.bf16.gmra.mxu0 %v6101
        %v6619 = vpop.f32.mrf.mxu0
        %v6620 = vadd.f32 0.0, %v6619
        %v6621 = vpop.f32.mrf.mxu0
        %v6622 = vadd.f32 0.0, %v6621
        %6623 = vmatmul.bf16.gmra.mxu0 %v6104
        %v6624 = vpop.f32.mrf.mxu0
        %v6625 = vadd.f32 0.0, %v6624
        %v6626 = vpop.f32.mrf.mxu0
        %v6627 = vadd.f32 0.0, %v6626
        %6628 = vmatmul.bf16.gmra.mxu0 %v6107
        %v6629 = vpop.f32.mrf.mxu0
        %v6630 = vadd.f32 0.0, %v6629
        %v6631 = vpop.f32.mrf.mxu0
        %v6632 = vadd.f32 0.0, %v6631
        %6633 = vmatmul.bf16.gmra.mxu0 %v6110
        %v6634 = vpop.f32.mrf.mxu0
        %v6635 = vadd.f32 0.0, %v6634
        %v6636 = vpop.f32.mrf.mxu0
        %v6637 = vadd.f32 0.0, %v6636
        %6638 = vmatmul.bf16.gmra.mxu0 %v6553
        %v6639 = vpop.f32.mrf.mxu0
        %v6640 = vadd.f32 0.0, %v6639
        %v6641 = vpop.f32.mrf.mxu0
        %v6642 = vadd.f32 0.0, %v6641
        %6643 = vdwg.mxu0
        %v6644 = vadd.f32 %v6495, %v6565
        %v6645 = vadd.f32 %v6496, %v6567
        %v6646 = vadd.f32 %v6497, %v6570
        %v6647 = vadd.f32 %v6498, %v6572
        %v6648 = vadd.f32 %v6499, %v6575
        %v6649 = vadd.f32 %v6500, %v6577
        %v6650 = vadd.f32 %v6501, %v6580
        %v6651 = vadd.f32 %v6502, %v6582
        %v6652 = vadd.f32 %v6503, %v6585
        %v6653 = vadd.f32 %v6504, %v6587
        %v6654 = vadd.f32 %v6505, %v6590
        %v6655 = vadd.f32 %v6506, %v6592
        %v6656 = vadd.f32 %v6507, %v6595
        %v6657 = vadd.f32 %v6508, %v6597
        %v6658 = vadd.f32 %v6509, %v6600
        %v6659 = vadd.f32 %v6510, %v6602
        %v6660 = vadd.f32 %v6511, %v6605
        %v6661 = vadd.f32 %v6512, %v6607
        %v6662 = vadd.f32 %v6513, %v6610
        %v6663 = vadd.f32 %v6514, %v6612
        %v6664 = vadd.f32 %v6515, %v6615
        %v6665 = vadd.f32 %v6516, %v6617
        %v6666 = vadd.f32 %v6517, %v6620
        %v6667 = vadd.f32 %v6518, %v6622
        %v6668 = vadd.f32 %v6519, %v6625
        %v6669 = vadd.f32 %v6520, %v6627
        %v6670 = vadd.f32 %v6521, %v6630
        %v6671 = vadd.f32 %v6522, %v6632
        %v6672 = vadd.f32 %v6523, %v6635
        %v6673 = vadd.f32 %v6524, %v6637
        %v6674 = vadd.f32 %v6525, %v6640
        %v6675 = vadd.f32 %v6526, %v6642
        %v6676 = vpack.c.bf16 %v5416, %v5415
        %s6677 = scalar_lea.vmem %s7, 96
        %v6678 = vld [vmem:[%s6677] sm:$0xf]
        %v6679 = vld [vmem:[%s6677 + $0x4] sm:$0xf]
        %v6680 = vld [vmem:[%s6677 + $0x8] sm:$0xf]
        %v6681 = vld [vmem:[%s6677 + $0xc] sm:$0xf]
        %v6686 = vunpack.c.l.b16 %v6678
        %v6687 = vunpack.c.l.b16 %v6679
        %v6688 = vunpack.c.l.b16 %v6680
        %v6689 = vunpack.c.l.b16 %v6681
        %v6690 = vpack.c.b16 %v6687, %v6686
        %v6691 = vpack.c.b16 %v6689, %v6688
        %v6695 = vsel %vm903, %v6676, 0
        %6697 = vmatpush.bf16.msra.mxu0 0
        %6698 = vmatpush.bf16.msra.mxu0 0
        %6699 = vmatpush.bf16.msra.mxu0 0
        %6700 = vmatpush.bf16.msra.mxu0 0
        %6701 = vmatpush.bf16.msra.mxu0 0
        %6702 = vmatpush.bf16.msra.mxu0 0
        %6703 = vmatpush.bf16.msra.mxu0 %v6691
        %6704 = vmatpush.bf16.msra.mxu0 %v6690
        %6705 = vmatmul.bf16.gmra.mxu0 %v5788
        %v6706 = vpop.f32.mrf.mxu0
        %v6707 = vadd.f32 0.0, %v6706
        %v6708 = vpop.f32.mrf.mxu0
        %v6709 = vadd.f32 0.0, %v6708
        %6710 = vmatmul.bf16.gmra.mxu0 %v5791
        %v6711 = vpop.f32.mrf.mxu0
        %v6712 = vadd.f32 0.0, %v6711
        %v6713 = vpop.f32.mrf.mxu0
        %v6714 = vadd.f32 0.0, %v6713
        %6715 = vmatmul.bf16.gmra.mxu0 %v5794
        %v6716 = vpop.f32.mrf.mxu0
        %v6717 = vadd.f32 0.0, %v6716
        %v6718 = vpop.f32.mrf.mxu0
        %v6719 = vadd.f32 0.0, %v6718
        %6720 = vmatmul.bf16.gmra.mxu0 %v5797
        %v6721 = vpop.f32.mrf.mxu0
        %v6722 = vadd.f32 0.0, %v6721
        %v6723 = vpop.f32.mrf.mxu0
        %v6724 = vadd.f32 0.0, %v6723
        %6725 = vmatmul.bf16.gmra.mxu0 %v5800
        %v6726 = vpop.f32.mrf.mxu0
        %v6727 = vadd.f32 0.0, %v6726
        %v6728 = vpop.f32.mrf.mxu0
        %v6729 = vadd.f32 0.0, %v6728
        %6730 = vmatmul.bf16.gmra.mxu0 %v5803
        %v6731 = vpop.f32.mrf.mxu0
        %v6732 = vadd.f32 0.0, %v6731
        %v6733 = vpop.f32.mrf.mxu0
        %v6734 = vadd.f32 0.0, %v6733
        %6735 = vmatmul.bf16.gmra.mxu0 %v5806
        %v6736 = vpop.f32.mrf.mxu0
        %v6737 = vadd.f32 0.0, %v6736
        %v6738 = vpop.f32.mrf.mxu0
        %v6739 = vadd.f32 0.0, %v6738
        %6740 = vmatmul.bf16.gmra.mxu0 %v5809
        %v6741 = vpop.f32.mrf.mxu0
        %v6742 = vadd.f32 0.0, %v6741
        %v6743 = vpop.f32.mrf.mxu0
        %v6744 = vadd.f32 0.0, %v6743
        %6745 = vmatmul.bf16.gmra.mxu0 %v5812
        %v6746 = vpop.f32.mrf.mxu0
        %v6747 = vadd.f32 0.0, %v6746
        %v6748 = vpop.f32.mrf.mxu0
        %v6749 = vadd.f32 0.0, %v6748
        %6750 = vmatmul.bf16.gmra.mxu0 %v5815
        %v6751 = vpop.f32.mrf.mxu0
        %v6752 = vadd.f32 0.0, %v6751
        %v6753 = vpop.f32.mrf.mxu0
        %v6754 = vadd.f32 0.0, %v6753
        %6755 = vmatmul.bf16.gmra.mxu0 %v5818
        %v6756 = vpop.f32.mrf.mxu0
        %v6757 = vadd.f32 0.0, %v6756
        %v6758 = vpop.f32.mrf.mxu0
        %v6759 = vadd.f32 0.0, %v6758
        %6760 = vmatmul.bf16.gmra.mxu0 %v5821
        %v6761 = vpop.f32.mrf.mxu0
        %v6762 = vadd.f32 0.0, %v6761
        %v6763 = vpop.f32.mrf.mxu0
        %v6764 = vadd.f32 0.0, %v6763
        %6765 = vmatmul.bf16.gmra.mxu0 %v5824
        %v6766 = vpop.f32.mrf.mxu0
        %v6767 = vadd.f32 0.0, %v6766
        %v6768 = vpop.f32.mrf.mxu0
        %v6769 = vadd.f32 0.0, %v6768
        %6770 = vmatmul.bf16.gmra.mxu0 %v5827
        %v6771 = vpop.f32.mrf.mxu0
        %v6772 = vadd.f32 0.0, %v6771
        %v6773 = vpop.f32.mrf.mxu0
        %v6774 = vadd.f32 0.0, %v6773
        %6775 = vmatmul.bf16.gmra.mxu0 %v6252
        %v6776 = vpop.f32.mrf.mxu0
        %v6777 = vadd.f32 0.0, %v6776
        %v6778 = vpop.f32.mrf.mxu0
        %v6779 = vadd.f32 0.0, %v6778
        %6780 = vmatmul.bf16.gmra.mxu0 %v6695
        %v6781 = vpop.f32.mrf.mxu0
        %v6782 = vadd.f32 0.0, %v6781
        %v6783 = vpop.f32.mrf.mxu0
        %v6784 = vadd.f32 0.0, %v6783
        %6785 = vdwg.mxu0
        %v6786 = vadd.f32 %v6644, %v6707
        %v6787 = vadd.f32 %v6645, %v6709
        %v6788 = vadd.f32 %v6646, %v6712
        %v6789 = vadd.f32 %v6647, %v6714
        %v6790 = vadd.f32 %v6648, %v6717
        %v6791 = vadd.f32 %v6649, %v6719
        %v6792 = vadd.f32 %v6650, %v6722
        %v6793 = vadd.f32 %v6651, %v6724
        %v6794 = vadd.f32 %v6652, %v6727
        %v6795 = vadd.f32 %v6653, %v6729
        %v6796 = vadd.f32 %v6654, %v6732
        %v6797 = vadd.f32 %v6655, %v6734
        %v6798 = vadd.f32 %v6656, %v6737
        %v6799 = vadd.f32 %v6657, %v6739
        %v6800 = vadd.f32 %v6658, %v6742
        %v6801 = vadd.f32 %v6659, %v6744
        %v6802 = vadd.f32 %v6660, %v6747
        %v6803 = vadd.f32 %v6661, %v6749
        %v6804 = vadd.f32 %v6662, %v6752
        %v6805 = vadd.f32 %v6663, %v6754
        %v6806 = vadd.f32 %v6664, %v6757
        %v6807 = vadd.f32 %v6665, %v6759
        %v6808 = vadd.f32 %v6666, %v6762
        %v6809 = vadd.f32 %v6667, %v6764
        %v6810 = vadd.f32 %v6668, %v6767
        %v6811 = vadd.f32 %v6669, %v6769
        %v6812 = vadd.f32 %v6670, %v6772
        %v6813 = vadd.f32 %v6671, %v6774
        %v6814 = vadd.f32 %v6672, %v6777
        %v6815 = vadd.f32 %v6673, %v6779
        %v6816 = vadd.f32 %v6674, %v6782
        %v6817 = vadd.f32 %v6675, %v6784
        %v6821 = vrot.slane %v5415, 1
        %v6822 = vrot.slane %v5416, 1
        %v6823 = vsel %vm5486, %v6821, %v6822
        %v6824 = vrot.slane %v5417, 1
        %v6825 = vsel %vm5486, %v6822, %v6824
        %v6828 = vpack.c.bf16 %v6825, %v6823
        %s6829 = scalar_lea.vmem %s7, 112
        %v6830 = vld [vmem:[%s6829] sm:$0xf]
        %v6831 = vld [vmem:[%s6829 + $0x4] sm:$0xf]
        %v6832 = vld [vmem:[%s6829 + $0x8] sm:$0xf]
        %v6833 = vld [vmem:[%s6829 + $0xc] sm:$0xf]
        %v6838 = vunpack.c.l.b16 %v6830
        %v6839 = vunpack.c.l.b16 %v6831
        %v6840 = vunpack.c.l.b16 %v6832
        %v6841 = vunpack.c.l.b16 %v6833
        %v6842 = vpack.c.b16 %v6839, %v6838
        %v6843 = vpack.c.b16 %v6841, %v6840
        %v6847 = vsel %vm903, %v6828, 0
        %6849 = vmatpush.bf16.msra.mxu0 0
        %6850 = vmatpush.bf16.msra.mxu0 0
        %6851 = vmatpush.bf16.msra.mxu0 0
        %6852 = vmatpush.bf16.msra.mxu0 0
        %6853 = vmatpush.bf16.msra.mxu0 0
        %6854 = vmatpush.bf16.msra.mxu0 0
        %6855 = vmatpush.bf16.msra.mxu0 %v6843
        %6856 = vmatpush.bf16.msra.mxu0 %v6842
        %6857 = vmatmul.bf16.gmra.mxu0 %v5639
        %v6858 = vpop.f32.mrf.mxu0
        %v6859 = vadd.f32 0.0, %v6858
        %v6860 = vpop.f32.mrf.mxu0
        %v6861 = vadd.f32 0.0, %v6860
        %6862 = vmatmul.bf16.gmra.mxu0 %v5642
        %v6863 = vpop.f32.mrf.mxu0
        %v6864 = vadd.f32 0.0, %v6863
        %v6865 = vpop.f32.mrf.mxu0
        %v6866 = vadd.f32 0.0, %v6865
        %6867 = vmatmul.bf16.gmra.mxu0 %v5645
        %v6868 = vpop.f32.mrf.mxu0
        %v6869 = vadd.f32 0.0, %v6868
        %v6870 = vpop.f32.mrf.mxu0
        %v6871 = vadd.f32 0.0, %v6870
        %6872 = vmatmul.bf16.gmra.mxu0 %v5648
        %v6873 = vpop.f32.mrf.mxu0
        %v6874 = vadd.f32 0.0, %v6873
        %v6875 = vpop.f32.mrf.mxu0
        %v6876 = vadd.f32 0.0, %v6875
        %6877 = vmatmul.bf16.gmra.mxu0 %v5651
        %v6878 = vpop.f32.mrf.mxu0
        %v6879 = vadd.f32 0.0, %v6878
        %v6880 = vpop.f32.mrf.mxu0
        %v6881 = vadd.f32 0.0, %v6880
        %6882 = vmatmul.bf16.gmra.mxu0 %v5654
        %v6883 = vpop.f32.mrf.mxu0
        %v6884 = vadd.f32 0.0, %v6883
        %v6885 = vpop.f32.mrf.mxu0
        %v6886 = vadd.f32 0.0, %v6885
        %6887 = vmatmul.bf16.gmra.mxu0 %v5657
        %v6888 = vpop.f32.mrf.mxu0
        %v6889 = vadd.f32 0.0, %v6888
        %v6890 = vpop.f32.mrf.mxu0
        %v6891 = vadd.f32 0.0, %v6890
        %6892 = vmatmul.bf16.gmra.mxu0 %v5660
        %v6893 = vpop.f32.mrf.mxu0
        %v6894 = vadd.f32 0.0, %v6893
        %v6895 = vpop.f32.mrf.mxu0
        %v6896 = vadd.f32 0.0, %v6895
        %6897 = vmatmul.bf16.gmra.mxu0 %v5663
        %v6898 = vpop.f32.mrf.mxu0
        %v6899 = vadd.f32 0.0, %v6898
        %v6900 = vpop.f32.mrf.mxu0
        %v6901 = vadd.f32 0.0, %v6900
        %6902 = vmatmul.bf16.gmra.mxu0 %v5666
        %v6903 = vpop.f32.mrf.mxu0
        %v6904 = vadd.f32 0.0, %v6903
        %v6905 = vpop.f32.mrf.mxu0
        %v6906 = vadd.f32 0.0, %v6905
        %6907 = vmatmul.bf16.gmra.mxu0 %v5669
        %v6908 = vpop.f32.mrf.mxu0
        %v6909 = vadd.f32 0.0, %v6908
        %v6910 = vpop.f32.mrf.mxu0
        %v6911 = vadd.f32 0.0, %v6910
        %6912 = vmatmul.bf16.gmra.mxu0 %v5672
        %v6913 = vpop.f32.mrf.mxu0
        %v6914 = vadd.f32 0.0, %v6913
        %v6915 = vpop.f32.mrf.mxu0
        %v6916 = vadd.f32 0.0, %v6915
        %6917 = vmatmul.bf16.gmra.mxu0 %v5675
        %v6918 = vpop.f32.mrf.mxu0
        %v6919 = vadd.f32 0.0, %v6918
        %v6920 = vpop.f32.mrf.mxu0
        %v6921 = vadd.f32 0.0, %v6920
        %6922 = vmatmul.bf16.gmra.mxu0 %v5678
        %v6923 = vpop.f32.mrf.mxu0
        %v6924 = vadd.f32 0.0, %v6923
        %v6925 = vpop.f32.mrf.mxu0
        %v6926 = vadd.f32 0.0, %v6925
        %6927 = vmatmul.bf16.gmra.mxu0 %v6404
        %v6928 = vpop.f32.mrf.mxu0
        %v6929 = vadd.f32 0.0, %v6928
        %v6930 = vpop.f32.mrf.mxu0
        %v6931 = vadd.f32 0.0, %v6930
        %6932 = vmatmul.bf16.gmra.mxu0 %v6847
        %v6933 = vpop.f32.mrf.mxu0
        %v6934 = vadd.f32 0.0, %v6933
        %v6935 = vpop.f32.mrf.mxu0
        %v6936 = vadd.f32 0.0, %v6935
        %6937 = vdwg.mxu0
        %v6938 = vadd.f32 %v6786, %v6859
        %v6939 = vadd.f32 %v6787, %v6861
        %v6940 = vadd.f32 %v6788, %v6864
        %v6941 = vadd.f32 %v6789, %v6866
        %v6942 = vadd.f32 %v6790, %v6869
        %v6943 = vadd.f32 %v6791, %v6871
        %v6944 = vadd.f32 %v6792, %v6874
        %v6945 = vadd.f32 %v6793, %v6876
        %v6946 = vadd.f32 %v6794, %v6879
        %v6947 = vadd.f32 %v6795, %v6881
        %v6948 = vadd.f32 %v6796, %v6884
        %v6949 = vadd.f32 %v6797, %v6886
        %v6950 = vadd.f32 %v6798, %v6889
        %v6951 = vadd.f32 %v6799, %v6891
        %v6952 = vadd.f32 %v6800, %v6894
        %v6953 = vadd.f32 %v6801, %v6896
        %v6954 = vadd.f32 %v6802, %v6899
        %v6955 = vadd.f32 %v6803, %v6901
        %v6956 = vadd.f32 %v6804, %v6904
        %v6957 = vadd.f32 %v6805, %v6906
        %v6958 = vadd.f32 %v6806, %v6909
        %v6959 = vadd.f32 %v6807, %v6911
        %v6960 = vadd.f32 %v6808, %v6914
        %v6961 = vadd.f32 %v6809, %v6916
        %v6962 = vadd.f32 %v6810, %v6919
        %v6963 = vadd.f32 %v6811, %v6921
        %v6964 = vadd.f32 %v6812, %v6924
        %v6965 = vadd.f32 %v6813, %v6926
        %v6966 = vadd.f32 %v6814, %v6929
        %v6967 = vadd.f32 %v6815, %v6931
        %v6968 = vadd.f32 %v6816, %v6934
        %v6969 = vadd.f32 %v6817, %v6936
        %v6970 = vrot.slane %v5415, 2
        %v6971 = vrot.slane %v5416, 2
        %v6972 = vsel %vm5918, %v6970, %v6971
        %v6973 = vrot.slane %v5417, 2
        %v6974 = vsel %vm5918, %v6971, %v6973
        %v6977 = vpack.c.bf16 %v6974, %v6972
        %s6978 = scalar_lea.vmem %s7, 128
        %v6979 = vld [vmem:[%s6978] sm:$0xf]
        %v6980 = vld [vmem:[%s6978 + $0x4] sm:$0xf]
        %v6981 = vld [vmem:[%s6978 + $0x8] sm:$0xf]
        %v6982 = vld [vmem:[%s6978 + $0xc] sm:$0xf]
        %v6987 = vunpack.c.l.b16 %v6979
        %v6988 = vunpack.c.l.b16 %v6980
        %v6989 = vunpack.c.l.b16 %v6981
        %v6990 = vunpack.c.l.b16 %v6982
        %v6991 = vpack.c.b16 %v6988, %v6987
        %v6992 = vpack.c.b16 %v6990, %v6989
        %v6996 = vsel %vm903, %v6977, 0
        %6998 = vmatpush.bf16.msra.mxu0 0
        %6999 = vmatpush.bf16.msra.mxu0 0
        %7000 = vmatpush.bf16.msra.mxu0 0
        %7001 = vmatpush.bf16.msra.mxu0 0
        %7002 = vmatpush.bf16.msra.mxu0 0
        %7003 = vmatpush.bf16.msra.mxu0 0
        %7004 = vmatpush.bf16.msra.mxu0 %v6992
        %7005 = vmatpush.bf16.msra.mxu0 %v6991
        %7006 = vmatmul.bf16.gmra.mxu0 %v6071
        %v7007 = vpop.f32.mrf.mxu0
        %v7008 = vadd.f32 0.0, %v7007
        %v7009 = vpop.f32.mrf.mxu0
        %v7010 = vadd.f32 0.0, %v7009
        %7011 = vmatmul.bf16.gmra.mxu0 %v6074
        %v7012 = vpop.f32.mrf.mxu0
        %v7013 = vadd.f32 0.0, %v7012
        %v7014 = vpop.f32.mrf.mxu0
        %v7015 = vadd.f32 0.0, %v7014
        %7016 = vmatmul.bf16.gmra.mxu0 %v6077
        %v7017 = vpop.f32.mrf.mxu0
        %v7018 = vadd.f32 0.0, %v7017
        %v7019 = vpop.f32.mrf.mxu0
        %v7020 = vadd.f32 0.0, %v7019
        %7021 = vmatmul.bf16.gmra.mxu0 %v6080
        %v7022 = vpop.f32.mrf.mxu0
        %v7023 = vadd.f32 0.0, %v7022
        %v7024 = vpop.f32.mrf.mxu0
        %v7025 = vadd.f32 0.0, %v7024
        %7026 = vmatmul.bf16.gmra.mxu0 %v6083
        %v7027 = vpop.f32.mrf.mxu0
        %v7028 = vadd.f32 0.0, %v7027
        %v7029 = vpop.f32.mrf.mxu0
        %v7030 = vadd.f32 0.0, %v7029
        %7031 = vmatmul.bf16.gmra.mxu0 %v6086
        %v7032 = vpop.f32.mrf.mxu0
        %v7033 = vadd.f32 0.0, %v7032
        %v7034 = vpop.f32.mrf.mxu0
        %v7035 = vadd.f32 0.0, %v7034
        %7036 = vmatmul.bf16.gmra.mxu0 %v6089
        %v7037 = vpop.f32.mrf.mxu0
        %v7038 = vadd.f32 0.0, %v7037
        %v7039 = vpop.f32.mrf.mxu0
        %v7040 = vadd.f32 0.0, %v7039
        %7041 = vmatmul.bf16.gmra.mxu0 %v6092
        %v7042 = vpop.f32.mrf.mxu0
        %v7043 = vadd.f32 0.0, %v7042
        %v7044 = vpop.f32.mrf.mxu0
        %v7045 = vadd.f32 0.0, %v7044
        %7046 = vmatmul.bf16.gmra.mxu0 %v6095
        %v7047 = vpop.f32.mrf.mxu0
        %v7048 = vadd.f32 0.0, %v7047
        %v7049 = vpop.f32.mrf.mxu0
        %v7050 = vadd.f32 0.0, %v7049
        %7051 = vmatmul.bf16.gmra.mxu0 %v6098
        %v7052 = vpop.f32.mrf.mxu0
        %v7053 = vadd.f32 0.0, %v7052
        %v7054 = vpop.f32.mrf.mxu0
        %v7055 = vadd.f32 0.0, %v7054
        %7056 = vmatmul.bf16.gmra.mxu0 %v6101
        %v7057 = vpop.f32.mrf.mxu0
        %v7058 = vadd.f32 0.0, %v7057
        %v7059 = vpop.f32.mrf.mxu0
        %v7060 = vadd.f32 0.0, %v7059
        %7061 = vmatmul.bf16.gmra.mxu0 %v6104
        %v7062 = vpop.f32.mrf.mxu0
        %v7063 = vadd.f32 0.0, %v7062
        %v7064 = vpop.f32.mrf.mxu0
        %v7065 = vadd.f32 0.0, %v7064
        %7066 = vmatmul.bf16.gmra.mxu0 %v6107
        %v7067 = vpop.f32.mrf.mxu0
        %v7068 = vadd.f32 0.0, %v7067
        %v7069 = vpop.f32.mrf.mxu0
        %v7070 = vadd.f32 0.0, %v7069
        %7071 = vmatmul.bf16.gmra.mxu0 %v6110
        %v7072 = vpop.f32.mrf.mxu0
        %v7073 = vadd.f32 0.0, %v7072
        %v7074 = vpop.f32.mrf.mxu0
        %v7075 = vadd.f32 0.0, %v7074
        %7076 = vmatmul.bf16.gmra.mxu0 %v6553
        %v7077 = vpop.f32.mrf.mxu0
        %v7078 = vadd.f32 0.0, %v7077
        %v7079 = vpop.f32.mrf.mxu0
        %v7080 = vadd.f32 0.0, %v7079
        %7081 = vmatmul.bf16.gmra.mxu0 %v6996
        %v7082 = vpop.f32.mrf.mxu0
        %v7083 = vadd.f32 0.0, %v7082
        %v7084 = vpop.f32.mrf.mxu0
        %v7085 = vadd.f32 0.0, %v7084
        %7086 = vdwg.mxu0
        %v7087 = vadd.f32 %v6938, %v7008
        %v7088 = vadd.f32 %v6939, %v7010
        %v7089 = vadd.f32 %v6940, %v7013
        %v7090 = vadd.f32 %v6941, %v7015
        %v7091 = vadd.f32 %v6942, %v7018
        %v7092 = vadd.f32 %v6943, %v7020
        %v7093 = vadd.f32 %v6944, %v7023
        %v7094 = vadd.f32 %v6945, %v7025
        %v7095 = vadd.f32 %v6946, %v7028
        %v7096 = vadd.f32 %v6947, %v7030
        %v7097 = vadd.f32 %v6948, %v7033
        %v7098 = vadd.f32 %v6949, %v7035
        %v7099 = vadd.f32 %v6950, %v7038
        %v7100 = vadd.f32 %v6951, %v7040
        %v7101 = vadd.f32 %v6952, %v7043
        %v7102 = vadd.f32 %v6953, %v7045
        %v7103 = vadd.f32 %v6954, %v7048
        %v7104 = vadd.f32 %v6955, %v7050
        %v7105 = vadd.f32 %v6956, %v7053
        %v7106 = vadd.f32 %v6957, %v7055
        %v7107 = vadd.f32 %v6958, %v7058
        %v7108 = vadd.f32 %v6959, %v7060
        %v7109 = vadd.f32 %v6960, %v7063
        %v7110 = vadd.f32 %v6961, %v7065
        %v7111 = vadd.f32 %v6962, %v7068
        %v7112 = vadd.f32 %v6963, %v7070
        %v7113 = vadd.f32 %v6964, %v7073
        %v7114 = vadd.f32 %v6965, %v7075
        %v7115 = vadd.f32 %v6966, %v7078
        %v7116 = vadd.f32 %v6967, %v7080
        %v7117 = vadd.f32 %v6968, %v7083
        %v7118 = vadd.f32 %v6969, %v7085
        %7119 = vxpose.xlu0.b32.start [1/16] %v7087, 128
        %7120 = vxpose.xlu0.b32.cont [2/16] %v7088, 128
        %7121 = vxpose.xlu0.b32.cont [3/16] %v7089, 128
        %7122 = vxpose.xlu0.b32.cont [4/16] %v7090, 128
        %7123 = vxpose.xlu0.b32.cont [5/16] %v7091, 128
        %7124 = vxpose.xlu0.b32.cont [6/16] %v7092, 128
        %7125 = vxpose.xlu0.b32.cont [7/16] %v7093, 128
        %7126 = vxpose.xlu0.b32.cont [8/16] %v7094, 128
        %7127 = vxpose.xlu0.b32.cont [9/16] %v7095, 128
        %7128 = vxpose.xlu0.b32.cont [10/16] %v7096, 128
        %7129 = vxpose.xlu0.b32.cont [11/16] %v7097, 128
        %7130 = vxpose.xlu0.b32.cont [12/16] %v7098, 128
        %7131 = vxpose.xlu0.b32.cont [13/16] %v7099, 128
        %7132 = vxpose.xlu0.b32.cont [14/16] %v7100, 128
        %7133 = vxpose.xlu0.b32.cont [15/16] %v7101, 128
        %7134 = vxpose.xlu0.b32.end [16/16] %v7102, 128
        %v7135 = vpop.trf.xlu0
        %v7136 = vpop.trf.xlu0
        %v7137 = vpop.trf.xlu0
        %v7138 = vpop.trf.xlu0
        %v7139 = vpop.trf.xlu0
        %v7140 = vpop.trf.xlu0
        %v7141 = vpop.trf.xlu0
        %v7142 = vpop.trf.xlu0
        %v7143 = vpop.trf.xlu0
        %v7144 = vpop.trf.xlu0
        %v7145 = vpop.trf.xlu0
        %v7146 = vpop.trf.xlu0
        %v7147 = vpop.trf.xlu0
        %v7148 = vpop.trf.xlu0
        %v7149 = vpop.trf.xlu0
        %v7150 = vpop.trf.xlu0
        %7151 = vxpose.xlu0.b32.start [1/16] %v7103, 128
        %7152 = vxpose.xlu0.b32.cont [2/16] %v7104, 128
        %7153 = vxpose.xlu0.b32.cont [3/16] %v7105, 128
        %7154 = vxpose.xlu0.b32.cont [4/16] %v7106, 128
        %7155 = vxpose.xlu0.b32.cont [5/16] %v7107, 128
        %7156 = vxpose.xlu0.b32.cont [6/16] %v7108, 128
        %7157 = vxpose.xlu0.b32.cont [7/16] %v7109, 128
        %7158 = vxpose.xlu0.b32.cont [8/16] %v7110, 128
        %7159 = vxpose.xlu0.b32.cont [9/16] %v7111, 128
        %7160 = vxpose.xlu0.b32.cont [10/16] %v7112, 128
        %7161 = vxpose.xlu0.b32.cont [11/16] %v7113, 128
        %7162 = vxpose.xlu0.b32.cont [12/16] %v7114, 128
        %7163 = vxpose.xlu0.b32.cont [13/16] %v7115, 128
        %7164 = vxpose.xlu0.b32.cont [14/16] %v7116, 128
        %7165 = vxpose.xlu0.b32.cont [15/16] %v7117, 128
        %7166 = vxpose.xlu0.b32.end [16/16] %v7118, 128
        %v7167 = vpop.trf.xlu0
        %v7168 = vpop.trf.xlu0
        %v7169 = vpop.trf.xlu0
        %v7170 = vpop.trf.xlu0
        %v7171 = vpop.trf.xlu0
        %v7172 = vpop.trf.xlu0
        %v7173 = vpop.trf.xlu0
        %v7174 = vpop.trf.xlu0
        %v7175 = vpop.trf.xlu0
        %v7176 = vpop.trf.xlu0
        %v7177 = vpop.trf.xlu0
        %v7178 = vpop.trf.xlu0
        %v7179 = vpop.trf.xlu0
        %v7180 = vpop.trf.xlu0
        %v7181 = vpop.trf.xlu0
        %v7182 = vpop.trf.xlu0
        %v7183 = vadd.f32 %v2591, %v7135
        %v7184 = vadd.f32 %v2623, %v7167
        %v7185 = vadd.f32 %v2592, %v7136
        %v7186 = vadd.f32 %v2624, %v7168
        %v7187 = vadd.f32 %v2593, %v7137
        %v7188 = vadd.f32 %v2625, %v7169
        %v7189 = vadd.f32 %v2594, %v7138
        %v7190 = vadd.f32 %v2626, %v7170
        %v7191 = vld [vmem:[%s383] sm:$0xff]
        %v7192 = vld [vmem:[%s383 + $0x8] sm:$0xff]
        %v7193 = vld [vmem:[%s383 + $0x10] sm:$0xff]
        %v7194 = vld [vmem:[%s383 + $0x18] sm:$0xff]
        %v7195 = vld [vmem:[%s383 + $0x20] sm:$0xff]
        %v7196 = vld [vmem:[%s383 + $0x28] sm:$0xff]
        %v7197 = vld [vmem:[%s383 + $0x30] sm:$0xff]
        %v7198 = vld [vmem:[%s383 + $0x38] sm:$0xff]
        %v7199 = vadd.f32 %v7183, %v7191
        %v7200 = vadd.f32 %v7184, %v7192
        %v7201 = vadd.f32 %v7185, %v7193
        %v7202 = vadd.f32 %v7186, %v7194
        %v7203 = vadd.f32 %v7187, %v7195
        %v7204 = vadd.f32 %v7188, %v7196
        %v7205 = vadd.f32 %v7189, %v7197
        %v7206 = vadd.f32 %v7190, %v7198
        %v7207 = vtanh.pop %v7199
        %v7208 = vtanh.pop %v7200
        %v7209 = vtanh.pop %v7201
        %v7210 = vtanh.pop %v7202
        %v7211 = vtanh.pop %v7203
        %v7212 = vtanh.pop %v7204
        %v7213 = vtanh.pop %v7205
        %v7214 = vtanh.pop %v7206
        %v7215 = vsub.f32 1.0, %v4988
        %v7216 = vsub.f32 1.0, %v5003
        %v7217 = vsub.f32 1.0, %v5018
        %v7218 = vsub.f32 1.0, %v5033
        %v7219 = vsub.f32 1.0, %v5048
        %v7220 = vsub.f32 1.0, %v5063
        %v7221 = vsub.f32 1.0, %v5078
        %v7222 = vsub.f32 1.0, %v5093
        %v7223 = vmul.f32 %v7215, %v385
        %v7224 = vmul.f32 %v7216, %v386
        %v7225 = vmul.f32 %v7217, %v387
        %v7226 = vmul.f32 %v7218, %v388
        %v7227 = vmul.f32 %v7219, %v389
        %v7228 = vmul.f32 %v7220, %v390
        %v7229 = vmul.f32 %v7221, %v391
        %v7230 = vmul.f32 %v7222, %v392
        %v7231 = vmul.f32 %v4988, %v7207
        %v7232 = vmul.f32 %v5003, %v7208
        %v7233 = vmul.f32 %v5018, %v7209
        %v7234 = vmul.f32 %v5033, %v7210
        %v7235 = vmul.f32 %v5048, %v7211
        %v7236 = vmul.f32 %v5063, %v7212
        %v7237 = vmul.f32 %v5078, %v7213
        %v7238 = vmul.f32 %v5093, %v7214
        %v7239 = vadd.f32 %v7223, %v7231
        %v7240 = vadd.f32 %v7224, %v7232
        %v7241 = vadd.f32 %v7225, %v7233
        %v7242 = vadd.f32 %v7226, %v7234
        %v7243 = vadd.f32 %v7227, %v7235
        %v7244 = vadd.f32 %v7228, %v7236
        %v7245 = vadd.f32 %v7229, %v7237
        %v7246 = vadd.f32 %v7230, %v7238
        %7247 = vst [vmem:[%s358] sm:$0xff] %v7239
        %7248 = vst [vmem:[%s358 + $0x8] sm:$0xff] %v7240
        %7249 = vst [vmem:[%s358 + $0x10] sm:$0xff] %v7241
        %7250 = vst [vmem:[%s358 + $0x18] sm:$0xff] %v7242
        %7251 = vst [vmem:[%s358 + $0x20] sm:$0xff] %v7243
        %7252 = vst [vmem:[%s358 + $0x28] sm:$0xff] %v7244
        %7253 = vst [vmem:[%s358 + $0x30] sm:$0xff] %v7245
        %7254 = vst [vmem:[%s358 + $0x38] sm:$0xff] %v7246
        %s7255 = sand.u32 %s223, 1
        %s7256 = scalar_lea.sflag [#allocation4], %s7255
        %s7257 = sand.u32 %s223, 1
        %s7258 = smul.addr %s7257, 64
        %s7259 = scalar_lea.vmem [#allocation3], %s7258
        // Predicated region
        $region53: #{tpu_custom_call.1} parent=51 // pred_check
          %p7260 = pneg %p233
        $region54: #{tpu_custom_call.1} parent=51 // pred_check_branch
          %7262 = sbr.rel (%p7260) target = $region56
        $region55: #{tpu_custom_call.1} parent=51 // pred_region
          %7264 = vsyncadd %s7256, 0
          %s7265 = smul.addr %s22, 8
          %s7266 = smul.addr %s7265, 8
          %s7267 = scalar_lea.hbm %s8, %s7266
          %s7268 = sshll.u32 %s7259, 4
          %s7269 = int_to_ptr.vmem [resolvable:$true] %s7268
          %s7270 = sshll.u32 %s7267, 4
          %s7271 = int_to_ptr.hbm [resolvable:$true] %s7270
          %7276 = dma.vmem_to_hbm [thread:$0]  %s7269, 1024, %s7271, %s7256, 256, 256, 16
        $region56: #{tpu_custom_call.1} parent=51 // pred_fallthru
          _
      $region52: #{tpu_custom_call.1} parent=5 // pred_fallthru
        _
      %p7277 = scmp.le.s32.totalorder 2, %s17
      // Predicated region
      $region57: #{tpu_custom_call.1} parent=5 // pred_check
        %p7278 = pneg %p7277
      $region58: #{tpu_custom_call.1} parent=5 // pred_check_branch
        %7280 = sbr.rel (%p7278) target = $region60
      $region59: #{tpu_custom_call.1} parent=5 // pred_region
        %s7281 = ssub.s32 %s17, 2
        // Predicated region
        $region61: #{tpu_custom_call.1} parent=59 // pred_check
          %p7282 = pneg %p239
        $region62: #{tpu_custom_call.1} parent=59 // pred_check_branch
          %7284 = sbr.rel (%p7282) target = $region64
        $region63: #{tpu_custom_call.1} parent=59 // pred_region
          %s7285 = sand.u32 %s224, 1
          %s7286 = scalar_lea.sflag [#allocation4], %s7285
          %s7287 = sand.u32 %s224, 1
          %s7288 = smul.addr %s7287, 64
          %s7289 = scalar_lea.vmem [#allocation3], %s7288
          %7291 = dma.done %s7286, 1024
        $region64: #{tpu_custom_call.1} parent=59 // pred_fallthru
          _
      $region60: #{tpu_custom_call.1} parent=5 // pred_fallthru
        _
    $region6: #{tpu_custom_call.1} parent=1 // loop_footer
      %s21 = sadd.s32 1, %s17
    $region7: #{tpu_custom_call.1} parent=1 // loop_footer_branch
      %16 = sbr.rel target = $region3
    $region8: #{tpu_custom_call.1} parent=1 // loop_exit
      _
    %7292 = vsyncpa [#allocation4], 1
    %s7293 = scalar_lea.sflag [#allocation4], 1
    %7294 = vsyncpa %s7293, 1

</llo_original>
